<compile_context>
chip_gen: v5e
topology: v5e:2x2
jax: 0.10.0
libtpu: 0.0.40
codegen_flags: <defaults>
</compile_context>

<pallas_src>
import functools

import numpy as np
import jax
import jax.numpy as jnp
from jax.experimental import pallas as pl
from jax.experimental.pallas import tpu as pltpu


_INV_SQRT2 = 0.7071067811865476


def fusion_head_kernel(a_ref, b_ref, aff_ref, w1a_ref, w1b_ref, w2_ref, o_ref,
                       *, approx_gelu: bool):
    a = a_ref[...].astype(jnp.float32)
    b = b_ref[...].astype(jnp.float32)
    d = a.shape[-1]
    inv_2d = 1.0 / (2 * d)

    # Packed affine params: rows = [gamma_a, gamma_b, beta_a, beta_b], all f32.
    aff = aff_ref[...]
    ga, gb = aff[0:1, :], aff[1:2, :]
    ba, bb = aff[2:3, :], aff[3:4, :]

    # LayerNorm over the (virtual) concatenated feature axis — no concat
    # materialized, stats combined across the two halves.
    mean = (jnp.sum(a, axis=-1, keepdims=True)
            + jnp.sum(b, axis=-1, keepdims=True)) * inv_2d
    ca = a - mean
    cb = b - mean
    var = (jnp.sum(ca * ca, axis=-1, keepdims=True)
           + jnp.sum(cb * cb, axis=-1, keepdims=True)) * inv_2d
    inv_std = jax.lax.rsqrt(var + 1e-5)

    w1a = w1a_ref[...]
    w1b = w1b_ref[...]
    w2 = w2_ref[...]
    mm_dtype = w1a.dtype  # bf16 (fast path) or f32 (exact path), set by wrapper

    # Early cast to the matmul dtype to shrink f32 live ranges.
    xn_a = ((ca * inv_std) * ga + ba).astype(mm_dtype)
    xn_b = ((cb * inv_std) * gb + bb).astype(mm_dtype)

    # First linear (2d -> hidden), K-split into two MXU matmuls, f32 accumulation.
    h = (jnp.dot(xn_a, w1a, preferred_element_type=jnp.float32)
         + jnp.dot(xn_b, w1b, preferred_element_type=jnp.float32))

    if approx_gelu:
        # tanh approximation (EUP slot; deviates slightly from torch default).
        h = jax.nn.gelu(h, approximate=True)
    else:
        # Exact (erf) GELU in f32 — matches torch.nn.GELU() default.
        h = 0.5 * h * (1.0 + jax.lax.erf(h * _INV_SQRT2))

    # Second linear (hidden -> d).
    y = jnp.dot(h.astype(mm_dtype), w2, preferred_element_type=jnp.float32)

    # L2 normalize along last dim (no eps clamp — matches `x / x.norm(...)`;
    # an all-zero row would produce inf/NaN, same as the torch reference).
    inv_norm = jax.lax.rsqrt(jnp.sum(y * y, axis=-1, keepdims=True))
    o_ref[...] = (y * inv_norm).astype(o_ref.dtype)


def _vmem_cap_bytes():
    """Per-core VMEM capacity; conservative (v7x) fallback if the query fails."""
    try:
        info = pltpu.get_tpu_info()
        cap = getattr(info, "vmem_capacity_bytes", None)
        if cap:
            return int(cap)
    except Exception:
        pass
    return 64 << 20


def _auto_tb(B, tb_max=512, min_steps=2):
    """Largest batch tile (multiple of 8, divides B) keeping >= min_steps grid steps."""
    cands = [t for t in range(8, min(tb_max, B) + 1, 8) if B % t == 0]
    if not cands:
        raise ValueError(f"batch {B} must be a multiple of 8")
    pref = [t for t in cands if B // t >= min_steps]
    return max(pref) if pref else max(cands)


def _spec(block_shape, index_map, buffer_count=None):
    """BlockSpec, optionally with pipeline_mode=pl.Buffered(n); falls back if
    this JAX version's BlockSpec has no pipeline_mode kwarg."""
    if buffer_count is None:
        return pl.BlockSpec(block_shape, index_map)
    try:
        return pl.BlockSpec(block_shape, index_map,
                            pipeline_mode=pl.Buffered(buffer_count))
    except Exception:
        return pl.BlockSpec(block_shape, index_map)


def fusion_head(a, b, gamma, beta, w1, w2, *, tb=None, use_bf16_matmul=True,
                out_dtype=None, approximate_gelu=False, act_buffers=None,
                single_buffer_weights=True, min_steps=2, vmem_limit_bytes=None):
    """a, b: (B, d). gamma, beta: (2d,). w1: (2d, hidden). w2: (hidden, d).

    Weights are (in_features, out_features) == PyTorch weight transposed.
    """
    B, d = a.shape
    two_d, hidden = w1.shape
    assert two_d == 2 * d
    assert w2.shape == (hidden, d)
    assert b.shape == (B, d)

    if tb is None:
        tb = _auto_tb(B, min_steps=min_steps)
    tb = min(tb, B)
    assert B % tb == 0, f"batch {B} must be divisible by batch tile {tb}"
    assert tb % 8 == 0, "f32 sublane tiling needs tb % 8 == 0"

    out_dtype = a.dtype if out_dtype is None else out_dtype
    w_dtype = jnp.bfloat16 if use_bf16_matmul else jnp.float32
    w_itemsize = 2 if use_bf16_matmul else 4
    out_itemsize = jnp.dtype(out_dtype).itemsize

    # Pre-split weights and pack affine params outside the kernel (done once).
    w1a = w1[:d].astype(w_dtype)
    w1b = w1[d:].astype(w_dtype)
    w2c = w2.astype(w_dtype)
    gamma2 = gamma.reshape(2, d).astype(jnp.float32)
    beta2 = beta.reshape(2, d).astype(jnp.float32)
    affine = jnp.concatenate([gamma2, beta2], axis=0)  # (4, d): [ga, gb, ba, bb]

    if vmem_limit_bytes is None:
        w_bufs = 1 if single_buffer_weights else 2
        nact = act_buffers if act_buffers else 2
        w_bytes = (2 * d * hidden + hidden * d) * w_itemsize * w_bufs
        aff_bytes = 4 * d * 4 * w_bufs
        act_bytes = (2 * tb * d * 4 + tb * d * out_itemsize) * nact
        live_bytes = (tb * hidden + 4 * tb * d) * 4   # f32 intermediates
        needed = w_bytes + aff_bytes + act_bytes + live_bytes + (4 << 20)
        cap = _vmem_cap_bytes() * 3 // 4               # 48 MiB v7x, 96 MiB v5e/v6e
        vmem_limit_bytes = int(min(max(needed, 16 << 20), cap))

    grid = (B // tb,)
    kernel = functools.partial(fusion_head_kernel, approx_gelu=approximate_gelu)

    def _build(weights_single_buffered):
        w_buf = 1 if weights_single_buffered else None
        a_buf = act_buffers if (act_buffers and act_buffers != 2) else None
        in_specs = [
            _spec((tb, d), lambda i: (i, 0), a_buf),        # a tile
            _spec((tb, d), lambda i: (i, 0), a_buf),        # b tile
            _spec((4, d), lambda i: (0, 0), w_buf),         # packed gamma/beta
            _spec((d, hidden), lambda i: (0, 0), w_buf),    # W1 top half (in, out)
            _spec((d, hidden), lambda i: (0, 0), w_buf),    # W1 bottom half
            _spec((hidden, d), lambda i: (0, 0), w_buf),    # W2 (in, out)
        ]
        out_specs = _spec((tb, d), lambda i: (i, 0), a_buf)
        return pl.pallas_call(
            kernel,
            out_shape=jax.ShapeDtypeStruct((B, d), out_dtype),
            grid=grid,
            in_specs=in_specs,
            out_specs=out_specs,
            compiler_params=pltpu.CompilerParams(
                dimension_semantics=("parallel",),
                vmem_limit_bytes=vmem_limit_bytes,
            ),
        )

    try:
        out = _build(single_buffer_weights)(a, b, affine, w1a, w1b, w2c)
        return jax.block_until_ready(out)
    except Exception:
        if not single_buffer_weights:
            raise
        # Fallback: default double-buffering everywhere.
        out = _build(False)(a, b, affine, w1a, w1b, w2c)
        return jax.block_until_ready(out)


def fusion_head_ref(a, b, gamma, beta, w1, w2):
    x = jnp.concatenate([a, b], axis=-1).astype(jnp.float32)
    mean = jnp.mean(x, axis=-1, keepdims=True)
    var = jnp.mean((x - mean) ** 2, axis=-1, keepdims=True)
    xn = (x - mean) / jnp.sqrt(var + 1e-5)
    xn = xn * gamma + beta
    h = xn @ w1
    h = 0.5 * h * (1.0 + jax.lax.erf(h / jnp.sqrt(2.0)))
    y = h @ w2
    return y / jnp.linalg.norm(y, axis=-1, keepdims=True)


if __name__ == "__main__":
    # Small shapes consistent with the module (d / hidden scaled down); B=256
    # so the auto tile (128) gives a 2-step parallel grid (exercises megacore).
    B, d, hidden = 256, 128, 256
    key = jax.random.PRNGKey(0)
    ka, kb, k1, k2, kg, kbt = jax.random.split(key, 6)

    a = jax.random.normal(ka, (B, d), dtype=jnp.float32)
    b = jax.random.normal(kb, (B, d), dtype=jnp.float32)
    gamma = 1.0 + 0.1 * jax.random.normal(kg, (2 * d,), dtype=jnp.float32)
    beta = 0.1 * jax.random.normal(kbt, (2 * d,), dtype=jnp.float32)
    w1 = jax.random.normal(k1, (2 * d, hidden), dtype=jnp.float32) * 0.02
    w2 = jax.random.normal(k2, (hidden, d), dtype=jnp.float32) * 0.02

    ref = fusion_head_ref(a, b, gamma, beta, w1, w2)

    # Exact-precision path (f32 MXU operands, f32 output): tight check.
    out_f32 = fusion_head(a, b, gamma, beta, w1, w2,
                          use_bf16_matmul=False, out_dtype=jnp.float32)
    jax.block_until_ready(out_f32)
    np.testing.assert_allclose(np.asarray(out_f32), np.asarray(ref),
                               atol=2e-4, rtol=2e-4)

    # Fast path (bf16 MXU operands + bf16 writeback): relaxed check.
    out_bf16 = fusion_head(a, b, gamma, beta, w1, w2,
                           use_bf16_matmul=True, out_dtype=jnp.bfloat16)
    jax.block_until_ready(out_bf16)
    np.testing.assert_allclose(np.asarray(out_bf16).astype(np.float32),
                               np.asarray(ref), atol=3e-2, rtol=3e-2)

    print("KERNEL_OK")
</pallas_src>

<mosaic_0001>
module attributes {stable_mosaic.version = 11 : i64} {
  func.func @fusion_head_kernel(%arg0: i32, %arg1: memref<128x128xf32, #tpu.memory_space<vmem>>, %arg2: memref<128x128xf32, #tpu.memory_space<vmem>>, %arg3: memref<4x128xf32, #tpu.memory_space<vmem>>, %arg4: memref<128x256xf32, #tpu.memory_space<vmem>>, %arg5: memref<128x256xf32, #tpu.memory_space<vmem>>, %arg6: memref<256x128xf32, #tpu.memory_space<vmem>>, %arg7: memref<128x128xf32, #tpu.memory_space<vmem>>) attributes {dimension_semantics = [#tpu.dimension_semantics<parallel>], iteration_bounds = array<i64: 2>, scalar_prefetch = 0 : i64, scratch_operands = 0 : i64, tpu.core_type = #tpu.core_type<tc>, window_params = [{transform_indices = @transform_0, window_bounds = array<i64: 128, 128>}, {transform_indices = @transform_1, window_bounds = array<i64: 128, 128>}, {pipeline_mode = #tpu.pipeline_mode<synchronous>, transform_indices = @transform_2, window_bounds = array<i64: 4, 128>}, {pipeline_mode = #tpu.pipeline_mode<synchronous>, transform_indices = @transform_3, window_bounds = array<i64: 128, 256>}, {pipeline_mode = #tpu.pipeline_mode<synchronous>, transform_indices = @transform_4, window_bounds = array<i64: 128, 256>}, {pipeline_mode = #tpu.pipeline_mode<synchronous>, transform_indices = @transform_5, window_bounds = array<i64: 256, 128>}, {transform_indices = @transform_6, window_bounds = array<i64: 128, 128>}]} {
    %c0 = arith.constant 0 : index
    %c0_0 = arith.constant 0 : index
    %0 = vector.load %arg1[%c0, %c0_0] : memref<128x128xf32, #tpu.memory_space<vmem>>, vector<128x128xf32>
    %c0_1 = arith.constant 0 : index
    %c0_2 = arith.constant 0 : index
    %1 = vector.load %arg2[%c0_1, %c0_2] : memref<128x128xf32, #tpu.memory_space<vmem>>, vector<128x128xf32>
    %c0_3 = arith.constant 0 : index
    %c0_4 = arith.constant 0 : index
    %2 = vector.load %arg3[%c0_3, %c0_4] : memref<4x128xf32, #tpu.memory_space<vmem>>, vector<4x128xf32>
    %3 = vector.extract_strided_slice %2 {offsets = [0, 0], sizes = [1, 128], strides = [1, 1]} : vector<4x128xf32> to vector<1x128xf32>
    %4 = vector.extract_strided_slice %2 {offsets = [1, 0], sizes = [1, 128], strides = [1, 1]} : vector<4x128xf32> to vector<1x128xf32>
    %5 = vector.extract_strided_slice %2 {offsets = [2, 0], sizes = [1, 128], strides = [1, 1]} : vector<4x128xf32> to vector<1x128xf32>
    %6 = vector.extract_strided_slice %2 {offsets = [3, 0], sizes = [1, 128], strides = [1, 1]} : vector<4x128xf32> to vector<1x128xf32>
    %cst = arith.constant dense<0.000000e+00> : vector<128xf32>
    %7 = vector.multi_reduction <add>, %0, %cst [1] : vector<128x128xf32> to vector<128xf32>
    %8 = vector.shape_cast %7 : vector<128xf32> to vector<128x1xf32>
    %cst_5 = arith.constant dense<0.000000e+00> : vector<128xf32>
    %9 = vector.multi_reduction <add>, %1, %cst_5 [1] : vector<128x128xf32> to vector<128xf32>
    %10 = vector.shape_cast %9 : vector<128xf32> to vector<128x1xf32>
    %11 = arith.addf %8, %10 : vector<128x1xf32>
    %cst_6 = arith.constant 3.906250e-03 : f32
    %12 = vector.broadcast %cst_6 : f32 to vector<128x1xf32>
    %13 = arith.mulf %11, %12 : vector<128x1xf32>
    %14 = vector.broadcast %13 : vector<128x1xf32> to vector<128x128xf32>
    %15 = arith.subf %0, %14 : vector<128x128xf32>
    %16 = vector.broadcast %13 : vector<128x1xf32> to vector<128x128xf32>
    %17 = arith.subf %1, %16 : vector<128x128xf32>
    %18 = arith.mulf %15, %15 : vector<128x128xf32>
    %cst_7 = arith.constant dense<0.000000e+00> : vector<128xf32>
    %19 = vector.multi_reduction <add>, %18, %cst_7 [1] : vector<128x128xf32> to vector<128xf32>
    %20 = vector.shape_cast %19 : vector<128xf32> to vector<128x1xf32>
    %21 = arith.mulf %17, %17 : vector<128x128xf32>
    %cst_8 = arith.constant dense<0.000000e+00> : vector<128xf32>
    %22 = vector.multi_reduction <add>, %21, %cst_8 [1] : vector<128x128xf32> to vector<128xf32>
    %23 = vector.shape_cast %22 : vector<128xf32> to vector<128x1xf32>
    %24 = arith.addf %20, %23 : vector<128x1xf32>
    %cst_9 = arith.constant 3.906250e-03 : f32
    %25 = vector.broadcast %cst_9 : f32 to vector<128x1xf32>
    %26 = arith.mulf %24, %25 : vector<128x1xf32>
    %cst_10 = arith.constant 9.99999974E-6 : f32
    %27 = vector.broadcast %cst_10 : f32 to vector<128x1xf32>
    %28 = arith.addf %26, %27 : vector<128x1xf32>
    %29 = math.rsqrt %28 : vector<128x1xf32>
    %c0_11 = arith.constant 0 : index
    %c0_12 = arith.constant 0 : index
    %30 = vector.load %arg4[%c0_11, %c0_12] : memref<128x256xf32, #tpu.memory_space<vmem>>, vector<128x256xf32>
    %c0_13 = arith.constant 0 : index
    %c0_14 = arith.constant 0 : index
    %31 = vector.load %arg5[%c0_13, %c0_14] : memref<128x256xf32, #tpu.memory_space<vmem>>, vector<128x256xf32>
    %c0_15 = arith.constant 0 : index
    %c0_16 = arith.constant 0 : index
    %32 = vector.load %arg6[%c0_15, %c0_16] : memref<256x128xf32, #tpu.memory_space<vmem>>, vector<256x128xf32>
    %33 = vector.broadcast %29 : vector<128x1xf32> to vector<128x128xf32>
    %34 = arith.mulf %15, %33 : vector<128x128xf32>
    %35 = vector.broadcast %3 : vector<1x128xf32> to vector<128x128xf32>
    %36 = arith.mulf %34, %35 : vector<128x128xf32>
    %37 = vector.broadcast %5 : vector<1x128xf32> to vector<128x128xf32>
    %38 = arith.addf %36, %37 : vector<128x128xf32>
    %39 = vector.broadcast %29 : vector<128x1xf32> to vector<128x128xf32>
    %40 = arith.mulf %17, %39 : vector<128x128xf32>
    %41 = vector.broadcast %4 : vector<1x128xf32> to vector<128x128xf32>
    %42 = arith.mulf %40, %41 : vector<128x128xf32>
    %43 = vector.broadcast %6 : vector<1x128xf32> to vector<128x128xf32>
    %44 = arith.addf %42, %43 : vector<128x128xf32>
    %cst_17 = arith.constant dense<0.000000e+00> : vector<128x256xf32>
    %45 = tpu.matmul %38, %30, %cst_17 {dimension_numbers = #tpu.dot_dimension_numbers<[1], [0], [0], [1], [0, 0, 1, 1], [], []>} : vector<128x128xf32>, vector<128x256xf32>, vector<128x256xf32> -> vector<128x256xf32>
    %cst_18 = arith.constant dense<0.000000e+00> : vector<128x256xf32>
    %46 = tpu.matmul %44, %31, %cst_18 {dimension_numbers = #tpu.dot_dimension_numbers<[1], [0], [0], [1], [0, 0, 1, 1], [], []>} : vector<128x128xf32>, vector<128x256xf32>, vector<128x256xf32> -> vector<128x256xf32>
    %47 = arith.addf %45, %46 : vector<128x256xf32>
    %cst_19 = arith.constant 5.000000e-01 : f32
    %48 = vector.broadcast %cst_19 : f32 to vector<128x256xf32>
    %49 = arith.mulf %48, %47 : vector<128x256xf32>
    %cst_20 = arith.constant 0.707106769 : f32
    %50 = vector.broadcast %cst_20 : f32 to vector<128x256xf32>
    %51 = arith.mulf %47, %50 : vector<128x256xf32>
    %52 = math.erf %51 : vector<128x256xf32>
    %cst_21 = arith.constant 1.000000e+00 : f32
    %53 = vector.broadcast %cst_21 : f32 to vector<128x256xf32>
    %54 = arith.addf %53, %52 : vector<128x256xf32>
    %55 = arith.mulf %49, %54 : vector<128x256xf32>
    %cst_22 = arith.constant dense<0.000000e+00> : vector<128x128xf32>
    %56 = tpu.matmul %55, %32, %cst_22 {dimension_numbers = #tpu.dot_dimension_numbers<[1], [0], [0], [1], [0, 0, 1, 1], [], []>} : vector<128x256xf32>, vector<256x128xf32>, vector<128x128xf32> -> vector<128x128xf32>
    %57 = arith.mulf %56, %56 : vector<128x128xf32>
    %cst_23 = arith.constant dense<0.000000e+00> : vector<128xf32>
    %58 = vector.multi_reduction <add>, %57, %cst_23 [1] : vector<128x128xf32> to vector<128xf32>
    %59 = vector.shape_cast %58 : vector<128xf32> to vector<128x1xf32>
    %60 = math.rsqrt %59 : vector<128x1xf32>
    %61 = vector.broadcast %60 : vector<128x1xf32> to vector<128x128xf32>
    %62 = arith.mulf %56, %61 : vector<128x128xf32>
    %c0_24 = arith.constant 0 : index
    %c0_25 = arith.constant 0 : index
    %63 = vector.load %arg7[%c0_24, %c0_25] : memref<128x128xf32, #tpu.memory_space<vmem>>, vector<128x128xf32>
    tpu.vector_store %arg7[%c0_24, %c0_25], %62 {strides = array<i32>} : memref<128x128xf32, #tpu.memory_space<vmem>>, vector<128x128xf32>,
    return
  }
  func.func @transform_0(%arg0: i32) -> (i32, i32) {
    %c0_i32 = arith.constant 0 : i32
    %c0_i32_0 = arith.constant 0 : i32
    return %arg0, %c0_i32 : i32, i32
  }
  func.func @transform_1(%arg0: i32) -> (i32, i32) {
    %c0_i32 = arith.constant 0 : i32
    %c0_i32_0 = arith.constant 0 : i32
    return %arg0, %c0_i32 : i32, i32
  }
  func.func @transform_2(%arg0: i32) -> (i32, i32) {
    %c0_i32 = arith.constant 0 : i32
    %c0_i32_0 = arith.constant 0 : i32
    %c0_i32_1 = arith.constant 0 : i32
    return %c0_i32, %c0_i32_0 : i32, i32
  }
  func.func @transform_3(%arg0: i32) -> (i32, i32) {
    %c0_i32 = arith.constant 0 : i32
    %c0_i32_0 = arith.constant 0 : i32
    %c0_i32_1 = arith.constant 0 : i32
    return %c0_i32, %c0_i32_0 : i32, i32
  }
  func.func @transform_4(%arg0: i32) -> (i32, i32) {
    %c0_i32 = arith.constant 0 : i32
    %c0_i32_0 = arith.constant 0 : i32
    %c0_i32_1 = arith.constant 0 : i32
    return %c0_i32, %c0_i32_0 : i32, i32
  }
  func.func @transform_5(%arg0: i32) -> (i32, i32) {
    %c0_i32 = arith.constant 0 : i32
    %c0_i32_0 = arith.constant 0 : i32
    %c0_i32_1 = arith.constant 0 : i32
    return %c0_i32, %c0_i32_0 : i32, i32
  }
  func.func @transform_6(%arg0: i32) -> (i32, i32) {
    %c0_i32 = arith.constant 0 : i32
    %c0_i32_0 = arith.constant 0 : i32
    return %arg0, %c0_i32 : i32, i32
  }
}

module attributes {stable_mosaic.version = 11 : i64} {
  func.func @fusion_head_kernel(%arg0: i32, %arg1: memref<128x128xf32, #tpu.memory_space<vmem>>, %arg2: memref<128x128xf32, #tpu.memory_space<vmem>>, %arg3: memref<4x128xf32, #tpu.memory_space<vmem>>, %arg4: memref<128x256xf32, #tpu.memory_space<vmem>>, %arg5: memref<128x256xf32, #tpu.memory_space<vmem>>, %arg6: memref<256x128xf32, #tpu.memory_space<vmem>>, %arg7: memref<128x128xf32, #tpu.memory_space<vmem>>) attributes {dimension_semantics = [#tpu.dimension_semantics<parallel>], iteration_bounds = array<i64: 2>, scalar_prefetch = 0 : i64, scratch_operands = 0 : i64, tpu.core_type = #tpu.core_type<tc>, window_params = [{transform_indices = @transform_0, window_bounds = array<i64: 128, 128>}, {transform_indices = @transform_1, window_bounds = array<i64: 128, 128>}, {pipeline_mode = #tpu.pipeline_mode<synchronous>, transform_indices = @transform_2, window_bounds = array<i64: 4, 128>}, {pipeline_mode = #tpu.pipeline_mode<synchronous>, transform_indices = @transform_3, window_bounds = array<i64: 128, 256>}, {pipeline_mode = #tpu.pipeline_mode<synchronous>, transform_indices = @transform_4, window_bounds = array<i64: 128, 256>}, {pipeline_mode = #tpu.pipeline_mode<synchronous>, transform_indices = @transform_5, window_bounds = array<i64: 256, 128>}, {transform_indices = @transform_6, window_bounds = array<i64: 128, 128>}]} {
    %c0 = arith.constant 0 : index
    %c0_0 = arith.constant 0 : index
    %0 = vector.load %arg1[%c0, %c0_0] : memref<128x128xf32, #tpu.memory_space<vmem>>, vector<128x128xf32>
    %c0_1 = arith.constant 0 : index
    %c0_2 = arith.constant 0 : index
    %1 = vector.load %arg2[%c0_1, %c0_2] : memref<128x128xf32, #tpu.memory_space<vmem>>, vector<128x128xf32>
    %c0_3 = arith.constant 0 : index
    %c0_4 = arith.constant 0 : index
    %2 = vector.load %arg3[%c0_3, %c0_4] : memref<4x128xf32, #tpu.memory_space<vmem>>, vector<4x128xf32>
    %3 = vector.extract_strided_slice %2 {offsets = [0, 0], sizes = [1, 128], strides = [1, 1]} : vector<4x128xf32> to vector<1x128xf32>
    %4 = vector.extract_strided_slice %2 {offsets = [1, 0], sizes = [1, 128], strides = [1, 1]} : vector<4x128xf32> to vector<1x128xf32>
    %5 = vector.extract_strided_slice %2 {offsets = [2, 0], sizes = [1, 128], strides = [1, 1]} : vector<4x128xf32> to vector<1x128xf32>
    %6 = vector.extract_strided_slice %2 {offsets = [3, 0], sizes = [1, 128], strides = [1, 1]} : vector<4x128xf32> to vector<1x128xf32>
    %cst = arith.constant dense<0.000000e+00> : vector<128xf32>
    %7 = vector.multi_reduction <add>, %0, %cst [1] : vector<128x128xf32> to vector<128xf32>
    %8 = vector.shape_cast %7 : vector<128xf32> to vector<128x1xf32>
    %cst_5 = arith.constant dense<0.000000e+00> : vector<128xf32>
    %9 = vector.multi_reduction <add>, %1, %cst_5 [1] : vector<128x128xf32> to vector<128xf32>
    %10 = vector.shape_cast %9 : vector<128xf32> to vector<128x1xf32>
    %11 = arith.addf %8, %10 : vector<128x1xf32>
    %cst_6 = arith.constant 3.906250e-03 : f32
    %12 = vector.broadcast %cst_6 : f32 to vector<128x1xf32>
    %13 = arith.mulf %11, %12 : vector<128x1xf32>
    %14 = vector.broadcast %13 : vector<128x1xf32> to vector<128x128xf32>
    %15 = arith.subf %0, %14 : vector<128x128xf32>
    %16 = vector.broadcast %13 : vector<128x1xf32> to vector<128x128xf32>
    %17 = arith.subf %1, %16 : vector<128x128xf32>
    %18 = arith.mulf %15, %15 : vector<128x128xf32>
    %cst_7 = arith.constant dense<0.000000e+00> : vector<128xf32>
    %19 = vector.multi_reduction <add>, %18, %cst_7 [1] : vector<128x128xf32> to vector<128xf32>
    %20 = vector.shape_cast %19 : vector<128xf32> to vector<128x1xf32>
    %21 = arith.mulf %17, %17 : vector<128x128xf32>
    %cst_8 = arith.constant dense<0.000000e+00> : vector<128xf32>
    %22 = vector.multi_reduction <add>, %21, %cst_8 [1] : vector<128x128xf32> to vector<128xf32>
    %23 = vector.shape_cast %22 : vector<128xf32> to vector<128x1xf32>
    %24 = arith.addf %20, %23 : vector<128x1xf32>
    %cst_9 = arith.constant 3.906250e-03 : f32
    %25 = vector.broadcast %cst_9 : f32 to vector<128x1xf32>
    %26 = arith.mulf %24, %25 : vector<128x1xf32>
    %cst_10 = arith.constant 9.99999974E-6 : f32
    %27 = vector.broadcast %cst_10 : f32 to vector<128x1xf32>
    %28 = arith.addf %26, %27 : vector<128x1xf32>
    %29 = math.rsqrt %28 : vector<128x1xf32>
    %c0_11 = arith.constant 0 : index
    %c0_12 = arith.constant 0 : index
    %30 = vector.load %arg4[%c0_11, %c0_12] : memref<128x256xf32, #tpu.memory_space<vmem>>, vector<128x256xf32>
    %c0_13 = arith.constant 0 : index
    %c0_14 = arith.constant 0 : index
    %31 = vector.load %arg5[%c0_13, %c0_14] : memref<128x256xf32, #tpu.memory_space<vmem>>, vector<128x256xf32>
    %c0_15 = arith.constant 0 : index
    %c0_16 = arith.constant 0 : index
    %32 = vector.load %arg6[%c0_15, %c0_16] : memref<256x128xf32, #tpu.memory_space<vmem>>, vector<256x128xf32>
    %33 = vector.broadcast %29 : vector<128x1xf32> to vector<128x128xf32>
    %34 = arith.mulf %15, %33 : vector<128x128xf32>
    %35 = vector.broadcast %3 : vector<1x128xf32> to vector<128x128xf32>
    %36 = arith.mulf %34, %35 : vector<128x128xf32>
    %37 = vector.broadcast %5 : vector<1x128xf32> to vector<128x128xf32>
    %38 = arith.addf %36, %37 : vector<128x128xf32>
    %39 = vector.broadcast %29 : vector<128x1xf32> to vector<128x128xf32>
    %40 = arith.mulf %17, %39 : vector<128x128xf32>
    %41 = vector.broadcast %4 : vector<1x128xf32> to vector<128x128xf32>
    %42 = arith.mulf %40, %41 : vector<128x128xf32>
    %43 = vector.broadcast %6 : vector<1x128xf32> to vector<128x128xf32>
    %44 = arith.addf %42, %43 : vector<128x128xf32>
    %cst_17 = arith.constant dense<0.000000e+00> : vector<128x256xf32>
    %45 = tpu.matmul %38, %30, %cst_17 {dimension_numbers = #tpu.dot_dimension_numbers<[1], [0], [0], [1], [0, 0, 1, 1], [], []>} : vector<128x128xf32>, vector<128x256xf32>, vector<128x256xf32> -> vector<128x256xf32>
    %cst_18 = arith.constant dense<0.000000e+00> : vector<128x256xf32>
    %46 = tpu.matmul %44, %31, %cst_18 {dimension_numbers = #tpu.dot_dimension_numbers<[1], [0], [0], [1], [0, 0, 1, 1], [], []>} : vector<128x128xf32>, vector<128x256xf32>, vector<128x256xf32> -> vector<128x256xf32>
    %47 = arith.addf %45, %46 : vector<128x256xf32>
    %cst_19 = arith.constant 5.000000e-01 : f32
    %48 = vector.broadcast %cst_19 : f32 to vector<128x256xf32>
    %49 = arith.mulf %48, %47 : vector<128x256xf32>
    %cst_20 = arith.constant 0.707106769 : f32
    %50 = vector.broadcast %cst_20 : f32 to vector<128x256xf32>
    %51 = arith.mulf %47, %50 : vector<128x256xf32>
    %52 = math.erf %51 : vector<128x256xf32>
    %cst_21 = arith.constant 1.000000e+00 : f32
    %53 = vector.broadcast %cst_21 : f32 to vector<128x256xf32>
    %54 = arith.addf %53, %52 : vector<128x256xf32>
    %55 = arith.mulf %49, %54 : vector<128x256xf32>
    %cst_22 = arith.constant dense<0.000000e+00> : vector<128x128xf32>
    %56 = tpu.matmul %55, %32, %cst_22 {dimension_numbers = #tpu.dot_dimension_numbers<[1], [0], [0], [1], [0, 0, 1, 1], [], []>} : vector<128x256xf32>, vector<256x128xf32>, vector<128x128xf32> -> vector<128x128xf32>
    %57 = arith.mulf %56, %56 : vector<128x128xf32>
    %cst_23 = arith.constant dense<0.000000e+00> : vector<128xf32>
    %58 = vector.multi_reduction <add>, %57, %cst_23 [1] : vector<128x128xf32> to vector<128xf32>
    %59 = vector.shape_cast %58 : vector<128xf32> to vector<128x1xf32>
    %60 = math.rsqrt %59 : vector<128x1xf32>
    %61 = vector.broadcast %60 : vector<128x1xf32> to vector<128x128xf32>
    %62 = arith.mulf %56, %61 : vector<128x128xf32>
    %c0_24 = arith.constant 0 : index
    %c0_25 = arith.constant 0 : index
    %63 = vector.load %arg7[%c0_24, %c0_25] : memref<128x128xf32, #tpu.memory_space<vmem>>, vector<128x128xf32>
    tpu.vector_store %arg7[%c0_24, %c0_25], %62 {strides = array<i32>} : memref<128x128xf32, #tpu.memory_space<vmem>>, vector<128x128xf32>,
    return
  }
  func.func @transform_0(%arg0: i32) -> (i32, i32) {
    %c0_i32 = arith.constant 0 : i32
    %c0_i32_0 = arith.constant 0 : i32
    return %arg0, %c0_i32 : i32, i32
  }
  func.func @transform_1(%arg0: i32) -> (i32, i32) {
    %c0_i32 = arith.constant 0 : i32
    %c0_i32_0 = arith.constant 0 : i32
    return %arg0, %c0_i32 : i32, i32
  }
  func.func @transform_2(%arg0: i32) -> (i32, i32) {
    %c0_i32 = arith.constant 0 : i32
    %c0_i32_0 = arith.constant 0 : i32
    %c0_i32_1 = arith.constant 0 : i32
    return %c0_i32, %c0_i32_0 : i32, i32
  }
  func.func @transform_3(%arg0: i32) -> (i32, i32) {
    %c0_i32 = arith.constant 0 : i32
    %c0_i32_0 = arith.constant 0 : i32
    %c0_i32_1 = arith.constant 0 : i32
    return %c0_i32, %c0_i32_0 : i32, i32
  }
  func.func @transform_4(%arg0: i32) -> (i32, i32) {
    %c0_i32 = arith.constant 0 : i32
    %c0_i32_0 = arith.constant 0 : i32
    %c0_i32_1 = arith.constant 0 : i32
    return %c0_i32, %c0_i32_0 : i32, i32
  }
  func.func @transform_5(%arg0: i32) -> (i32, i32) {
    %c0_i32 = arith.constant 0 : i32
    %c0_i32_0 = arith.constant 0 : i32
    %c0_i32_1 = arith.constant 0 : i32
    return %c0_i32, %c0_i32_0 : i32, i32
  }
  func.func @transform_6(%arg0: i32) -> (i32, i32) {
    %c0_i32 = arith.constant 0 : i32
    %c0_i32_0 = arith.constant 0 : i32
    return %arg0, %c0_i32 : i32, i32
  }
}

</mosaic_0001>

<llo_original>
// kernel: tpu_custom_call.1
$region0: #{tpu_custom_call.1}
  #allocation0 [shape = 'u32[]', space=smem, size = 0x4, offset = 0x4, fixed_abs, tag = 'smem constant byte address 0x4 - core index']
  #allocation1 [shape = 'u32[72,128]{1,0:T(1,128)}', space=vmem, size = 0x9000, scoped, tag = 'internal scratch']
  %s0 = inlined_call_operand.hbm [shape: f32[256,128], index: 0, kind: input, shape index: {}]
  %s1 = inlined_call_operand.hbm [shape: f32[256,128], index: 1, kind: input, shape index: {}]
  %s2 = inlined_call_operand.hbm [shape: f32[4,128], index: 2, kind: input, shape index: {}]
  %s3 = inlined_call_operand.hbm [shape: f32[128,256], index: 3, kind: input, shape index: {}]
  %s4 = inlined_call_operand.hbm [shape: f32[128,256], index: 4, kind: input, shape index: {}]
  %s5 = inlined_call_operand.hbm [shape: f32[256,128], index: 5, kind: input, shape index: {}]
  %s6 = inlined_call_operand.hbm [shape: f32[256,128], index: 6, kind: output, shape index: {}]
  %s7 = sld [smem:[#allocation0]]
  $region81: #{tpu_custom_call.1} parent=0
    _
  %s9 = ssub.s32 1, %s7
  %s10 = scalar_select 0, %s9, %s7
  $region1: #{tpu_custom_call.1} parent=0
    #allocation2 [shape = 'u8[131072]{0}', space=vmem, size = 0x20000, scoped, tag = 'input window, operand 0']
    #allocation3 [shape = 's32[2]{0}', space=sflag, size = 0x8, scoped, tag = 'scoped memory for tpu_custom_call.1']
    #allocation4 [shape = 's32[2]{0}', space=sflag, size = 0x8, scoped, tag = 'scoped memory for tpu_custom_call.1']
    #allocation5 [shape = 'u8[131072]{0}', space=vmem, size = 0x20000, scoped, tag = 'input window, operand 1']
    #allocation6 [shape = 's32[2]{0}', space=sflag, size = 0x8, scoped, tag = 'scoped memory for tpu_custom_call.1']
    #allocation7 [shape = 'u8[2048]{0}', space=vmem, size = 0x800, scoped, tag = 'input window, operand 2, single buffered']
    #allocation8 [shape = 'u8[131072]{0}', space=vmem, size = 0x20000, scoped, tag = 'input window, operand 3, single buffered']
    #allocation9 [shape = 's32[1]{0}', space=sflag, size = 0x4, scoped, tag = 'scoped memory for tpu_custom_call.1']
    #allocation10 [shape = 'u8[131072]{0}', space=vmem, size = 0x20000, scoped, tag = 'input window, operand 4, single buffered']
    #allocation11 [shape = 'u8[131072]{0}', space=vmem, size = 0x20000, scoped, tag = 'input window, operand 5, single buffered']
    #allocation12 [shape = 's32[1]{0}', space=sflag, size = 0x4, scoped, tag = 'scoped memory for tpu_custom_call.1']
    #allocation13 [shape = 'u8[131072]{0}', space=vmem, size = 0x20000, scoped, tag = 'output window, operand 0']
    %11 = vsyncpa [#allocation3], 0
    %s12 = scalar_lea.sflag [#allocation3], 1
    %13 = vsyncpa %s12, 0
    %14 = vsyncpa [#allocation6], 0
    %s15 = scalar_lea.sflag [#allocation6], 1
    %16 = vsyncpa %s15, 0
    %17 = vsyncpa [#allocation9], 0
    %18 = vsyncpa [#allocation12], 0
    %19 = vsyncpa [#allocation4], 0
    %s20 = scalar_lea.sflag [#allocation4], 1
    %21 = vsyncpa %s20, 0
    loop: start=0, step=1, limit=4
    $region2: #{tpu_custom_call.1} parent=1 // loop_pre_header
      _
    $region3: #{tpu_custom_call.1} parent=1 // loop_header
      %s23 = sphi 0, %s27
      %p24 = scmp.ge.s32.totalorder %s23, 4
      %s33 = sphi 0, %s35
      %s36 = sphi 0, %s33
      %s37 = sphi 0, %s36
      %s53 = sphi 0, %s37
      %s59 = sphi 0, %s61
      %s62 = sphi 0, %s59
      %s63 = sphi 0, %s62
      %s79 = sphi 0, %s63
      %s83 = sphi 0, %s83
      %s85 = sphi 0, %s83
      %s86 = sphi 0, %s85
      %s100 = sphi 0, %s86
      %s104 = sphi 0, %s104
      %s106 = sphi 0, %s104
      %s107 = sphi 0, %s106
      %s121 = sphi 0, %s107
      %s125 = sphi 0, %s125
      %s127 = sphi 0, %s125
      %s128 = sphi 0, %s127
      %s142 = sphi 0, %s128
      %s146 = sphi 0, %s146
      %s148 = sphi 0, %s146
      %s149 = sphi 0, %s148
      %s163 = sphi 0, %s149
      %s169 = sphi 0, %s171
      %s172 = sphi 0, %s169
      %s173 = sphi 0, %s172
      %s189 = sphi 0, %s173
    $region4: #{tpu_custom_call.1} parent=1 // loop_header_branch
      %26 = sbr.rel (%p24) target = $region8
    $region5: #{tpu_custom_call.1} parent=1 // loop_body
      %s28 = ssub.s32 %s23, 1
      %s29 = ssub.s32 %s23, 2
      %s30 = sadd.s32 %s23, 1
      %s31 = ssub.s32 %s23, %s30
      %p32 = scmp.eq.s32.totalorder %s31, 0
      %s34 = sadd.s32 %s33, 1
      %s35 = scalar_select %p32, %s33, %s34
      %p38 = pneg %p32
      %p39 = scmp.eq.s32.totalorder %s23, 1
      %p40 = por %p38, %p39
      %p41 = scmp.ne.s32.totalorder %s33, %s36
      %p42 = scmp.eq.s32.totalorder %s23, 0
      %p43 = por %p41, %p42
      %p44 = scmp.ne.s32.totalorder %s33, %s36
      %p45 = scmp.eq.s32.totalorder %s28, 1
      %p46 = por %p44, %p45
      %p47 = scmp.ne.s32.totalorder %s36, %s37
      %p48 = scmp.eq.s32.totalorder %s28, 0
      %p49 = por %p47, %p48
      %p50 = scmp.ne.s32.totalorder %s36, %s37
      %p51 = scmp.eq.s32.totalorder %s29, 1
      %p52 = por %p50, %p51
      %p54 = scmp.ne.s32.totalorder %s37, %s53
      %p55 = scmp.eq.s32.totalorder %s29, 0
      %p56 = por %p54, %p55
      %s57 = ssub.s32 %s23, %s30
      %p58 = scmp.eq.s32.totalorder %s57, 0
      %s60 = sadd.s32 %s59, 1
      %s61 = scalar_select %p58, %s59, %s60
      %p64 = pneg %p58
      %p65 = scmp.eq.s32.totalorder %s23, 1
      %p66 = por %p64, %p65
      %p67 = scmp.ne.s32.totalorder %s59, %s62
      %p68 = scmp.eq.s32.totalorder %s23, 0
      %p69 = por %p67, %p68
      %p70 = scmp.ne.s32.totalorder %s59, %s62
      %p71 = scmp.eq.s32.totalorder %s28, 1
      %p72 = por %p70, %p71
      %p73 = scmp.ne.s32.totalorder %s62, %s63
      %p74 = scmp.eq.s32.totalorder %s28, 0
      %p75 = por %p73, %p74
      %p76 = scmp.ne.s32.totalorder %s62, %s63
      %p77 = scmp.eq.s32.totalorder %s29, 1
      %p78 = por %p76, %p77
      %p80 = scmp.ne.s32.totalorder %s63, %s79
      %p81 = scmp.eq.s32.totalorder %s29, 0
      %p82 = por %p80, %p81
      %s84 = sadd.s32 %s83, 1
      %p87 = scmp.eq.s32.totalorder %s23, 1
      %p88 = scmp.ne.s32.totalorder %s83, %s85
      %p89 = scmp.eq.s32.totalorder %s23, 0
      %p90 = por %p88, %p89
      %p91 = scmp.ne.s32.totalorder %s83, %s85
      %p92 = scmp.eq.s32.totalorder %s28, 1
      %p93 = por %p91, %p92
      %p94 = scmp.ne.s32.totalorder %s85, %s86
      %p95 = scmp.eq.s32.totalorder %s28, 0
      %p96 = por %p94, %p95
      %p97 = scmp.ne.s32.totalorder %s85, %s86
      %p98 = scmp.eq.s32.totalorder %s29, 1
      %p99 = por %p97, %p98
      %p101 = scmp.ne.s32.totalorder %s86, %s100
      %p102 = scmp.eq.s32.totalorder %s29, 0
      %p103 = por %p101, %p102
      %s105 = sadd.s32 %s104, 1
      %p108 = scmp.eq.s32.totalorder %s23, 1
      %p109 = scmp.ne.s32.totalorder %s104, %s106
      %p110 = scmp.eq.s32.totalorder %s23, 0
      %p111 = por %p109, %p110
      %p112 = scmp.ne.s32.totalorder %s104, %s106
      %p113 = scmp.eq.s32.totalorder %s28, 1
      %p114 = por %p112, %p113
      %p115 = scmp.ne.s32.totalorder %s106, %s107
      %p116 = scmp.eq.s32.totalorder %s28, 0
      %p117 = por %p115, %p116
      %p118 = scmp.ne.s32.totalorder %s106, %s107
      %p119 = scmp.eq.s32.totalorder %s29, 1
      %p120 = por %p118, %p119
      %p122 = scmp.ne.s32.totalorder %s107, %s121
      %p123 = scmp.eq.s32.totalorder %s29, 0
      %p124 = por %p122, %p123
      %s126 = sadd.s32 %s125, 1
      %p129 = scmp.eq.s32.totalorder %s23, 1
      %p130 = scmp.ne.s32.totalorder %s125, %s127
      %p131 = scmp.eq.s32.totalorder %s23, 0
      %p132 = por %p130, %p131
      %p133 = scmp.ne.s32.totalorder %s125, %s127
      %p134 = scmp.eq.s32.totalorder %s28, 1
      %p135 = por %p133, %p134
      %p136 = scmp.ne.s32.totalorder %s127, %s128
      %p137 = scmp.eq.s32.totalorder %s28, 0
      %p138 = por %p136, %p137
      %p139 = scmp.ne.s32.totalorder %s127, %s128
      %p140 = scmp.eq.s32.totalorder %s29, 1
      %p141 = por %p139, %p140
      %p143 = scmp.ne.s32.totalorder %s128, %s142
      %p144 = scmp.eq.s32.totalorder %s29, 0
      %p145 = por %p143, %p144
      %s147 = sadd.s32 %s146, 1
      %p150 = scmp.eq.s32.totalorder %s23, 1
      %p151 = scmp.ne.s32.totalorder %s146, %s148
      %p152 = scmp.eq.s32.totalorder %s23, 0
      %p153 = por %p151, %p152
      %p154 = scmp.ne.s32.totalorder %s146, %s148
      %p155 = scmp.eq.s32.totalorder %s28, 1
      %p156 = por %p154, %p155
      %p157 = scmp.ne.s32.totalorder %s148, %s149
      %p158 = scmp.eq.s32.totalorder %s28, 0
      %p159 = por %p157, %p158
      %p160 = scmp.ne.s32.totalorder %s148, %s149
      %p161 = scmp.eq.s32.totalorder %s29, 1
      %p162 = por %p160, %p161
      %p164 = scmp.ne.s32.totalorder %s149, %s163
      %p165 = scmp.eq.s32.totalorder %s29, 0
      %p166 = por %p164, %p165
      %s167 = ssub.s32 %s23, %s30
      %p168 = scmp.eq.s32.totalorder %s167, 0
      %s170 = sadd.s32 %s169, 1
      %s171 = scalar_select %p168, %s169, %s170
      %p174 = pneg %p168
      %p175 = scmp.eq.s32.totalorder %s23, 1
      %p176 = por %p174, %p175
      %p177 = scmp.ne.s32.totalorder %s169, %s172
      %p178 = scmp.eq.s32.totalorder %s23, 0
      %p179 = por %p177, %p178
      %p180 = scmp.ne.s32.totalorder %s169, %s172
      %p181 = scmp.eq.s32.totalorder %s28, 1
      %p182 = por %p180, %p181
      %p183 = scmp.ne.s32.totalorder %s172, %s173
      %p184 = scmp.eq.s32.totalorder %s28, 0
      %p185 = por %p183, %p184
      %p186 = scmp.ne.s32.totalorder %s172, %s173
      %p187 = scmp.eq.s32.totalorder %s29, 1
      %p188 = por %p186, %p187
      %p190 = scmp.ne.s32.totalorder %s173, %s189
      %p191 = scmp.eq.s32.totalorder %s29, 0
      %p192 = por %p190, %p191
      %p193 = scmp.le.s32.totalorder 1, %s23
      %p194 = scmp.lt.s32.totalorder %s23, 3
      %p195 = pnand %p193, %p194
      %p196 = pneg %p195
      // Predicated region
      $region9: #{tpu_custom_call.1} parent=5 // pred_check
        _
      $region10: #{tpu_custom_call.1} parent=5 // pred_check_branch
        %198 = sbr.rel (%p195) target = $region12
      $region11: #{tpu_custom_call.1} parent=5 // pred_region
        %s199 = ssub.s32 %s23, 1
        // Predicated region
        $region13: #{tpu_custom_call.1} parent=11 // pred_check
          %p200 = pneg %p96
        $region14: #{tpu_custom_call.1} parent=11 // pred_check_branch
          %202 = sbr.rel (%p200) target = $region16
        $region15: #{tpu_custom_call.1} parent=11 // pred_region
          %204 = vsyncadd [#allocation6], 0
          %s206 = sshll.u32 %s2, 4
          %s207 = int_to_ptr.hbm [resolvable:$true] %s206
          %s208 = sshll.u32 [#allocation7], 4
          %s209 = int_to_ptr.vmem [resolvable:$true] %s208
          %211 = dma.hbm_to_vmem [thread:$0]  %s207, 64, %s209, [#allocation6]
        $region16: #{tpu_custom_call.1} parent=11 // pred_fallthru
          _
        // Predicated region
        $region17: #{tpu_custom_call.1} parent=11 // pred_check
          %p212 = pneg %p117
        $region18: #{tpu_custom_call.1} parent=11 // pred_check_branch
          %214 = sbr.rel (%p212) target = $region20
        $region19: #{tpu_custom_call.1} parent=11 // pred_region
          %216 = vsyncadd [#allocation9], 0
          %s217 = sshll.u32 %s3, 4
          %s218 = int_to_ptr.hbm [resolvable:$true] %s217
          %s219 = sshll.u32 [#allocation8], 4
          %s220 = int_to_ptr.vmem [resolvable:$true] %s219
          %225 = dma.hbm_to_vmem [thread:$0]  %s218, 4096, %s220, [#allocation9], 256, 256, 16
        $region20: #{tpu_custom_call.1} parent=11 // pred_fallthru
          _
        // Predicated region
        $region21: #{tpu_custom_call.1} parent=11 // pred_check
          %p226 = pneg %p138
        $region22: #{tpu_custom_call.1} parent=11 // pred_check_branch
          %228 = sbr.rel (%p226) target = $region24
        $region23: #{tpu_custom_call.1} parent=11 // pred_region
          %230 = vsyncadd [#allocation9], 0
          %s231 = sshll.u32 %s4, 4
          %s232 = int_to_ptr.hbm [resolvable:$true] %s231
          %s233 = sshll.u32 [#allocation10], 4
          %s234 = int_to_ptr.vmem [resolvable:$true] %s233
          %239 = dma.hbm_to_vmem [thread:$0]  %s232, 4096, %s234, [#allocation9], 256, 256, 16
        $region24: #{tpu_custom_call.1} parent=11 // pred_fallthru
          _
        // Predicated region
        $region25: #{tpu_custom_call.1} parent=11 // pred_check
          %p240 = pneg %p159
        $region26: #{tpu_custom_call.1} parent=11 // pred_check_branch
          %242 = sbr.rel (%p240) target = $region28
        $region27: #{tpu_custom_call.1} parent=11 // pred_region
          %244 = vsyncadd [#allocation12], 0
          %s245 = sshll.u32 %s5, 4
          %s246 = int_to_ptr.hbm [resolvable:$true] %s245
          %s247 = sshll.u32 [#allocation11], 4
          %s248 = int_to_ptr.vmem [resolvable:$true] %s247
          %253 = dma.hbm_to_vmem [thread:$0]  %s246, 4096, %s248, [#allocation12], 128, 128, 8
        $region28: #{tpu_custom_call.1} parent=11 // pred_fallthru
          _
      $region12: #{tpu_custom_call.1} parent=5 // pred_fallthru
        _
      %p254 = scmp.lt.s32.totalorder %s23, 2
      // Predicated region
      $region29: #{tpu_custom_call.1} parent=5 // pred_check
        %p255 = pneg %p254
      $region30: #{tpu_custom_call.1} parent=5 // pred_check_branch
        %257 = sbr.rel (%p255) target = $region32
      $region31: #{tpu_custom_call.1} parent=5 // pred_region
        // Predicated region
        $region33: #{tpu_custom_call.1} parent=31 // pred_check
          %p258 = pneg %p43
        $region34: #{tpu_custom_call.1} parent=31 // pred_check_branch
          %260 = sbr.rel (%p258) target = $region36
        $region35: #{tpu_custom_call.1} parent=31 // pred_region
          %s261 = sand.u32 %s33, 1
          %s262 = scalar_lea.sflag [#allocation3], %s261
          %s263 = sand.u32 %s33, 1
          %s264 = smul.addr %s263, 128
          %s265 = scalar_lea.vmem [#allocation2], %s264
          %s266 = smul.u32 16, %s23
          %268 = vsyncadd %s262, 0
          %s269 = smul.addr %s266, 8
          %s270 = scalar_lea.hbm %s0, %s269
          %s271 = sshll.u32 %s270, 4
          %s272 = int_to_ptr.hbm [resolvable:$true] %s271
          %s273 = sshll.u32 %s265, 4
          %s274 = int_to_ptr.vmem [resolvable:$true] %s273
          %279 = dma.hbm_to_vmem [thread:$0]  %s272, 2048, %s274, %s262, 128, 128, 8
        $region36: #{tpu_custom_call.1} parent=31 // pred_fallthru
          _
        // Predicated region
        $region37: #{tpu_custom_call.1} parent=31 // pred_check
          %p280 = pneg %p69
        $region38: #{tpu_custom_call.1} parent=31 // pred_check_branch
          %282 = sbr.rel (%p280) target = $region40
        $region39: #{tpu_custom_call.1} parent=31 // pred_region
          %s283 = sand.u32 %s23, 1
          %s284 = scalar_lea.sflag [#allocation6], %s283
          %s285 = sand.u32 %s59, 1
          %s286 = smul.addr %s285, 128
          %s287 = scalar_lea.vmem [#allocation5], %s286
          %s288 = smul.u32 16, %s23
          %290 = vsyncadd %s284, 0
          %s291 = smul.addr %s288, 8
          %s292 = scalar_lea.hbm %s1, %s291
          %s293 = sshll.u32 %s292, 4
          %s294 = int_to_ptr.hbm [resolvable:$true] %s293
          %s295 = sshll.u32 %s287, 4
          %s296 = int_to_ptr.vmem [resolvable:$true] %s295
          %301 = dma.hbm_to_vmem [thread:$0]  %s294, 2048, %s296, %s284, 128, 128, 8
        $region40: #{tpu_custom_call.1} parent=31 // pred_fallthru
          _
      $region32: #{tpu_custom_call.1} parent=5 // pred_fallthru
        _
      %p302 = scmp.le.s32.totalorder 1, %s23
      %p303 = scmp.lt.s32.totalorder %s23, 3
      %p304 = pnand %p302, %p303
      %p305 = pneg %p304
      // Predicated region
      $region41: #{tpu_custom_call.1} parent=5 // pred_check
        _
      $region42: #{tpu_custom_call.1} parent=5 // pred_check_branch
        %307 = sbr.rel (%p304) target = $region44
      $region43: #{tpu_custom_call.1} parent=5 // pred_region
        %s308 = ssub.s32 %s23, 1
        %s309 = sand.u32 %s36, 1
        %s310 = scalar_lea.sflag [#allocation3], %s309
        %s311 = sand.u32 %s36, 1
        %s312 = smul.addr %s311, 128
        %s313 = scalar_lea.vmem [#allocation2], %s312
        // Predicated region
        $region45: #{tpu_custom_call.1} parent=43 // pred_check
          %p314 = pneg %p49
        $region46: #{tpu_custom_call.1} parent=43 // pred_check_branch
          %316 = sbr.rel (%p314) target = $region48
        $region47: #{tpu_custom_call.1} parent=43 // pred_region
          %318 = dma.done %s310, 2048
        $region48: #{tpu_custom_call.1} parent=43 // pred_fallthru
          _
        %s319 = sand.u32 %s28, 1
        %s320 = scalar_lea.sflag [#allocation6], %s319
        %s321 = sand.u32 %s62, 1
        %s322 = smul.addr %s321, 128
        %s323 = scalar_lea.vmem [#allocation5], %s322
        // Predicated region
        $region49: #{tpu_custom_call.1} parent=43 // pred_check
          %p324 = pneg %p75
        $region50: #{tpu_custom_call.1} parent=43 // pred_check_branch
          %326 = sbr.rel (%p324) target = $region52
        $region51: #{tpu_custom_call.1} parent=43 // pred_region
          %328 = dma.done %s320, 2048
        $region52: #{tpu_custom_call.1} parent=43 // pred_fallthru
          _
        // Predicated region
        $region53: #{tpu_custom_call.1} parent=43 // pred_check
          %p329 = pneg %p96
        $region54: #{tpu_custom_call.1} parent=43 // pred_check_branch
          %331 = sbr.rel (%p329) target = $region56
        $region55: #{tpu_custom_call.1} parent=43 // pred_region
          %333 = dma.done [#allocation6], 64
        $region56: #{tpu_custom_call.1} parent=43 // pred_fallthru
          _
        // Predicated region
        $region57: #{tpu_custom_call.1} parent=43 // pred_check
          %p334 = pneg %p117
        $region58: #{tpu_custom_call.1} parent=43 // pred_check_branch
          %336 = sbr.rel (%p334) target = $region60
        $region59: #{tpu_custom_call.1} parent=43 // pred_region
          %338 = dma.done [#allocation9], 4096
        $region60: #{tpu_custom_call.1} parent=43 // pred_fallthru
          _
        // Predicated region
        $region61: #{tpu_custom_call.1} parent=43 // pred_check
          %p339 = pneg %p138
        $region62: #{tpu_custom_call.1} parent=43 // pred_check_branch
          %341 = sbr.rel (%p339) target = $region64
        $region63: #{tpu_custom_call.1} parent=43 // pred_region
          %343 = dma.done [#allocation9], 4096
        $region64: #{tpu_custom_call.1} parent=43 // pred_fallthru
          _
        // Predicated region
        $region65: #{tpu_custom_call.1} parent=43 // pred_check
          %p344 = pneg %p159
        $region66: #{tpu_custom_call.1} parent=43 // pred_check_branch
          %346 = sbr.rel (%p344) target = $region68
        $region67: #{tpu_custom_call.1} parent=43 // pred_region
          %348 = dma.done [#allocation12], 4096
        $region68: #{tpu_custom_call.1} parent=43 // pred_fallthru
          _
        %s349 = sand.u32 %s36, 1
        %s350 = scalar_lea.sflag [#allocation3], %s349
        %s351 = sand.u32 %s36, 1
        %s352 = smul.addr %s351, 128
        %s353 = scalar_lea.vmem [#allocation2], %s352
        %p354 = pneg %p49
        %p355 = pneg %p46
        %s356 = sand.u32 %s28, 1
        %s357 = scalar_lea.sflag [#allocation6], %s356
        %s358 = sand.u32 %s62, 1
        %s359 = smul.addr %s358, 128
        %s360 = scalar_lea.vmem [#allocation5], %s359
        %p361 = pneg %p75
        %p362 = pneg %p72
        %p363 = pneg %p96
        %p364 = pneg %p93
        %p365 = pneg %p117
        %p366 = pneg %p114
        %p367 = pneg %p138
        %p368 = pneg %p135
        %p369 = pneg %p159
        %p370 = pneg %p156
        %p371 = pneg %p185
        %p372 = pneg %p182
        %s373 = sand.u32 %s172, 1
        %s374 = scalar_lea.sflag [#allocation4], %s373
        %s375 = sand.u32 %s172, 1
        %s376 = smul.addr %s375, 128
        %s377 = scalar_lea.vmem [#allocation13], %s376
        %s378 = smul.u32 16, %s28
        %s379 = smul.u32 16, %s28
        %s380 = smul.u32 16, %s28
        %v381 = vld [vmem:[%s313] sm:$0xff]
        %v382 = vld [vmem:[%s313 + $0x8] sm:$0xff]
        %v383 = vld [vmem:[%s313 + $0x10] sm:$0xff]
        %v384 = vld [vmem:[%s313 + $0x18] sm:$0xff]
        %v385 = vld [vmem:[%s313 + $0x20] sm:$0xff]
        %v386 = vld [vmem:[%s313 + $0x28] sm:$0xff]
        %v387 = vld [vmem:[%s313 + $0x30] sm:$0xff]
        %v388 = vld [vmem:[%s313 + $0x38] sm:$0xff]
        %v389 = vld [vmem:[%s313 + $0x40] sm:$0xff]
        %v390 = vld [vmem:[%s313 + $0x48] sm:$0xff]
        %v391 = vld [vmem:[%s313 + $0x50] sm:$0xff]
        %v392 = vld [vmem:[%s313 + $0x58] sm:$0xff]
        %v393 = vld [vmem:[%s313 + $0x60] sm:$0xff]
        %v394 = vld [vmem:[%s313 + $0x68] sm:$0xff]
        %v395 = vld [vmem:[%s313 + $0x70] sm:$0xff]
        %v396 = vld [vmem:[%s313 + $0x78] sm:$0xff]
        %v397 = vld [vmem:[%s323] sm:$0xff]
        %v398 = vld [vmem:[%s323 + $0x8] sm:$0xff]
        %v399 = vld [vmem:[%s323 + $0x10] sm:$0xff]
        %v400 = vld [vmem:[%s323 + $0x18] sm:$0xff]
        %v401 = vld [vmem:[%s323 + $0x20] sm:$0xff]
        %v402 = vld [vmem:[%s323 + $0x28] sm:$0xff]
        %v403 = vld [vmem:[%s323 + $0x30] sm:$0xff]
        %v404 = vld [vmem:[%s323 + $0x38] sm:$0xff]
        %v405 = vld [vmem:[%s323 + $0x40] sm:$0xff]
        %v406 = vld [vmem:[%s323 + $0x48] sm:$0xff]
        %v407 = vld [vmem:[%s323 + $0x50] sm:$0xff]
        %v408 = vld [vmem:[%s323 + $0x58] sm:$0xff]
        %v409 = vld [vmem:[%s323 + $0x60] sm:$0xff]
        %v410 = vld [vmem:[%s323 + $0x68] sm:$0xff]
        %v411 = vld [vmem:[%s323 + $0x70] sm:$0xff]
        %v412 = vld [vmem:[%s323 + $0x78] sm:$0xff]
        %v413 = vld [vmem:[#allocation7] sm:$0xf]
        %414 = vadd.xlane.f32.xlu0 %v381
        %v415 = vpop.xlane.xlu0 %414
        %416 = vadd.xlane.f32.xlu0 %v382
        %v417 = vpop.xlane.xlu0 %416
        %418 = vadd.xlane.f32.xlu0 %v383
        %v419 = vpop.xlane.xlu0 %418
        %420 = vadd.xlane.f32.xlu0 %v384
        %v421 = vpop.xlane.xlu0 %420
        %422 = vadd.xlane.f32.xlu0 %v385
        %v423 = vpop.xlane.xlu0 %422
        %424 = vadd.xlane.f32.xlu0 %v386
        %v425 = vpop.xlane.xlu0 %424
        %426 = vadd.xlane.f32.xlu0 %v387
        %v427 = vpop.xlane.xlu0 %426
        %428 = vadd.xlane.f32.xlu0 %v388
        %v429 = vpop.xlane.xlu0 %428
        %430 = vadd.xlane.f32.xlu0 %v389
        %v431 = vpop.xlane.xlu0 %430
        %432 = vadd.xlane.f32.xlu0 %v390
        %v433 = vpop.xlane.xlu0 %432
        %434 = vadd.xlane.f32.xlu0 %v391
        %v435 = vpop.xlane.xlu0 %434
        %436 = vadd.xlane.f32.xlu0 %v392
        %v437 = vpop.xlane.xlu0 %436
        %438 = vadd.xlane.f32.xlu0 %v393
        %v439 = vpop.xlane.xlu0 %438
        %440 = vadd.xlane.f32.xlu0 %v394
        %v441 = vpop.xlane.xlu0 %440
        %442 = vadd.xlane.f32.xlu0 %v395
        %v443 = vpop.xlane.xlu0 %442
        %444 = vadd.xlane.f32.xlu0 %v396
        %v445 = vpop.xlane.xlu0 %444
        %446 = vadd.xlane.f32.xlu0 %v397
        %v447 = vpop.xlane.xlu0 %446
        %448 = vadd.xlane.f32.xlu0 %v398
        %v449 = vpop.xlane.xlu0 %448
        %450 = vadd.xlane.f32.xlu0 %v399
        %v451 = vpop.xlane.xlu0 %450
        %452 = vadd.xlane.f32.xlu0 %v400
        %v453 = vpop.xlane.xlu0 %452
        %454 = vadd.xlane.f32.xlu0 %v401
        %v455 = vpop.xlane.xlu0 %454
        %456 = vadd.xlane.f32.xlu0 %v402
        %v457 = vpop.xlane.xlu0 %456
        %458 = vadd.xlane.f32.xlu0 %v403
        %v459 = vpop.xlane.xlu0 %458
        %460 = vadd.xlane.f32.xlu0 %v404
        %v461 = vpop.xlane.xlu0 %460
        %462 = vadd.xlane.f32.xlu0 %v405
        %v463 = vpop.xlane.xlu0 %462
        %464 = vadd.xlane.f32.xlu0 %v406
        %v465 = vpop.xlane.xlu0 %464
        %466 = vadd.xlane.f32.xlu0 %v407
        %v467 = vpop.xlane.xlu0 %466
        %468 = vadd.xlane.f32.xlu0 %v408
        %v469 = vpop.xlane.xlu0 %468
        %470 = vadd.xlane.f32.xlu0 %v409
        %v471 = vpop.xlane.xlu0 %470
        %472 = vadd.xlane.f32.xlu0 %v410
        %v473 = vpop.xlane.xlu0 %472
        %474 = vadd.xlane.f32.xlu0 %v411
        %v475 = vpop.xlane.xlu0 %474
        %476 = vadd.xlane.f32.xlu0 %v412
        %v477 = vpop.xlane.xlu0 %476
        %v478 = vadd.f32 %v415, %v447
        %v479 = vadd.f32 %v417, %v449
        %v480 = vadd.f32 %v419, %v451
        %v481 = vadd.f32 %v421, %v453
        %v482 = vadd.f32 %v423, %v455
        %v483 = vadd.f32 %v425, %v457
        %v484 = vadd.f32 %v427, %v459
        %v485 = vadd.f32 %v429, %v461
        %v486 = vadd.f32 %v431, %v463
        %v487 = vadd.f32 %v433, %v465
        %v488 = vadd.f32 %v435, %v467
        %v489 = vadd.f32 %v437, %v469
        %v490 = vadd.f32 %v439, %v471
        %v491 = vadd.f32 %v441, %v473
        %v492 = vadd.f32 %v443, %v475
        %v493 = vadd.f32 %v445, %v477
        %v494 = vmul.f32 %v478, 0.00390625
        %v495 = vmul.f32 %v479, 0.00390625
        %v496 = vmul.f32 %v480, 0.00390625
        %v497 = vmul.f32 %v481, 0.00390625
        %v498 = vmul.f32 %v482, 0.00390625
        %v499 = vmul.f32 %v483, 0.00390625
        %v500 = vmul.f32 %v484, 0.00390625
        %v501 = vmul.f32 %v485, 0.00390625
        %v502 = vmul.f32 %v486, 0.00390625
        %v503 = vmul.f32 %v487, 0.00390625
        %v504 = vmul.f32 %v488, 0.00390625
        %v505 = vmul.f32 %v489, 0.00390625
        %v506 = vmul.f32 %v490, 0.00390625
        %v507 = vmul.f32 %v491, 0.00390625
        %v508 = vmul.f32 %v492, 0.00390625
        %v509 = vmul.f32 %v493, 0.00390625
        %v510 = vsub.f32 %v381, %v494
        %v511 = vsub.f32 %v382, %v495
        %v512 = vsub.f32 %v383, %v496
        %v513 = vsub.f32 %v384, %v497
        %v514 = vsub.f32 %v385, %v498
        %v515 = vsub.f32 %v386, %v499
        %v516 = vsub.f32 %v387, %v500
        %v517 = vsub.f32 %v388, %v501
        %v518 = vsub.f32 %v389, %v502
        %v519 = vsub.f32 %v390, %v503
        %v520 = vsub.f32 %v391, %v504
        %v521 = vsub.f32 %v392, %v505
        %v522 = vsub.f32 %v393, %v506
        %v523 = vsub.f32 %v394, %v507
        %v524 = vsub.f32 %v395, %v508
        %v525 = vsub.f32 %v396, %v509
        %v526 = vsub.f32 %v397, %v494
        %v527 = vsub.f32 %v398, %v495
        %v528 = vsub.f32 %v399, %v496
        %v529 = vsub.f32 %v400, %v497
        %v530 = vsub.f32 %v401, %v498
        %v531 = vsub.f32 %v402, %v499
        %v532 = vsub.f32 %v403, %v500
        %v533 = vsub.f32 %v404, %v501
        %v534 = vsub.f32 %v405, %v502
        %v535 = vsub.f32 %v406, %v503
        %v536 = vsub.f32 %v407, %v504
        %v537 = vsub.f32 %v408, %v505
        %v538 = vsub.f32 %v409, %v506
        %v539 = vsub.f32 %v410, %v507
        %v540 = vsub.f32 %v411, %v508
        %v541 = vsub.f32 %v412, %v509
        %v542 = vmul.f32 %v510, %v510
        %v543 = vmul.f32 %v511, %v511
        %v544 = vmul.f32 %v512, %v512
        %v545 = vmul.f32 %v513, %v513
        %v546 = vmul.f32 %v514, %v514
        %v547 = vmul.f32 %v515, %v515
        %v548 = vmul.f32 %v516, %v516
        %v549 = vmul.f32 %v517, %v517
        %v550 = vmul.f32 %v518, %v518
        %v551 = vmul.f32 %v519, %v519
        %v552 = vmul.f32 %v520, %v520
        %v553 = vmul.f32 %v521, %v521
        %v554 = vmul.f32 %v522, %v522
        %v555 = vmul.f32 %v523, %v523
        %v556 = vmul.f32 %v524, %v524
        %v557 = vmul.f32 %v525, %v525
        %558 = vadd.xlane.f32.xlu0 %v542
        %v559 = vpop.xlane.xlu0 %558
        %560 = vadd.xlane.f32.xlu0 %v543
        %v561 = vpop.xlane.xlu0 %560
        %562 = vadd.xlane.f32.xlu0 %v544
        %v563 = vpop.xlane.xlu0 %562
        %564 = vadd.xlane.f32.xlu0 %v545
        %v565 = vpop.xlane.xlu0 %564
        %566 = vadd.xlane.f32.xlu0 %v546
        %v567 = vpop.xlane.xlu0 %566
        %568 = vadd.xlane.f32.xlu0 %v547
        %v569 = vpop.xlane.xlu0 %568
        %570 = vadd.xlane.f32.xlu0 %v548
        %v571 = vpop.xlane.xlu0 %570
        %572 = vadd.xlane.f32.xlu0 %v549
        %v573 = vpop.xlane.xlu0 %572
        %574 = vadd.xlane.f32.xlu0 %v550
        %v575 = vpop.xlane.xlu0 %574
        %576 = vadd.xlane.f32.xlu0 %v551
        %v577 = vpop.xlane.xlu0 %576
        %578 = vadd.xlane.f32.xlu0 %v552
        %v579 = vpop.xlane.xlu0 %578
        %580 = vadd.xlane.f32.xlu0 %v553
        %v581 = vpop.xlane.xlu0 %580
        %582 = vadd.xlane.f32.xlu0 %v554
        %v583 = vpop.xlane.xlu0 %582
        %584 = vadd.xlane.f32.xlu0 %v555
        %v585 = vpop.xlane.xlu0 %584
        %586 = vadd.xlane.f32.xlu0 %v556
        %v587 = vpop.xlane.xlu0 %586
        %588 = vadd.xlane.f32.xlu0 %v557
        %v589 = vpop.xlane.xlu0 %588
        %v590 = vmul.f32 %v526, %v526
        %v591 = vmul.f32 %v527, %v527
        %v592 = vmul.f32 %v528, %v528
        %v593 = vmul.f32 %v529, %v529
        %v594 = vmul.f32 %v530, %v530
        %v595 = vmul.f32 %v531, %v531
        %v596 = vmul.f32 %v532, %v532
        %v597 = vmul.f32 %v533, %v533
        %v598 = vmul.f32 %v534, %v534
        %v599 = vmul.f32 %v535, %v535
        %v600 = vmul.f32 %v536, %v536
        %v601 = vmul.f32 %v537, %v537
        %v602 = vmul.f32 %v538, %v538
        %v603 = vmul.f32 %v539, %v539
        %v604 = vmul.f32 %v540, %v540
        %v605 = vmul.f32 %v541, %v541
        %606 = vadd.xlane.f32.xlu0 %v590
        %v607 = vpop.xlane.xlu0 %606
        %608 = vadd.xlane.f32.xlu0 %v591
        %v609 = vpop.xlane.xlu0 %608
        %610 = vadd.xlane.f32.xlu0 %v592
        %v611 = vpop.xlane.xlu0 %610
        %612 = vadd.xlane.f32.xlu0 %v593
        %v613 = vpop.xlane.xlu0 %612
        %614 = vadd.xlane.f32.xlu0 %v594
        %v615 = vpop.xlane.xlu0 %614
        %616 = vadd.xlane.f32.xlu0 %v595
        %v617 = vpop.xlane.xlu0 %616
        %618 = vadd.xlane.f32.xlu0 %v596
        %v619 = vpop.xlane.xlu0 %618
        %620 = vadd.xlane.f32.xlu0 %v597
        %v621 = vpop.xlane.xlu0 %620
        %622 = vadd.xlane.f32.xlu0 %v598
        %v623 = vpop.xlane.xlu0 %622
        %624 = vadd.xlane.f32.xlu0 %v599
        %v625 = vpop.xlane.xlu0 %624
        %626 = vadd.xlane.f32.xlu0 %v600
        %v627 = vpop.xlane.xlu0 %626
        %628 = vadd.xlane.f32.xlu0 %v601
        %v629 = vpop.xlane.xlu0 %628
        %630 = vadd.xlane.f32.xlu0 %v602
        %v631 = vpop.xlane.xlu0 %630
        %632 = vadd.xlane.f32.xlu0 %v603
        %v633 = vpop.xlane.xlu0 %632
        %634 = vadd.xlane.f32.xlu0 %v604
        %v635 = vpop.xlane.xlu0 %634
        %636 = vadd.xlane.f32.xlu0 %v605
        %v637 = vpop.xlane.xlu0 %636
        %v638 = vadd.f32 %v559, %v607
        %v639 = vadd.f32 %v561, %v609
        %v640 = vadd.f32 %v563, %v611
        %v641 = vadd.f32 %v565, %v613
        %v642 = vadd.f32 %v567, %v615
        %v643 = vadd.f32 %v569, %v617
        %v644 = vadd.f32 %v571, %v619
        %v645 = vadd.f32 %v573, %v621
        %v646 = vadd.f32 %v575, %v623
        %v647 = vadd.f32 %v577, %v625
        %v648 = vadd.f32 %v579, %v627
        %v649 = vadd.f32 %v581, %v629
        %v650 = vadd.f32 %v583, %v631
        %v651 = vadd.f32 %v585, %v633
        %v652 = vadd.f32 %v587, %v635
        %v653 = vadd.f32 %v589, %v637
        %v654 = vmul.f32 %v638, 0.00390625
        %v655 = vmul.f32 %v639, 0.00390625
        %v656 = vmul.f32 %v640, 0.00390625
        %v657 = vmul.f32 %v641, 0.00390625
        %v658 = vmul.f32 %v642, 0.00390625
        %v659 = vmul.f32 %v643, 0.00390625
        %v660 = vmul.f32 %v644, 0.00390625
        %v661 = vmul.f32 %v645, 0.00390625
        %v662 = vmul.f32 %v646, 0.00390625
        %v663 = vmul.f32 %v647, 0.00390625
        %v664 = vmul.f32 %v648, 0.00390625
        %v665 = vmul.f32 %v649, 0.00390625
        %v666 = vmul.f32 %v650, 0.00390625
        %v667 = vmul.f32 %v651, 0.00390625
        %v668 = vmul.f32 %v652, 0.00390625
        %v669 = vmul.f32 %v653, 0.00390625
        %v670 = vadd.f32 %v654, 1e-05
        %v671 = vadd.f32 %v655, 1e-05
        %v672 = vadd.f32 %v656, 1e-05
        %v673 = vadd.f32 %v657, 1e-05
        %v674 = vadd.f32 %v658, 1e-05
        %v675 = vadd.f32 %v659, 1e-05
        %v676 = vadd.f32 %v660, 1e-05
        %v677 = vadd.f32 %v661, 1e-05
        %v678 = vadd.f32 %v662, 1e-05
        %v679 = vadd.f32 %v663, 1e-05
        %v680 = vadd.f32 %v664, 1e-05
        %v681 = vadd.f32 %v665, 1e-05
        %v682 = vadd.f32 %v666, 1e-05
        %v683 = vadd.f32 %v667, 1e-05
        %v684 = vadd.f32 %v668, 1e-05
        %v685 = vadd.f32 %v669, 1e-05
        %v686 = vrsqrt.pop %v670
        %v687 = vmul.f32 %v686, %v670
        %v688 = vmul.f32 %v687, %v686
        %v689 = vmul.f32 0.5, %v688
        %v690 = vsub.f32 1.5, %v689
        %v691 = vmul.f32 %v686, %v690
        %vm692 = vweird.f32 %v670
        %vm693 = vweird.f32 %v686
        %vm694 = vmor %vm692, %vm693
        %v695 = vsel %vm694, %v686, %v691
        %v696 = vrsqrt.pop %v671
        %v697 = vmul.f32 %v696, %v671
        %v698 = vmul.f32 %v697, %v696
        %v699 = vmul.f32 0.5, %v698
        %v700 = vsub.f32 1.5, %v699
        %v701 = vmul.f32 %v696, %v700
        %vm702 = vweird.f32 %v671
        %vm703 = vweird.f32 %v696
        %vm704 = vmor %vm702, %vm703
        %v705 = vsel %vm704, %v696, %v701
        %v706 = vrsqrt.pop %v672
        %v707 = vmul.f32 %v706, %v672
        %v708 = vmul.f32 %v707, %v706
        %v709 = vmul.f32 0.5, %v708
        %v710 = vsub.f32 1.5, %v709
        %v711 = vmul.f32 %v706, %v710
        %vm712 = vweird.f32 %v672
        %vm713 = vweird.f32 %v706
        %vm714 = vmor %vm712, %vm713
        %v715 = vsel %vm714, %v706, %v711
        %v716 = vrsqrt.pop %v673
        %v717 = vmul.f32 %v716, %v673
        %v718 = vmul.f32 %v717, %v716
        %v719 = vmul.f32 0.5, %v718
        %v720 = vsub.f32 1.5, %v719
        %v721 = vmul.f32 %v716, %v720
        %vm722 = vweird.f32 %v673
        %vm723 = vweird.f32 %v716
        %vm724 = vmor %vm722, %vm723
        %v725 = vsel %vm724, %v716, %v721
        %v726 = vrsqrt.pop %v674
        %v727 = vmul.f32 %v726, %v674
        %v728 = vmul.f32 %v727, %v726
        %v729 = vmul.f32 0.5, %v728
        %v730 = vsub.f32 1.5, %v729
        %v731 = vmul.f32 %v726, %v730
        %vm732 = vweird.f32 %v674
        %vm733 = vweird.f32 %v726
        %vm734 = vmor %vm732, %vm733
        %v735 = vsel %vm734, %v726, %v731
        %v736 = vrsqrt.pop %v675
        %v737 = vmul.f32 %v736, %v675
        %v738 = vmul.f32 %v737, %v736
        %v739 = vmul.f32 0.5, %v738
        %v740 = vsub.f32 1.5, %v739
        %v741 = vmul.f32 %v736, %v740
        %vm742 = vweird.f32 %v675
        %vm743 = vweird.f32 %v736
        %vm744 = vmor %vm742, %vm743
        %v745 = vsel %vm744, %v736, %v741
        %v746 = vrsqrt.pop %v676
        %v747 = vmul.f32 %v746, %v676
        %v748 = vmul.f32 %v747, %v746
        %v749 = vmul.f32 0.5, %v748
        %v750 = vsub.f32 1.5, %v749
        %v751 = vmul.f32 %v746, %v750
        %vm752 = vweird.f32 %v676
        %vm753 = vweird.f32 %v746
        %vm754 = vmor %vm752, %vm753
        %v755 = vsel %vm754, %v746, %v751
        %v756 = vrsqrt.pop %v677
        %v757 = vmul.f32 %v756, %v677
        %v758 = vmul.f32 %v757, %v756
        %v759 = vmul.f32 0.5, %v758
        %v760 = vsub.f32 1.5, %v759
        %v761 = vmul.f32 %v756, %v760
        %vm762 = vweird.f32 %v677
        %vm763 = vweird.f32 %v756
        %vm764 = vmor %vm762, %vm763
        %v765 = vsel %vm764, %v756, %v761
        %v766 = vrsqrt.pop %v678
        %v767 = vmul.f32 %v766, %v678
        %v768 = vmul.f32 %v767, %v766
        %v769 = vmul.f32 0.5, %v768
        %v770 = vsub.f32 1.5, %v769
        %v771 = vmul.f32 %v766, %v770
        %vm772 = vweird.f32 %v678
        %vm773 = vweird.f32 %v766
        %vm774 = vmor %vm772, %vm773
        %v775 = vsel %vm774, %v766, %v771
        %v776 = vrsqrt.pop %v679
        %v777 = vmul.f32 %v776, %v679
        %v778 = vmul.f32 %v777, %v776
        %v779 = vmul.f32 0.5, %v778
        %v780 = vsub.f32 1.5, %v779
        %v781 = vmul.f32 %v776, %v780
        %vm782 = vweird.f32 %v679
        %vm783 = vweird.f32 %v776
        %vm784 = vmor %vm782, %vm783
        %v785 = vsel %vm784, %v776, %v781
        %v786 = vrsqrt.pop %v680
        %v787 = vmul.f32 %v786, %v680
        %v788 = vmul.f32 %v787, %v786
        %v789 = vmul.f32 0.5, %v788
        %v790 = vsub.f32 1.5, %v789
        %v791 = vmul.f32 %v786, %v790
        %vm792 = vweird.f32 %v680
        %vm793 = vweird.f32 %v786
        %vm794 = vmor %vm792, %vm793
        %v795 = vsel %vm794, %v786, %v791
        %v796 = vrsqrt.pop %v681
        %v797 = vmul.f32 %v796, %v681
        %v798 = vmul.f32 %v797, %v796
        %v799 = vmul.f32 0.5, %v798
        %v800 = vsub.f32 1.5, %v799
        %v801 = vmul.f32 %v796, %v800
        %vm802 = vweird.f32 %v681
        %vm803 = vweird.f32 %v796
        %vm804 = vmor %vm802, %vm803
        %v805 = vsel %vm804, %v796, %v801
        %v806 = vrsqrt.pop %v682
        %v807 = vmul.f32 %v806, %v682
        %v808 = vmul.f32 %v807, %v806
        %v809 = vmul.f32 0.5, %v808
        %v810 = vsub.f32 1.5, %v809
        %v811 = vmul.f32 %v806, %v810
        %vm812 = vweird.f32 %v682
        %vm813 = vweird.f32 %v806
        %vm814 = vmor %vm812, %vm813
        %v815 = vsel %vm814, %v806, %v811
        %v816 = vrsqrt.pop %v683
        %v817 = vmul.f32 %v816, %v683
        %v818 = vmul.f32 %v817, %v816
        %v819 = vmul.f32 0.5, %v818
        %v820 = vsub.f32 1.5, %v819
        %v821 = vmul.f32 %v816, %v820
        %vm822 = vweird.f32 %v683
        %vm823 = vweird.f32 %v816
        %vm824 = vmor %vm822, %vm823
        %v825 = vsel %vm824, %v816, %v821
        %v826 = vrsqrt.pop %v684
        %v827 = vmul.f32 %v826, %v684
        %v828 = vmul.f32 %v827, %v826
        %v829 = vmul.f32 0.5, %v828
        %v830 = vsub.f32 1.5, %v829
        %v831 = vmul.f32 %v826, %v830
        %vm832 = vweird.f32 %v684
        %vm833 = vweird.f32 %v826
        %vm834 = vmor %vm832, %vm833
        %v835 = vsel %vm834, %v826, %v831
        %v836 = vrsqrt.pop %v685
        %v837 = vmul.f32 %v836, %v685
        %v838 = vmul.f32 %v837, %v836
        %v839 = vmul.f32 0.5, %v838
        %v840 = vsub.f32 1.5, %v839
        %v841 = vmul.f32 %v836, %v840
        %vm842 = vweird.f32 %v685
        %vm843 = vweird.f32 %v836
        %vm844 = vmor %vm842, %vm843
        %v845 = vsel %vm844, %v836, %v841
        %v846 = vld [vmem:[#allocation8] sm:$0xff]
        %v847 = vld [vmem:[#allocation8 + $0x8] sm:$0xff]
        %v848 = vld [vmem:[#allocation8 + $0x10] sm:$0xff]
        %v849 = vld [vmem:[#allocation8 + $0x18] sm:$0xff]
        %v850 = vld [vmem:[#allocation8 + $0x20] sm:$0xff]
        %v851 = vld [vmem:[#allocation8 + $0x28] sm:$0xff]
        %v852 = vld [vmem:[#allocation8 + $0x30] sm:$0xff]
        %v853 = vld [vmem:[#allocation8 + $0x38] sm:$0xff]
        %v854 = vld [vmem:[#allocation8 + $0x40] sm:$0xff]
        %v855 = vld [vmem:[#allocation8 + $0x48] sm:$0xff]
        %v856 = vld [vmem:[#allocation8 + $0x50] sm:$0xff]
        %v857 = vld [vmem:[#allocation8 + $0x58] sm:$0xff]
        %v858 = vld [vmem:[#allocation8 + $0x60] sm:$0xff]
        %v859 = vld [vmem:[#allocation8 + $0x68] sm:$0xff]
        %v860 = vld [vmem:[#allocation8 + $0x70] sm:$0xff]
        %v861 = vld [vmem:[#allocation8 + $0x78] sm:$0xff]
        %v862 = vld [vmem:[#allocation8 + $0x80] sm:$0xff]
        %v863 = vld [vmem:[#allocation8 + $0x88] sm:$0xff]
        %v864 = vld [vmem:[#allocation8 + $0x90] sm:$0xff]
        %v865 = vld [vmem:[#allocation8 + $0x98] sm:$0xff]
        %v866 = vld [vmem:[#allocation8 + $0xa0] sm:$0xff]
        %v867 = vld [vmem:[#allocation8 + $0xa8] sm:$0xff]
        %v868 = vld [vmem:[#allocation8 + $0xb0] sm:$0xff]
        %v869 = vld [vmem:[#allocation8 + $0xb8] sm:$0xff]
        %v870 = vld [vmem:[#allocation8 + $0xc0] sm:$0xff]
        %v871 = vld [vmem:[#allocation8 + $0xc8] sm:$0xff]
        %v872 = vld [vmem:[#allocation8 + $0xd0] sm:$0xff]
        %v873 = vld [vmem:[#allocation8 + $0xd8] sm:$0xff]
        %v874 = vld [vmem:[#allocation8 + $0xe0] sm:$0xff]
        %v875 = vld [vmem:[#allocation8 + $0xe8] sm:$0xff]
        %v876 = vld [vmem:[#allocation8 + $0xf0] sm:$0xff]
        %v877 = vld [vmem:[#allocation8 + $0xf8] sm:$0xff]
        %v878 = vld [vmem:[#allocation10] sm:$0xff]
        %v879 = vld [vmem:[#allocation10 + $0x8] sm:$0xff]
        %v880 = vld [vmem:[#allocation10 + $0x10] sm:$0xff]
        %v881 = vld [vmem:[#allocation10 + $0x18] sm:$0xff]
        %v882 = vld [vmem:[#allocation10 + $0x20] sm:$0xff]
        %v883 = vld [vmem:[#allocation10 + $0x28] sm:$0xff]
        %v884 = vld [vmem:[#allocation10 + $0x30] sm:$0xff]
        %v885 = vld [vmem:[#allocation10 + $0x38] sm:$0xff]
        %v886 = vld [vmem:[#allocation10 + $0x40] sm:$0xff]
        %v887 = vld [vmem:[#allocation10 + $0x48] sm:$0xff]
        %v888 = vld [vmem:[#allocation10 + $0x50] sm:$0xff]
        %v889 = vld [vmem:[#allocation10 + $0x58] sm:$0xff]
        %v890 = vld [vmem:[#allocation10 + $0x60] sm:$0xff]
        %v891 = vld [vmem:[#allocation10 + $0x68] sm:$0xff]
        %v892 = vld [vmem:[#allocation10 + $0x70] sm:$0xff]
        %v893 = vld [vmem:[#allocation10 + $0x78] sm:$0xff]
        %v894 = vld [vmem:[#allocation10 + $0x80] sm:$0xff]
        %v895 = vld [vmem:[#allocation10 + $0x88] sm:$0xff]
        %v896 = vld [vmem:[#allocation10 + $0x90] sm:$0xff]
        %v897 = vld [vmem:[#allocation10 + $0x98] sm:$0xff]
        %v898 = vld [vmem:[#allocation10 + $0xa0] sm:$0xff]
        %v899 = vld [vmem:[#allocation10 + $0xa8] sm:$0xff]
        %v900 = vld [vmem:[#allocation10 + $0xb0] sm:$0xff]
        %v901 = vld [vmem:[#allocation10 + $0xb8] sm:$0xff]
        %v902 = vld [vmem:[#allocation10 + $0xc0] sm:$0xff]
        %v903 = vld [vmem:[#allocation10 + $0xc8] sm:$0xff]
        %v904 = vld [vmem:[#allocation10 + $0xd0] sm:$0xff]
        %v905 = vld [vmem:[#allocation10 + $0xd8] sm:$0xff]
        %v906 = vld [vmem:[#allocation10 + $0xe0] sm:$0xff]
        %v907 = vld [vmem:[#allocation10 + $0xe8] sm:$0xff]
        %v908 = vld [vmem:[#allocation10 + $0xf0] sm:$0xff]
        %v909 = vld [vmem:[#allocation10 + $0xf8] sm:$0xff]
        %v910 = vld [vmem:[#allocation11] sm:$0xff]
        %v911 = vld [vmem:[#allocation11 + $0x8] sm:$0xff]
        %v912 = vld [vmem:[#allocation11 + $0x10] sm:$0xff]
        %v913 = vld [vmem:[#allocation11 + $0x18] sm:$0xff]
        %v914 = vld [vmem:[#allocation11 + $0x20] sm:$0xff]
        %v915 = vld [vmem:[#allocation11 + $0x28] sm:$0xff]
        %v916 = vld [vmem:[#allocation11 + $0x30] sm:$0xff]
        %v917 = vld [vmem:[#allocation11 + $0x38] sm:$0xff]
        %v918 = vld [vmem:[#allocation11 + $0x40] sm:$0xff]
        %v919 = vld [vmem:[#allocation11 + $0x48] sm:$0xff]
        %v920 = vld [vmem:[#allocation11 + $0x50] sm:$0xff]
        %v921 = vld [vmem:[#allocation11 + $0x58] sm:$0xff]
        %v922 = vld [vmem:[#allocation11 + $0x60] sm:$0xff]
        %v923 = vld [vmem:[#allocation11 + $0x68] sm:$0xff]
        %v924 = vld [vmem:[#allocation11 + $0x70] sm:$0xff]
        %v925 = vld [vmem:[#allocation11 + $0x78] sm:$0xff]
        %v926 = vld [vmem:[#allocation11 + $0x80] sm:$0xff]
        %v927 = vld [vmem:[#allocation11 + $0x88] sm:$0xff]
        %v928 = vld [vmem:[#allocation11 + $0x90] sm:$0xff]
        %v929 = vld [vmem:[#allocation11 + $0x98] sm:$0xff]
        %v930 = vld [vmem:[#allocation11 + $0xa0] sm:$0xff]
        %v931 = vld [vmem:[#allocation11 + $0xa8] sm:$0xff]
        %v932 = vld [vmem:[#allocation11 + $0xb0] sm:$0xff]
        %v933 = vld [vmem:[#allocation11 + $0xb8] sm:$0xff]
        %v934 = vld [vmem:[#allocation11 + $0xc0] sm:$0xff]
        %v935 = vld [vmem:[#allocation11 + $0xc8] sm:$0xff]
        %v936 = vld [vmem:[#allocation11 + $0xd0] sm:$0xff]
        %v937 = vld [vmem:[#allocation11 + $0xd8] sm:$0xff]
        %v938 = vld [vmem:[#allocation11 + $0xe0] sm:$0xff]
        %v939 = vld [vmem:[#allocation11 + $0xe8] sm:$0xff]
        %v940 = vld [vmem:[#allocation11 + $0xf0] sm:$0xff]
        %v941 = vld [vmem:[#allocation11 + $0xf8] sm:$0xff]
        %v942 = vmul.f32 %v510, %v695
        %v943 = vmul.f32 %v511, %v705
        %v944 = vmul.f32 %v512, %v715
        %v945 = vmul.f32 %v513, %v725
        %v946 = vmul.f32 %v514, %v735
        %v947 = vmul.f32 %v515, %v745
        %v948 = vmul.f32 %v516, %v755
        %v949 = vmul.f32 %v517, %v765
        %v950 = vmul.f32 %v518, %v775
        %v951 = vmul.f32 %v519, %v785
        %v952 = vmul.f32 %v520, %v795
        %v953 = vmul.f32 %v521, %v805
        %v954 = vmul.f32 %v522, %v815
        %v955 = vmul.f32 %v523, %v825
        %v956 = vmul.f32 %v524, %v835
        %v957 = vmul.f32 %v525, %v845
        %v958 = vperm.slane %v413, 0
        %v959 = vmul.f32 %v942, %v958
        %v960 = vmul.f32 %v943, %v958
        %v961 = vmul.f32 %v944, %v958
        %v962 = vmul.f32 %v945, %v958
        %v963 = vmul.f32 %v946, %v958
        %v964 = vmul.f32 %v947, %v958
        %v965 = vmul.f32 %v948, %v958
        %v966 = vmul.f32 %v949, %v958
        %v967 = vmul.f32 %v950, %v958
        %v968 = vmul.f32 %v951, %v958
        %v969 = vmul.f32 %v952, %v958
        %v970 = vmul.f32 %v953, %v958
        %v971 = vmul.f32 %v954, %v958
        %v972 = vmul.f32 %v955, %v958
        %v973 = vmul.f32 %v956, %v958
        %v974 = vmul.f32 %v957, %v958
        %v975 = vperm.slane %v413, 2
        %v976 = vadd.f32 %v959, %v975
        %v977 = vadd.f32 %v960, %v975
        %v978 = vadd.f32 %v961, %v975
        %v979 = vadd.f32 %v962, %v975
        %v980 = vadd.f32 %v963, %v975
        %v981 = vadd.f32 %v964, %v975
        %v982 = vadd.f32 %v965, %v975
        %v983 = vadd.f32 %v966, %v975
        %v984 = vadd.f32 %v967, %v975
        %v985 = vadd.f32 %v968, %v975
        %v986 = vadd.f32 %v969, %v975
        %v987 = vadd.f32 %v970, %v975
        %v988 = vadd.f32 %v971, %v975
        %v989 = vadd.f32 %v972, %v975
        %v990 = vadd.f32 %v973, %v975
        %v991 = vadd.f32 %v974, %v975
        %v992 = vmul.f32 %v526, %v695
        %v993 = vmul.f32 %v527, %v705
        %v994 = vmul.f32 %v528, %v715
        %v995 = vmul.f32 %v529, %v725
        %v996 = vmul.f32 %v530, %v735
        %v997 = vmul.f32 %v531, %v745
        %v998 = vmul.f32 %v532, %v755
        %v999 = vmul.f32 %v533, %v765
        %v1000 = vmul.f32 %v534, %v775
        %v1001 = vmul.f32 %v535, %v785
        %v1002 = vmul.f32 %v536, %v795
        %v1003 = vmul.f32 %v537, %v805
        %v1004 = vmul.f32 %v538, %v815
        %v1005 = vmul.f32 %v539, %v825
        %v1006 = vmul.f32 %v540, %v835
        %v1007 = vmul.f32 %v541, %v845
        %v1008 = vperm.slane %v413, 1
        %v1009 = vmul.f32 %v992, %v1008
        %v1010 = vmul.f32 %v993, %v1008
        %v1011 = vmul.f32 %v994, %v1008
        %v1012 = vmul.f32 %v995, %v1008
        %v1013 = vmul.f32 %v996, %v1008
        %v1014 = vmul.f32 %v997, %v1008
        %v1015 = vmul.f32 %v998, %v1008
        %v1016 = vmul.f32 %v999, %v1008
        %v1017 = vmul.f32 %v1000, %v1008
        %v1018 = vmul.f32 %v1001, %v1008
        %v1019 = vmul.f32 %v1002, %v1008
        %v1020 = vmul.f32 %v1003, %v1008
        %v1021 = vmul.f32 %v1004, %v1008
        %v1022 = vmul.f32 %v1005, %v1008
        %v1023 = vmul.f32 %v1006, %v1008
        %v1024 = vmul.f32 %v1007, %v1008
        %v1025 = vperm.slane %v413, 3
        %v1026 = vadd.f32 %v1009, %v1025
        %v1027 = vadd.f32 %v1010, %v1025
        %v1028 = vadd.f32 %v1011, %v1025
        %v1029 = vadd.f32 %v1012, %v1025
        %v1030 = vadd.f32 %v1013, %v1025
        %v1031 = vadd.f32 %v1014, %v1025
        %v1032 = vadd.f32 %v1015, %v1025
        %v1033 = vadd.f32 %v1016, %v1025
        %v1034 = vadd.f32 %v1017, %v1025
        %v1035 = vadd.f32 %v1018, %v1025
        %v1036 = vadd.f32 %v1019, %v1025
        %v1037 = vadd.f32 %v1020, %v1025
        %v1038 = vadd.f32 %v1021, %v1025
        %v1039 = vadd.f32 %v1022, %v1025
        %v1040 = vadd.f32 %v1023, %v1025
        %v1041 = vadd.f32 %v1024, %v1025
        %1042 = vmatpush.msra.mxu0 %v908
        %1043 = vmatpush.msra.mxu0 %v906
        %1044 = vmatpush.msra.mxu0 %v904
        %1045 = vmatpush.msra.mxu0 %v902
        %1046 = vmatpush.msra.mxu0 %v900
        %1047 = vmatpush.msra.mxu0 %v898
        %1048 = vmatpush.msra.mxu0 %v896
        %1049 = vmatpush.msra.mxu0 %v894
        %1050 = vmatpush.msra.mxu0 %v892
        %1051 = vmatpush.msra.mxu0 %v890
        %1052 = vmatpush.msra.mxu0 %v888
        %1053 = vmatpush.msra.mxu0 %v886
        %1054 = vmatpush.msra.mxu0 %v884
        %1055 = vmatpush.msra.mxu0 %v882
        %1056 = vmatpush.msra.mxu0 %v880
        %1057 = vmatpush.msra.mxu0 %v878
        %1058 = vmatmul.f32.gmra.mxu0 %v1026
        %v1059 = vpop.f32.mrf.mxu0
        %v1060 = vadd.f32 0.0, %v1059
        %1061 = vmatmul.f32.gmra.mxu0 %v1027
        %v1062 = vpop.f32.mrf.mxu0
        %v1063 = vadd.f32 0.0, %v1062
        %1064 = vmatmul.f32.gmra.mxu0 %v1028
        %v1065 = vpop.f32.mrf.mxu0
        %v1066 = vadd.f32 0.0, %v1065
        %1067 = vmatmul.f32.gmra.mxu0 %v1029
        %v1068 = vpop.f32.mrf.mxu0
        %v1069 = vadd.f32 0.0, %v1068
        %1070 = vmatmul.f32.gmra.mxu0 %v1030
        %v1071 = vpop.f32.mrf.mxu0
        %v1072 = vadd.f32 0.0, %v1071
        %1073 = vmatmul.f32.gmra.mxu0 %v1031
        %v1074 = vpop.f32.mrf.mxu0
        %v1075 = vadd.f32 0.0, %v1074
        %1076 = vmatmul.f32.gmra.mxu0 %v1032
        %v1077 = vpop.f32.mrf.mxu0
        %v1078 = vadd.f32 0.0, %v1077
        %1079 = vmatmul.f32.gmra.mxu0 %v1033
        %v1080 = vpop.f32.mrf.mxu0
        %v1081 = vadd.f32 0.0, %v1080
        %1082 = vmatmul.f32.gmra.mxu0 %v1034
        %v1083 = vpop.f32.mrf.mxu0
        %v1084 = vadd.f32 0.0, %v1083
        %1085 = vmatmul.f32.gmra.mxu0 %v1035
        %v1086 = vpop.f32.mrf.mxu0
        %v1087 = vadd.f32 0.0, %v1086
        %1088 = vmatmul.f32.gmra.mxu0 %v1036
        %v1089 = vpop.f32.mrf.mxu0
        %v1090 = vadd.f32 0.0, %v1089
        %1091 = vmatmul.f32.gmra.mxu0 %v1037
        %v1092 = vpop.f32.mrf.mxu0
        %v1093 = vadd.f32 0.0, %v1092
        %1094 = vmatmul.f32.gmra.mxu0 %v1038
        %v1095 = vpop.f32.mrf.mxu0
        %v1096 = vadd.f32 0.0, %v1095
        %1097 = vmatmul.f32.gmra.mxu0 %v1039
        %v1098 = vpop.f32.mrf.mxu0
        %v1099 = vadd.f32 0.0, %v1098
        %1100 = vmatmul.f32.gmra.mxu0 %v1040
        %v1101 = vpop.f32.mrf.mxu0
        %v1102 = vadd.f32 0.0, %v1101
        %1103 = vmatmul.f32.gmra.mxu0 %v1041
        %v1104 = vpop.f32.mrf.mxu0
        %v1105 = vadd.f32 0.0, %v1104
        %1106 = vdwg.mxu0
        %1107 = vmatpush.msra.mxu0 %v909
        %1108 = vmatpush.msra.mxu0 %v907
        %1109 = vmatpush.msra.mxu0 %v905
        %1110 = vmatpush.msra.mxu0 %v903
        %1111 = vmatpush.msra.mxu0 %v901
        %1112 = vmatpush.msra.mxu0 %v899
        %1113 = vmatpush.msra.mxu0 %v897
        %1114 = vmatpush.msra.mxu0 %v895
        %1115 = vmatpush.msra.mxu0 %v893
        %1116 = vmatpush.msra.mxu0 %v891
        %1117 = vmatpush.msra.mxu0 %v889
        %1118 = vmatpush.msra.mxu0 %v887
        %1119 = vmatpush.msra.mxu0 %v885
        %1120 = vmatpush.msra.mxu0 %v883
        %1121 = vmatpush.msra.mxu0 %v881
        %1122 = vmatpush.msra.mxu0 %v879
        %1123 = vmatmul.f32.gmra.mxu0 %v1026
        %v1124 = vpop.f32.mrf.mxu0
        %v1125 = vadd.f32 0.0, %v1124
        %1126 = vmatmul.f32.gmra.mxu0 %v1027
        %v1127 = vpop.f32.mrf.mxu0
        %v1128 = vadd.f32 0.0, %v1127
        %1129 = vmatmul.f32.gmra.mxu0 %v1028
        %v1130 = vpop.f32.mrf.mxu0
        %v1131 = vadd.f32 0.0, %v1130
        %1132 = vmatmul.f32.gmra.mxu0 %v1029
        %v1133 = vpop.f32.mrf.mxu0
        %v1134 = vadd.f32 0.0, %v1133
        %1135 = vmatmul.f32.gmra.mxu0 %v1030
        %v1136 = vpop.f32.mrf.mxu0
        %v1137 = vadd.f32 0.0, %v1136
        %1138 = vmatmul.f32.gmra.mxu0 %v1031
        %v1139 = vpop.f32.mrf.mxu0
        %v1140 = vadd.f32 0.0, %v1139
        %1141 = vmatmul.f32.gmra.mxu0 %v1032
        %v1142 = vpop.f32.mrf.mxu0
        %v1143 = vadd.f32 0.0, %v1142
        %1144 = vmatmul.f32.gmra.mxu0 %v1033
        %v1145 = vpop.f32.mrf.mxu0
        %v1146 = vadd.f32 0.0, %v1145
        %1147 = vmatmul.f32.gmra.mxu0 %v1034
        %v1148 = vpop.f32.mrf.mxu0
        %v1149 = vadd.f32 0.0, %v1148
        %1150 = vmatmul.f32.gmra.mxu0 %v1035
        %v1151 = vpop.f32.mrf.mxu0
        %v1152 = vadd.f32 0.0, %v1151
        %1153 = vmatmul.f32.gmra.mxu0 %v1036
        %v1154 = vpop.f32.mrf.mxu0
        %v1155 = vadd.f32 0.0, %v1154
        %1156 = vmatmul.f32.gmra.mxu0 %v1037
        %v1157 = vpop.f32.mrf.mxu0
        %v1158 = vadd.f32 0.0, %v1157
        %1159 = vmatmul.f32.gmra.mxu0 %v1038
        %v1160 = vpop.f32.mrf.mxu0
        %v1161 = vadd.f32 0.0, %v1160
        %1162 = vmatmul.f32.gmra.mxu0 %v1039
        %v1163 = vpop.f32.mrf.mxu0
        %v1164 = vadd.f32 0.0, %v1163
        %1165 = vmatmul.f32.gmra.mxu0 %v1040
        %v1166 = vpop.f32.mrf.mxu0
        %v1167 = vadd.f32 0.0, %v1166
        %1168 = vmatmul.f32.gmra.mxu0 %v1041
        %v1169 = vpop.f32.mrf.mxu0
        %v1170 = vadd.f32 0.0, %v1169
        %1171 = vdwg.mxu0
        %1172 = vmatpush.msra.mxu0 %v876
        %1173 = vmatpush.msra.mxu0 %v874
        %1174 = vmatpush.msra.mxu0 %v872
        %1175 = vmatpush.msra.mxu0 %v870
        %1176 = vmatpush.msra.mxu0 %v868
        %1177 = vmatpush.msra.mxu0 %v866
        %1178 = vmatpush.msra.mxu0 %v864
        %1179 = vmatpush.msra.mxu0 %v862
        %1180 = vmatpush.msra.mxu0 %v860
        %1181 = vmatpush.msra.mxu0 %v858
        %1182 = vmatpush.msra.mxu0 %v856
        %1183 = vmatpush.msra.mxu0 %v854
        %1184 = vmatpush.msra.mxu0 %v852
        %1185 = vmatpush.msra.mxu0 %v850
        %1186 = vmatpush.msra.mxu0 %v848
        %1187 = vmatpush.msra.mxu0 %v846
        %1188 = vmatmul.f32.gmra.mxu0 %v976
        %v1189 = vpop.f32.mrf.mxu0
        %v1190 = vadd.f32 %v1060, %v1189
        %1191 = vmatmul.f32.gmra.mxu0 %v977
        %v1192 = vpop.f32.mrf.mxu0
        %v1193 = vadd.f32 %v1063, %v1192
        %1194 = vmatmul.f32.gmra.mxu0 %v978
        %v1195 = vpop.f32.mrf.mxu0
        %v1196 = vadd.f32 %v1066, %v1195
        %1197 = vmatmul.f32.gmra.mxu0 %v979
        %v1198 = vpop.f32.mrf.mxu0
        %v1199 = vadd.f32 %v1069, %v1198
        %1200 = vmatmul.f32.gmra.mxu0 %v980
        %v1201 = vpop.f32.mrf.mxu0
        %v1202 = vadd.f32 %v1072, %v1201
        %1203 = vmatmul.f32.gmra.mxu0 %v981
        %v1204 = vpop.f32.mrf.mxu0
        %v1205 = vadd.f32 %v1075, %v1204
        %1206 = vmatmul.f32.gmra.mxu0 %v982
        %v1207 = vpop.f32.mrf.mxu0
        %v1208 = vadd.f32 %v1078, %v1207
        %1209 = vmatmul.f32.gmra.mxu0 %v983
        %v1210 = vpop.f32.mrf.mxu0
        %v1211 = vadd.f32 %v1081, %v1210
        %1212 = vmatmul.f32.gmra.mxu0 %v984
        %v1213 = vpop.f32.mrf.mxu0
        %v1214 = vadd.f32 %v1084, %v1213
        %1215 = vmatmul.f32.gmra.mxu0 %v985
        %v1216 = vpop.f32.mrf.mxu0
        %v1217 = vadd.f32 %v1087, %v1216
        %1218 = vmatmul.f32.gmra.mxu0 %v986
        %v1219 = vpop.f32.mrf.mxu0
        %v1220 = vadd.f32 %v1090, %v1219
        %1221 = vmatmul.f32.gmra.mxu0 %v987
        %v1222 = vpop.f32.mrf.mxu0
        %v1223 = vadd.f32 %v1093, %v1222
        %1224 = vmatmul.f32.gmra.mxu0 %v988
        %v1225 = vpop.f32.mrf.mxu0
        %v1226 = vadd.f32 %v1096, %v1225
        %1227 = vmatmul.f32.gmra.mxu0 %v989
        %v1228 = vpop.f32.mrf.mxu0
        %v1229 = vadd.f32 %v1099, %v1228
        %1230 = vmatmul.f32.gmra.mxu0 %v990
        %v1231 = vpop.f32.mrf.mxu0
        %v1232 = vadd.f32 %v1102, %v1231
        %1233 = vmatmul.f32.gmra.mxu0 %v991
        %v1234 = vpop.f32.mrf.mxu0
        %v1235 = vadd.f32 %v1105, %v1234
        %1236 = vdwg.mxu0
        %1237 = vmatpush.msra.mxu0 %v877
        %1238 = vmatpush.msra.mxu0 %v875
        %1239 = vmatpush.msra.mxu0 %v873
        %1240 = vmatpush.msra.mxu0 %v871
        %1241 = vmatpush.msra.mxu0 %v869
        %1242 = vmatpush.msra.mxu0 %v867
        %1243 = vmatpush.msra.mxu0 %v865
        %1244 = vmatpush.msra.mxu0 %v863
        %1245 = vmatpush.msra.mxu0 %v861
        %1246 = vmatpush.msra.mxu0 %v859
        %1247 = vmatpush.msra.mxu0 %v857
        %1248 = vmatpush.msra.mxu0 %v855
        %1249 = vmatpush.msra.mxu0 %v853
        %1250 = vmatpush.msra.mxu0 %v851
        %1251 = vmatpush.msra.mxu0 %v849
        %1252 = vmatpush.msra.mxu0 %v847
        %1253 = vmatmul.f32.gmra.mxu0 %v976
        %v1254 = vpop.f32.mrf.mxu0
        %v1255 = vadd.f32 %v1125, %v1254
        %1256 = vmatmul.f32.gmra.mxu0 %v977
        %v1257 = vpop.f32.mrf.mxu0
        %v1258 = vadd.f32 %v1128, %v1257
        %1259 = vmatmul.f32.gmra.mxu0 %v978
        %v1260 = vpop.f32.mrf.mxu0
        %v1261 = vadd.f32 %v1131, %v1260
        %1262 = vmatmul.f32.gmra.mxu0 %v979
        %v1263 = vpop.f32.mrf.mxu0
        %v1264 = vadd.f32 %v1134, %v1263
        %1265 = vmatmul.f32.gmra.mxu0 %v980
        %v1266 = vpop.f32.mrf.mxu0
        %v1267 = vadd.f32 %v1137, %v1266
        %1268 = vmatmul.f32.gmra.mxu0 %v981
        %v1269 = vpop.f32.mrf.mxu0
        %v1270 = vadd.f32 %v1140, %v1269
        %1271 = vmatmul.f32.gmra.mxu0 %v982
        %v1272 = vpop.f32.mrf.mxu0
        %v1273 = vadd.f32 %v1143, %v1272
        %1274 = vmatmul.f32.gmra.mxu0 %v983
        %v1275 = vpop.f32.mrf.mxu0
        %v1276 = vadd.f32 %v1146, %v1275
        %1277 = vmatmul.f32.gmra.mxu0 %v984
        %v1278 = vpop.f32.mrf.mxu0
        %v1279 = vadd.f32 %v1149, %v1278
        %1280 = vmatmul.f32.gmra.mxu0 %v985
        %v1281 = vpop.f32.mrf.mxu0
        %v1282 = vadd.f32 %v1152, %v1281
        %1283 = vmatmul.f32.gmra.mxu0 %v986
        %v1284 = vpop.f32.mrf.mxu0
        %v1285 = vadd.f32 %v1155, %v1284
        %1286 = vmatmul.f32.gmra.mxu0 %v987
        %v1287 = vpop.f32.mrf.mxu0
        %v1288 = vadd.f32 %v1158, %v1287
        %1289 = vmatmul.f32.gmra.mxu0 %v988
        %v1290 = vpop.f32.mrf.mxu0
        %v1291 = vadd.f32 %v1161, %v1290
        %1292 = vmatmul.f32.gmra.mxu0 %v989
        %v1293 = vpop.f32.mrf.mxu0
        %v1294 = vadd.f32 %v1164, %v1293
        %1295 = vmatmul.f32.gmra.mxu0 %v990
        %v1296 = vpop.f32.mrf.mxu0
        %v1297 = vadd.f32 %v1167, %v1296
        %1298 = vmatmul.f32.gmra.mxu0 %v991
        %v1299 = vpop.f32.mrf.mxu0
        %v1300 = vadd.f32 %v1170, %v1299
        %1301 = vdwg.mxu0
        %v1302 = vmul.f32 %v1190, 0.5
        %v1303 = vmul.f32 %v1255, 0.5
        %v1304 = vmul.f32 %v1193, 0.5
        %v1305 = vmul.f32 %v1258, 0.5
        %v1306 = vmul.f32 %v1196, 0.5
        %v1307 = vmul.f32 %v1261, 0.5
        %v1308 = vmul.f32 %v1199, 0.5
        %v1309 = vmul.f32 %v1264, 0.5
        %v1310 = vmul.f32 %v1202, 0.5
        %v1311 = vmul.f32 %v1267, 0.5
        %v1312 = vmul.f32 %v1205, 0.5
        %v1313 = vmul.f32 %v1270, 0.5
        %v1314 = vmul.f32 %v1208, 0.5
        %v1315 = vmul.f32 %v1273, 0.5
        %v1316 = vmul.f32 %v1211, 0.5
        %v1317 = vmul.f32 %v1276, 0.5
        %v1318 = vmul.f32 %v1214, 0.5
        %v1319 = vmul.f32 %v1279, 0.5
        %v1320 = vmul.f32 %v1217, 0.5
        %v1321 = vmul.f32 %v1282, 0.5
        %v1322 = vmul.f32 %v1220, 0.5
        %v1323 = vmul.f32 %v1285, 0.5
        %v1324 = vmul.f32 %v1223, 0.5
        %v1325 = vmul.f32 %v1288, 0.5
        %v1326 = vmul.f32 %v1226, 0.5
        %v1327 = vmul.f32 %v1291, 0.5
        %v1328 = vmul.f32 %v1229, 0.5
        %v1329 = vmul.f32 %v1294, 0.5
        %v1330 = vmul.f32 %v1232, 0.5
        %v1331 = vmul.f32 %v1297, 0.5
        %v1332 = vmul.f32 %v1235, 0.5
        %v1333 = vmul.f32 %v1300, 0.5
        %v1334 = vmul.f32 %v1190, 0.70710677
        %v1335 = vmul.f32 %v1255, 0.70710677
        %v1336 = vmul.f32 %v1193, 0.70710677
        %v1337 = vmul.f32 %v1258, 0.70710677
        %v1338 = vmul.f32 %v1196, 0.70710677
        %v1339 = vmul.f32 %v1261, 0.70710677
        %v1340 = vmul.f32 %v1199, 0.70710677
        %v1341 = vmul.f32 %v1264, 0.70710677
        %v1342 = vmul.f32 %v1202, 0.70710677
        %v1343 = vmul.f32 %v1267, 0.70710677
        %v1344 = vmul.f32 %v1205, 0.70710677
        %v1345 = vmul.f32 %v1270, 0.70710677
        %v1346 = vmul.f32 %v1208, 0.70710677
        %v1347 = vmul.f32 %v1273, 0.70710677
        %v1348 = vmul.f32 %v1211, 0.70710677
        %v1349 = vmul.f32 %v1276, 0.70710677
        %v1350 = vmul.f32 %v1214, 0.70710677
        %v1351 = vmul.f32 %v1279, 0.70710677
        %v1352 = vmul.f32 %v1217, 0.70710677
        %v1353 = vmul.f32 %v1282, 0.70710677
        %v1354 = vmul.f32 %v1220, 0.70710677
        %v1355 = vmul.f32 %v1285, 0.70710677
        %v1356 = vmul.f32 %v1223, 0.70710677
        %v1357 = vmul.f32 %v1288, 0.70710677
        %v1358 = vmul.f32 %v1226, 0.70710677
        %v1359 = vmul.f32 %v1291, 0.70710677
        %v1360 = vmul.f32 %v1229, 0.70710677
        %v1361 = vmul.f32 %v1294, 0.70710677
        %v1362 = vmul.f32 %v1232, 0.70710677
        %v1363 = vmul.f32 %v1297, 0.70710677
        %v1364 = vmul.f32 %v1235, 0.70710677
        %v1365 = vmul.f32 %v1300, 0.70710677
        %v1366 = vmul.f32 %v1334, %v1334
        %v1367 = vmin.f32 16.0, %v1366
        %v1368 = vmul.f32 %v1367, 2.1237322e-06
        %v1369 = vadd.f32 %v1368, 0.00028619796
        %v1370 = vmul.f32 %v1367, %v1369
        %v1371 = vadd.f32 %v1370, 0.0036580483
        %v1372 = vmul.f32 %v1367, %v1371
        %v1373 = vadd.f32 %v1372, 0.05243302
        %v1374 = vmul.f32 %v1367, %v1373
        %v1375 = vadd.f32 %v1374, 0.18741608
        %v1376 = vmul.f32 %v1367, %v1375
        %v1377 = vadd.f32 %v1376, 1.1283791
        %v1378 = vmul.f32 %v1334, %v1377
        %v1379 = vmul.f32 %v1367, 3.8918573e-05
        %v1380 = vadd.f32 %v1379, 0.001143296
        %v1381 = vmul.f32 %v1367, %v1380
        %v1382 = vadd.f32 %v1381, 0.014752088
        %v1383 = vmul.f32 %v1367, %v1382
        %v1384 = vadd.f32 %v1383, 0.112945676
        %v1385 = vmul.f32 %v1367, %v1384
        %v1386 = vadd.f32 %v1385, 0.4994258
        %v1387 = vmul.f32 %v1367, %v1386
        %v1388 = vadd.f32 %v1387, 1.0
        %v1389 = vrcp.pop %v1388
        %v1390 = vmul.f32 %v1388, %v1389
        %v1391 = vsub.f32 1.0, %v1390
        %v1392 = vmul.f32 %v1389, %v1391
        %v1393 = vadd.f32 %v1389, %v1392
        %vm1394 = vweird.f32 %v1388
        %vm1395 = vweird.f32 %v1389
        %vm1396 = vmor %vm1394, %vm1395
        %v1397 = vsel %vm1396, %v1389, %v1393
        %v1398 = vand.u32 2147483647, %v1388
        %vm1399 = vcmp.eq.f32.partialorder %v1398, 8.507059e+37
        %v1400 = vand.u32 %v1388, 2147483648
        %v1401 = vor.u32 1.1754944e-38, %v1400
        %v1402 = vsel %vm1399, %v1401, %v1397
        %v1403 = vmul.f32 %v1378, %v1402
        %v1404 = vmin.f32 %v1403, 1.0
        %v1405 = vmax.f32 %v1404, -1.0
        %v1406 = vmul.f32 %v1335, %v1335
        %v1407 = vmin.f32 16.0, %v1406
        %v1408 = vmul.f32 %v1407, 2.1237322e-06
        %v1409 = vadd.f32 %v1408, 0.00028619796
        %v1410 = vmul.f32 %v1407, %v1409
        %v1411 = vadd.f32 %v1410, 0.0036580483
        %v1412 = vmul.f32 %v1407, %v1411
        %v1413 = vadd.f32 %v1412, 0.05243302
        %v1414 = vmul.f32 %v1407, %v1413
        %v1415 = vadd.f32 %v1414, 0.18741608
        %v1416 = vmul.f32 %v1407, %v1415
        %v1417 = vadd.f32 %v1416, 1.1283791
        %v1418 = vmul.f32 %v1335, %v1417
        %v1419 = vmul.f32 %v1407, 3.8918573e-05
        %v1420 = vadd.f32 %v1419, 0.001143296
        %v1421 = vmul.f32 %v1407, %v1420
        %v1422 = vadd.f32 %v1421, 0.014752088
        %v1423 = vmul.f32 %v1407, %v1422
        %v1424 = vadd.f32 %v1423, 0.112945676
        %v1425 = vmul.f32 %v1407, %v1424
        %v1426 = vadd.f32 %v1425, 0.4994258
        %v1427 = vmul.f32 %v1407, %v1426
        %v1428 = vadd.f32 %v1427, 1.0
        %v1429 = vrcp.pop %v1428
        %v1430 = vmul.f32 %v1428, %v1429
        %v1431 = vsub.f32 1.0, %v1430
        %v1432 = vmul.f32 %v1429, %v1431
        %v1433 = vadd.f32 %v1429, %v1432
        %vm1434 = vweird.f32 %v1428
        %vm1435 = vweird.f32 %v1429
        %vm1436 = vmor %vm1434, %vm1435
        %v1437 = vsel %vm1436, %v1429, %v1433
        %v1438 = vand.u32 2147483647, %v1428
        %vm1439 = vcmp.eq.f32.partialorder %v1438, 8.507059e+37
        %v1440 = vand.u32 %v1428, 2147483648
        %v1441 = vor.u32 1.1754944e-38, %v1440
        %v1442 = vsel %vm1439, %v1441, %v1437
        %v1443 = vmul.f32 %v1418, %v1442
        %v1444 = vmin.f32 %v1443, 1.0
        %v1445 = vmax.f32 %v1444, -1.0
        %v1446 = vmul.f32 %v1336, %v1336
        %v1447 = vmin.f32 16.0, %v1446
        %v1448 = vmul.f32 %v1447, 2.1237322e-06
        %v1449 = vadd.f32 %v1448, 0.00028619796
        %v1450 = vmul.f32 %v1447, %v1449
        %v1451 = vadd.f32 %v1450, 0.0036580483
        %v1452 = vmul.f32 %v1447, %v1451
        %v1453 = vadd.f32 %v1452, 0.05243302
        %v1454 = vmul.f32 %v1447, %v1453
        %v1455 = vadd.f32 %v1454, 0.18741608
        %v1456 = vmul.f32 %v1447, %v1455
        %v1457 = vadd.f32 %v1456, 1.1283791
        %v1458 = vmul.f32 %v1336, %v1457
        %v1459 = vmul.f32 %v1447, 3.8918573e-05
        %v1460 = vadd.f32 %v1459, 0.001143296
        %v1461 = vmul.f32 %v1447, %v1460
        %v1462 = vadd.f32 %v1461, 0.014752088
        %v1463 = vmul.f32 %v1447, %v1462
        %v1464 = vadd.f32 %v1463, 0.112945676
        %v1465 = vmul.f32 %v1447, %v1464
        %v1466 = vadd.f32 %v1465, 0.4994258
        %v1467 = vmul.f32 %v1447, %v1466
        %v1468 = vadd.f32 %v1467, 1.0
        %v1469 = vrcp.pop %v1468
        %v1470 = vmul.f32 %v1468, %v1469
        %v1471 = vsub.f32 1.0, %v1470
        %v1472 = vmul.f32 %v1469, %v1471
        %v1473 = vadd.f32 %v1469, %v1472
        %vm1474 = vweird.f32 %v1468
        %vm1475 = vweird.f32 %v1469
        %vm1476 = vmor %vm1474, %vm1475
        %v1477 = vsel %vm1476, %v1469, %v1473
        %v1478 = vand.u32 2147483647, %v1468
        %vm1479 = vcmp.eq.f32.partialorder %v1478, 8.507059e+37
        %v1480 = vand.u32 %v1468, 2147483648
        %v1481 = vor.u32 1.1754944e-38, %v1480
        %v1482 = vsel %vm1479, %v1481, %v1477
        %v1483 = vmul.f32 %v1458, %v1482
        %v1484 = vmin.f32 %v1483, 1.0
        %v1485 = vmax.f32 %v1484, -1.0
        %v1486 = vmul.f32 %v1337, %v1337
        %v1487 = vmin.f32 16.0, %v1486
        %v1488 = vmul.f32 %v1487, 2.1237322e-06
        %v1489 = vadd.f32 %v1488, 0.00028619796
        %v1490 = vmul.f32 %v1487, %v1489
        %v1491 = vadd.f32 %v1490, 0.0036580483
        %v1492 = vmul.f32 %v1487, %v1491
        %v1493 = vadd.f32 %v1492, 0.05243302
        %v1494 = vmul.f32 %v1487, %v1493
        %v1495 = vadd.f32 %v1494, 0.18741608
        %v1496 = vmul.f32 %v1487, %v1495
        %v1497 = vadd.f32 %v1496, 1.1283791
        %v1498 = vmul.f32 %v1337, %v1497
        %v1499 = vmul.f32 %v1487, 3.8918573e-05
        %v1500 = vadd.f32 %v1499, 0.001143296
        %v1501 = vmul.f32 %v1487, %v1500
        %v1502 = vadd.f32 %v1501, 0.014752088
        %v1503 = vmul.f32 %v1487, %v1502
        %v1504 = vadd.f32 %v1503, 0.112945676
        %v1505 = vmul.f32 %v1487, %v1504
        %v1506 = vadd.f32 %v1505, 0.4994258
        %v1507 = vmul.f32 %v1487, %v1506
        %v1508 = vadd.f32 %v1507, 1.0
        %v1509 = vrcp.pop %v1508
        %v1510 = vmul.f32 %v1508, %v1509
        %v1511 = vsub.f32 1.0, %v1510
        %v1512 = vmul.f32 %v1509, %v1511
        %v1513 = vadd.f32 %v1509, %v1512
        %vm1514 = vweird.f32 %v1508
        %vm1515 = vweird.f32 %v1509
        %vm1516 = vmor %vm1514, %vm1515
        %v1517 = vsel %vm1516, %v1509, %v1513
        %v1518 = vand.u32 2147483647, %v1508
        %vm1519 = vcmp.eq.f32.partialorder %v1518, 8.507059e+37
        %v1520 = vand.u32 %v1508, 2147483648
        %v1521 = vor.u32 1.1754944e-38, %v1520
        %v1522 = vsel %vm1519, %v1521, %v1517
        %v1523 = vmul.f32 %v1498, %v1522
        %v1524 = vmin.f32 %v1523, 1.0
        %v1525 = vmax.f32 %v1524, -1.0
        %v1526 = vmul.f32 %v1338, %v1338
        %v1527 = vmin.f32 16.0, %v1526
        %v1528 = vmul.f32 %v1527, 2.1237322e-06
        %v1529 = vadd.f32 %v1528, 0.00028619796
        %v1530 = vmul.f32 %v1527, %v1529
        %v1531 = vadd.f32 %v1530, 0.0036580483
        %v1532 = vmul.f32 %v1527, %v1531
        %v1533 = vadd.f32 %v1532, 0.05243302
        %v1534 = vmul.f32 %v1527, %v1533
        %v1535 = vadd.f32 %v1534, 0.18741608
        %v1536 = vmul.f32 %v1527, %v1535
        %v1537 = vadd.f32 %v1536, 1.1283791
        %v1538 = vmul.f32 %v1338, %v1537
        %v1539 = vmul.f32 %v1527, 3.8918573e-05
        %v1540 = vadd.f32 %v1539, 0.001143296
        %v1541 = vmul.f32 %v1527, %v1540
        %v1542 = vadd.f32 %v1541, 0.014752088
        %v1543 = vmul.f32 %v1527, %v1542
        %v1544 = vadd.f32 %v1543, 0.112945676
        %v1545 = vmul.f32 %v1527, %v1544
        %v1546 = vadd.f32 %v1545, 0.4994258
        %v1547 = vmul.f32 %v1527, %v1546
        %v1548 = vadd.f32 %v1547, 1.0
        %v1549 = vrcp.pop %v1548
        %v1550 = vmul.f32 %v1548, %v1549
        %v1551 = vsub.f32 1.0, %v1550
        %v1552 = vmul.f32 %v1549, %v1551
        %v1553 = vadd.f32 %v1549, %v1552
        %vm1554 = vweird.f32 %v1548
        %vm1555 = vweird.f32 %v1549
        %vm1556 = vmor %vm1554, %vm1555
        %v1557 = vsel %vm1556, %v1549, %v1553
        %v1558 = vand.u32 2147483647, %v1548
        %vm1559 = vcmp.eq.f32.partialorder %v1558, 8.507059e+37
        %v1560 = vand.u32 %v1548, 2147483648
        %v1561 = vor.u32 1.1754944e-38, %v1560
        %v1562 = vsel %vm1559, %v1561, %v1557
        %v1563 = vmul.f32 %v1538, %v1562
        %v1564 = vmin.f32 %v1563, 1.0
        %v1565 = vmax.f32 %v1564, -1.0
        %v1566 = vmul.f32 %v1339, %v1339
        %v1567 = vmin.f32 16.0, %v1566
        %v1568 = vmul.f32 %v1567, 2.1237322e-06
        %v1569 = vadd.f32 %v1568, 0.00028619796
        %v1570 = vmul.f32 %v1567, %v1569
        %v1571 = vadd.f32 %v1570, 0.0036580483
        %v1572 = vmul.f32 %v1567, %v1571
        %v1573 = vadd.f32 %v1572, 0.05243302
        %v1574 = vmul.f32 %v1567, %v1573
        %v1575 = vadd.f32 %v1574, 0.18741608
        %v1576 = vmul.f32 %v1567, %v1575
        %v1577 = vadd.f32 %v1576, 1.1283791
        %v1578 = vmul.f32 %v1339, %v1577
        %v1579 = vmul.f32 %v1567, 3.8918573e-05
        %v1580 = vadd.f32 %v1579, 0.001143296
        %v1581 = vmul.f32 %v1567, %v1580
        %v1582 = vadd.f32 %v1581, 0.014752088
        %v1583 = vmul.f32 %v1567, %v1582
        %v1584 = vadd.f32 %v1583, 0.112945676
        %v1585 = vmul.f32 %v1567, %v1584
        %v1586 = vadd.f32 %v1585, 0.4994258
        %v1587 = vmul.f32 %v1567, %v1586
        %v1588 = vadd.f32 %v1587, 1.0
        %v1589 = vrcp.pop %v1588
        %v1590 = vmul.f32 %v1588, %v1589
        %v1591 = vsub.f32 1.0, %v1590
        %v1592 = vmul.f32 %v1589, %v1591
        %v1593 = vadd.f32 %v1589, %v1592
        %vm1594 = vweird.f32 %v1588
        %vm1595 = vweird.f32 %v1589
        %vm1596 = vmor %vm1594, %vm1595
        %v1597 = vsel %vm1596, %v1589, %v1593
        %v1598 = vand.u32 2147483647, %v1588
        %vm1599 = vcmp.eq.f32.partialorder %v1598, 8.507059e+37
        %v1600 = vand.u32 %v1588, 2147483648
        %v1601 = vor.u32 1.1754944e-38, %v1600
        %v1602 = vsel %vm1599, %v1601, %v1597
        %v1603 = vmul.f32 %v1578, %v1602
        %v1604 = vmin.f32 %v1603, 1.0
        %v1605 = vmax.f32 %v1604, -1.0
        %v1606 = vmul.f32 %v1340, %v1340
        %v1607 = vmin.f32 16.0, %v1606
        %v1608 = vmul.f32 %v1607, 2.1237322e-06
        %v1609 = vadd.f32 %v1608, 0.00028619796
        %v1610 = vmul.f32 %v1607, %v1609
        %v1611 = vadd.f32 %v1610, 0.0036580483
        %v1612 = vmul.f32 %v1607, %v1611
        %v1613 = vadd.f32 %v1612, 0.05243302
        %v1614 = vmul.f32 %v1607, %v1613
        %v1615 = vadd.f32 %v1614, 0.18741608
        %v1616 = vmul.f32 %v1607, %v1615
        %v1617 = vadd.f32 %v1616, 1.1283791
        %v1618 = vmul.f32 %v1340, %v1617
        %v1619 = vmul.f32 %v1607, 3.8918573e-05
        %v1620 = vadd.f32 %v1619, 0.001143296
        %v1621 = vmul.f32 %v1607, %v1620
        %v1622 = vadd.f32 %v1621, 0.014752088
        %v1623 = vmul.f32 %v1607, %v1622
        %v1624 = vadd.f32 %v1623, 0.112945676
        %v1625 = vmul.f32 %v1607, %v1624
        %v1626 = vadd.f32 %v1625, 0.4994258
        %v1627 = vmul.f32 %v1607, %v1626
        %v1628 = vadd.f32 %v1627, 1.0
        %v1629 = vrcp.pop %v1628
        %v1630 = vmul.f32 %v1628, %v1629
        %v1631 = vsub.f32 1.0, %v1630
        %v1632 = vmul.f32 %v1629, %v1631
        %v1633 = vadd.f32 %v1629, %v1632
        %vm1634 = vweird.f32 %v1628
        %vm1635 = vweird.f32 %v1629
        %vm1636 = vmor %vm1634, %vm1635
        %v1637 = vsel %vm1636, %v1629, %v1633
        %v1638 = vand.u32 2147483647, %v1628
        %vm1639 = vcmp.eq.f32.partialorder %v1638, 8.507059e+37
        %v1640 = vand.u32 %v1628, 2147483648
        %v1641 = vor.u32 1.1754944e-38, %v1640
        %v1642 = vsel %vm1639, %v1641, %v1637
        %v1643 = vmul.f32 %v1618, %v1642
        %v1644 = vmin.f32 %v1643, 1.0
        %v1645 = vmax.f32 %v1644, -1.0
        %v1646 = vmul.f32 %v1341, %v1341
        %v1647 = vmin.f32 16.0, %v1646
        %v1648 = vmul.f32 %v1647, 2.1237322e-06
        %v1649 = vadd.f32 %v1648, 0.00028619796
        %v1650 = vmul.f32 %v1647, %v1649
        %v1651 = vadd.f32 %v1650, 0.0036580483
        %v1652 = vmul.f32 %v1647, %v1651
        %v1653 = vadd.f32 %v1652, 0.05243302
        %v1654 = vmul.f32 %v1647, %v1653
        %v1655 = vadd.f32 %v1654, 0.18741608
        %v1656 = vmul.f32 %v1647, %v1655
        %v1657 = vadd.f32 %v1656, 1.1283791
        %v1658 = vmul.f32 %v1341, %v1657
        %v1659 = vmul.f32 %v1647, 3.8918573e-05
        %v1660 = vadd.f32 %v1659, 0.001143296
        %v1661 = vmul.f32 %v1647, %v1660
        %v1662 = vadd.f32 %v1661, 0.014752088
        %v1663 = vmul.f32 %v1647, %v1662
        %v1664 = vadd.f32 %v1663, 0.112945676
        %v1665 = vmul.f32 %v1647, %v1664
        %v1666 = vadd.f32 %v1665, 0.4994258
        %v1667 = vmul.f32 %v1647, %v1666
        %v1668 = vadd.f32 %v1667, 1.0
        %v1669 = vrcp.pop %v1668
        %v1670 = vmul.f32 %v1668, %v1669
        %v1671 = vsub.f32 1.0, %v1670
        %v1672 = vmul.f32 %v1669, %v1671
        %v1673 = vadd.f32 %v1669, %v1672
        %vm1674 = vweird.f32 %v1668
        %vm1675 = vweird.f32 %v1669
        %vm1676 = vmor %vm1674, %vm1675
        %v1677 = vsel %vm1676, %v1669, %v1673
        %v1678 = vand.u32 2147483647, %v1668
        %vm1679 = vcmp.eq.f32.partialorder %v1678, 8.507059e+37
        %v1680 = vand.u32 %v1668, 2147483648
        %v1681 = vor.u32 1.1754944e-38, %v1680
        %v1682 = vsel %vm1679, %v1681, %v1677
        %v1683 = vmul.f32 %v1658, %v1682
        %v1684 = vmin.f32 %v1683, 1.0
        %v1685 = vmax.f32 %v1684, -1.0
        %v1686 = vmul.f32 %v1342, %v1342
        %v1687 = vmin.f32 16.0, %v1686
        %v1688 = vmul.f32 %v1687, 2.1237322e-06
        %v1689 = vadd.f32 %v1688, 0.00028619796
        %v1690 = vmul.f32 %v1687, %v1689
        %v1691 = vadd.f32 %v1690, 0.0036580483
        %v1692 = vmul.f32 %v1687, %v1691
        %v1693 = vadd.f32 %v1692, 0.05243302
        %v1694 = vmul.f32 %v1687, %v1693
        %v1695 = vadd.f32 %v1694, 0.18741608
        %v1696 = vmul.f32 %v1687, %v1695
        %v1697 = vadd.f32 %v1696, 1.1283791
        %v1698 = vmul.f32 %v1342, %v1697
        %v1699 = vmul.f32 %v1687, 3.8918573e-05
        %v1700 = vadd.f32 %v1699, 0.001143296
        %v1701 = vmul.f32 %v1687, %v1700
        %v1702 = vadd.f32 %v1701, 0.014752088
        %v1703 = vmul.f32 %v1687, %v1702
        %v1704 = vadd.f32 %v1703, 0.112945676
        %v1705 = vmul.f32 %v1687, %v1704
        %v1706 = vadd.f32 %v1705, 0.4994258
        %v1707 = vmul.f32 %v1687, %v1706
        %v1708 = vadd.f32 %v1707, 1.0
        %v1709 = vrcp.pop %v1708
        %v1710 = vmul.f32 %v1708, %v1709
        %v1711 = vsub.f32 1.0, %v1710
        %v1712 = vmul.f32 %v1709, %v1711
        %v1713 = vadd.f32 %v1709, %v1712
        %vm1714 = vweird.f32 %v1708
        %vm1715 = vweird.f32 %v1709
        %vm1716 = vmor %vm1714, %vm1715
        %v1717 = vsel %vm1716, %v1709, %v1713
        %v1718 = vand.u32 2147483647, %v1708
        %vm1719 = vcmp.eq.f32.partialorder %v1718, 8.507059e+37
        %v1720 = vand.u32 %v1708, 2147483648
        %v1721 = vor.u32 1.1754944e-38, %v1720
        %v1722 = vsel %vm1719, %v1721, %v1717
        %v1723 = vmul.f32 %v1698, %v1722
        %v1724 = vmin.f32 %v1723, 1.0
        %v1725 = vmax.f32 %v1724, -1.0
        %v1726 = vmul.f32 %v1343, %v1343
        %v1727 = vmin.f32 16.0, %v1726
        %v1728 = vmul.f32 %v1727, 2.1237322e-06
        %v1729 = vadd.f32 %v1728, 0.00028619796
        %v1730 = vmul.f32 %v1727, %v1729
        %v1731 = vadd.f32 %v1730, 0.0036580483
        %v1732 = vmul.f32 %v1727, %v1731
        %v1733 = vadd.f32 %v1732, 0.05243302
        %v1734 = vmul.f32 %v1727, %v1733
        %v1735 = vadd.f32 %v1734, 0.18741608
        %v1736 = vmul.f32 %v1727, %v1735
        %v1737 = vadd.f32 %v1736, 1.1283791
        %v1738 = vmul.f32 %v1343, %v1737
        %v1739 = vmul.f32 %v1727, 3.8918573e-05
        %v1740 = vadd.f32 %v1739, 0.001143296
        %v1741 = vmul.f32 %v1727, %v1740
        %v1742 = vadd.f32 %v1741, 0.014752088
        %v1743 = vmul.f32 %v1727, %v1742
        %v1744 = vadd.f32 %v1743, 0.112945676
        %v1745 = vmul.f32 %v1727, %v1744
        %v1746 = vadd.f32 %v1745, 0.4994258
        %v1747 = vmul.f32 %v1727, %v1746
        %v1748 = vadd.f32 %v1747, 1.0
        %v1749 = vrcp.pop %v1748
        %v1750 = vmul.f32 %v1748, %v1749
        %v1751 = vsub.f32 1.0, %v1750
        %v1752 = vmul.f32 %v1749, %v1751
        %v1753 = vadd.f32 %v1749, %v1752
        %vm1754 = vweird.f32 %v1748
        %vm1755 = vweird.f32 %v1749
        %vm1756 = vmor %vm1754, %vm1755
        %v1757 = vsel %vm1756, %v1749, %v1753
        %v1758 = vand.u32 2147483647, %v1748
        %vm1759 = vcmp.eq.f32.partialorder %v1758, 8.507059e+37
        %v1760 = vand.u32 %v1748, 2147483648
        %v1761 = vor.u32 1.1754944e-38, %v1760
        %v1762 = vsel %vm1759, %v1761, %v1757
        %v1763 = vmul.f32 %v1738, %v1762
        %v1764 = vmin.f32 %v1763, 1.0
        %v1765 = vmax.f32 %v1764, -1.0
        %v1766 = vmul.f32 %v1344, %v1344
        %v1767 = vmin.f32 16.0, %v1766
        %v1768 = vmul.f32 %v1767, 2.1237322e-06
        %v1769 = vadd.f32 %v1768, 0.00028619796
        %v1770 = vmul.f32 %v1767, %v1769
        %v1771 = vadd.f32 %v1770, 0.0036580483
        %v1772 = vmul.f32 %v1767, %v1771
        %v1773 = vadd.f32 %v1772, 0.05243302
        %v1774 = vmul.f32 %v1767, %v1773
        %v1775 = vadd.f32 %v1774, 0.18741608
        %v1776 = vmul.f32 %v1767, %v1775
        %v1777 = vadd.f32 %v1776, 1.1283791
        %v1778 = vmul.f32 %v1344, %v1777
        %v1779 = vmul.f32 %v1767, 3.8918573e-05
        %v1780 = vadd.f32 %v1779, 0.001143296
        %v1781 = vmul.f32 %v1767, %v1780
        %v1782 = vadd.f32 %v1781, 0.014752088
        %v1783 = vmul.f32 %v1767, %v1782
        %v1784 = vadd.f32 %v1783, 0.112945676
        %v1785 = vmul.f32 %v1767, %v1784
        %v1786 = vadd.f32 %v1785, 0.4994258
        %v1787 = vmul.f32 %v1767, %v1786
        %v1788 = vadd.f32 %v1787, 1.0
        %v1789 = vrcp.pop %v1788
        %v1790 = vmul.f32 %v1788, %v1789
        %v1791 = vsub.f32 1.0, %v1790
        %v1792 = vmul.f32 %v1789, %v1791
        %v1793 = vadd.f32 %v1789, %v1792
        %vm1794 = vweird.f32 %v1788
        %vm1795 = vweird.f32 %v1789
        %vm1796 = vmor %vm1794, %vm1795
        %v1797 = vsel %vm1796, %v1789, %v1793
        %v1798 = vand.u32 2147483647, %v1788
        %vm1799 = vcmp.eq.f32.partialorder %v1798, 8.507059e+37
        %v1800 = vand.u32 %v1788, 2147483648
        %v1801 = vor.u32 1.1754944e-38, %v1800
        %v1802 = vsel %vm1799, %v1801, %v1797
        %v1803 = vmul.f32 %v1778, %v1802
        %v1804 = vmin.f32 %v1803, 1.0
        %v1805 = vmax.f32 %v1804, -1.0
        %v1806 = vmul.f32 %v1345, %v1345
        %v1807 = vmin.f32 16.0, %v1806
        %v1808 = vmul.f32 %v1807, 2.1237322e-06
        %v1809 = vadd.f32 %v1808, 0.00028619796
        %v1810 = vmul.f32 %v1807, %v1809
        %v1811 = vadd.f32 %v1810, 0.0036580483
        %v1812 = vmul.f32 %v1807, %v1811
        %v1813 = vadd.f32 %v1812, 0.05243302
        %v1814 = vmul.f32 %v1807, %v1813
        %v1815 = vadd.f32 %v1814, 0.18741608
        %v1816 = vmul.f32 %v1807, %v1815
        %v1817 = vadd.f32 %v1816, 1.1283791
        %v1818 = vmul.f32 %v1345, %v1817
        %v1819 = vmul.f32 %v1807, 3.8918573e-05
        %v1820 = vadd.f32 %v1819, 0.001143296
        %v1821 = vmul.f32 %v1807, %v1820
        %v1822 = vadd.f32 %v1821, 0.014752088
        %v1823 = vmul.f32 %v1807, %v1822
        %v1824 = vadd.f32 %v1823, 0.112945676
        %v1825 = vmul.f32 %v1807, %v1824
        %v1826 = vadd.f32 %v1825, 0.4994258
        %v1827 = vmul.f32 %v1807, %v1826
        %v1828 = vadd.f32 %v1827, 1.0
        %v1829 = vrcp.pop %v1828
        %v1830 = vmul.f32 %v1828, %v1829
        %v1831 = vsub.f32 1.0, %v1830
        %v1832 = vmul.f32 %v1829, %v1831
        %v1833 = vadd.f32 %v1829, %v1832
        %vm1834 = vweird.f32 %v1828
        %vm1835 = vweird.f32 %v1829
        %vm1836 = vmor %vm1834, %vm1835
        %v1837 = vsel %vm1836, %v1829, %v1833
        %v1838 = vand.u32 2147483647, %v1828
        %vm1839 = vcmp.eq.f32.partialorder %v1838, 8.507059e+37
        %v1840 = vand.u32 %v1828, 2147483648
        %v1841 = vor.u32 1.1754944e-38, %v1840
        %v1842 = vsel %vm1839, %v1841, %v1837
        %v1843 = vmul.f32 %v1818, %v1842
        %v1844 = vmin.f32 %v1843, 1.0
        %v1845 = vmax.f32 %v1844, -1.0
        %v1846 = vmul.f32 %v1346, %v1346
        %v1847 = vmin.f32 16.0, %v1846
        %v1848 = vmul.f32 %v1847, 2.1237322e-06
        %v1849 = vadd.f32 %v1848, 0.00028619796
        %v1850 = vmul.f32 %v1847, %v1849
        %v1851 = vadd.f32 %v1850, 0.0036580483
        %v1852 = vmul.f32 %v1847, %v1851
        %v1853 = vadd.f32 %v1852, 0.05243302
        %v1854 = vmul.f32 %v1847, %v1853
        %v1855 = vadd.f32 %v1854, 0.18741608
        %v1856 = vmul.f32 %v1847, %v1855
        %v1857 = vadd.f32 %v1856, 1.1283791
        %v1858 = vmul.f32 %v1346, %v1857
        %v1859 = vmul.f32 %v1847, 3.8918573e-05
        %v1860 = vadd.f32 %v1859, 0.001143296
        %v1861 = vmul.f32 %v1847, %v1860
        %v1862 = vadd.f32 %v1861, 0.014752088
        %v1863 = vmul.f32 %v1847, %v1862
        %v1864 = vadd.f32 %v1863, 0.112945676
        %v1865 = vmul.f32 %v1847, %v1864
        %v1866 = vadd.f32 %v1865, 0.4994258
        %v1867 = vmul.f32 %v1847, %v1866
        %v1868 = vadd.f32 %v1867, 1.0
        %v1869 = vrcp.pop %v1868
        %v1870 = vmul.f32 %v1868, %v1869
        %v1871 = vsub.f32 1.0, %v1870
        %v1872 = vmul.f32 %v1869, %v1871
        %v1873 = vadd.f32 %v1869, %v1872
        %vm1874 = vweird.f32 %v1868
        %vm1875 = vweird.f32 %v1869
        %vm1876 = vmor %vm1874, %vm1875
        %v1877 = vsel %vm1876, %v1869, %v1873
        %v1878 = vand.u32 2147483647, %v1868
        %vm1879 = vcmp.eq.f32.partialorder %v1878, 8.507059e+37
        %v1880 = vand.u32 %v1868, 2147483648
        %v1881 = vor.u32 1.1754944e-38, %v1880
        %v1882 = vsel %vm1879, %v1881, %v1877
        %v1883 = vmul.f32 %v1858, %v1882
        %v1884 = vmin.f32 %v1883, 1.0
        %v1885 = vmax.f32 %v1884, -1.0
        %v1886 = vmul.f32 %v1347, %v1347
        %v1887 = vmin.f32 16.0, %v1886
        %v1888 = vmul.f32 %v1887, 2.1237322e-06
        %v1889 = vadd.f32 %v1888, 0.00028619796
        %v1890 = vmul.f32 %v1887, %v1889
        %v1891 = vadd.f32 %v1890, 0.0036580483
        %v1892 = vmul.f32 %v1887, %v1891
        %v1893 = vadd.f32 %v1892, 0.05243302
        %v1894 = vmul.f32 %v1887, %v1893
        %v1895 = vadd.f32 %v1894, 0.18741608
        %v1896 = vmul.f32 %v1887, %v1895
        %v1897 = vadd.f32 %v1896, 1.1283791
        %v1898 = vmul.f32 %v1347, %v1897
        %v1899 = vmul.f32 %v1887, 3.8918573e-05
        %v1900 = vadd.f32 %v1899, 0.001143296
        %v1901 = vmul.f32 %v1887, %v1900
        %v1902 = vadd.f32 %v1901, 0.014752088
        %v1903 = vmul.f32 %v1887, %v1902
        %v1904 = vadd.f32 %v1903, 0.112945676
        %v1905 = vmul.f32 %v1887, %v1904
        %v1906 = vadd.f32 %v1905, 0.4994258
        %v1907 = vmul.f32 %v1887, %v1906
        %v1908 = vadd.f32 %v1907, 1.0
        %v1909 = vrcp.pop %v1908
        %v1910 = vmul.f32 %v1908, %v1909
        %v1911 = vsub.f32 1.0, %v1910
        %v1912 = vmul.f32 %v1909, %v1911
        %v1913 = vadd.f32 %v1909, %v1912
        %vm1914 = vweird.f32 %v1908
        %vm1915 = vweird.f32 %v1909
        %vm1916 = vmor %vm1914, %vm1915
        %v1917 = vsel %vm1916, %v1909, %v1913
        %v1918 = vand.u32 2147483647, %v1908
        %vm1919 = vcmp.eq.f32.partialorder %v1918, 8.507059e+37
        %v1920 = vand.u32 %v1908, 2147483648
        %v1921 = vor.u32 1.1754944e-38, %v1920
        %v1922 = vsel %vm1919, %v1921, %v1917
        %v1923 = vmul.f32 %v1898, %v1922
        %v1924 = vmin.f32 %v1923, 1.0
        %v1925 = vmax.f32 %v1924, -1.0
        %v1926 = vmul.f32 %v1348, %v1348
        %v1927 = vmin.f32 16.0, %v1926
        %v1928 = vmul.f32 %v1927, 2.1237322e-06
        %v1929 = vadd.f32 %v1928, 0.00028619796
        %v1930 = vmul.f32 %v1927, %v1929
        %v1931 = vadd.f32 %v1930, 0.0036580483
        %v1932 = vmul.f32 %v1927, %v1931
        %v1933 = vadd.f32 %v1932, 0.05243302
        %v1934 = vmul.f32 %v1927, %v1933
        %v1935 = vadd.f32 %v1934, 0.18741608
        %v1936 = vmul.f32 %v1927, %v1935
        %v1937 = vadd.f32 %v1936, 1.1283791
        %v1938 = vmul.f32 %v1348, %v1937
        %v1939 = vmul.f32 %v1927, 3.8918573e-05
        %v1940 = vadd.f32 %v1939, 0.001143296
        %v1941 = vmul.f32 %v1927, %v1940
        %v1942 = vadd.f32 %v1941, 0.014752088
        %v1943 = vmul.f32 %v1927, %v1942
        %v1944 = vadd.f32 %v1943, 0.112945676
        %v1945 = vmul.f32 %v1927, %v1944
        %v1946 = vadd.f32 %v1945, 0.4994258
        %v1947 = vmul.f32 %v1927, %v1946
        %v1948 = vadd.f32 %v1947, 1.0
        %v1949 = vrcp.pop %v1948
        %v1950 = vmul.f32 %v1948, %v1949
        %v1951 = vsub.f32 1.0, %v1950
        %v1952 = vmul.f32 %v1949, %v1951
        %v1953 = vadd.f32 %v1949, %v1952
        %vm1954 = vweird.f32 %v1948
        %vm1955 = vweird.f32 %v1949
        %vm1956 = vmor %vm1954, %vm1955
        %v1957 = vsel %vm1956, %v1949, %v1953
        %v1958 = vand.u32 2147483647, %v1948
        %vm1959 = vcmp.eq.f32.partialorder %v1958, 8.507059e+37
        %v1960 = vand.u32 %v1948, 2147483648
        %v1961 = vor.u32 1.1754944e-38, %v1960
        %v1962 = vsel %vm1959, %v1961, %v1957
        %v1963 = vmul.f32 %v1938, %v1962
        %v1964 = vmin.f32 %v1963, 1.0
        %v1965 = vmax.f32 %v1964, -1.0
        %v1966 = vmul.f32 %v1349, %v1349
        %v1967 = vmin.f32 16.0, %v1966
        %v1968 = vmul.f32 %v1967, 2.1237322e-06
        %v1969 = vadd.f32 %v1968, 0.00028619796
        %v1970 = vmul.f32 %v1967, %v1969
        %v1971 = vadd.f32 %v1970, 0.0036580483
        %v1972 = vmul.f32 %v1967, %v1971
        %v1973 = vadd.f32 %v1972, 0.05243302
        %v1974 = vmul.f32 %v1967, %v1973
        %v1975 = vadd.f32 %v1974, 0.18741608
        %v1976 = vmul.f32 %v1967, %v1975
        %v1977 = vadd.f32 %v1976, 1.1283791
        %v1978 = vmul.f32 %v1349, %v1977
        %v1979 = vmul.f32 %v1967, 3.8918573e-05
        %v1980 = vadd.f32 %v1979, 0.001143296
        %v1981 = vmul.f32 %v1967, %v1980
        %v1982 = vadd.f32 %v1981, 0.014752088
        %v1983 = vmul.f32 %v1967, %v1982
        %v1984 = vadd.f32 %v1983, 0.112945676
        %v1985 = vmul.f32 %v1967, %v1984
        %v1986 = vadd.f32 %v1985, 0.4994258
        %v1987 = vmul.f32 %v1967, %v1986
        %v1988 = vadd.f32 %v1987, 1.0
        %v1989 = vrcp.pop %v1988
        %v1990 = vmul.f32 %v1988, %v1989
        %v1991 = vsub.f32 1.0, %v1990
        %v1992 = vmul.f32 %v1989, %v1991
        %v1993 = vadd.f32 %v1989, %v1992
        %vm1994 = vweird.f32 %v1988
        %vm1995 = vweird.f32 %v1989
        %vm1996 = vmor %vm1994, %vm1995
        %v1997 = vsel %vm1996, %v1989, %v1993
        %v1998 = vand.u32 2147483647, %v1988
        %vm1999 = vcmp.eq.f32.partialorder %v1998, 8.507059e+37
        %v2000 = vand.u32 %v1988, 2147483648
        %v2001 = vor.u32 1.1754944e-38, %v2000
        %v2002 = vsel %vm1999, %v2001, %v1997
        %v2003 = vmul.f32 %v1978, %v2002
        %v2004 = vmin.f32 %v2003, 1.0
        %v2005 = vmax.f32 %v2004, -1.0
        %v2006 = vmul.f32 %v1350, %v1350
        %v2007 = vmin.f32 16.0, %v2006
        %v2008 = vmul.f32 %v2007, 2.1237322e-06
        %v2009 = vadd.f32 %v2008, 0.00028619796
        %v2010 = vmul.f32 %v2007, %v2009
        %v2011 = vadd.f32 %v2010, 0.0036580483
        %v2012 = vmul.f32 %v2007, %v2011
        %v2013 = vadd.f32 %v2012, 0.05243302
        %v2014 = vmul.f32 %v2007, %v2013
        %v2015 = vadd.f32 %v2014, 0.18741608
        %v2016 = vmul.f32 %v2007, %v2015
        %v2017 = vadd.f32 %v2016, 1.1283791
        %v2018 = vmul.f32 %v1350, %v2017
        %v2019 = vmul.f32 %v2007, 3.8918573e-05
        %v2020 = vadd.f32 %v2019, 0.001143296
        %v2021 = vmul.f32 %v2007, %v2020
        %v2022 = vadd.f32 %v2021, 0.014752088
        %v2023 = vmul.f32 %v2007, %v2022
        %v2024 = vadd.f32 %v2023, 0.112945676
        %v2025 = vmul.f32 %v2007, %v2024
        %v2026 = vadd.f32 %v2025, 0.4994258
        %v2027 = vmul.f32 %v2007, %v2026
        %v2028 = vadd.f32 %v2027, 1.0
        %v2029 = vrcp.pop %v2028
        %v2030 = vmul.f32 %v2028, %v2029
        %v2031 = vsub.f32 1.0, %v2030
        %v2032 = vmul.f32 %v2029, %v2031
        %v2033 = vadd.f32 %v2029, %v2032
        %vm2034 = vweird.f32 %v2028
        %vm2035 = vweird.f32 %v2029
        %vm2036 = vmor %vm2034, %vm2035
        %v2037 = vsel %vm2036, %v2029, %v2033
        %v2038 = vand.u32 2147483647, %v2028
        %vm2039 = vcmp.eq.f32.partialorder %v2038, 8.507059e+37
        %v2040 = vand.u32 %v2028, 2147483648
        %v2041 = vor.u32 1.1754944e-38, %v2040
        %v2042 = vsel %vm2039, %v2041, %v2037
        %v2043 = vmul.f32 %v2018, %v2042
        %v2044 = vmin.f32 %v2043, 1.0
        %v2045 = vmax.f32 %v2044, -1.0
        %v2046 = vmul.f32 %v1351, %v1351
        %v2047 = vmin.f32 16.0, %v2046
        %v2048 = vmul.f32 %v2047, 2.1237322e-06
        %v2049 = vadd.f32 %v2048, 0.00028619796
        %v2050 = vmul.f32 %v2047, %v2049
        %v2051 = vadd.f32 %v2050, 0.0036580483
        %v2052 = vmul.f32 %v2047, %v2051
        %v2053 = vadd.f32 %v2052, 0.05243302
        %v2054 = vmul.f32 %v2047, %v2053
        %v2055 = vadd.f32 %v2054, 0.18741608
        %v2056 = vmul.f32 %v2047, %v2055
        %v2057 = vadd.f32 %v2056, 1.1283791
        %v2058 = vmul.f32 %v1351, %v2057
        %v2059 = vmul.f32 %v2047, 3.8918573e-05
        %v2060 = vadd.f32 %v2059, 0.001143296
        %v2061 = vmul.f32 %v2047, %v2060
        %v2062 = vadd.f32 %v2061, 0.014752088
        %v2063 = vmul.f32 %v2047, %v2062
        %v2064 = vadd.f32 %v2063, 0.112945676
        %v2065 = vmul.f32 %v2047, %v2064
        %v2066 = vadd.f32 %v2065, 0.4994258
        %v2067 = vmul.f32 %v2047, %v2066
        %v2068 = vadd.f32 %v2067, 1.0
        %v2069 = vrcp.pop %v2068
        %v2070 = vmul.f32 %v2068, %v2069
        %v2071 = vsub.f32 1.0, %v2070
        %v2072 = vmul.f32 %v2069, %v2071
        %v2073 = vadd.f32 %v2069, %v2072
        %vm2074 = vweird.f32 %v2068
        %vm2075 = vweird.f32 %v2069
        %vm2076 = vmor %vm2074, %vm2075
        %v2077 = vsel %vm2076, %v2069, %v2073
        %v2078 = vand.u32 2147483647, %v2068
        %vm2079 = vcmp.eq.f32.partialorder %v2078, 8.507059e+37
        %v2080 = vand.u32 %v2068, 2147483648
        %v2081 = vor.u32 1.1754944e-38, %v2080
        %v2082 = vsel %vm2079, %v2081, %v2077
        %v2083 = vmul.f32 %v2058, %v2082
        %v2084 = vmin.f32 %v2083, 1.0
        %v2085 = vmax.f32 %v2084, -1.0
        %v2086 = vmul.f32 %v1352, %v1352
        %v2087 = vmin.f32 16.0, %v2086
        %v2088 = vmul.f32 %v2087, 2.1237322e-06
        %v2089 = vadd.f32 %v2088, 0.00028619796
        %v2090 = vmul.f32 %v2087, %v2089
        %v2091 = vadd.f32 %v2090, 0.0036580483
        %v2092 = vmul.f32 %v2087, %v2091
        %v2093 = vadd.f32 %v2092, 0.05243302
        %v2094 = vmul.f32 %v2087, %v2093
        %v2095 = vadd.f32 %v2094, 0.18741608
        %v2096 = vmul.f32 %v2087, %v2095
        %v2097 = vadd.f32 %v2096, 1.1283791
        %v2098 = vmul.f32 %v1352, %v2097
        %v2099 = vmul.f32 %v2087, 3.8918573e-05
        %v2100 = vadd.f32 %v2099, 0.001143296
        %v2101 = vmul.f32 %v2087, %v2100
        %v2102 = vadd.f32 %v2101, 0.014752088
        %v2103 = vmul.f32 %v2087, %v2102
        %v2104 = vadd.f32 %v2103, 0.112945676
        %v2105 = vmul.f32 %v2087, %v2104
        %v2106 = vadd.f32 %v2105, 0.4994258
        %v2107 = vmul.f32 %v2087, %v2106
        %v2108 = vadd.f32 %v2107, 1.0
        %v2109 = vrcp.pop %v2108
        %v2110 = vmul.f32 %v2108, %v2109
        %v2111 = vsub.f32 1.0, %v2110
        %v2112 = vmul.f32 %v2109, %v2111
        %v2113 = vadd.f32 %v2109, %v2112
        %vm2114 = vweird.f32 %v2108
        %vm2115 = vweird.f32 %v2109
        %vm2116 = vmor %vm2114, %vm2115
        %v2117 = vsel %vm2116, %v2109, %v2113
        %v2118 = vand.u32 2147483647, %v2108
        %vm2119 = vcmp.eq.f32.partialorder %v2118, 8.507059e+37
        %v2120 = vand.u32 %v2108, 2147483648
        %v2121 = vor.u32 1.1754944e-38, %v2120
        %v2122 = vsel %vm2119, %v2121, %v2117
        %v2123 = vmul.f32 %v2098, %v2122
        %v2124 = vmin.f32 %v2123, 1.0
        %v2125 = vmax.f32 %v2124, -1.0
        %v2126 = vmul.f32 %v1353, %v1353
        %v2127 = vmin.f32 16.0, %v2126
        %v2128 = vmul.f32 %v2127, 2.1237322e-06
        %v2129 = vadd.f32 %v2128, 0.00028619796
        %v2130 = vmul.f32 %v2127, %v2129
        %v2131 = vadd.f32 %v2130, 0.0036580483
        %v2132 = vmul.f32 %v2127, %v2131
        %v2133 = vadd.f32 %v2132, 0.05243302
        %v2134 = vmul.f32 %v2127, %v2133
        %v2135 = vadd.f32 %v2134, 0.18741608
        %v2136 = vmul.f32 %v2127, %v2135
        %v2137 = vadd.f32 %v2136, 1.1283791
        %v2138 = vmul.f32 %v1353, %v2137
        %v2139 = vmul.f32 %v2127, 3.8918573e-05
        %v2140 = vadd.f32 %v2139, 0.001143296
        %v2141 = vmul.f32 %v2127, %v2140
        %v2142 = vadd.f32 %v2141, 0.014752088
        %v2143 = vmul.f32 %v2127, %v2142
        %v2144 = vadd.f32 %v2143, 0.112945676
        %v2145 = vmul.f32 %v2127, %v2144
        %v2146 = vadd.f32 %v2145, 0.4994258
        %v2147 = vmul.f32 %v2127, %v2146
        %v2148 = vadd.f32 %v2147, 1.0
        %v2149 = vrcp.pop %v2148
        %v2150 = vmul.f32 %v2148, %v2149
        %v2151 = vsub.f32 1.0, %v2150
        %v2152 = vmul.f32 %v2149, %v2151
        %v2153 = vadd.f32 %v2149, %v2152
        %vm2154 = vweird.f32 %v2148
        %vm2155 = vweird.f32 %v2149
        %vm2156 = vmor %vm2154, %vm2155
        %v2157 = vsel %vm2156, %v2149, %v2153
        %v2158 = vand.u32 2147483647, %v2148
        %vm2159 = vcmp.eq.f32.partialorder %v2158, 8.507059e+37
        %v2160 = vand.u32 %v2148, 2147483648
        %v2161 = vor.u32 1.1754944e-38, %v2160
        %v2162 = vsel %vm2159, %v2161, %v2157
        %v2163 = vmul.f32 %v2138, %v2162
        %v2164 = vmin.f32 %v2163, 1.0
        %v2165 = vmax.f32 %v2164, -1.0
        %v2166 = vmul.f32 %v1354, %v1354
        %v2167 = vmin.f32 16.0, %v2166
        %v2168 = vmul.f32 %v2167, 2.1237322e-06
        %v2169 = vadd.f32 %v2168, 0.00028619796
        %v2170 = vmul.f32 %v2167, %v2169
        %v2171 = vadd.f32 %v2170, 0.0036580483
        %v2172 = vmul.f32 %v2167, %v2171
        %v2173 = vadd.f32 %v2172, 0.05243302
        %v2174 = vmul.f32 %v2167, %v2173
        %v2175 = vadd.f32 %v2174, 0.18741608
        %v2176 = vmul.f32 %v2167, %v2175
        %v2177 = vadd.f32 %v2176, 1.1283791
        %v2178 = vmul.f32 %v1354, %v2177
        %v2179 = vmul.f32 %v2167, 3.8918573e-05
        %v2180 = vadd.f32 %v2179, 0.001143296
        %v2181 = vmul.f32 %v2167, %v2180
        %v2182 = vadd.f32 %v2181, 0.014752088
        %v2183 = vmul.f32 %v2167, %v2182
        %v2184 = vadd.f32 %v2183, 0.112945676
        %v2185 = vmul.f32 %v2167, %v2184
        %v2186 = vadd.f32 %v2185, 0.4994258
        %v2187 = vmul.f32 %v2167, %v2186
        %v2188 = vadd.f32 %v2187, 1.0
        %v2189 = vrcp.pop %v2188
        %v2190 = vmul.f32 %v2188, %v2189
        %v2191 = vsub.f32 1.0, %v2190
        %v2192 = vmul.f32 %v2189, %v2191
        %v2193 = vadd.f32 %v2189, %v2192
        %vm2194 = vweird.f32 %v2188
        %vm2195 = vweird.f32 %v2189
        %vm2196 = vmor %vm2194, %vm2195
        %v2197 = vsel %vm2196, %v2189, %v2193
        %v2198 = vand.u32 2147483647, %v2188
        %vm2199 = vcmp.eq.f32.partialorder %v2198, 8.507059e+37
        %v2200 = vand.u32 %v2188, 2147483648
        %v2201 = vor.u32 1.1754944e-38, %v2200
        %v2202 = vsel %vm2199, %v2201, %v2197
        %v2203 = vmul.f32 %v2178, %v2202
        %v2204 = vmin.f32 %v2203, 1.0
        %v2205 = vmax.f32 %v2204, -1.0
        %v2206 = vmul.f32 %v1355, %v1355
        %v2207 = vmin.f32 16.0, %v2206
        %v2208 = vmul.f32 %v2207, 2.1237322e-06
        %v2209 = vadd.f32 %v2208, 0.00028619796
        %v2210 = vmul.f32 %v2207, %v2209
        %v2211 = vadd.f32 %v2210, 0.0036580483
        %v2212 = vmul.f32 %v2207, %v2211
        %v2213 = vadd.f32 %v2212, 0.05243302
        %v2214 = vmul.f32 %v2207, %v2213
        %v2215 = vadd.f32 %v2214, 0.18741608
        %v2216 = vmul.f32 %v2207, %v2215
        %v2217 = vadd.f32 %v2216, 1.1283791
        %v2218 = vmul.f32 %v1355, %v2217
        %v2219 = vmul.f32 %v2207, 3.8918573e-05
        %v2220 = vadd.f32 %v2219, 0.001143296
        %v2221 = vmul.f32 %v2207, %v2220
        %v2222 = vadd.f32 %v2221, 0.014752088
        %v2223 = vmul.f32 %v2207, %v2222
        %v2224 = vadd.f32 %v2223, 0.112945676
        %v2225 = vmul.f32 %v2207, %v2224
        %v2226 = vadd.f32 %v2225, 0.4994258
        %v2227 = vmul.f32 %v2207, %v2226
        %v2228 = vadd.f32 %v2227, 1.0
        %v2229 = vrcp.pop %v2228
        %v2230 = vmul.f32 %v2228, %v2229
        %v2231 = vsub.f32 1.0, %v2230
        %v2232 = vmul.f32 %v2229, %v2231
        %v2233 = vadd.f32 %v2229, %v2232
        %vm2234 = vweird.f32 %v2228
        %vm2235 = vweird.f32 %v2229
        %vm2236 = vmor %vm2234, %vm2235
        %v2237 = vsel %vm2236, %v2229, %v2233
        %v2238 = vand.u32 2147483647, %v2228
        %vm2239 = vcmp.eq.f32.partialorder %v2238, 8.507059e+37
        %v2240 = vand.u32 %v2228, 2147483648
        %v2241 = vor.u32 1.1754944e-38, %v2240
        %v2242 = vsel %vm2239, %v2241, %v2237
        %v2243 = vmul.f32 %v2218, %v2242
        %v2244 = vmin.f32 %v2243, 1.0
        %v2245 = vmax.f32 %v2244, -1.0
        %v2246 = vmul.f32 %v1356, %v1356
        %v2247 = vmin.f32 16.0, %v2246
        %v2248 = vmul.f32 %v2247, 2.1237322e-06
        %v2249 = vadd.f32 %v2248, 0.00028619796
        %v2250 = vmul.f32 %v2247, %v2249
        %v2251 = vadd.f32 %v2250, 0.0036580483
        %v2252 = vmul.f32 %v2247, %v2251
        %v2253 = vadd.f32 %v2252, 0.05243302
        %v2254 = vmul.f32 %v2247, %v2253
        %v2255 = vadd.f32 %v2254, 0.18741608
        %v2256 = vmul.f32 %v2247, %v2255
        %v2257 = vadd.f32 %v2256, 1.1283791
        %v2258 = vmul.f32 %v1356, %v2257
        %v2259 = vmul.f32 %v2247, 3.8918573e-05
        %v2260 = vadd.f32 %v2259, 0.001143296
        %v2261 = vmul.f32 %v2247, %v2260
        %v2262 = vadd.f32 %v2261, 0.014752088
        %v2263 = vmul.f32 %v2247, %v2262
        %v2264 = vadd.f32 %v2263, 0.112945676
        %v2265 = vmul.f32 %v2247, %v2264
        %v2266 = vadd.f32 %v2265, 0.4994258
        %v2267 = vmul.f32 %v2247, %v2266
        %v2268 = vadd.f32 %v2267, 1.0
        %v2269 = vrcp.pop %v2268
        %v2270 = vmul.f32 %v2268, %v2269
        %v2271 = vsub.f32 1.0, %v2270
        %v2272 = vmul.f32 %v2269, %v2271
        %v2273 = vadd.f32 %v2269, %v2272
        %vm2274 = vweird.f32 %v2268
        %vm2275 = vweird.f32 %v2269
        %vm2276 = vmor %vm2274, %vm2275
        %v2277 = vsel %vm2276, %v2269, %v2273
        %v2278 = vand.u32 2147483647, %v2268
        %vm2279 = vcmp.eq.f32.partialorder %v2278, 8.507059e+37
        %v2280 = vand.u32 %v2268, 2147483648
        %v2281 = vor.u32 1.1754944e-38, %v2280
        %v2282 = vsel %vm2279, %v2281, %v2277
        %v2283 = vmul.f32 %v2258, %v2282
        %v2284 = vmin.f32 %v2283, 1.0
        %v2285 = vmax.f32 %v2284, -1.0
        %v2286 = vmul.f32 %v1357, %v1357
        %v2287 = vmin.f32 16.0, %v2286
        %v2288 = vmul.f32 %v2287, 2.1237322e-06
        %v2289 = vadd.f32 %v2288, 0.00028619796
        %v2290 = vmul.f32 %v2287, %v2289
        %v2291 = vadd.f32 %v2290, 0.0036580483
        %v2292 = vmul.f32 %v2287, %v2291
        %v2293 = vadd.f32 %v2292, 0.05243302
        %v2294 = vmul.f32 %v2287, %v2293
        %v2295 = vadd.f32 %v2294, 0.18741608
        %v2296 = vmul.f32 %v2287, %v2295
        %v2297 = vadd.f32 %v2296, 1.1283791
        %v2298 = vmul.f32 %v1357, %v2297
        %v2299 = vmul.f32 %v2287, 3.8918573e-05
        %v2300 = vadd.f32 %v2299, 0.001143296
        %v2301 = vmul.f32 %v2287, %v2300
        %v2302 = vadd.f32 %v2301, 0.014752088
        %v2303 = vmul.f32 %v2287, %v2302
        %v2304 = vadd.f32 %v2303, 0.112945676
        %v2305 = vmul.f32 %v2287, %v2304
        %v2306 = vadd.f32 %v2305, 0.4994258
        %v2307 = vmul.f32 %v2287, %v2306
        %v2308 = vadd.f32 %v2307, 1.0
        %v2309 = vrcp.pop %v2308
        %v2310 = vmul.f32 %v2308, %v2309
        %v2311 = vsub.f32 1.0, %v2310
        %v2312 = vmul.f32 %v2309, %v2311
        %v2313 = vadd.f32 %v2309, %v2312
        %vm2314 = vweird.f32 %v2308
        %vm2315 = vweird.f32 %v2309
        %vm2316 = vmor %vm2314, %vm2315
        %v2317 = vsel %vm2316, %v2309, %v2313
        %v2318 = vand.u32 2147483647, %v2308
        %vm2319 = vcmp.eq.f32.partialorder %v2318, 8.507059e+37
        %v2320 = vand.u32 %v2308, 2147483648
        %v2321 = vor.u32 1.1754944e-38, %v2320
        %v2322 = vsel %vm2319, %v2321, %v2317
        %v2323 = vmul.f32 %v2298, %v2322
        %v2324 = vmin.f32 %v2323, 1.0
        %v2325 = vmax.f32 %v2324, -1.0
        %v2326 = vmul.f32 %v1358, %v1358
        %v2327 = vmin.f32 16.0, %v2326
        %v2328 = vmul.f32 %v2327, 2.1237322e-06
        %v2329 = vadd.f32 %v2328, 0.00028619796
        %v2330 = vmul.f32 %v2327, %v2329
        %v2331 = vadd.f32 %v2330, 0.0036580483
        %v2332 = vmul.f32 %v2327, %v2331
        %v2333 = vadd.f32 %v2332, 0.05243302
        %v2334 = vmul.f32 %v2327, %v2333
        %v2335 = vadd.f32 %v2334, 0.18741608
        %v2336 = vmul.f32 %v2327, %v2335
        %v2337 = vadd.f32 %v2336, 1.1283791
        %v2338 = vmul.f32 %v1358, %v2337
        %v2339 = vmul.f32 %v2327, 3.8918573e-05
        %v2340 = vadd.f32 %v2339, 0.001143296
        %v2341 = vmul.f32 %v2327, %v2340
        %v2342 = vadd.f32 %v2341, 0.014752088
        %v2343 = vmul.f32 %v2327, %v2342
        %v2344 = vadd.f32 %v2343, 0.112945676
        %v2345 = vmul.f32 %v2327, %v2344
        %v2346 = vadd.f32 %v2345, 0.4994258
        %v2347 = vmul.f32 %v2327, %v2346
        %v2348 = vadd.f32 %v2347, 1.0
        %v2349 = vrcp.pop %v2348
        %v2350 = vmul.f32 %v2348, %v2349
        %v2351 = vsub.f32 1.0, %v2350
        %v2352 = vmul.f32 %v2349, %v2351
        %v2353 = vadd.f32 %v2349, %v2352
        %vm2354 = vweird.f32 %v2348
        %vm2355 = vweird.f32 %v2349
        %vm2356 = vmor %vm2354, %vm2355
        %v2357 = vsel %vm2356, %v2349, %v2353
        %v2358 = vand.u32 2147483647, %v2348
        %vm2359 = vcmp.eq.f32.partialorder %v2358, 8.507059e+37
        %v2360 = vand.u32 %v2348, 2147483648
        %v2361 = vor.u32 1.1754944e-38, %v2360
        %v2362 = vsel %vm2359, %v2361, %v2357
        %v2363 = vmul.f32 %v2338, %v2362
        %v2364 = vmin.f32 %v2363, 1.0
        %v2365 = vmax.f32 %v2364, -1.0
        %v2366 = vmul.f32 %v1359, %v1359
        %v2367 = vmin.f32 16.0, %v2366
        %v2368 = vmul.f32 %v2367, 2.1237322e-06
        %v2369 = vadd.f32 %v2368, 0.00028619796
        %v2370 = vmul.f32 %v2367, %v2369
        %v2371 = vadd.f32 %v2370, 0.0036580483
        %v2372 = vmul.f32 %v2367, %v2371
        %v2373 = vadd.f32 %v2372, 0.05243302
        %v2374 = vmul.f32 %v2367, %v2373
        %v2375 = vadd.f32 %v2374, 0.18741608
        %v2376 = vmul.f32 %v2367, %v2375
        %v2377 = vadd.f32 %v2376, 1.1283791
        %v2378 = vmul.f32 %v1359, %v2377
        %v2379 = vmul.f32 %v2367, 3.8918573e-05
        %v2380 = vadd.f32 %v2379, 0.001143296
        %v2381 = vmul.f32 %v2367, %v2380
        %v2382 = vadd.f32 %v2381, 0.014752088
        %v2383 = vmul.f32 %v2367, %v2382
        %v2384 = vadd.f32 %v2383, 0.112945676
        %v2385 = vmul.f32 %v2367, %v2384
        %v2386 = vadd.f32 %v2385, 0.4994258
        %v2387 = vmul.f32 %v2367, %v2386
        %v2388 = vadd.f32 %v2387, 1.0
        %v2389 = vrcp.pop %v2388
        %v2390 = vmul.f32 %v2388, %v2389
        %v2391 = vsub.f32 1.0, %v2390
        %v2392 = vmul.f32 %v2389, %v2391
        %v2393 = vadd.f32 %v2389, %v2392
        %vm2394 = vweird.f32 %v2388
        %vm2395 = vweird.f32 %v2389
        %vm2396 = vmor %vm2394, %vm2395
        %v2397 = vsel %vm2396, %v2389, %v2393
        %v2398 = vand.u32 2147483647, %v2388
        %vm2399 = vcmp.eq.f32.partialorder %v2398, 8.507059e+37
        %v2400 = vand.u32 %v2388, 2147483648
        %v2401 = vor.u32 1.1754944e-38, %v2400
        %v2402 = vsel %vm2399, %v2401, %v2397
        %v2403 = vmul.f32 %v2378, %v2402
        %v2404 = vmin.f32 %v2403, 1.0
        %v2405 = vmax.f32 %v2404, -1.0
        %v2406 = vmul.f32 %v1360, %v1360
        %v2407 = vmin.f32 16.0, %v2406
        %v2408 = vmul.f32 %v2407, 2.1237322e-06
        %v2409 = vadd.f32 %v2408, 0.00028619796
        %v2410 = vmul.f32 %v2407, %v2409
        %v2411 = vadd.f32 %v2410, 0.0036580483
        %v2412 = vmul.f32 %v2407, %v2411
        %v2413 = vadd.f32 %v2412, 0.05243302
        %v2414 = vmul.f32 %v2407, %v2413
        %v2415 = vadd.f32 %v2414, 0.18741608
        %v2416 = vmul.f32 %v2407, %v2415
        %v2417 = vadd.f32 %v2416, 1.1283791
        %v2418 = vmul.f32 %v1360, %v2417
        %v2419 = vmul.f32 %v2407, 3.8918573e-05
        %v2420 = vadd.f32 %v2419, 0.001143296
        %v2421 = vmul.f32 %v2407, %v2420
        %v2422 = vadd.f32 %v2421, 0.014752088
        %v2423 = vmul.f32 %v2407, %v2422
        %v2424 = vadd.f32 %v2423, 0.112945676
        %v2425 = vmul.f32 %v2407, %v2424
        %v2426 = vadd.f32 %v2425, 0.4994258
        %v2427 = vmul.f32 %v2407, %v2426
        %v2428 = vadd.f32 %v2427, 1.0
        %v2429 = vrcp.pop %v2428
        %v2430 = vmul.f32 %v2428, %v2429
        %v2431 = vsub.f32 1.0, %v2430
        %v2432 = vmul.f32 %v2429, %v2431
        %v2433 = vadd.f32 %v2429, %v2432
        %vm2434 = vweird.f32 %v2428
        %vm2435 = vweird.f32 %v2429
        %vm2436 = vmor %vm2434, %vm2435
        %v2437 = vsel %vm2436, %v2429, %v2433
        %v2438 = vand.u32 2147483647, %v2428
        %vm2439 = vcmp.eq.f32.partialorder %v2438, 8.507059e+37
        %v2440 = vand.u32 %v2428, 2147483648
        %v2441 = vor.u32 1.1754944e-38, %v2440
        %v2442 = vsel %vm2439, %v2441, %v2437
        %v2443 = vmul.f32 %v2418, %v2442
        %v2444 = vmin.f32 %v2443, 1.0
        %v2445 = vmax.f32 %v2444, -1.0
        %v2446 = vmul.f32 %v1361, %v1361
        %v2447 = vmin.f32 16.0, %v2446
        %v2448 = vmul.f32 %v2447, 2.1237322e-06
        %v2449 = vadd.f32 %v2448, 0.00028619796
        %v2450 = vmul.f32 %v2447, %v2449
        %v2451 = vadd.f32 %v2450, 0.0036580483
        %v2452 = vmul.f32 %v2447, %v2451
        %v2453 = vadd.f32 %v2452, 0.05243302
        %v2454 = vmul.f32 %v2447, %v2453
        %v2455 = vadd.f32 %v2454, 0.18741608
        %v2456 = vmul.f32 %v2447, %v2455
        %v2457 = vadd.f32 %v2456, 1.1283791
        %v2458 = vmul.f32 %v1361, %v2457
        %v2459 = vmul.f32 %v2447, 3.8918573e-05
        %v2460 = vadd.f32 %v2459, 0.001143296
        %v2461 = vmul.f32 %v2447, %v2460
        %v2462 = vadd.f32 %v2461, 0.014752088
        %v2463 = vmul.f32 %v2447, %v2462
        %v2464 = vadd.f32 %v2463, 0.112945676
        %v2465 = vmul.f32 %v2447, %v2464
        %v2466 = vadd.f32 %v2465, 0.4994258
        %v2467 = vmul.f32 %v2447, %v2466
        %v2468 = vadd.f32 %v2467, 1.0
        %v2469 = vrcp.pop %v2468
        %v2470 = vmul.f32 %v2468, %v2469
        %v2471 = vsub.f32 1.0, %v2470
        %v2472 = vmul.f32 %v2469, %v2471
        %v2473 = vadd.f32 %v2469, %v2472
        %vm2474 = vweird.f32 %v2468
        %vm2475 = vweird.f32 %v2469
        %vm2476 = vmor %vm2474, %vm2475
        %v2477 = vsel %vm2476, %v2469, %v2473
        %v2478 = vand.u32 2147483647, %v2468
        %vm2479 = vcmp.eq.f32.partialorder %v2478, 8.507059e+37
        %v2480 = vand.u32 %v2468, 2147483648
        %v2481 = vor.u32 1.1754944e-38, %v2480
        %v2482 = vsel %vm2479, %v2481, %v2477
        %v2483 = vmul.f32 %v2458, %v2482
        %v2484 = vmin.f32 %v2483, 1.0
        %v2485 = vmax.f32 %v2484, -1.0
        %v2486 = vmul.f32 %v1362, %v1362
        %v2487 = vmin.f32 16.0, %v2486
        %v2488 = vmul.f32 %v2487, 2.1237322e-06
        %v2489 = vadd.f32 %v2488, 0.00028619796
        %v2490 = vmul.f32 %v2487, %v2489
        %v2491 = vadd.f32 %v2490, 0.0036580483
        %v2492 = vmul.f32 %v2487, %v2491
        %v2493 = vadd.f32 %v2492, 0.05243302
        %v2494 = vmul.f32 %v2487, %v2493
        %v2495 = vadd.f32 %v2494, 0.18741608
        %v2496 = vmul.f32 %v2487, %v2495
        %v2497 = vadd.f32 %v2496, 1.1283791
        %v2498 = vmul.f32 %v1362, %v2497
        %v2499 = vmul.f32 %v2487, 3.8918573e-05
        %v2500 = vadd.f32 %v2499, 0.001143296
        %v2501 = vmul.f32 %v2487, %v2500
        %v2502 = vadd.f32 %v2501, 0.014752088
        %v2503 = vmul.f32 %v2487, %v2502
        %v2504 = vadd.f32 %v2503, 0.112945676
        %v2505 = vmul.f32 %v2487, %v2504
        %v2506 = vadd.f32 %v2505, 0.4994258
        %v2507 = vmul.f32 %v2487, %v2506
        %v2508 = vadd.f32 %v2507, 1.0
        %v2509 = vrcp.pop %v2508
        %v2510 = vmul.f32 %v2508, %v2509
        %v2511 = vsub.f32 1.0, %v2510
        %v2512 = vmul.f32 %v2509, %v2511
        %v2513 = vadd.f32 %v2509, %v2512
        %vm2514 = vweird.f32 %v2508
        %vm2515 = vweird.f32 %v2509
        %vm2516 = vmor %vm2514, %vm2515
        %v2517 = vsel %vm2516, %v2509, %v2513
        %v2518 = vand.u32 2147483647, %v2508
        %vm2519 = vcmp.eq.f32.partialorder %v2518, 8.507059e+37
        %v2520 = vand.u32 %v2508, 2147483648
        %v2521 = vor.u32 1.1754944e-38, %v2520
        %v2522 = vsel %vm2519, %v2521, %v2517
        %v2523 = vmul.f32 %v2498, %v2522
        %v2524 = vmin.f32 %v2523, 1.0
        %v2525 = vmax.f32 %v2524, -1.0
        %v2526 = vmul.f32 %v1363, %v1363
        %v2527 = vmin.f32 16.0, %v2526
        %v2528 = vmul.f32 %v2527, 2.1237322e-06
        %v2529 = vadd.f32 %v2528, 0.00028619796
        %v2530 = vmul.f32 %v2527, %v2529
        %v2531 = vadd.f32 %v2530, 0.0036580483
        %v2532 = vmul.f32 %v2527, %v2531
        %v2533 = vadd.f32 %v2532, 0.05243302
        %v2534 = vmul.f32 %v2527, %v2533
        %v2535 = vadd.f32 %v2534, 0.18741608
        %v2536 = vmul.f32 %v2527, %v2535
        %v2537 = vadd.f32 %v2536, 1.1283791
        %v2538 = vmul.f32 %v1363, %v2537
        %v2539 = vmul.f32 %v2527, 3.8918573e-05
        %v2540 = vadd.f32 %v2539, 0.001143296
        %v2541 = vmul.f32 %v2527, %v2540
        %v2542 = vadd.f32 %v2541, 0.014752088
        %v2543 = vmul.f32 %v2527, %v2542
        %v2544 = vadd.f32 %v2543, 0.112945676
        %v2545 = vmul.f32 %v2527, %v2544
        %v2546 = vadd.f32 %v2545, 0.4994258
        %v2547 = vmul.f32 %v2527, %v2546
        %v2548 = vadd.f32 %v2547, 1.0
        %v2549 = vrcp.pop %v2548
        %v2550 = vmul.f32 %v2548, %v2549
        %v2551 = vsub.f32 1.0, %v2550
        %v2552 = vmul.f32 %v2549, %v2551
        %v2553 = vadd.f32 %v2549, %v2552
        %vm2554 = vweird.f32 %v2548
        %vm2555 = vweird.f32 %v2549
        %vm2556 = vmor %vm2554, %vm2555
        %v2557 = vsel %vm2556, %v2549, %v2553
        %v2558 = vand.u32 2147483647, %v2548
        %vm2559 = vcmp.eq.f32.partialorder %v2558, 8.507059e+37
        %v2560 = vand.u32 %v2548, 2147483648
        %v2561 = vor.u32 1.1754944e-38, %v2560
        %v2562 = vsel %vm2559, %v2561, %v2557
        %v2563 = vmul.f32 %v2538, %v2562
        %v2564 = vmin.f32 %v2563, 1.0
        %v2565 = vmax.f32 %v2564, -1.0
        %v2566 = vmul.f32 %v1364, %v1364
        %v2567 = vmin.f32 16.0, %v2566
        %v2568 = vmul.f32 %v2567, 2.1237322e-06
        %v2569 = vadd.f32 %v2568, 0.00028619796
        %v2570 = vmul.f32 %v2567, %v2569
        %v2571 = vadd.f32 %v2570, 0.0036580483
        %v2572 = vmul.f32 %v2567, %v2571
        %v2573 = vadd.f32 %v2572, 0.05243302
        %v2574 = vmul.f32 %v2567, %v2573
        %v2575 = vadd.f32 %v2574, 0.18741608
        %v2576 = vmul.f32 %v2567, %v2575
        %v2577 = vadd.f32 %v2576, 1.1283791
        %v2578 = vmul.f32 %v1364, %v2577
        %v2579 = vmul.f32 %v2567, 3.8918573e-05
        %v2580 = vadd.f32 %v2579, 0.001143296
        %v2581 = vmul.f32 %v2567, %v2580
        %v2582 = vadd.f32 %v2581, 0.014752088
        %v2583 = vmul.f32 %v2567, %v2582
        %v2584 = vadd.f32 %v2583, 0.112945676
        %v2585 = vmul.f32 %v2567, %v2584
        %v2586 = vadd.f32 %v2585, 0.4994258
        %v2587 = vmul.f32 %v2567, %v2586
        %v2588 = vadd.f32 %v2587, 1.0
        %v2589 = vrcp.pop %v2588
        %v2590 = vmul.f32 %v2588, %v2589
        %v2591 = vsub.f32 1.0, %v2590
        %v2592 = vmul.f32 %v2589, %v2591
        %v2593 = vadd.f32 %v2589, %v2592
        %vm2594 = vweird.f32 %v2588
        %vm2595 = vweird.f32 %v2589
        %vm2596 = vmor %vm2594, %vm2595
        %v2597 = vsel %vm2596, %v2589, %v2593
        %v2598 = vand.u32 2147483647, %v2588
        %vm2599 = vcmp.eq.f32.partialorder %v2598, 8.507059e+37
        %v2600 = vand.u32 %v2588, 2147483648
        %v2601 = vor.u32 1.1754944e-38, %v2600
        %v2602 = vsel %vm2599, %v2601, %v2597
        %v2603 = vmul.f32 %v2578, %v2602
        %v2604 = vmin.f32 %v2603, 1.0
        %v2605 = vmax.f32 %v2604, -1.0
        %v2606 = vmul.f32 %v1365, %v1365
        %v2607 = vmin.f32 16.0, %v2606
        %v2608 = vmul.f32 %v2607, 2.1237322e-06
        %v2609 = vadd.f32 %v2608, 0.00028619796
        %v2610 = vmul.f32 %v2607, %v2609
        %v2611 = vadd.f32 %v2610, 0.0036580483
        %v2612 = vmul.f32 %v2607, %v2611
        %v2613 = vadd.f32 %v2612, 0.05243302
        %v2614 = vmul.f32 %v2607, %v2613
        %v2615 = vadd.f32 %v2614, 0.18741608
        %v2616 = vmul.f32 %v2607, %v2615
        %v2617 = vadd.f32 %v2616, 1.1283791
        %v2618 = vmul.f32 %v1365, %v2617
        %v2619 = vmul.f32 %v2607, 3.8918573e-05
        %v2620 = vadd.f32 %v2619, 0.001143296
        %v2621 = vmul.f32 %v2607, %v2620
        %v2622 = vadd.f32 %v2621, 0.014752088
        %v2623 = vmul.f32 %v2607, %v2622
        %v2624 = vadd.f32 %v2623, 0.112945676
        %v2625 = vmul.f32 %v2607, %v2624
        %v2626 = vadd.f32 %v2625, 0.4994258
        %v2627 = vmul.f32 %v2607, %v2626
        %v2628 = vadd.f32 %v2627, 1.0
        %v2629 = vrcp.pop %v2628
        %v2630 = vmul.f32 %v2628, %v2629
        %v2631 = vsub.f32 1.0, %v2630
        %v2632 = vmul.f32 %v2629, %v2631
        %v2633 = vadd.f32 %v2629, %v2632
        %vm2634 = vweird.f32 %v2628
        %vm2635 = vweird.f32 %v2629
        %vm2636 = vmor %vm2634, %vm2635
        %v2637 = vsel %vm2636, %v2629, %v2633
        %v2638 = vand.u32 2147483647, %v2628
        %vm2639 = vcmp.eq.f32.partialorder %v2638, 8.507059e+37
        %v2640 = vand.u32 %v2628, 2147483648
        %v2641 = vor.u32 1.1754944e-38, %v2640
        %v2642 = vsel %vm2639, %v2641, %v2637
        %v2643 = vmul.f32 %v2618, %v2642
        %v2644 = vmin.f32 %v2643, 1.0
        %v2645 = vmax.f32 %v2644, -1.0
        %v2646 = vadd.f32 %v1405, 1.0
        %v2647 = vadd.f32 %v1445, 1.0
        %v2648 = vadd.f32 %v1485, 1.0
        %v2649 = vadd.f32 %v1525, 1.0
        %v2650 = vadd.f32 %v1565, 1.0
        %v2651 = vadd.f32 %v1605, 1.0
        %v2652 = vadd.f32 %v1645, 1.0
        %v2653 = vadd.f32 %v1685, 1.0
        %v2654 = vadd.f32 %v1725, 1.0
        %v2655 = vadd.f32 %v1765, 1.0
        %v2656 = vadd.f32 %v1805, 1.0
        %v2657 = vadd.f32 %v1845, 1.0
        %v2658 = vadd.f32 %v1885, 1.0
        %v2659 = vadd.f32 %v1925, 1.0
        %v2660 = vadd.f32 %v1965, 1.0
        %v2661 = vadd.f32 %v2005, 1.0
        %v2662 = vadd.f32 %v2045, 1.0
        %v2663 = vadd.f32 %v2085, 1.0
        %v2664 = vadd.f32 %v2125, 1.0
        %v2665 = vadd.f32 %v2165, 1.0
        %v2666 = vadd.f32 %v2205, 1.0
        %v2667 = vadd.f32 %v2245, 1.0
        %v2668 = vadd.f32 %v2285, 1.0
        %v2669 = vadd.f32 %v2325, 1.0
        %v2670 = vadd.f32 %v2365, 1.0
        %v2671 = vadd.f32 %v2405, 1.0
        %v2672 = vadd.f32 %v2445, 1.0
        %v2673 = vadd.f32 %v2485, 1.0
        %v2674 = vadd.f32 %v2525, 1.0
        %v2675 = vadd.f32 %v2565, 1.0
        %v2676 = vadd.f32 %v2605, 1.0
        %v2677 = vadd.f32 %v2645, 1.0
        %v2678 = vmul.f32 %v1302, %v2646
        %v2679 = vmul.f32 %v1303, %v2647
        %v2680 = vmul.f32 %v1304, %v2648
        %v2681 = vmul.f32 %v1305, %v2649
        %v2682 = vmul.f32 %v1306, %v2650
        %v2683 = vmul.f32 %v1307, %v2651
        %v2684 = vmul.f32 %v1308, %v2652
        %v2685 = vmul.f32 %v1309, %v2653
        %v2686 = vmul.f32 %v1310, %v2654
        %v2687 = vmul.f32 %v1311, %v2655
        %v2688 = vmul.f32 %v1312, %v2656
        %v2689 = vmul.f32 %v1313, %v2657
        %v2690 = vmul.f32 %v1314, %v2658
        %v2691 = vmul.f32 %v1315, %v2659
        %v2692 = vmul.f32 %v1316, %v2660
        %v2693 = vmul.f32 %v1317, %v2661
        %v2694 = vmul.f32 %v1318, %v2662
        %v2695 = vmul.f32 %v1319, %v2663
        %v2696 = vmul.f32 %v1320, %v2664
        %v2697 = vmul.f32 %v1321, %v2665
        %v2698 = vmul.f32 %v1322, %v2666
        %v2699 = vmul.f32 %v1323, %v2667
        %v2700 = vmul.f32 %v1324, %v2668
        %v2701 = vmul.f32 %v1325, %v2669
        %v2702 = vmul.f32 %v1326, %v2670
        %v2703 = vmul.f32 %v1327, %v2671
        %v2704 = vmul.f32 %v1328, %v2672
        %v2705 = vmul.f32 %v1329, %v2673
        %v2706 = vmul.f32 %v1330, %v2674
        %v2707 = vmul.f32 %v1331, %v2675
        %v2708 = vmul.f32 %v1332, %v2676
        %v2709 = vmul.f32 %v1333, %v2677
        %2710 = vmatpush.msra.mxu0 %v925
        %2711 = vmatpush.msra.mxu0 %v924
        %2712 = vmatpush.msra.mxu0 %v923
        %2713 = vmatpush.msra.mxu0 %v922
        %2714 = vmatpush.msra.mxu0 %v921
        %2715 = vmatpush.msra.mxu0 %v920
        %2716 = vmatpush.msra.mxu0 %v919
        %2717 = vmatpush.msra.mxu0 %v918
        %2718 = vmatpush.msra.mxu0 %v917
        %2719 = vmatpush.msra.mxu0 %v916
        %2720 = vmatpush.msra.mxu0 %v915
        %2721 = vmatpush.msra.mxu0 %v914
        %2722 = vmatpush.msra.mxu0 %v913
        %2723 = vmatpush.msra.mxu0 %v912
        %2724 = vmatpush.msra.mxu0 %v911
        %2725 = vmatpush.msra.mxu0 %v910
        %2726 = vmatmul.f32.gmra.mxu0 %v2678
        %v2727 = vpop.f32.mrf.mxu0
        %v2728 = vadd.f32 0.0, %v2727
        %2729 = vmatmul.f32.gmra.mxu0 %v2680
        %v2730 = vpop.f32.mrf.mxu0
        %v2731 = vadd.f32 0.0, %v2730
        %2732 = vmatmul.f32.gmra.mxu0 %v2682
        %v2733 = vpop.f32.mrf.mxu0
        %v2734 = vadd.f32 0.0, %v2733
        %2735 = vmatmul.f32.gmra.mxu0 %v2684
        %v2736 = vpop.f32.mrf.mxu0
        %v2737 = vadd.f32 0.0, %v2736
        %2738 = vmatmul.f32.gmra.mxu0 %v2686
        %v2739 = vpop.f32.mrf.mxu0
        %v2740 = vadd.f32 0.0, %v2739
        %2741 = vmatmul.f32.gmra.mxu0 %v2688
        %v2742 = vpop.f32.mrf.mxu0
        %v2743 = vadd.f32 0.0, %v2742
        %2744 = vmatmul.f32.gmra.mxu0 %v2690
        %v2745 = vpop.f32.mrf.mxu0
        %v2746 = vadd.f32 0.0, %v2745
        %2747 = vmatmul.f32.gmra.mxu0 %v2692
        %v2748 = vpop.f32.mrf.mxu0
        %v2749 = vadd.f32 0.0, %v2748
        %2750 = vmatmul.f32.gmra.mxu0 %v2694
        %v2751 = vpop.f32.mrf.mxu0
        %v2752 = vadd.f32 0.0, %v2751
        %2753 = vmatmul.f32.gmra.mxu0 %v2696
        %v2754 = vpop.f32.mrf.mxu0
        %v2755 = vadd.f32 0.0, %v2754
        %2756 = vmatmul.f32.gmra.mxu0 %v2698
        %v2757 = vpop.f32.mrf.mxu0
        %v2758 = vadd.f32 0.0, %v2757
        %2759 = vmatmul.f32.gmra.mxu0 %v2700
        %v2760 = vpop.f32.mrf.mxu0
        %v2761 = vadd.f32 0.0, %v2760
        %2762 = vmatmul.f32.gmra.mxu0 %v2702
        %v2763 = vpop.f32.mrf.mxu0
        %v2764 = vadd.f32 0.0, %v2763
        %2765 = vmatmul.f32.gmra.mxu0 %v2704
        %v2766 = vpop.f32.mrf.mxu0
        %v2767 = vadd.f32 0.0, %v2766
        %2768 = vmatmul.f32.gmra.mxu0 %v2706
        %v2769 = vpop.f32.mrf.mxu0
        %v2770 = vadd.f32 0.0, %v2769
        %2771 = vmatmul.f32.gmra.mxu0 %v2708
        %v2772 = vpop.f32.mrf.mxu0
        %v2773 = vadd.f32 0.0, %v2772
        %2774 = vdwg.mxu0
        %2775 = vmatpush.msra.mxu0 %v941
        %2776 = vmatpush.msra.mxu0 %v940
        %2777 = vmatpush.msra.mxu0 %v939
        %2778 = vmatpush.msra.mxu0 %v938
        %2779 = vmatpush.msra.mxu0 %v937
        %2780 = vmatpush.msra.mxu0 %v936
        %2781 = vmatpush.msra.mxu0 %v935
        %2782 = vmatpush.msra.mxu0 %v934
        %2783 = vmatpush.msra.mxu0 %v933
        %2784 = vmatpush.msra.mxu0 %v932
        %2785 = vmatpush.msra.mxu0 %v931
        %2786 = vmatpush.msra.mxu0 %v930
        %2787 = vmatpush.msra.mxu0 %v929
        %2788 = vmatpush.msra.mxu0 %v928
        %2789 = vmatpush.msra.mxu0 %v927
        %2790 = vmatpush.msra.mxu0 %v926
        %2791 = vmatmul.f32.gmra.mxu0 %v2679
        %v2792 = vpop.f32.mrf.mxu0
        %v2793 = vadd.f32 %v2728, %v2792
        %2794 = vmatmul.f32.gmra.mxu0 %v2681
        %v2795 = vpop.f32.mrf.mxu0
        %v2796 = vadd.f32 %v2731, %v2795
        %2797 = vmatmul.f32.gmra.mxu0 %v2683
        %v2798 = vpop.f32.mrf.mxu0
        %v2799 = vadd.f32 %v2734, %v2798
        %2800 = vmatmul.f32.gmra.mxu0 %v2685
        %v2801 = vpop.f32.mrf.mxu0
        %v2802 = vadd.f32 %v2737, %v2801
        %2803 = vmatmul.f32.gmra.mxu0 %v2687
        %v2804 = vpop.f32.mrf.mxu0
        %v2805 = vadd.f32 %v2740, %v2804
        %2806 = vmatmul.f32.gmra.mxu0 %v2689
        %v2807 = vpop.f32.mrf.mxu0
        %v2808 = vadd.f32 %v2743, %v2807
        %2809 = vmatmul.f32.gmra.mxu0 %v2691
        %v2810 = vpop.f32.mrf.mxu0
        %v2811 = vadd.f32 %v2746, %v2810
        %2812 = vmatmul.f32.gmra.mxu0 %v2693
        %v2813 = vpop.f32.mrf.mxu0
        %v2814 = vadd.f32 %v2749, %v2813
        %2815 = vmatmul.f32.gmra.mxu0 %v2695
        %v2816 = vpop.f32.mrf.mxu0
        %v2817 = vadd.f32 %v2752, %v2816
        %2818 = vmatmul.f32.gmra.mxu0 %v2697
        %v2819 = vpop.f32.mrf.mxu0
        %v2820 = vadd.f32 %v2755, %v2819
        %2821 = vmatmul.f32.gmra.mxu0 %v2699
        %v2822 = vpop.f32.mrf.mxu0
        %v2823 = vadd.f32 %v2758, %v2822
        %2824 = vmatmul.f32.gmra.mxu0 %v2701
        %v2825 = vpop.f32.mrf.mxu0
        %v2826 = vadd.f32 %v2761, %v2825
        %2827 = vmatmul.f32.gmra.mxu0 %v2703
        %v2828 = vpop.f32.mrf.mxu0
        %v2829 = vadd.f32 %v2764, %v2828
        %2830 = vmatmul.f32.gmra.mxu0 %v2705
        %v2831 = vpop.f32.mrf.mxu0
        %v2832 = vadd.f32 %v2767, %v2831
        %2833 = vmatmul.f32.gmra.mxu0 %v2707
        %v2834 = vpop.f32.mrf.mxu0
        %v2835 = vadd.f32 %v2770, %v2834
        %2836 = vmatmul.f32.gmra.mxu0 %v2709
        %v2837 = vpop.f32.mrf.mxu0
        %v2838 = vadd.f32 %v2773, %v2837
        %2839 = vdwg.mxu0
        %v2840 = vmul.f32 %v2793, %v2793
        %v2841 = vmul.f32 %v2796, %v2796
        %v2842 = vmul.f32 %v2799, %v2799
        %v2843 = vmul.f32 %v2802, %v2802
        %v2844 = vmul.f32 %v2805, %v2805
        %v2845 = vmul.f32 %v2808, %v2808
        %v2846 = vmul.f32 %v2811, %v2811
        %v2847 = vmul.f32 %v2814, %v2814
        %v2848 = vmul.f32 %v2817, %v2817
        %v2849 = vmul.f32 %v2820, %v2820
        %v2850 = vmul.f32 %v2823, %v2823
        %v2851 = vmul.f32 %v2826, %v2826
        %v2852 = vmul.f32 %v2829, %v2829
        %v2853 = vmul.f32 %v2832, %v2832
        %v2854 = vmul.f32 %v2835, %v2835
        %v2855 = vmul.f32 %v2838, %v2838
        %2856 = vadd.xlane.f32.xlu0 %v2840
        %v2857 = vpop.xlane.xlu0 %2856
        %2858 = vadd.xlane.f32.xlu0 %v2841
        %v2859 = vpop.xlane.xlu0 %2858
        %2860 = vadd.xlane.f32.xlu0 %v2842
        %v2861 = vpop.xlane.xlu0 %2860
        %2862 = vadd.xlane.f32.xlu0 %v2843
        %v2863 = vpop.xlane.xlu0 %2862
        %2864 = vadd.xlane.f32.xlu0 %v2844
        %v2865 = vpop.xlane.xlu0 %2864
        %2866 = vadd.xlane.f32.xlu0 %v2845
        %v2867 = vpop.xlane.xlu0 %2866
        %2868 = vadd.xlane.f32.xlu0 %v2846
        %v2869 = vpop.xlane.xlu0 %2868
        %2870 = vadd.xlane.f32.xlu0 %v2847
        %v2871 = vpop.xlane.xlu0 %2870
        %2872 = vadd.xlane.f32.xlu0 %v2848
        %v2873 = vpop.xlane.xlu0 %2872
        %2874 = vadd.xlane.f32.xlu0 %v2849
        %v2875 = vpop.xlane.xlu0 %2874
        %2876 = vadd.xlane.f32.xlu0 %v2850
        %v2877 = vpop.xlane.xlu0 %2876
        %2878 = vadd.xlane.f32.xlu0 %v2851
        %v2879 = vpop.xlane.xlu0 %2878
        %2880 = vadd.xlane.f32.xlu0 %v2852
        %v2881 = vpop.xlane.xlu0 %2880
        %2882 = vadd.xlane.f32.xlu0 %v2853
        %v2883 = vpop.xlane.xlu0 %2882
        %2884 = vadd.xlane.f32.xlu0 %v2854
        %v2885 = vpop.xlane.xlu0 %2884
        %2886 = vadd.xlane.f32.xlu0 %v2855
        %v2887 = vpop.xlane.xlu0 %2886
        %v2888 = vrsqrt.pop %v2857
        %v2889 = vmul.f32 %v2888, %v2857
        %v2890 = vmul.f32 %v2889, %v2888
        %v2891 = vmul.f32 0.5, %v2890
        %v2892 = vsub.f32 1.5, %v2891
        %v2893 = vmul.f32 %v2888, %v2892
        %vm2894 = vweird.f32 %v2857
        %vm2895 = vweird.f32 %v2888
        %vm2896 = vmor %vm2894, %vm2895
        %v2897 = vsel %vm2896, %v2888, %v2893
        %v2898 = vrsqrt.pop %v2859
        %v2899 = vmul.f32 %v2898, %v2859
        %v2900 = vmul.f32 %v2899, %v2898
        %v2901 = vmul.f32 0.5, %v2900
        %v2902 = vsub.f32 1.5, %v2901
        %v2903 = vmul.f32 %v2898, %v2902
        %vm2904 = vweird.f32 %v2859
        %vm2905 = vweird.f32 %v2898
        %vm2906 = vmor %vm2904, %vm2905
        %v2907 = vsel %vm2906, %v2898, %v2903
        %v2908 = vrsqrt.pop %v2861
        %v2909 = vmul.f32 %v2908, %v2861
        %v2910 = vmul.f32 %v2909, %v2908
        %v2911 = vmul.f32 0.5, %v2910
        %v2912 = vsub.f32 1.5, %v2911
        %v2913 = vmul.f32 %v2908, %v2912
        %vm2914 = vweird.f32 %v2861
        %vm2915 = vweird.f32 %v2908
        %vm2916 = vmor %vm2914, %vm2915
        %v2917 = vsel %vm2916, %v2908, %v2913
        %v2918 = vrsqrt.pop %v2863
        %v2919 = vmul.f32 %v2918, %v2863
        %v2920 = vmul.f32 %v2919, %v2918
        %v2921 = vmul.f32 0.5, %v2920
        %v2922 = vsub.f32 1.5, %v2921
        %v2923 = vmul.f32 %v2918, %v2922
        %vm2924 = vweird.f32 %v2863
        %vm2925 = vweird.f32 %v2918
        %vm2926 = vmor %vm2924, %vm2925
        %v2927 = vsel %vm2926, %v2918, %v2923
        %v2928 = vrsqrt.pop %v2865
        %v2929 = vmul.f32 %v2928, %v2865
        %v2930 = vmul.f32 %v2929, %v2928
        %v2931 = vmul.f32 0.5, %v2930
        %v2932 = vsub.f32 1.5, %v2931
        %v2933 = vmul.f32 %v2928, %v2932
        %vm2934 = vweird.f32 %v2865
        %vm2935 = vweird.f32 %v2928
        %vm2936 = vmor %vm2934, %vm2935
        %v2937 = vsel %vm2936, %v2928, %v2933
        %v2938 = vrsqrt.pop %v2867
        %v2939 = vmul.f32 %v2938, %v2867
        %v2940 = vmul.f32 %v2939, %v2938
        %v2941 = vmul.f32 0.5, %v2940
        %v2942 = vsub.f32 1.5, %v2941
        %v2943 = vmul.f32 %v2938, %v2942
        %vm2944 = vweird.f32 %v2867
        %vm2945 = vweird.f32 %v2938
        %vm2946 = vmor %vm2944, %vm2945
        %v2947 = vsel %vm2946, %v2938, %v2943
        %v2948 = vrsqrt.pop %v2869
        %v2949 = vmul.f32 %v2948, %v2869
        %v2950 = vmul.f32 %v2949, %v2948
        %v2951 = vmul.f32 0.5, %v2950
        %v2952 = vsub.f32 1.5, %v2951
        %v2953 = vmul.f32 %v2948, %v2952
        %vm2954 = vweird.f32 %v2869
        %vm2955 = vweird.f32 %v2948
        %vm2956 = vmor %vm2954, %vm2955
        %v2957 = vsel %vm2956, %v2948, %v2953
        %v2958 = vrsqrt.pop %v2871
        %v2959 = vmul.f32 %v2958, %v2871
        %v2960 = vmul.f32 %v2959, %v2958
        %v2961 = vmul.f32 0.5, %v2960
        %v2962 = vsub.f32 1.5, %v2961
        %v2963 = vmul.f32 %v2958, %v2962
        %vm2964 = vweird.f32 %v2871
        %vm2965 = vweird.f32 %v2958
        %vm2966 = vmor %vm2964, %vm2965
        %v2967 = vsel %vm2966, %v2958, %v2963
        %v2968 = vrsqrt.pop %v2873
        %v2969 = vmul.f32 %v2968, %v2873
        %v2970 = vmul.f32 %v2969, %v2968
        %v2971 = vmul.f32 0.5, %v2970
        %v2972 = vsub.f32 1.5, %v2971
        %v2973 = vmul.f32 %v2968, %v2972
        %vm2974 = vweird.f32 %v2873
        %vm2975 = vweird.f32 %v2968
        %vm2976 = vmor %vm2974, %vm2975
        %v2977 = vsel %vm2976, %v2968, %v2973
        %v2978 = vrsqrt.pop %v2875
        %v2979 = vmul.f32 %v2978, %v2875
        %v2980 = vmul.f32 %v2979, %v2978
        %v2981 = vmul.f32 0.5, %v2980
        %v2982 = vsub.f32 1.5, %v2981
        %v2983 = vmul.f32 %v2978, %v2982
        %vm2984 = vweird.f32 %v2875
        %vm2985 = vweird.f32 %v2978
        %vm2986 = vmor %vm2984, %vm2985
        %v2987 = vsel %vm2986, %v2978, %v2983
        %v2988 = vrsqrt.pop %v2877
        %v2989 = vmul.f32 %v2988, %v2877
        %v2990 = vmul.f32 %v2989, %v2988
        %v2991 = vmul.f32 0.5, %v2990
        %v2992 = vsub.f32 1.5, %v2991
        %v2993 = vmul.f32 %v2988, %v2992
        %vm2994 = vweird.f32 %v2877
        %vm2995 = vweird.f32 %v2988
        %vm2996 = vmor %vm2994, %vm2995
        %v2997 = vsel %vm2996, %v2988, %v2993
        %v2998 = vrsqrt.pop %v2879
        %v2999 = vmul.f32 %v2998, %v2879
        %v3000 = vmul.f32 %v2999, %v2998
        %v3001 = vmul.f32 0.5, %v3000
        %v3002 = vsub.f32 1.5, %v3001
        %v3003 = vmul.f32 %v2998, %v3002
        %vm3004 = vweird.f32 %v2879
        %vm3005 = vweird.f32 %v2998
        %vm3006 = vmor %vm3004, %vm3005
        %v3007 = vsel %vm3006, %v2998, %v3003
        %v3008 = vrsqrt.pop %v2881
        %v3009 = vmul.f32 %v3008, %v2881
        %v3010 = vmul.f32 %v3009, %v3008
        %v3011 = vmul.f32 0.5, %v3010
        %v3012 = vsub.f32 1.5, %v3011
        %v3013 = vmul.f32 %v3008, %v3012
        %vm3014 = vweird.f32 %v2881
        %vm3015 = vweird.f32 %v3008
        %vm3016 = vmor %vm3014, %vm3015
        %v3017 = vsel %vm3016, %v3008, %v3013
        %v3018 = vrsqrt.pop %v2883
        %v3019 = vmul.f32 %v3018, %v2883
        %v3020 = vmul.f32 %v3019, %v3018
        %v3021 = vmul.f32 0.5, %v3020
        %v3022 = vsub.f32 1.5, %v3021
        %v3023 = vmul.f32 %v3018, %v3022
        %vm3024 = vweird.f32 %v2883
        %vm3025 = vweird.f32 %v3018
        %vm3026 = vmor %vm3024, %vm3025
        %v3027 = vsel %vm3026, %v3018, %v3023
        %v3028 = vrsqrt.pop %v2885
        %v3029 = vmul.f32 %v3028, %v2885
        %v3030 = vmul.f32 %v3029, %v3028
        %v3031 = vmul.f32 0.5, %v3030
        %v3032 = vsub.f32 1.5, %v3031
        %v3033 = vmul.f32 %v3028, %v3032
        %vm3034 = vweird.f32 %v2885
        %vm3035 = vweird.f32 %v3028
        %vm3036 = vmor %vm3034, %vm3035
        %v3037 = vsel %vm3036, %v3028, %v3033
        %v3038 = vrsqrt.pop %v2887
        %v3039 = vmul.f32 %v3038, %v2887
        %v3040 = vmul.f32 %v3039, %v3038
        %v3041 = vmul.f32 0.5, %v3040
        %v3042 = vsub.f32 1.5, %v3041
        %v3043 = vmul.f32 %v3038, %v3042
        %vm3044 = vweird.f32 %v2887
        %vm3045 = vweird.f32 %v3038
        %vm3046 = vmor %vm3044, %vm3045
        %v3047 = vsel %vm3046, %v3038, %v3043
        %v3048 = vmul.f32 %v2793, %v2897
        %v3049 = vmul.f32 %v2796, %v2907
        %v3050 = vmul.f32 %v2799, %v2917
        %v3051 = vmul.f32 %v2802, %v2927
        %v3052 = vmul.f32 %v2805, %v2937
        %v3053 = vmul.f32 %v2808, %v2947
        %v3054 = vmul.f32 %v2811, %v2957
        %v3055 = vmul.f32 %v2814, %v2967
        %v3056 = vmul.f32 %v2817, %v2977
        %v3057 = vmul.f32 %v2820, %v2987
        %v3058 = vmul.f32 %v2823, %v2997
        %v3059 = vmul.f32 %v2826, %v3007
        %v3060 = vmul.f32 %v2829, %v3017
        %v3061 = vmul.f32 %v2832, %v3027
        %v3062 = vmul.f32 %v2835, %v3037
        %v3063 = vmul.f32 %v2838, %v3047
        %3064 = vst [vmem:[%s377] sm:$0xff] %v3048
        %3065 = vst [vmem:[%s377 + $0x8] sm:$0xff] %v3049
        %3066 = vst [vmem:[%s377 + $0x10] sm:$0xff] %v3050
        %3067 = vst [vmem:[%s377 + $0x18] sm:$0xff] %v3051
        %3068 = vst [vmem:[%s377 + $0x20] sm:$0xff] %v3052
        %3069 = vst [vmem:[%s377 + $0x28] sm:$0xff] %v3053
        %3070 = vst [vmem:[%s377 + $0x30] sm:$0xff] %v3054
        %3071 = vst [vmem:[%s377 + $0x38] sm:$0xff] %v3055
        %3072 = vst [vmem:[%s377 + $0x40] sm:$0xff] %v3056
        %3073 = vst [vmem:[%s377 + $0x48] sm:$0xff] %v3057
        %3074 = vst [vmem:[%s377 + $0x50] sm:$0xff] %v3058
        %3075 = vst [vmem:[%s377 + $0x58] sm:$0xff] %v3059
        %3076 = vst [vmem:[%s377 + $0x60] sm:$0xff] %v3060
        %3077 = vst [vmem:[%s377 + $0x68] sm:$0xff] %v3061
        %3078 = vst [vmem:[%s377 + $0x70] sm:$0xff] %v3062
        %3079 = vst [vmem:[%s377 + $0x78] sm:$0xff] %v3063
        %s3080 = sand.u32 %s172, 1
        %s3081 = scalar_lea.sflag [#allocation4], %s3080
        %s3082 = sand.u32 %s172, 1
        %s3083 = smul.addr %s3082, 128
        %s3084 = scalar_lea.vmem [#allocation13], %s3083
        // Predicated region
        $region69: #{tpu_custom_call.1} parent=43 // pred_check
          %p3085 = pneg %p182
        $region70: #{tpu_custom_call.1} parent=43 // pred_check_branch
          %3087 = sbr.rel (%p3085) target = $region72
        $region71: #{tpu_custom_call.1} parent=43 // pred_region
          %s3088 = smul.u32 16, %s28
          %3090 = vsyncadd %s3081, 0
          %s3091 = smul.addr %s3088, 8
          %s3092 = scalar_lea.hbm %s6, %s3091
          %s3093 = sshll.u32 %s3084, 4
          %s3094 = int_to_ptr.vmem [resolvable:$true] %s3093
          %s3095 = sshll.u32 %s3092, 4
          %s3096 = int_to_ptr.hbm [resolvable:$true] %s3095
          %3101 = dma.vmem_to_hbm [thread:$0]  %s3094, 2048, %s3096, %s3081, 128, 128, 8
        $region72: #{tpu_custom_call.1} parent=43 // pred_fallthru
          _
      $region44: #{tpu_custom_call.1} parent=5 // pred_fallthru
        _
      %p3102 = scmp.le.s32.totalorder 2, %s23
      // Predicated region
      $region73: #{tpu_custom_call.1} parent=5 // pred_check
        %p3103 = pneg %p3102
      $region74: #{tpu_custom_call.1} parent=5 // pred_check_branch
        %3105 = sbr.rel (%p3103) target = $region76
      $region75: #{tpu_custom_call.1} parent=5 // pred_region
        %s3106 = ssub.s32 %s23, 2
        // Predicated region
        $region77: #{tpu_custom_call.1} parent=75 // pred_check
          %p3107 = pneg %p188
        $region78: #{tpu_custom_call.1} parent=75 // pred_check_branch
          %3109 = sbr.rel (%p3107) target = $region80
        $region79: #{tpu_custom_call.1} parent=75 // pred_region
          %s3110 = sand.u32 %s173, 1
          %s3111 = scalar_lea.sflag [#allocation4], %s3110
          %s3112 = sand.u32 %s173, 1
          %s3113 = smul.addr %s3112, 128
          %s3114 = scalar_lea.vmem [#allocation13], %s3113
          %3116 = dma.done %s3111, 2048
        $region80: #{tpu_custom_call.1} parent=75 // pred_fallthru
          _
      $region76: #{tpu_custom_call.1} parent=5 // pred_fallthru
        _
    $region6: #{tpu_custom_call.1} parent=1 // loop_footer
      %s27 = sadd.s32 1, %s23
    $region7: #{tpu_custom_call.1} parent=1 // loop_footer_branch
      %22 = sbr.rel target = $region3
    $region8: #{tpu_custom_call.1} parent=1 // loop_exit
      _
    %3117 = vsyncpa [#allocation3], 1
    %s3118 = scalar_lea.sflag [#allocation3], 1
    %3119 = vsyncpa %s3118, 1
    %3120 = vsyncpa [#allocation6], 1
    %s3121 = scalar_lea.sflag [#allocation6], 1
    %3122 = vsyncpa %s3121, 1
    %3123 = vsyncpa [#allocation9], 1
    %3124 = vsyncpa [#allocation12], 1
    %3125 = vsyncpa [#allocation4], 1
    %s3126 = scalar_lea.sflag [#allocation4], 1
    %3127 = vsyncpa %s3126, 1

// kernel: tpu_custom_call.1
$region0: #{tpu_custom_call.1}
  #allocation0 [shape = 'u32[]', space=smem, size = 0x4, offset = 0x4, fixed_abs, tag = 'smem constant byte address 0x4 - core index']
  #allocation1 [shape = 'u32[72,128]{1,0:T(1,128)}', space=vmem, size = 0x9000, scoped, tag = 'internal scratch']
  %s0 = inlined_call_operand.hbm [shape: f32[256,128], index: 0, kind: input, shape index: {}]
  %s1 = inlined_call_operand.hbm [shape: f32[256,128], index: 1, kind: input, shape index: {}]
  %s2 = inlined_call_operand.hbm [shape: f32[4,128], index: 2, kind: input, shape index: {}]
  %s3 = inlined_call_operand.hbm [shape: f32[128,256], index: 3, kind: input, shape index: {}]
  %s4 = inlined_call_operand.hbm [shape: f32[128,256], index: 4, kind: input, shape index: {}]
  %s5 = inlined_call_operand.hbm [shape: f32[256,128], index: 5, kind: input, shape index: {}]
  %s6 = inlined_call_operand.hbm [shape: f32[256,128], index: 6, kind: output, shape index: {}]
  %s7 = sld [smem:[#allocation0]]
  $region81: #{tpu_custom_call.1} parent=0
    _
  %s9 = ssub.s32 1, %s7
  %s10 = scalar_select 0, %s9, %s7
  $region1: #{tpu_custom_call.1} parent=0
    #allocation2 [shape = 'u8[131072]{0}', space=vmem, size = 0x20000, scoped, tag = 'input window, operand 0']
    #allocation3 [shape = 's32[2]{0}', space=sflag, size = 0x8, scoped, tag = 'scoped memory for tpu_custom_call.1']
    #allocation4 [shape = 's32[2]{0}', space=sflag, size = 0x8, scoped, tag = 'scoped memory for tpu_custom_call.1']
    #allocation5 [shape = 'u8[131072]{0}', space=vmem, size = 0x20000, scoped, tag = 'input window, operand 1']
    #allocation6 [shape = 's32[2]{0}', space=sflag, size = 0x8, scoped, tag = 'scoped memory for tpu_custom_call.1']
    #allocation7 [shape = 'u8[2048]{0}', space=vmem, size = 0x800, scoped, tag = 'input window, operand 2, single buffered']
    #allocation8 [shape = 'u8[131072]{0}', space=vmem, size = 0x20000, scoped, tag = 'input window, operand 3, single buffered']
    #allocation9 [shape = 's32[1]{0}', space=sflag, size = 0x4, scoped, tag = 'scoped memory for tpu_custom_call.1']
    #allocation10 [shape = 'u8[131072]{0}', space=vmem, size = 0x20000, scoped, tag = 'input window, operand 4, single buffered']
    #allocation11 [shape = 'u8[131072]{0}', space=vmem, size = 0x20000, scoped, tag = 'input window, operand 5, single buffered']
    #allocation12 [shape = 's32[1]{0}', space=sflag, size = 0x4, scoped, tag = 'scoped memory for tpu_custom_call.1']
    #allocation13 [shape = 'u8[131072]{0}', space=vmem, size = 0x20000, scoped, tag = 'output window, operand 0']
    %11 = vsyncpa [#allocation3], 0
    %s12 = scalar_lea.sflag [#allocation3], 1
    %13 = vsyncpa %s12, 0
    %14 = vsyncpa [#allocation6], 0
    %s15 = scalar_lea.sflag [#allocation6], 1
    %16 = vsyncpa %s15, 0
    %17 = vsyncpa [#allocation9], 0
    %18 = vsyncpa [#allocation12], 0
    %19 = vsyncpa [#allocation4], 0
    %s20 = scalar_lea.sflag [#allocation4], 1
    %21 = vsyncpa %s20, 0
    loop: start=0, step=1, limit=4
    $region2: #{tpu_custom_call.1} parent=1 // loop_pre_header
      _
    $region3: #{tpu_custom_call.1} parent=1 // loop_header
      %s23 = sphi 0, %s27
      %p24 = scmp.ge.s32.totalorder %s23, 4
      %s33 = sphi 0, %s35
      %s36 = sphi 0, %s33
      %s37 = sphi 0, %s36
      %s53 = sphi 0, %s37
      %s59 = sphi 0, %s61
      %s62 = sphi 0, %s59
      %s63 = sphi 0, %s62
      %s79 = sphi 0, %s63
      %s83 = sphi 0, %s83
      %s85 = sphi 0, %s83
      %s86 = sphi 0, %s85
      %s100 = sphi 0, %s86
      %s104 = sphi 0, %s104
      %s106 = sphi 0, %s104
      %s107 = sphi 0, %s106
      %s121 = sphi 0, %s107
      %s125 = sphi 0, %s125
      %s127 = sphi 0, %s125
      %s128 = sphi 0, %s127
      %s142 = sphi 0, %s128
      %s146 = sphi 0, %s146
      %s148 = sphi 0, %s146
      %s149 = sphi 0, %s148
      %s163 = sphi 0, %s149
      %s169 = sphi 0, %s171
      %s172 = sphi 0, %s169
      %s173 = sphi 0, %s172
      %s189 = sphi 0, %s173
    $region4: #{tpu_custom_call.1} parent=1 // loop_header_branch
      %26 = sbr.rel (%p24) target = $region8
    $region5: #{tpu_custom_call.1} parent=1 // loop_body
      %s28 = ssub.s32 %s23, 1
      %s29 = ssub.s32 %s23, 2
      %s30 = sadd.s32 %s23, 1
      %s31 = ssub.s32 %s23, %s30
      %p32 = scmp.eq.s32.totalorder %s31, 0
      %s34 = sadd.s32 %s33, 1
      %s35 = scalar_select %p32, %s33, %s34
      %p38 = pneg %p32
      %p39 = scmp.eq.s32.totalorder %s23, 1
      %p40 = por %p38, %p39
      %p41 = scmp.ne.s32.totalorder %s33, %s36
      %p42 = scmp.eq.s32.totalorder %s23, 0
      %p43 = por %p41, %p42
      %p44 = scmp.ne.s32.totalorder %s33, %s36
      %p45 = scmp.eq.s32.totalorder %s28, 1
      %p46 = por %p44, %p45
      %p47 = scmp.ne.s32.totalorder %s36, %s37
      %p48 = scmp.eq.s32.totalorder %s28, 0
      %p49 = por %p47, %p48
      %p50 = scmp.ne.s32.totalorder %s36, %s37
      %p51 = scmp.eq.s32.totalorder %s29, 1
      %p52 = por %p50, %p51
      %p54 = scmp.ne.s32.totalorder %s37, %s53
      %p55 = scmp.eq.s32.totalorder %s29, 0
      %p56 = por %p54, %p55
      %s57 = ssub.s32 %s23, %s30
      %p58 = scmp.eq.s32.totalorder %s57, 0
      %s60 = sadd.s32 %s59, 1
      %s61 = scalar_select %p58, %s59, %s60
      %p64 = pneg %p58
      %p65 = scmp.eq.s32.totalorder %s23, 1
      %p66 = por %p64, %p65
      %p67 = scmp.ne.s32.totalorder %s59, %s62
      %p68 = scmp.eq.s32.totalorder %s23, 0
      %p69 = por %p67, %p68
      %p70 = scmp.ne.s32.totalorder %s59, %s62
      %p71 = scmp.eq.s32.totalorder %s28, 1
      %p72 = por %p70, %p71
      %p73 = scmp.ne.s32.totalorder %s62, %s63
      %p74 = scmp.eq.s32.totalorder %s28, 0
      %p75 = por %p73, %p74
      %p76 = scmp.ne.s32.totalorder %s62, %s63
      %p77 = scmp.eq.s32.totalorder %s29, 1
      %p78 = por %p76, %p77
      %p80 = scmp.ne.s32.totalorder %s63, %s79
      %p81 = scmp.eq.s32.totalorder %s29, 0
      %p82 = por %p80, %p81
      %s84 = sadd.s32 %s83, 1
      %p87 = scmp.eq.s32.totalorder %s23, 1
      %p88 = scmp.ne.s32.totalorder %s83, %s85
      %p89 = scmp.eq.s32.totalorder %s23, 0
      %p90 = por %p88, %p89
      %p91 = scmp.ne.s32.totalorder %s83, %s85
      %p92 = scmp.eq.s32.totalorder %s28, 1
      %p93 = por %p91, %p92
      %p94 = scmp.ne.s32.totalorder %s85, %s86
      %p95 = scmp.eq.s32.totalorder %s28, 0
      %p96 = por %p94, %p95
      %p97 = scmp.ne.s32.totalorder %s85, %s86
      %p98 = scmp.eq.s32.totalorder %s29, 1
      %p99 = por %p97, %p98
      %p101 = scmp.ne.s32.totalorder %s86, %s100
      %p102 = scmp.eq.s32.totalorder %s29, 0
      %p103 = por %p101, %p102
      %s105 = sadd.s32 %s104, 1
      %p108 = scmp.eq.s32.totalorder %s23, 1
      %p109 = scmp.ne.s32.totalorder %s104, %s106
      %p110 = scmp.eq.s32.totalorder %s23, 0
      %p111 = por %p109, %p110
      %p112 = scmp.ne.s32.totalorder %s104, %s106
      %p113 = scmp.eq.s32.totalorder %s28, 1
      %p114 = por %p112, %p113
      %p115 = scmp.ne.s32.totalorder %s106, %s107
      %p116 = scmp.eq.s32.totalorder %s28, 0
      %p117 = por %p115, %p116
      %p118 = scmp.ne.s32.totalorder %s106, %s107
      %p119 = scmp.eq.s32.totalorder %s29, 1
      %p120 = por %p118, %p119
      %p122 = scmp.ne.s32.totalorder %s107, %s121
      %p123 = scmp.eq.s32.totalorder %s29, 0
      %p124 = por %p122, %p123
      %s126 = sadd.s32 %s125, 1
      %p129 = scmp.eq.s32.totalorder %s23, 1
      %p130 = scmp.ne.s32.totalorder %s125, %s127
      %p131 = scmp.eq.s32.totalorder %s23, 0
      %p132 = por %p130, %p131
      %p133 = scmp.ne.s32.totalorder %s125, %s127
      %p134 = scmp.eq.s32.totalorder %s28, 1
      %p135 = por %p133, %p134
      %p136 = scmp.ne.s32.totalorder %s127, %s128
      %p137 = scmp.eq.s32.totalorder %s28, 0
      %p138 = por %p136, %p137
      %p139 = scmp.ne.s32.totalorder %s127, %s128
      %p140 = scmp.eq.s32.totalorder %s29, 1
      %p141 = por %p139, %p140
      %p143 = scmp.ne.s32.totalorder %s128, %s142
      %p144 = scmp.eq.s32.totalorder %s29, 0
      %p145 = por %p143, %p144
      %s147 = sadd.s32 %s146, 1
      %p150 = scmp.eq.s32.totalorder %s23, 1
      %p151 = scmp.ne.s32.totalorder %s146, %s148
      %p152 = scmp.eq.s32.totalorder %s23, 0
      %p153 = por %p151, %p152
      %p154 = scmp.ne.s32.totalorder %s146, %s148
      %p155 = scmp.eq.s32.totalorder %s28, 1
      %p156 = por %p154, %p155
      %p157 = scmp.ne.s32.totalorder %s148, %s149
      %p158 = scmp.eq.s32.totalorder %s28, 0
      %p159 = por %p157, %p158
      %p160 = scmp.ne.s32.totalorder %s148, %s149
      %p161 = scmp.eq.s32.totalorder %s29, 1
      %p162 = por %p160, %p161
      %p164 = scmp.ne.s32.totalorder %s149, %s163
      %p165 = scmp.eq.s32.totalorder %s29, 0
      %p166 = por %p164, %p165
      %s167 = ssub.s32 %s23, %s30
      %p168 = scmp.eq.s32.totalorder %s167, 0
      %s170 = sadd.s32 %s169, 1
      %s171 = scalar_select %p168, %s169, %s170
      %p174 = pneg %p168
      %p175 = scmp.eq.s32.totalorder %s23, 1
      %p176 = por %p174, %p175
      %p177 = scmp.ne.s32.totalorder %s169, %s172
      %p178 = scmp.eq.s32.totalorder %s23, 0
      %p179 = por %p177, %p178
      %p180 = scmp.ne.s32.totalorder %s169, %s172
      %p181 = scmp.eq.s32.totalorder %s28, 1
      %p182 = por %p180, %p181
      %p183 = scmp.ne.s32.totalorder %s172, %s173
      %p184 = scmp.eq.s32.totalorder %s28, 0
      %p185 = por %p183, %p184
      %p186 = scmp.ne.s32.totalorder %s172, %s173
      %p187 = scmp.eq.s32.totalorder %s29, 1
      %p188 = por %p186, %p187
      %p190 = scmp.ne.s32.totalorder %s173, %s189
      %p191 = scmp.eq.s32.totalorder %s29, 0
      %p192 = por %p190, %p191
      %p193 = scmp.le.s32.totalorder 1, %s23
      %p194 = scmp.lt.s32.totalorder %s23, 3
      %p195 = pnand %p193, %p194
      %p196 = pneg %p195
      // Predicated region
      $region9: #{tpu_custom_call.1} parent=5 // pred_check
        _
      $region10: #{tpu_custom_call.1} parent=5 // pred_check_branch
        %198 = sbr.rel (%p195) target = $region12
      $region11: #{tpu_custom_call.1} parent=5 // pred_region
        %s199 = ssub.s32 %s23, 1
        // Predicated region
        $region13: #{tpu_custom_call.1} parent=11 // pred_check
          %p200 = pneg %p96
        $region14: #{tpu_custom_call.1} parent=11 // pred_check_branch
          %202 = sbr.rel (%p200) target = $region16
        $region15: #{tpu_custom_call.1} parent=11 // pred_region
          %204 = vsyncadd [#allocation6], 0
          %s206 = sshll.u32 %s2, 4
          %s207 = int_to_ptr.hbm [resolvable:$true] %s206
          %s208 = sshll.u32 [#allocation7], 4
          %s209 = int_to_ptr.vmem [resolvable:$true] %s208
          %211 = dma.hbm_to_vmem [thread:$0]  %s207, 64, %s209, [#allocation6]
        $region16: #{tpu_custom_call.1} parent=11 // pred_fallthru
          _
        // Predicated region
        $region17: #{tpu_custom_call.1} parent=11 // pred_check
          %p212 = pneg %p117
        $region18: #{tpu_custom_call.1} parent=11 // pred_check_branch
          %214 = sbr.rel (%p212) target = $region20
        $region19: #{tpu_custom_call.1} parent=11 // pred_region
          %216 = vsyncadd [#allocation9], 0
          %s217 = sshll.u32 %s3, 4
          %s218 = int_to_ptr.hbm [resolvable:$true] %s217
          %s219 = sshll.u32 [#allocation8], 4
          %s220 = int_to_ptr.vmem [resolvable:$true] %s219
          %225 = dma.hbm_to_vmem [thread:$0]  %s218, 4096, %s220, [#allocation9], 256, 256, 16
        $region20: #{tpu_custom_call.1} parent=11 // pred_fallthru
          _
        // Predicated region
        $region21: #{tpu_custom_call.1} parent=11 // pred_check
          %p226 = pneg %p138
        $region22: #{tpu_custom_call.1} parent=11 // pred_check_branch
          %228 = sbr.rel (%p226) target = $region24
        $region23: #{tpu_custom_call.1} parent=11 // pred_region
          %230 = vsyncadd [#allocation9], 0
          %s231 = sshll.u32 %s4, 4
          %s232 = int_to_ptr.hbm [resolvable:$true] %s231
          %s233 = sshll.u32 [#allocation10], 4
          %s234 = int_to_ptr.vmem [resolvable:$true] %s233
          %239 = dma.hbm_to_vmem [thread:$0]  %s232, 4096, %s234, [#allocation9], 256, 256, 16
        $region24: #{tpu_custom_call.1} parent=11 // pred_fallthru
          _
        // Predicated region
        $region25: #{tpu_custom_call.1} parent=11 // pred_check
          %p240 = pneg %p159
        $region26: #{tpu_custom_call.1} parent=11 // pred_check_branch
          %242 = sbr.rel (%p240) target = $region28
        $region27: #{tpu_custom_call.1} parent=11 // pred_region
          %244 = vsyncadd [#allocation12], 0
          %s245 = sshll.u32 %s5, 4
          %s246 = int_to_ptr.hbm [resolvable:$true] %s245
          %s247 = sshll.u32 [#allocation11], 4
          %s248 = int_to_ptr.vmem [resolvable:$true] %s247
          %253 = dma.hbm_to_vmem [thread:$0]  %s246, 4096, %s248, [#allocation12], 128, 128, 8
        $region28: #{tpu_custom_call.1} parent=11 // pred_fallthru
          _
      $region12: #{tpu_custom_call.1} parent=5 // pred_fallthru
        _
      %p254 = scmp.lt.s32.totalorder %s23, 2
      // Predicated region
      $region29: #{tpu_custom_call.1} parent=5 // pred_check
        %p255 = pneg %p254
      $region30: #{tpu_custom_call.1} parent=5 // pred_check_branch
        %257 = sbr.rel (%p255) target = $region32
      $region31: #{tpu_custom_call.1} parent=5 // pred_region
        // Predicated region
        $region33: #{tpu_custom_call.1} parent=31 // pred_check
          %p258 = pneg %p43
        $region34: #{tpu_custom_call.1} parent=31 // pred_check_branch
          %260 = sbr.rel (%p258) target = $region36
        $region35: #{tpu_custom_call.1} parent=31 // pred_region
          %s261 = sand.u32 %s33, 1
          %s262 = scalar_lea.sflag [#allocation3], %s261
          %s263 = sand.u32 %s33, 1
          %s264 = smul.addr %s263, 128
          %s265 = scalar_lea.vmem [#allocation2], %s264
          %s266 = smul.u32 16, %s23
          %268 = vsyncadd %s262, 0
          %s269 = smul.addr %s266, 8
          %s270 = scalar_lea.hbm %s0, %s269
          %s271 = sshll.u32 %s270, 4
          %s272 = int_to_ptr.hbm [resolvable:$true] %s271
          %s273 = sshll.u32 %s265, 4
          %s274 = int_to_ptr.vmem [resolvable:$true] %s273
          %279 = dma.hbm_to_vmem [thread:$0]  %s272, 2048, %s274, %s262, 128, 128, 8
        $region36: #{tpu_custom_call.1} parent=31 // pred_fallthru
          _
        // Predicated region
        $region37: #{tpu_custom_call.1} parent=31 // pred_check
          %p280 = pneg %p69
        $region38: #{tpu_custom_call.1} parent=31 // pred_check_branch
          %282 = sbr.rel (%p280) target = $region40
        $region39: #{tpu_custom_call.1} parent=31 // pred_region
          %s283 = sand.u32 %s23, 1
          %s284 = scalar_lea.sflag [#allocation6], %s283
          %s285 = sand.u32 %s59, 1
          %s286 = smul.addr %s285, 128
          %s287 = scalar_lea.vmem [#allocation5], %s286
          %s288 = smul.u32 16, %s23
          %290 = vsyncadd %s284, 0
          %s291 = smul.addr %s288, 8
          %s292 = scalar_lea.hbm %s1, %s291
          %s293 = sshll.u32 %s292, 4
          %s294 = int_to_ptr.hbm [resolvable:$true] %s293
          %s295 = sshll.u32 %s287, 4
          %s296 = int_to_ptr.vmem [resolvable:$true] %s295
          %301 = dma.hbm_to_vmem [thread:$0]  %s294, 2048, %s296, %s284, 128, 128, 8
        $region40: #{tpu_custom_call.1} parent=31 // pred_fallthru
          _
      $region32: #{tpu_custom_call.1} parent=5 // pred_fallthru
        _
      %p302 = scmp.le.s32.totalorder 1, %s23
      %p303 = scmp.lt.s32.totalorder %s23, 3
      %p304 = pnand %p302, %p303
      %p305 = pneg %p304
      // Predicated region
      $region41: #{tpu_custom_call.1} parent=5 // pred_check
        _
      $region42: #{tpu_custom_call.1} parent=5 // pred_check_branch
        %307 = sbr.rel (%p304) target = $region44
      $region43: #{tpu_custom_call.1} parent=5 // pred_region
        %s308 = ssub.s32 %s23, 1
        %s309 = sand.u32 %s36, 1
        %s310 = scalar_lea.sflag [#allocation3], %s309
        %s311 = sand.u32 %s36, 1
        %s312 = smul.addr %s311, 128
        %s313 = scalar_lea.vmem [#allocation2], %s312
        // Predicated region
        $region45: #{tpu_custom_call.1} parent=43 // pred_check
          %p314 = pneg %p49
        $region46: #{tpu_custom_call.1} parent=43 // pred_check_branch
          %316 = sbr.rel (%p314) target = $region48
        $region47: #{tpu_custom_call.1} parent=43 // pred_region
          %318 = dma.done %s310, 2048
        $region48: #{tpu_custom_call.1} parent=43 // pred_fallthru
          _
        %s319 = sand.u32 %s28, 1
        %s320 = scalar_lea.sflag [#allocation6], %s319
        %s321 = sand.u32 %s62, 1
        %s322 = smul.addr %s321, 128
        %s323 = scalar_lea.vmem [#allocation5], %s322
        // Predicated region
        $region49: #{tpu_custom_call.1} parent=43 // pred_check
          %p324 = pneg %p75
        $region50: #{tpu_custom_call.1} parent=43 // pred_check_branch
          %326 = sbr.rel (%p324) target = $region52
        $region51: #{tpu_custom_call.1} parent=43 // pred_region
          %328 = dma.done %s320, 2048
        $region52: #{tpu_custom_call.1} parent=43 // pred_fallthru
          _
        // Predicated region
        $region53: #{tpu_custom_call.1} parent=43 // pred_check
          %p329 = pneg %p96
        $region54: #{tpu_custom_call.1} parent=43 // pred_check_branch
          %331 = sbr.rel (%p329) target = $region56
        $region55: #{tpu_custom_call.1} parent=43 // pred_region
          %333 = dma.done [#allocation6], 64
        $region56: #{tpu_custom_call.1} parent=43 // pred_fallthru
          _
        // Predicated region
        $region57: #{tpu_custom_call.1} parent=43 // pred_check
          %p334 = pneg %p117
        $region58: #{tpu_custom_call.1} parent=43 // pred_check_branch
          %336 = sbr.rel (%p334) target = $region60
        $region59: #{tpu_custom_call.1} parent=43 // pred_region
          %338 = dma.done [#allocation9], 4096
        $region60: #{tpu_custom_call.1} parent=43 // pred_fallthru
          _
        // Predicated region
        $region61: #{tpu_custom_call.1} parent=43 // pred_check
          %p339 = pneg %p138
        $region62: #{tpu_custom_call.1} parent=43 // pred_check_branch
          %341 = sbr.rel (%p339) target = $region64
        $region63: #{tpu_custom_call.1} parent=43 // pred_region
          %343 = dma.done [#allocation9], 4096
        $region64: #{tpu_custom_call.1} parent=43 // pred_fallthru
          _
        // Predicated region
        $region65: #{tpu_custom_call.1} parent=43 // pred_check
          %p344 = pneg %p159
        $region66: #{tpu_custom_call.1} parent=43 // pred_check_branch
          %346 = sbr.rel (%p344) target = $region68
        $region67: #{tpu_custom_call.1} parent=43 // pred_region
          %348 = dma.done [#allocation12], 4096
        $region68: #{tpu_custom_call.1} parent=43 // pred_fallthru
          _
        %s349 = sand.u32 %s36, 1
        %s350 = scalar_lea.sflag [#allocation3], %s349
        %s351 = sand.u32 %s36, 1
        %s352 = smul.addr %s351, 128
        %s353 = scalar_lea.vmem [#allocation2], %s352
        %p354 = pneg %p49
        %p355 = pneg %p46
        %s356 = sand.u32 %s28, 1
        %s357 = scalar_lea.sflag [#allocation6], %s356
        %s358 = sand.u32 %s62, 1
        %s359 = smul.addr %s358, 128
        %s360 = scalar_lea.vmem [#allocation5], %s359
        %p361 = pneg %p75
        %p362 = pneg %p72
        %p363 = pneg %p96
        %p364 = pneg %p93
        %p365 = pneg %p117
        %p366 = pneg %p114
        %p367 = pneg %p138
        %p368 = pneg %p135
        %p369 = pneg %p159
        %p370 = pneg %p156
        %p371 = pneg %p185
        %p372 = pneg %p182
        %s373 = sand.u32 %s172, 1
        %s374 = scalar_lea.sflag [#allocation4], %s373
        %s375 = sand.u32 %s172, 1
        %s376 = smul.addr %s375, 128
        %s377 = scalar_lea.vmem [#allocation13], %s376
        %s378 = smul.u32 16, %s28
        %s379 = smul.u32 16, %s28
        %s380 = smul.u32 16, %s28
        %v381 = vld [vmem:[%s313] sm:$0xff]
        %v382 = vld [vmem:[%s313 + $0x8] sm:$0xff]
        %v383 = vld [vmem:[%s313 + $0x10] sm:$0xff]
        %v384 = vld [vmem:[%s313 + $0x18] sm:$0xff]
        %v385 = vld [vmem:[%s313 + $0x20] sm:$0xff]
        %v386 = vld [vmem:[%s313 + $0x28] sm:$0xff]
        %v387 = vld [vmem:[%s313 + $0x30] sm:$0xff]
        %v388 = vld [vmem:[%s313 + $0x38] sm:$0xff]
        %v389 = vld [vmem:[%s313 + $0x40] sm:$0xff]
        %v390 = vld [vmem:[%s313 + $0x48] sm:$0xff]
        %v391 = vld [vmem:[%s313 + $0x50] sm:$0xff]
        %v392 = vld [vmem:[%s313 + $0x58] sm:$0xff]
        %v393 = vld [vmem:[%s313 + $0x60] sm:$0xff]
        %v394 = vld [vmem:[%s313 + $0x68] sm:$0xff]
        %v395 = vld [vmem:[%s313 + $0x70] sm:$0xff]
        %v396 = vld [vmem:[%s313 + $0x78] sm:$0xff]
        %v397 = vld [vmem:[%s323] sm:$0xff]
        %v398 = vld [vmem:[%s323 + $0x8] sm:$0xff]
        %v399 = vld [vmem:[%s323 + $0x10] sm:$0xff]
        %v400 = vld [vmem:[%s323 + $0x18] sm:$0xff]
        %v401 = vld [vmem:[%s323 + $0x20] sm:$0xff]
        %v402 = vld [vmem:[%s323 + $0x28] sm:$0xff]
        %v403 = vld [vmem:[%s323 + $0x30] sm:$0xff]
        %v404 = vld [vmem:[%s323 + $0x38] sm:$0xff]
        %v405 = vld [vmem:[%s323 + $0x40] sm:$0xff]
        %v406 = vld [vmem:[%s323 + $0x48] sm:$0xff]
        %v407 = vld [vmem:[%s323 + $0x50] sm:$0xff]
        %v408 = vld [vmem:[%s323 + $0x58] sm:$0xff]
        %v409 = vld [vmem:[%s323 + $0x60] sm:$0xff]
        %v410 = vld [vmem:[%s323 + $0x68] sm:$0xff]
        %v411 = vld [vmem:[%s323 + $0x70] sm:$0xff]
        %v412 = vld [vmem:[%s323 + $0x78] sm:$0xff]
        %v413 = vld [vmem:[#allocation7] sm:$0xf]
        %414 = vadd.xlane.f32.xlu0 %v381
        %v415 = vpop.xlane.xlu0 %414
        %416 = vadd.xlane.f32.xlu0 %v382
        %v417 = vpop.xlane.xlu0 %416
        %418 = vadd.xlane.f32.xlu0 %v383
        %v419 = vpop.xlane.xlu0 %418
        %420 = vadd.xlane.f32.xlu0 %v384
        %v421 = vpop.xlane.xlu0 %420
        %422 = vadd.xlane.f32.xlu0 %v385
        %v423 = vpop.xlane.xlu0 %422
        %424 = vadd.xlane.f32.xlu0 %v386
        %v425 = vpop.xlane.xlu0 %424
        %426 = vadd.xlane.f32.xlu0 %v387
        %v427 = vpop.xlane.xlu0 %426
        %428 = vadd.xlane.f32.xlu0 %v388
        %v429 = vpop.xlane.xlu0 %428
        %430 = vadd.xlane.f32.xlu0 %v389
        %v431 = vpop.xlane.xlu0 %430
        %432 = vadd.xlane.f32.xlu0 %v390
        %v433 = vpop.xlane.xlu0 %432
        %434 = vadd.xlane.f32.xlu0 %v391
        %v435 = vpop.xlane.xlu0 %434
        %436 = vadd.xlane.f32.xlu0 %v392
        %v437 = vpop.xlane.xlu0 %436
        %438 = vadd.xlane.f32.xlu0 %v393
        %v439 = vpop.xlane.xlu0 %438
        %440 = vadd.xlane.f32.xlu0 %v394
        %v441 = vpop.xlane.xlu0 %440
        %442 = vadd.xlane.f32.xlu0 %v395
        %v443 = vpop.xlane.xlu0 %442
        %444 = vadd.xlane.f32.xlu0 %v396
        %v445 = vpop.xlane.xlu0 %444
        %446 = vadd.xlane.f32.xlu0 %v397
        %v447 = vpop.xlane.xlu0 %446
        %448 = vadd.xlane.f32.xlu0 %v398
        %v449 = vpop.xlane.xlu0 %448
        %450 = vadd.xlane.f32.xlu0 %v399
        %v451 = vpop.xlane.xlu0 %450
        %452 = vadd.xlane.f32.xlu0 %v400
        %v453 = vpop.xlane.xlu0 %452
        %454 = vadd.xlane.f32.xlu0 %v401
        %v455 = vpop.xlane.xlu0 %454
        %456 = vadd.xlane.f32.xlu0 %v402
        %v457 = vpop.xlane.xlu0 %456
        %458 = vadd.xlane.f32.xlu0 %v403
        %v459 = vpop.xlane.xlu0 %458
        %460 = vadd.xlane.f32.xlu0 %v404
        %v461 = vpop.xlane.xlu0 %460
        %462 = vadd.xlane.f32.xlu0 %v405
        %v463 = vpop.xlane.xlu0 %462
        %464 = vadd.xlane.f32.xlu0 %v406
        %v465 = vpop.xlane.xlu0 %464
        %466 = vadd.xlane.f32.xlu0 %v407
        %v467 = vpop.xlane.xlu0 %466
        %468 = vadd.xlane.f32.xlu0 %v408
        %v469 = vpop.xlane.xlu0 %468
        %470 = vadd.xlane.f32.xlu0 %v409
        %v471 = vpop.xlane.xlu0 %470
        %472 = vadd.xlane.f32.xlu0 %v410
        %v473 = vpop.xlane.xlu0 %472
        %474 = vadd.xlane.f32.xlu0 %v411
        %v475 = vpop.xlane.xlu0 %474
        %476 = vadd.xlane.f32.xlu0 %v412
        %v477 = vpop.xlane.xlu0 %476
        %v478 = vadd.f32 %v415, %v447
        %v479 = vadd.f32 %v417, %v449
        %v480 = vadd.f32 %v419, %v451
        %v481 = vadd.f32 %v421, %v453
        %v482 = vadd.f32 %v423, %v455
        %v483 = vadd.f32 %v425, %v457
        %v484 = vadd.f32 %v427, %v459
        %v485 = vadd.f32 %v429, %v461
        %v486 = vadd.f32 %v431, %v463
        %v487 = vadd.f32 %v433, %v465
        %v488 = vadd.f32 %v435, %v467
        %v489 = vadd.f32 %v437, %v469
        %v490 = vadd.f32 %v439, %v471
        %v491 = vadd.f32 %v441, %v473
        %v492 = vadd.f32 %v443, %v475
        %v493 = vadd.f32 %v445, %v477
        %v494 = vmul.f32 %v478, 0.00390625
        %v495 = vmul.f32 %v479, 0.00390625
        %v496 = vmul.f32 %v480, 0.00390625
        %v497 = vmul.f32 %v481, 0.00390625
        %v498 = vmul.f32 %v482, 0.00390625
        %v499 = vmul.f32 %v483, 0.00390625
        %v500 = vmul.f32 %v484, 0.00390625
        %v501 = vmul.f32 %v485, 0.00390625
        %v502 = vmul.f32 %v486, 0.00390625
        %v503 = vmul.f32 %v487, 0.00390625
        %v504 = vmul.f32 %v488, 0.00390625
        %v505 = vmul.f32 %v489, 0.00390625
        %v506 = vmul.f32 %v490, 0.00390625
        %v507 = vmul.f32 %v491, 0.00390625
        %v508 = vmul.f32 %v492, 0.00390625
        %v509 = vmul.f32 %v493, 0.00390625
        %v510 = vsub.f32 %v381, %v494
        %v511 = vsub.f32 %v382, %v495
        %v512 = vsub.f32 %v383, %v496
        %v513 = vsub.f32 %v384, %v497
        %v514 = vsub.f32 %v385, %v498
        %v515 = vsub.f32 %v386, %v499
        %v516 = vsub.f32 %v387, %v500
        %v517 = vsub.f32 %v388, %v501
        %v518 = vsub.f32 %v389, %v502
        %v519 = vsub.f32 %v390, %v503
        %v520 = vsub.f32 %v391, %v504
        %v521 = vsub.f32 %v392, %v505
        %v522 = vsub.f32 %v393, %v506
        %v523 = vsub.f32 %v394, %v507
        %v524 = vsub.f32 %v395, %v508
        %v525 = vsub.f32 %v396, %v509
        %v526 = vsub.f32 %v397, %v494
        %v527 = vsub.f32 %v398, %v495
        %v528 = vsub.f32 %v399, %v496
        %v529 = vsub.f32 %v400, %v497
        %v530 = vsub.f32 %v401, %v498
        %v531 = vsub.f32 %v402, %v499
        %v532 = vsub.f32 %v403, %v500
        %v533 = vsub.f32 %v404, %v501
        %v534 = vsub.f32 %v405, %v502
        %v535 = vsub.f32 %v406, %v503
        %v536 = vsub.f32 %v407, %v504
        %v537 = vsub.f32 %v408, %v505
        %v538 = vsub.f32 %v409, %v506
        %v539 = vsub.f32 %v410, %v507
        %v540 = vsub.f32 %v411, %v508
        %v541 = vsub.f32 %v412, %v509
        %v542 = vmul.f32 %v510, %v510
        %v543 = vmul.f32 %v511, %v511
        %v544 = vmul.f32 %v512, %v512
        %v545 = vmul.f32 %v513, %v513
        %v546 = vmul.f32 %v514, %v514
        %v547 = vmul.f32 %v515, %v515
        %v548 = vmul.f32 %v516, %v516
        %v549 = vmul.f32 %v517, %v517
        %v550 = vmul.f32 %v518, %v518
        %v551 = vmul.f32 %v519, %v519
        %v552 = vmul.f32 %v520, %v520
        %v553 = vmul.f32 %v521, %v521
        %v554 = vmul.f32 %v522, %v522
        %v555 = vmul.f32 %v523, %v523
        %v556 = vmul.f32 %v524, %v524
        %v557 = vmul.f32 %v525, %v525
        %558 = vadd.xlane.f32.xlu0 %v542
        %v559 = vpop.xlane.xlu0 %558
        %560 = vadd.xlane.f32.xlu0 %v543
        %v561 = vpop.xlane.xlu0 %560
        %562 = vadd.xlane.f32.xlu0 %v544
        %v563 = vpop.xlane.xlu0 %562
        %564 = vadd.xlane.f32.xlu0 %v545
        %v565 = vpop.xlane.xlu0 %564
        %566 = vadd.xlane.f32.xlu0 %v546
        %v567 = vpop.xlane.xlu0 %566
        %568 = vadd.xlane.f32.xlu0 %v547
        %v569 = vpop.xlane.xlu0 %568
        %570 = vadd.xlane.f32.xlu0 %v548
        %v571 = vpop.xlane.xlu0 %570
        %572 = vadd.xlane.f32.xlu0 %v549
        %v573 = vpop.xlane.xlu0 %572
        %574 = vadd.xlane.f32.xlu0 %v550
        %v575 = vpop.xlane.xlu0 %574
        %576 = vadd.xlane.f32.xlu0 %v551
        %v577 = vpop.xlane.xlu0 %576
        %578 = vadd.xlane.f32.xlu0 %v552
        %v579 = vpop.xlane.xlu0 %578
        %580 = vadd.xlane.f32.xlu0 %v553
        %v581 = vpop.xlane.xlu0 %580
        %582 = vadd.xlane.f32.xlu0 %v554
        %v583 = vpop.xlane.xlu0 %582
        %584 = vadd.xlane.f32.xlu0 %v555
        %v585 = vpop.xlane.xlu0 %584
        %586 = vadd.xlane.f32.xlu0 %v556
        %v587 = vpop.xlane.xlu0 %586
        %588 = vadd.xlane.f32.xlu0 %v557
        %v589 = vpop.xlane.xlu0 %588
        %v590 = vmul.f32 %v526, %v526
        %v591 = vmul.f32 %v527, %v527
        %v592 = vmul.f32 %v528, %v528
        %v593 = vmul.f32 %v529, %v529
        %v594 = vmul.f32 %v530, %v530
        %v595 = vmul.f32 %v531, %v531
        %v596 = vmul.f32 %v532, %v532
        %v597 = vmul.f32 %v533, %v533
        %v598 = vmul.f32 %v534, %v534
        %v599 = vmul.f32 %v535, %v535
        %v600 = vmul.f32 %v536, %v536
        %v601 = vmul.f32 %v537, %v537
        %v602 = vmul.f32 %v538, %v538
        %v603 = vmul.f32 %v539, %v539
        %v604 = vmul.f32 %v540, %v540
        %v605 = vmul.f32 %v541, %v541
        %606 = vadd.xlane.f32.xlu0 %v590
        %v607 = vpop.xlane.xlu0 %606
        %608 = vadd.xlane.f32.xlu0 %v591
        %v609 = vpop.xlane.xlu0 %608
        %610 = vadd.xlane.f32.xlu0 %v592
        %v611 = vpop.xlane.xlu0 %610
        %612 = vadd.xlane.f32.xlu0 %v593
        %v613 = vpop.xlane.xlu0 %612
        %614 = vadd.xlane.f32.xlu0 %v594
        %v615 = vpop.xlane.xlu0 %614
        %616 = vadd.xlane.f32.xlu0 %v595
        %v617 = vpop.xlane.xlu0 %616
        %618 = vadd.xlane.f32.xlu0 %v596
        %v619 = vpop.xlane.xlu0 %618
        %620 = vadd.xlane.f32.xlu0 %v597
        %v621 = vpop.xlane.xlu0 %620
        %622 = vadd.xlane.f32.xlu0 %v598
        %v623 = vpop.xlane.xlu0 %622
        %624 = vadd.xlane.f32.xlu0 %v599
        %v625 = vpop.xlane.xlu0 %624
        %626 = vadd.xlane.f32.xlu0 %v600
        %v627 = vpop.xlane.xlu0 %626
        %628 = vadd.xlane.f32.xlu0 %v601
        %v629 = vpop.xlane.xlu0 %628
        %630 = vadd.xlane.f32.xlu0 %v602
        %v631 = vpop.xlane.xlu0 %630
        %632 = vadd.xlane.f32.xlu0 %v603
        %v633 = vpop.xlane.xlu0 %632
        %634 = vadd.xlane.f32.xlu0 %v604
        %v635 = vpop.xlane.xlu0 %634
        %636 = vadd.xlane.f32.xlu0 %v605
        %v637 = vpop.xlane.xlu0 %636
        %v638 = vadd.f32 %v559, %v607
        %v639 = vadd.f32 %v561, %v609
        %v640 = vadd.f32 %v563, %v611
        %v641 = vadd.f32 %v565, %v613
        %v642 = vadd.f32 %v567, %v615
        %v643 = vadd.f32 %v569, %v617
        %v644 = vadd.f32 %v571, %v619
        %v645 = vadd.f32 %v573, %v621
        %v646 = vadd.f32 %v575, %v623
        %v647 = vadd.f32 %v577, %v625
        %v648 = vadd.f32 %v579, %v627
        %v649 = vadd.f32 %v581, %v629
        %v650 = vadd.f32 %v583, %v631
        %v651 = vadd.f32 %v585, %v633
        %v652 = vadd.f32 %v587, %v635
        %v653 = vadd.f32 %v589, %v637
        %v654 = vmul.f32 %v638, 0.00390625
        %v655 = vmul.f32 %v639, 0.00390625
        %v656 = vmul.f32 %v640, 0.00390625
        %v657 = vmul.f32 %v641, 0.00390625
        %v658 = vmul.f32 %v642, 0.00390625
        %v659 = vmul.f32 %v643, 0.00390625
        %v660 = vmul.f32 %v644, 0.00390625
        %v661 = vmul.f32 %v645, 0.00390625
        %v662 = vmul.f32 %v646, 0.00390625
        %v663 = vmul.f32 %v647, 0.00390625
        %v664 = vmul.f32 %v648, 0.00390625
        %v665 = vmul.f32 %v649, 0.00390625
        %v666 = vmul.f32 %v650, 0.00390625
        %v667 = vmul.f32 %v651, 0.00390625
        %v668 = vmul.f32 %v652, 0.00390625
        %v669 = vmul.f32 %v653, 0.00390625
        %v670 = vadd.f32 %v654, 1e-05
        %v671 = vadd.f32 %v655, 1e-05
        %v672 = vadd.f32 %v656, 1e-05
        %v673 = vadd.f32 %v657, 1e-05
        %v674 = vadd.f32 %v658, 1e-05
        %v675 = vadd.f32 %v659, 1e-05
        %v676 = vadd.f32 %v660, 1e-05
        %v677 = vadd.f32 %v661, 1e-05
        %v678 = vadd.f32 %v662, 1e-05
        %v679 = vadd.f32 %v663, 1e-05
        %v680 = vadd.f32 %v664, 1e-05
        %v681 = vadd.f32 %v665, 1e-05
        %v682 = vadd.f32 %v666, 1e-05
        %v683 = vadd.f32 %v667, 1e-05
        %v684 = vadd.f32 %v668, 1e-05
        %v685 = vadd.f32 %v669, 1e-05
        %v686 = vrsqrt.pop %v670
        %v687 = vmul.f32 %v686, %v670
        %v688 = vmul.f32 %v687, %v686
        %v689 = vmul.f32 0.5, %v688
        %v690 = vsub.f32 1.5, %v689
        %v691 = vmul.f32 %v686, %v690
        %vm692 = vweird.f32 %v670
        %vm693 = vweird.f32 %v686
        %vm694 = vmor %vm692, %vm693
        %v695 = vsel %vm694, %v686, %v691
        %v696 = vrsqrt.pop %v671
        %v697 = vmul.f32 %v696, %v671
        %v698 = vmul.f32 %v697, %v696
        %v699 = vmul.f32 0.5, %v698
        %v700 = vsub.f32 1.5, %v699
        %v701 = vmul.f32 %v696, %v700
        %vm702 = vweird.f32 %v671
        %vm703 = vweird.f32 %v696
        %vm704 = vmor %vm702, %vm703
        %v705 = vsel %vm704, %v696, %v701
        %v706 = vrsqrt.pop %v672
        %v707 = vmul.f32 %v706, %v672
        %v708 = vmul.f32 %v707, %v706
        %v709 = vmul.f32 0.5, %v708
        %v710 = vsub.f32 1.5, %v709
        %v711 = vmul.f32 %v706, %v710
        %vm712 = vweird.f32 %v672
        %vm713 = vweird.f32 %v706
        %vm714 = vmor %vm712, %vm713
        %v715 = vsel %vm714, %v706, %v711
        %v716 = vrsqrt.pop %v673
        %v717 = vmul.f32 %v716, %v673
        %v718 = vmul.f32 %v717, %v716
        %v719 = vmul.f32 0.5, %v718
        %v720 = vsub.f32 1.5, %v719
        %v721 = vmul.f32 %v716, %v720
        %vm722 = vweird.f32 %v673
        %vm723 = vweird.f32 %v716
        %vm724 = vmor %vm722, %vm723
        %v725 = vsel %vm724, %v716, %v721
        %v726 = vrsqrt.pop %v674
        %v727 = vmul.f32 %v726, %v674
        %v728 = vmul.f32 %v727, %v726
        %v729 = vmul.f32 0.5, %v728
        %v730 = vsub.f32 1.5, %v729
        %v731 = vmul.f32 %v726, %v730
        %vm732 = vweird.f32 %v674
        %vm733 = vweird.f32 %v726
        %vm734 = vmor %vm732, %vm733
        %v735 = vsel %vm734, %v726, %v731
        %v736 = vrsqrt.pop %v675
        %v737 = vmul.f32 %v736, %v675
        %v738 = vmul.f32 %v737, %v736
        %v739 = vmul.f32 0.5, %v738
        %v740 = vsub.f32 1.5, %v739
        %v741 = vmul.f32 %v736, %v740
        %vm742 = vweird.f32 %v675
        %vm743 = vweird.f32 %v736
        %vm744 = vmor %vm742, %vm743
        %v745 = vsel %vm744, %v736, %v741
        %v746 = vrsqrt.pop %v676
        %v747 = vmul.f32 %v746, %v676
        %v748 = vmul.f32 %v747, %v746
        %v749 = vmul.f32 0.5, %v748
        %v750 = vsub.f32 1.5, %v749
        %v751 = vmul.f32 %v746, %v750
        %vm752 = vweird.f32 %v676
        %vm753 = vweird.f32 %v746
        %vm754 = vmor %vm752, %vm753
        %v755 = vsel %vm754, %v746, %v751
        %v756 = vrsqrt.pop %v677
        %v757 = vmul.f32 %v756, %v677
        %v758 = vmul.f32 %v757, %v756
        %v759 = vmul.f32 0.5, %v758
        %v760 = vsub.f32 1.5, %v759
        %v761 = vmul.f32 %v756, %v760
        %vm762 = vweird.f32 %v677
        %vm763 = vweird.f32 %v756
        %vm764 = vmor %vm762, %vm763
        %v765 = vsel %vm764, %v756, %v761
        %v766 = vrsqrt.pop %v678
        %v767 = vmul.f32 %v766, %v678
        %v768 = vmul.f32 %v767, %v766
        %v769 = vmul.f32 0.5, %v768
        %v770 = vsub.f32 1.5, %v769
        %v771 = vmul.f32 %v766, %v770
        %vm772 = vweird.f32 %v678
        %vm773 = vweird.f32 %v766
        %vm774 = vmor %vm772, %vm773
        %v775 = vsel %vm774, %v766, %v771
        %v776 = vrsqrt.pop %v679
        %v777 = vmul.f32 %v776, %v679
        %v778 = vmul.f32 %v777, %v776
        %v779 = vmul.f32 0.5, %v778
        %v780 = vsub.f32 1.5, %v779
        %v781 = vmul.f32 %v776, %v780
        %vm782 = vweird.f32 %v679
        %vm783 = vweird.f32 %v776
        %vm784 = vmor %vm782, %vm783
        %v785 = vsel %vm784, %v776, %v781
        %v786 = vrsqrt.pop %v680
        %v787 = vmul.f32 %v786, %v680
        %v788 = vmul.f32 %v787, %v786
        %v789 = vmul.f32 0.5, %v788
        %v790 = vsub.f32 1.5, %v789
        %v791 = vmul.f32 %v786, %v790
        %vm792 = vweird.f32 %v680
        %vm793 = vweird.f32 %v786
        %vm794 = vmor %vm792, %vm793
        %v795 = vsel %vm794, %v786, %v791
        %v796 = vrsqrt.pop %v681
        %v797 = vmul.f32 %v796, %v681
        %v798 = vmul.f32 %v797, %v796
        %v799 = vmul.f32 0.5, %v798
        %v800 = vsub.f32 1.5, %v799
        %v801 = vmul.f32 %v796, %v800
        %vm802 = vweird.f32 %v681
        %vm803 = vweird.f32 %v796
        %vm804 = vmor %vm802, %vm803
        %v805 = vsel %vm804, %v796, %v801
        %v806 = vrsqrt.pop %v682
        %v807 = vmul.f32 %v806, %v682
        %v808 = vmul.f32 %v807, %v806
        %v809 = vmul.f32 0.5, %v808
        %v810 = vsub.f32 1.5, %v809
        %v811 = vmul.f32 %v806, %v810
        %vm812 = vweird.f32 %v682
        %vm813 = vweird.f32 %v806
        %vm814 = vmor %vm812, %vm813
        %v815 = vsel %vm814, %v806, %v811
        %v816 = vrsqrt.pop %v683
        %v817 = vmul.f32 %v816, %v683
        %v818 = vmul.f32 %v817, %v816
        %v819 = vmul.f32 0.5, %v818
        %v820 = vsub.f32 1.5, %v819
        %v821 = vmul.f32 %v816, %v820
        %vm822 = vweird.f32 %v683
        %vm823 = vweird.f32 %v816
        %vm824 = vmor %vm822, %vm823
        %v825 = vsel %vm824, %v816, %v821
        %v826 = vrsqrt.pop %v684
        %v827 = vmul.f32 %v826, %v684
        %v828 = vmul.f32 %v827, %v826
        %v829 = vmul.f32 0.5, %v828
        %v830 = vsub.f32 1.5, %v829
        %v831 = vmul.f32 %v826, %v830
        %vm832 = vweird.f32 %v684
        %vm833 = vweird.f32 %v826
        %vm834 = vmor %vm832, %vm833
        %v835 = vsel %vm834, %v826, %v831
        %v836 = vrsqrt.pop %v685
        %v837 = vmul.f32 %v836, %v685
        %v838 = vmul.f32 %v837, %v836
        %v839 = vmul.f32 0.5, %v838
        %v840 = vsub.f32 1.5, %v839
        %v841 = vmul.f32 %v836, %v840
        %vm842 = vweird.f32 %v685
        %vm843 = vweird.f32 %v836
        %vm844 = vmor %vm842, %vm843
        %v845 = vsel %vm844, %v836, %v841
        %v846 = vld [vmem:[#allocation8] sm:$0xff]
        %v847 = vld [vmem:[#allocation8 + $0x8] sm:$0xff]
        %v848 = vld [vmem:[#allocation8 + $0x10] sm:$0xff]
        %v849 = vld [vmem:[#allocation8 + $0x18] sm:$0xff]
        %v850 = vld [vmem:[#allocation8 + $0x20] sm:$0xff]
        %v851 = vld [vmem:[#allocation8 + $0x28] sm:$0xff]
        %v852 = vld [vmem:[#allocation8 + $0x30] sm:$0xff]
        %v853 = vld [vmem:[#allocation8 + $0x38] sm:$0xff]
        %v854 = vld [vmem:[#allocation8 + $0x40] sm:$0xff]
        %v855 = vld [vmem:[#allocation8 + $0x48] sm:$0xff]
        %v856 = vld [vmem:[#allocation8 + $0x50] sm:$0xff]
        %v857 = vld [vmem:[#allocation8 + $0x58] sm:$0xff]
        %v858 = vld [vmem:[#allocation8 + $0x60] sm:$0xff]
        %v859 = vld [vmem:[#allocation8 + $0x68] sm:$0xff]
        %v860 = vld [vmem:[#allocation8 + $0x70] sm:$0xff]
        %v861 = vld [vmem:[#allocation8 + $0x78] sm:$0xff]
        %v862 = vld [vmem:[#allocation8 + $0x80] sm:$0xff]
        %v863 = vld [vmem:[#allocation8 + $0x88] sm:$0xff]
        %v864 = vld [vmem:[#allocation8 + $0x90] sm:$0xff]
        %v865 = vld [vmem:[#allocation8 + $0x98] sm:$0xff]
        %v866 = vld [vmem:[#allocation8 + $0xa0] sm:$0xff]
        %v867 = vld [vmem:[#allocation8 + $0xa8] sm:$0xff]
        %v868 = vld [vmem:[#allocation8 + $0xb0] sm:$0xff]
        %v869 = vld [vmem:[#allocation8 + $0xb8] sm:$0xff]
        %v870 = vld [vmem:[#allocation8 + $0xc0] sm:$0xff]
        %v871 = vld [vmem:[#allocation8 + $0xc8] sm:$0xff]
        %v872 = vld [vmem:[#allocation8 + $0xd0] sm:$0xff]
        %v873 = vld [vmem:[#allocation8 + $0xd8] sm:$0xff]
        %v874 = vld [vmem:[#allocation8 + $0xe0] sm:$0xff]
        %v875 = vld [vmem:[#allocation8 + $0xe8] sm:$0xff]
        %v876 = vld [vmem:[#allocation8 + $0xf0] sm:$0xff]
        %v877 = vld [vmem:[#allocation8 + $0xf8] sm:$0xff]
        %v878 = vld [vmem:[#allocation10] sm:$0xff]
        %v879 = vld [vmem:[#allocation10 + $0x8] sm:$0xff]
        %v880 = vld [vmem:[#allocation10 + $0x10] sm:$0xff]
        %v881 = vld [vmem:[#allocation10 + $0x18] sm:$0xff]
        %v882 = vld [vmem:[#allocation10 + $0x20] sm:$0xff]
        %v883 = vld [vmem:[#allocation10 + $0x28] sm:$0xff]
        %v884 = vld [vmem:[#allocation10 + $0x30] sm:$0xff]
        %v885 = vld [vmem:[#allocation10 + $0x38] sm:$0xff]
        %v886 = vld [vmem:[#allocation10 + $0x40] sm:$0xff]
        %v887 = vld [vmem:[#allocation10 + $0x48] sm:$0xff]
        %v888 = vld [vmem:[#allocation10 + $0x50] sm:$0xff]
        %v889 = vld [vmem:[#allocation10 + $0x58] sm:$0xff]
        %v890 = vld [vmem:[#allocation10 + $0x60] sm:$0xff]
        %v891 = vld [vmem:[#allocation10 + $0x68] sm:$0xff]
        %v892 = vld [vmem:[#allocation10 + $0x70] sm:$0xff]
        %v893 = vld [vmem:[#allocation10 + $0x78] sm:$0xff]
        %v894 = vld [vmem:[#allocation10 + $0x80] sm:$0xff]
        %v895 = vld [vmem:[#allocation10 + $0x88] sm:$0xff]
        %v896 = vld [vmem:[#allocation10 + $0x90] sm:$0xff]
        %v897 = vld [vmem:[#allocation10 + $0x98] sm:$0xff]
        %v898 = vld [vmem:[#allocation10 + $0xa0] sm:$0xff]
        %v899 = vld [vmem:[#allocation10 + $0xa8] sm:$0xff]
        %v900 = vld [vmem:[#allocation10 + $0xb0] sm:$0xff]
        %v901 = vld [vmem:[#allocation10 + $0xb8] sm:$0xff]
        %v902 = vld [vmem:[#allocation10 + $0xc0] sm:$0xff]
        %v903 = vld [vmem:[#allocation10 + $0xc8] sm:$0xff]
        %v904 = vld [vmem:[#allocation10 + $0xd0] sm:$0xff]
        %v905 = vld [vmem:[#allocation10 + $0xd8] sm:$0xff]
        %v906 = vld [vmem:[#allocation10 + $0xe0] sm:$0xff]
        %v907 = vld [vmem:[#allocation10 + $0xe8] sm:$0xff]
        %v908 = vld [vmem:[#allocation10 + $0xf0] sm:$0xff]
        %v909 = vld [vmem:[#allocation10 + $0xf8] sm:$0xff]
        %v910 = vld [vmem:[#allocation11] sm:$0xff]
        %v911 = vld [vmem:[#allocation11 + $0x8] sm:$0xff]
        %v912 = vld [vmem:[#allocation11 + $0x10] sm:$0xff]
        %v913 = vld [vmem:[#allocation11 + $0x18] sm:$0xff]
        %v914 = vld [vmem:[#allocation11 + $0x20] sm:$0xff]
        %v915 = vld [vmem:[#allocation11 + $0x28] sm:$0xff]
        %v916 = vld [vmem:[#allocation11 + $0x30] sm:$0xff]
        %v917 = vld [vmem:[#allocation11 + $0x38] sm:$0xff]
        %v918 = vld [vmem:[#allocation11 + $0x40] sm:$0xff]
        %v919 = vld [vmem:[#allocation11 + $0x48] sm:$0xff]
        %v920 = vld [vmem:[#allocation11 + $0x50] sm:$0xff]
        %v921 = vld [vmem:[#allocation11 + $0x58] sm:$0xff]
        %v922 = vld [vmem:[#allocation11 + $0x60] sm:$0xff]
        %v923 = vld [vmem:[#allocation11 + $0x68] sm:$0xff]
        %v924 = vld [vmem:[#allocation11 + $0x70] sm:$0xff]
        %v925 = vld [vmem:[#allocation11 + $0x78] sm:$0xff]
        %v926 = vld [vmem:[#allocation11 + $0x80] sm:$0xff]
        %v927 = vld [vmem:[#allocation11 + $0x88] sm:$0xff]
        %v928 = vld [vmem:[#allocation11 + $0x90] sm:$0xff]
        %v929 = vld [vmem:[#allocation11 + $0x98] sm:$0xff]
        %v930 = vld [vmem:[#allocation11 + $0xa0] sm:$0xff]
        %v931 = vld [vmem:[#allocation11 + $0xa8] sm:$0xff]
        %v932 = vld [vmem:[#allocation11 + $0xb0] sm:$0xff]
        %v933 = vld [vmem:[#allocation11 + $0xb8] sm:$0xff]
        %v934 = vld [vmem:[#allocation11 + $0xc0] sm:$0xff]
        %v935 = vld [vmem:[#allocation11 + $0xc8] sm:$0xff]
        %v936 = vld [vmem:[#allocation11 + $0xd0] sm:$0xff]
        %v937 = vld [vmem:[#allocation11 + $0xd8] sm:$0xff]
        %v938 = vld [vmem:[#allocation11 + $0xe0] sm:$0xff]
        %v939 = vld [vmem:[#allocation11 + $0xe8] sm:$0xff]
        %v940 = vld [vmem:[#allocation11 + $0xf0] sm:$0xff]
        %v941 = vld [vmem:[#allocation11 + $0xf8] sm:$0xff]
        %v942 = vmul.f32 %v510, %v695
        %v943 = vmul.f32 %v511, %v705
        %v944 = vmul.f32 %v512, %v715
        %v945 = vmul.f32 %v513, %v725
        %v946 = vmul.f32 %v514, %v735
        %v947 = vmul.f32 %v515, %v745
        %v948 = vmul.f32 %v516, %v755
        %v949 = vmul.f32 %v517, %v765
        %v950 = vmul.f32 %v518, %v775
        %v951 = vmul.f32 %v519, %v785
        %v952 = vmul.f32 %v520, %v795
        %v953 = vmul.f32 %v521, %v805
        %v954 = vmul.f32 %v522, %v815
        %v955 = vmul.f32 %v523, %v825
        %v956 = vmul.f32 %v524, %v835
        %v957 = vmul.f32 %v525, %v845
        %v958 = vperm.slane %v413, 0
        %v959 = vmul.f32 %v942, %v958
        %v960 = vmul.f32 %v943, %v958
        %v961 = vmul.f32 %v944, %v958
        %v962 = vmul.f32 %v945, %v958
        %v963 = vmul.f32 %v946, %v958
        %v964 = vmul.f32 %v947, %v958
        %v965 = vmul.f32 %v948, %v958
        %v966 = vmul.f32 %v949, %v958
        %v967 = vmul.f32 %v950, %v958
        %v968 = vmul.f32 %v951, %v958
        %v969 = vmul.f32 %v952, %v958
        %v970 = vmul.f32 %v953, %v958
        %v971 = vmul.f32 %v954, %v958
        %v972 = vmul.f32 %v955, %v958
        %v973 = vmul.f32 %v956, %v958
        %v974 = vmul.f32 %v957, %v958
        %v975 = vperm.slane %v413, 2
        %v976 = vadd.f32 %v959, %v975
        %v977 = vadd.f32 %v960, %v975
        %v978 = vadd.f32 %v961, %v975
        %v979 = vadd.f32 %v962, %v975
        %v980 = vadd.f32 %v963, %v975
        %v981 = vadd.f32 %v964, %v975
        %v982 = vadd.f32 %v965, %v975
        %v983 = vadd.f32 %v966, %v975
        %v984 = vadd.f32 %v967, %v975
        %v985 = vadd.f32 %v968, %v975
        %v986 = vadd.f32 %v969, %v975
        %v987 = vadd.f32 %v970, %v975
        %v988 = vadd.f32 %v971, %v975
        %v989 = vadd.f32 %v972, %v975
        %v990 = vadd.f32 %v973, %v975
        %v991 = vadd.f32 %v974, %v975
        %v992 = vmul.f32 %v526, %v695
        %v993 = vmul.f32 %v527, %v705
        %v994 = vmul.f32 %v528, %v715
        %v995 = vmul.f32 %v529, %v725
        %v996 = vmul.f32 %v530, %v735
        %v997 = vmul.f32 %v531, %v745
        %v998 = vmul.f32 %v532, %v755
        %v999 = vmul.f32 %v533, %v765
        %v1000 = vmul.f32 %v534, %v775
        %v1001 = vmul.f32 %v535, %v785
        %v1002 = vmul.f32 %v536, %v795
        %v1003 = vmul.f32 %v537, %v805
        %v1004 = vmul.f32 %v538, %v815
        %v1005 = vmul.f32 %v539, %v825
        %v1006 = vmul.f32 %v540, %v835
        %v1007 = vmul.f32 %v541, %v845
        %v1008 = vperm.slane %v413, 1
        %v1009 = vmul.f32 %v992, %v1008
        %v1010 = vmul.f32 %v993, %v1008
        %v1011 = vmul.f32 %v994, %v1008
        %v1012 = vmul.f32 %v995, %v1008
        %v1013 = vmul.f32 %v996, %v1008
        %v1014 = vmul.f32 %v997, %v1008
        %v1015 = vmul.f32 %v998, %v1008
        %v1016 = vmul.f32 %v999, %v1008
        %v1017 = vmul.f32 %v1000, %v1008
        %v1018 = vmul.f32 %v1001, %v1008
        %v1019 = vmul.f32 %v1002, %v1008
        %v1020 = vmul.f32 %v1003, %v1008
        %v1021 = vmul.f32 %v1004, %v1008
        %v1022 = vmul.f32 %v1005, %v1008
        %v1023 = vmul.f32 %v1006, %v1008
        %v1024 = vmul.f32 %v1007, %v1008
        %v1025 = vperm.slane %v413, 3
        %v1026 = vadd.f32 %v1009, %v1025
        %v1027 = vadd.f32 %v1010, %v1025
        %v1028 = vadd.f32 %v1011, %v1025
        %v1029 = vadd.f32 %v1012, %v1025
        %v1030 = vadd.f32 %v1013, %v1025
        %v1031 = vadd.f32 %v1014, %v1025
        %v1032 = vadd.f32 %v1015, %v1025
        %v1033 = vadd.f32 %v1016, %v1025
        %v1034 = vadd.f32 %v1017, %v1025
        %v1035 = vadd.f32 %v1018, %v1025
        %v1036 = vadd.f32 %v1019, %v1025
        %v1037 = vadd.f32 %v1020, %v1025
        %v1038 = vadd.f32 %v1021, %v1025
        %v1039 = vadd.f32 %v1022, %v1025
        %v1040 = vadd.f32 %v1023, %v1025
        %v1041 = vadd.f32 %v1024, %v1025
        %1042 = vmatpush.msra.mxu0 %v908
        %1043 = vmatpush.msra.mxu0 %v906
        %1044 = vmatpush.msra.mxu0 %v904
        %1045 = vmatpush.msra.mxu0 %v902
        %1046 = vmatpush.msra.mxu0 %v900
        %1047 = vmatpush.msra.mxu0 %v898
        %1048 = vmatpush.msra.mxu0 %v896
        %1049 = vmatpush.msra.mxu0 %v894
        %1050 = vmatpush.msra.mxu0 %v892
        %1051 = vmatpush.msra.mxu0 %v890
        %1052 = vmatpush.msra.mxu0 %v888
        %1053 = vmatpush.msra.mxu0 %v886
        %1054 = vmatpush.msra.mxu0 %v884
        %1055 = vmatpush.msra.mxu0 %v882
        %1056 = vmatpush.msra.mxu0 %v880
        %1057 = vmatpush.msra.mxu0 %v878
        %1058 = vmatmul.f32.gmra.mxu0 %v1026
        %v1059 = vpop.f32.mrf.mxu0
        %v1060 = vadd.f32 0.0, %v1059
        %1061 = vmatmul.f32.gmra.mxu0 %v1027
        %v1062 = vpop.f32.mrf.mxu0
        %v1063 = vadd.f32 0.0, %v1062
        %1064 = vmatmul.f32.gmra.mxu0 %v1028
        %v1065 = vpop.f32.mrf.mxu0
        %v1066 = vadd.f32 0.0, %v1065
        %1067 = vmatmul.f32.gmra.mxu0 %v1029
        %v1068 = vpop.f32.mrf.mxu0
        %v1069 = vadd.f32 0.0, %v1068
        %1070 = vmatmul.f32.gmra.mxu0 %v1030
        %v1071 = vpop.f32.mrf.mxu0
        %v1072 = vadd.f32 0.0, %v1071
        %1073 = vmatmul.f32.gmra.mxu0 %v1031
        %v1074 = vpop.f32.mrf.mxu0
        %v1075 = vadd.f32 0.0, %v1074
        %1076 = vmatmul.f32.gmra.mxu0 %v1032
        %v1077 = vpop.f32.mrf.mxu0
        %v1078 = vadd.f32 0.0, %v1077
        %1079 = vmatmul.f32.gmra.mxu0 %v1033
        %v1080 = vpop.f32.mrf.mxu0
        %v1081 = vadd.f32 0.0, %v1080
        %1082 = vmatmul.f32.gmra.mxu0 %v1034
        %v1083 = vpop.f32.mrf.mxu0
        %v1084 = vadd.f32 0.0, %v1083
        %1085 = vmatmul.f32.gmra.mxu0 %v1035
        %v1086 = vpop.f32.mrf.mxu0
        %v1087 = vadd.f32 0.0, %v1086
        %1088 = vmatmul.f32.gmra.mxu0 %v1036
        %v1089 = vpop.f32.mrf.mxu0
        %v1090 = vadd.f32 0.0, %v1089
        %1091 = vmatmul.f32.gmra.mxu0 %v1037
        %v1092 = vpop.f32.mrf.mxu0
        %v1093 = vadd.f32 0.0, %v1092
        %1094 = vmatmul.f32.gmra.mxu0 %v1038
        %v1095 = vpop.f32.mrf.mxu0
        %v1096 = vadd.f32 0.0, %v1095
        %1097 = vmatmul.f32.gmra.mxu0 %v1039
        %v1098 = vpop.f32.mrf.mxu0
        %v1099 = vadd.f32 0.0, %v1098
        %1100 = vmatmul.f32.gmra.mxu0 %v1040
        %v1101 = vpop.f32.mrf.mxu0
        %v1102 = vadd.f32 0.0, %v1101
        %1103 = vmatmul.f32.gmra.mxu0 %v1041
        %v1104 = vpop.f32.mrf.mxu0
        %v1105 = vadd.f32 0.0, %v1104
        %1106 = vdwg.mxu0
        %1107 = vmatpush.msra.mxu0 %v909
        %1108 = vmatpush.msra.mxu0 %v907
        %1109 = vmatpush.msra.mxu0 %v905
        %1110 = vmatpush.msra.mxu0 %v903
        %1111 = vmatpush.msra.mxu0 %v901
        %1112 = vmatpush.msra.mxu0 %v899
        %1113 = vmatpush.msra.mxu0 %v897
        %1114 = vmatpush.msra.mxu0 %v895
        %1115 = vmatpush.msra.mxu0 %v893
        %1116 = vmatpush.msra.mxu0 %v891
        %1117 = vmatpush.msra.mxu0 %v889
        %1118 = vmatpush.msra.mxu0 %v887
        %1119 = vmatpush.msra.mxu0 %v885
        %1120 = vmatpush.msra.mxu0 %v883
        %1121 = vmatpush.msra.mxu0 %v881
        %1122 = vmatpush.msra.mxu0 %v879
        %1123 = vmatmul.f32.gmra.mxu0 %v1026
        %v1124 = vpop.f32.mrf.mxu0
        %v1125 = vadd.f32 0.0, %v1124
        %1126 = vmatmul.f32.gmra.mxu0 %v1027
        %v1127 = vpop.f32.mrf.mxu0
        %v1128 = vadd.f32 0.0, %v1127
        %1129 = vmatmul.f32.gmra.mxu0 %v1028
        %v1130 = vpop.f32.mrf.mxu0
        %v1131 = vadd.f32 0.0, %v1130
        %1132 = vmatmul.f32.gmra.mxu0 %v1029
        %v1133 = vpop.f32.mrf.mxu0
        %v1134 = vadd.f32 0.0, %v1133
        %1135 = vmatmul.f32.gmra.mxu0 %v1030
        %v1136 = vpop.f32.mrf.mxu0
        %v1137 = vadd.f32 0.0, %v1136
        %1138 = vmatmul.f32.gmra.mxu0 %v1031
        %v1139 = vpop.f32.mrf.mxu0
        %v1140 = vadd.f32 0.0, %v1139
        %1141 = vmatmul.f32.gmra.mxu0 %v1032
        %v1142 = vpop.f32.mrf.mxu0
        %v1143 = vadd.f32 0.0, %v1142
        %1144 = vmatmul.f32.gmra.mxu0 %v1033
        %v1145 = vpop.f32.mrf.mxu0
        %v1146 = vadd.f32 0.0, %v1145
        %1147 = vmatmul.f32.gmra.mxu0 %v1034
        %v1148 = vpop.f32.mrf.mxu0
        %v1149 = vadd.f32 0.0, %v1148
        %1150 = vmatmul.f32.gmra.mxu0 %v1035
        %v1151 = vpop.f32.mrf.mxu0
        %v1152 = vadd.f32 0.0, %v1151
        %1153 = vmatmul.f32.gmra.mxu0 %v1036
        %v1154 = vpop.f32.mrf.mxu0
        %v1155 = vadd.f32 0.0, %v1154
        %1156 = vmatmul.f32.gmra.mxu0 %v1037
        %v1157 = vpop.f32.mrf.mxu0
        %v1158 = vadd.f32 0.0, %v1157
        %1159 = vmatmul.f32.gmra.mxu0 %v1038
        %v1160 = vpop.f32.mrf.mxu0
        %v1161 = vadd.f32 0.0, %v1160
        %1162 = vmatmul.f32.gmra.mxu0 %v1039
        %v1163 = vpop.f32.mrf.mxu0
        %v1164 = vadd.f32 0.0, %v1163
        %1165 = vmatmul.f32.gmra.mxu0 %v1040
        %v1166 = vpop.f32.mrf.mxu0
        %v1167 = vadd.f32 0.0, %v1166
        %1168 = vmatmul.f32.gmra.mxu0 %v1041
        %v1169 = vpop.f32.mrf.mxu0
        %v1170 = vadd.f32 0.0, %v1169
        %1171 = vdwg.mxu0
        %1172 = vmatpush.msra.mxu0 %v876
        %1173 = vmatpush.msra.mxu0 %v874
        %1174 = vmatpush.msra.mxu0 %v872
        %1175 = vmatpush.msra.mxu0 %v870
        %1176 = vmatpush.msra.mxu0 %v868
        %1177 = vmatpush.msra.mxu0 %v866
        %1178 = vmatpush.msra.mxu0 %v864
        %1179 = vmatpush.msra.mxu0 %v862
        %1180 = vmatpush.msra.mxu0 %v860
        %1181 = vmatpush.msra.mxu0 %v858
        %1182 = vmatpush.msra.mxu0 %v856
        %1183 = vmatpush.msra.mxu0 %v854
        %1184 = vmatpush.msra.mxu0 %v852
        %1185 = vmatpush.msra.mxu0 %v850
        %1186 = vmatpush.msra.mxu0 %v848
        %1187 = vmatpush.msra.mxu0 %v846
        %1188 = vmatmul.f32.gmra.mxu0 %v976
        %v1189 = vpop.f32.mrf.mxu0
        %v1190 = vadd.f32 %v1060, %v1189
        %1191 = vmatmul.f32.gmra.mxu0 %v977
        %v1192 = vpop.f32.mrf.mxu0
        %v1193 = vadd.f32 %v1063, %v1192
        %1194 = vmatmul.f32.gmra.mxu0 %v978
        %v1195 = vpop.f32.mrf.mxu0
        %v1196 = vadd.f32 %v1066, %v1195
        %1197 = vmatmul.f32.gmra.mxu0 %v979
        %v1198 = vpop.f32.mrf.mxu0
        %v1199 = vadd.f32 %v1069, %v1198
        %1200 = vmatmul.f32.gmra.mxu0 %v980
        %v1201 = vpop.f32.mrf.mxu0
        %v1202 = vadd.f32 %v1072, %v1201
        %1203 = vmatmul.f32.gmra.mxu0 %v981
        %v1204 = vpop.f32.mrf.mxu0
        %v1205 = vadd.f32 %v1075, %v1204
        %1206 = vmatmul.f32.gmra.mxu0 %v982
        %v1207 = vpop.f32.mrf.mxu0
        %v1208 = vadd.f32 %v1078, %v1207
        %1209 = vmatmul.f32.gmra.mxu0 %v983
        %v1210 = vpop.f32.mrf.mxu0
        %v1211 = vadd.f32 %v1081, %v1210
        %1212 = vmatmul.f32.gmra.mxu0 %v984
        %v1213 = vpop.f32.mrf.mxu0
        %v1214 = vadd.f32 %v1084, %v1213
        %1215 = vmatmul.f32.gmra.mxu0 %v985
        %v1216 = vpop.f32.mrf.mxu0
        %v1217 = vadd.f32 %v1087, %v1216
        %1218 = vmatmul.f32.gmra.mxu0 %v986
        %v1219 = vpop.f32.mrf.mxu0
        %v1220 = vadd.f32 %v1090, %v1219
        %1221 = vmatmul.f32.gmra.mxu0 %v987
        %v1222 = vpop.f32.mrf.mxu0
        %v1223 = vadd.f32 %v1093, %v1222
        %1224 = vmatmul.f32.gmra.mxu0 %v988
        %v1225 = vpop.f32.mrf.mxu0
        %v1226 = vadd.f32 %v1096, %v1225
        %1227 = vmatmul.f32.gmra.mxu0 %v989
        %v1228 = vpop.f32.mrf.mxu0
        %v1229 = vadd.f32 %v1099, %v1228
        %1230 = vmatmul.f32.gmra.mxu0 %v990
        %v1231 = vpop.f32.mrf.mxu0
        %v1232 = vadd.f32 %v1102, %v1231
        %1233 = vmatmul.f32.gmra.mxu0 %v991
        %v1234 = vpop.f32.mrf.mxu0
        %v1235 = vadd.f32 %v1105, %v1234
        %1236 = vdwg.mxu0
        %1237 = vmatpush.msra.mxu0 %v877
        %1238 = vmatpush.msra.mxu0 %v875
        %1239 = vmatpush.msra.mxu0 %v873
        %1240 = vmatpush.msra.mxu0 %v871
        %1241 = vmatpush.msra.mxu0 %v869
        %1242 = vmatpush.msra.mxu0 %v867
        %1243 = vmatpush.msra.mxu0 %v865
        %1244 = vmatpush.msra.mxu0 %v863
        %1245 = vmatpush.msra.mxu0 %v861
        %1246 = vmatpush.msra.mxu0 %v859
        %1247 = vmatpush.msra.mxu0 %v857
        %1248 = vmatpush.msra.mxu0 %v855
        %1249 = vmatpush.msra.mxu0 %v853
        %1250 = vmatpush.msra.mxu0 %v851
        %1251 = vmatpush.msra.mxu0 %v849
        %1252 = vmatpush.msra.mxu0 %v847
        %1253 = vmatmul.f32.gmra.mxu0 %v976
        %v1254 = vpop.f32.mrf.mxu0
        %v1255 = vadd.f32 %v1125, %v1254
        %1256 = vmatmul.f32.gmra.mxu0 %v977
        %v1257 = vpop.f32.mrf.mxu0
        %v1258 = vadd.f32 %v1128, %v1257
        %1259 = vmatmul.f32.gmra.mxu0 %v978
        %v1260 = vpop.f32.mrf.mxu0
        %v1261 = vadd.f32 %v1131, %v1260
        %1262 = vmatmul.f32.gmra.mxu0 %v979
        %v1263 = vpop.f32.mrf.mxu0
        %v1264 = vadd.f32 %v1134, %v1263
        %1265 = vmatmul.f32.gmra.mxu0 %v980
        %v1266 = vpop.f32.mrf.mxu0
        %v1267 = vadd.f32 %v1137, %v1266
        %1268 = vmatmul.f32.gmra.mxu0 %v981
        %v1269 = vpop.f32.mrf.mxu0
        %v1270 = vadd.f32 %v1140, %v1269
        %1271 = vmatmul.f32.gmra.mxu0 %v982
        %v1272 = vpop.f32.mrf.mxu0
        %v1273 = vadd.f32 %v1143, %v1272
        %1274 = vmatmul.f32.gmra.mxu0 %v983
        %v1275 = vpop.f32.mrf.mxu0
        %v1276 = vadd.f32 %v1146, %v1275
        %1277 = vmatmul.f32.gmra.mxu0 %v984
        %v1278 = vpop.f32.mrf.mxu0
        %v1279 = vadd.f32 %v1149, %v1278
        %1280 = vmatmul.f32.gmra.mxu0 %v985
        %v1281 = vpop.f32.mrf.mxu0
        %v1282 = vadd.f32 %v1152, %v1281
        %1283 = vmatmul.f32.gmra.mxu0 %v986
        %v1284 = vpop.f32.mrf.mxu0
        %v1285 = vadd.f32 %v1155, %v1284
        %1286 = vmatmul.f32.gmra.mxu0 %v987
        %v1287 = vpop.f32.mrf.mxu0
        %v1288 = vadd.f32 %v1158, %v1287
        %1289 = vmatmul.f32.gmra.mxu0 %v988
        %v1290 = vpop.f32.mrf.mxu0
        %v1291 = vadd.f32 %v1161, %v1290
        %1292 = vmatmul.f32.gmra.mxu0 %v989
        %v1293 = vpop.f32.mrf.mxu0
        %v1294 = vadd.f32 %v1164, %v1293
        %1295 = vmatmul.f32.gmra.mxu0 %v990
        %v1296 = vpop.f32.mrf.mxu0
        %v1297 = vadd.f32 %v1167, %v1296
        %1298 = vmatmul.f32.gmra.mxu0 %v991
        %v1299 = vpop.f32.mrf.mxu0
        %v1300 = vadd.f32 %v1170, %v1299
        %1301 = vdwg.mxu0
        %v1302 = vmul.f32 %v1190, 0.5
        %v1303 = vmul.f32 %v1255, 0.5
        %v1304 = vmul.f32 %v1193, 0.5
        %v1305 = vmul.f32 %v1258, 0.5
        %v1306 = vmul.f32 %v1196, 0.5
        %v1307 = vmul.f32 %v1261, 0.5
        %v1308 = vmul.f32 %v1199, 0.5
        %v1309 = vmul.f32 %v1264, 0.5
        %v1310 = vmul.f32 %v1202, 0.5
        %v1311 = vmul.f32 %v1267, 0.5
        %v1312 = vmul.f32 %v1205, 0.5
        %v1313 = vmul.f32 %v1270, 0.5
        %v1314 = vmul.f32 %v1208, 0.5
        %v1315 = vmul.f32 %v1273, 0.5
        %v1316 = vmul.f32 %v1211, 0.5
        %v1317 = vmul.f32 %v1276, 0.5
        %v1318 = vmul.f32 %v1214, 0.5
        %v1319 = vmul.f32 %v1279, 0.5
        %v1320 = vmul.f32 %v1217, 0.5
        %v1321 = vmul.f32 %v1282, 0.5
        %v1322 = vmul.f32 %v1220, 0.5
        %v1323 = vmul.f32 %v1285, 0.5
        %v1324 = vmul.f32 %v1223, 0.5
        %v1325 = vmul.f32 %v1288, 0.5
        %v1326 = vmul.f32 %v1226, 0.5
        %v1327 = vmul.f32 %v1291, 0.5
        %v1328 = vmul.f32 %v1229, 0.5
        %v1329 = vmul.f32 %v1294, 0.5
        %v1330 = vmul.f32 %v1232, 0.5
        %v1331 = vmul.f32 %v1297, 0.5
        %v1332 = vmul.f32 %v1235, 0.5
        %v1333 = vmul.f32 %v1300, 0.5
        %v1334 = vmul.f32 %v1190, 0.70710677
        %v1335 = vmul.f32 %v1255, 0.70710677
        %v1336 = vmul.f32 %v1193, 0.70710677
        %v1337 = vmul.f32 %v1258, 0.70710677
        %v1338 = vmul.f32 %v1196, 0.70710677
        %v1339 = vmul.f32 %v1261, 0.70710677
        %v1340 = vmul.f32 %v1199, 0.70710677
        %v1341 = vmul.f32 %v1264, 0.70710677
        %v1342 = vmul.f32 %v1202, 0.70710677
        %v1343 = vmul.f32 %v1267, 0.70710677
        %v1344 = vmul.f32 %v1205, 0.70710677
        %v1345 = vmul.f32 %v1270, 0.70710677
        %v1346 = vmul.f32 %v1208, 0.70710677
        %v1347 = vmul.f32 %v1273, 0.70710677
        %v1348 = vmul.f32 %v1211, 0.70710677
        %v1349 = vmul.f32 %v1276, 0.70710677
        %v1350 = vmul.f32 %v1214, 0.70710677
        %v1351 = vmul.f32 %v1279, 0.70710677
        %v1352 = vmul.f32 %v1217, 0.70710677
        %v1353 = vmul.f32 %v1282, 0.70710677
        %v1354 = vmul.f32 %v1220, 0.70710677
        %v1355 = vmul.f32 %v1285, 0.70710677
        %v1356 = vmul.f32 %v1223, 0.70710677
        %v1357 = vmul.f32 %v1288, 0.70710677
        %v1358 = vmul.f32 %v1226, 0.70710677
        %v1359 = vmul.f32 %v1291, 0.70710677
        %v1360 = vmul.f32 %v1229, 0.70710677
        %v1361 = vmul.f32 %v1294, 0.70710677
        %v1362 = vmul.f32 %v1232, 0.70710677
        %v1363 = vmul.f32 %v1297, 0.70710677
        %v1364 = vmul.f32 %v1235, 0.70710677
        %v1365 = vmul.f32 %v1300, 0.70710677
        %v1366 = vmul.f32 %v1334, %v1334
        %v1367 = vmin.f32 16.0, %v1366
        %v1368 = vmul.f32 %v1367, 2.1237322e-06
        %v1369 = vadd.f32 %v1368, 0.00028619796
        %v1370 = vmul.f32 %v1367, %v1369
        %v1371 = vadd.f32 %v1370, 0.0036580483
        %v1372 = vmul.f32 %v1367, %v1371
        %v1373 = vadd.f32 %v1372, 0.05243302
        %v1374 = vmul.f32 %v1367, %v1373
        %v1375 = vadd.f32 %v1374, 0.18741608
        %v1376 = vmul.f32 %v1367, %v1375
        %v1377 = vadd.f32 %v1376, 1.1283791
        %v1378 = vmul.f32 %v1334, %v1377
        %v1379 = vmul.f32 %v1367, 3.8918573e-05
        %v1380 = vadd.f32 %v1379, 0.001143296
        %v1381 = vmul.f32 %v1367, %v1380
        %v1382 = vadd.f32 %v1381, 0.014752088
        %v1383 = vmul.f32 %v1367, %v1382
        %v1384 = vadd.f32 %v1383, 0.112945676
        %v1385 = vmul.f32 %v1367, %v1384
        %v1386 = vadd.f32 %v1385, 0.4994258
        %v1387 = vmul.f32 %v1367, %v1386
        %v1388 = vadd.f32 %v1387, 1.0
        %v1389 = vrcp.pop %v1388
        %v1390 = vmul.f32 %v1388, %v1389
        %v1391 = vsub.f32 1.0, %v1390
        %v1392 = vmul.f32 %v1389, %v1391
        %v1393 = vadd.f32 %v1389, %v1392
        %vm1394 = vweird.f32 %v1388
        %vm1395 = vweird.f32 %v1389
        %vm1396 = vmor %vm1394, %vm1395
        %v1397 = vsel %vm1396, %v1389, %v1393
        %v1398 = vand.u32 2147483647, %v1388
        %vm1399 = vcmp.eq.f32.partialorder %v1398, 8.507059e+37
        %v1400 = vand.u32 %v1388, 2147483648
        %v1401 = vor.u32 1.1754944e-38, %v1400
        %v1402 = vsel %vm1399, %v1401, %v1397
        %v1403 = vmul.f32 %v1378, %v1402
        %v1404 = vmin.f32 %v1403, 1.0
        %v1405 = vmax.f32 %v1404, -1.0
        %v1406 = vmul.f32 %v1335, %v1335
        %v1407 = vmin.f32 16.0, %v1406
        %v1408 = vmul.f32 %v1407, 2.1237322e-06
        %v1409 = vadd.f32 %v1408, 0.00028619796
        %v1410 = vmul.f32 %v1407, %v1409
        %v1411 = vadd.f32 %v1410, 0.0036580483
        %v1412 = vmul.f32 %v1407, %v1411
        %v1413 = vadd.f32 %v1412, 0.05243302
        %v1414 = vmul.f32 %v1407, %v1413
        %v1415 = vadd.f32 %v1414, 0.18741608
        %v1416 = vmul.f32 %v1407, %v1415
        %v1417 = vadd.f32 %v1416, 1.1283791
        %v1418 = vmul.f32 %v1335, %v1417
        %v1419 = vmul.f32 %v1407, 3.8918573e-05
        %v1420 = vadd.f32 %v1419, 0.001143296
        %v1421 = vmul.f32 %v1407, %v1420
        %v1422 = vadd.f32 %v1421, 0.014752088
        %v1423 = vmul.f32 %v1407, %v1422
        %v1424 = vadd.f32 %v1423, 0.112945676
        %v1425 = vmul.f32 %v1407, %v1424
        %v1426 = vadd.f32 %v1425, 0.4994258
        %v1427 = vmul.f32 %v1407, %v1426
        %v1428 = vadd.f32 %v1427, 1.0
        %v1429 = vrcp.pop %v1428
        %v1430 = vmul.f32 %v1428, %v1429
        %v1431 = vsub.f32 1.0, %v1430
        %v1432 = vmul.f32 %v1429, %v1431
        %v1433 = vadd.f32 %v1429, %v1432
        %vm1434 = vweird.f32 %v1428
        %vm1435 = vweird.f32 %v1429
        %vm1436 = vmor %vm1434, %vm1435
        %v1437 = vsel %vm1436, %v1429, %v1433
        %v1438 = vand.u32 2147483647, %v1428
        %vm1439 = vcmp.eq.f32.partialorder %v1438, 8.507059e+37
        %v1440 = vand.u32 %v1428, 2147483648
        %v1441 = vor.u32 1.1754944e-38, %v1440
        %v1442 = vsel %vm1439, %v1441, %v1437
        %v1443 = vmul.f32 %v1418, %v1442
        %v1444 = vmin.f32 %v1443, 1.0
        %v1445 = vmax.f32 %v1444, -1.0
        %v1446 = vmul.f32 %v1336, %v1336
        %v1447 = vmin.f32 16.0, %v1446
        %v1448 = vmul.f32 %v1447, 2.1237322e-06
        %v1449 = vadd.f32 %v1448, 0.00028619796
        %v1450 = vmul.f32 %v1447, %v1449
        %v1451 = vadd.f32 %v1450, 0.0036580483
        %v1452 = vmul.f32 %v1447, %v1451
        %v1453 = vadd.f32 %v1452, 0.05243302
        %v1454 = vmul.f32 %v1447, %v1453
        %v1455 = vadd.f32 %v1454, 0.18741608
        %v1456 = vmul.f32 %v1447, %v1455
        %v1457 = vadd.f32 %v1456, 1.1283791
        %v1458 = vmul.f32 %v1336, %v1457
        %v1459 = vmul.f32 %v1447, 3.8918573e-05
        %v1460 = vadd.f32 %v1459, 0.001143296
        %v1461 = vmul.f32 %v1447, %v1460
        %v1462 = vadd.f32 %v1461, 0.014752088
        %v1463 = vmul.f32 %v1447, %v1462
        %v1464 = vadd.f32 %v1463, 0.112945676
        %v1465 = vmul.f32 %v1447, %v1464
        %v1466 = vadd.f32 %v1465, 0.4994258
        %v1467 = vmul.f32 %v1447, %v1466
        %v1468 = vadd.f32 %v1467, 1.0
        %v1469 = vrcp.pop %v1468
        %v1470 = vmul.f32 %v1468, %v1469
        %v1471 = vsub.f32 1.0, %v1470
        %v1472 = vmul.f32 %v1469, %v1471
        %v1473 = vadd.f32 %v1469, %v1472
        %vm1474 = vweird.f32 %v1468
        %vm1475 = vweird.f32 %v1469
        %vm1476 = vmor %vm1474, %vm1475
        %v1477 = vsel %vm1476, %v1469, %v1473
        %v1478 = vand.u32 2147483647, %v1468
        %vm1479 = vcmp.eq.f32.partialorder %v1478, 8.507059e+37
        %v1480 = vand.u32 %v1468, 2147483648
        %v1481 = vor.u32 1.1754944e-38, %v1480
        %v1482 = vsel %vm1479, %v1481, %v1477
        %v1483 = vmul.f32 %v1458, %v1482
        %v1484 = vmin.f32 %v1483, 1.0
        %v1485 = vmax.f32 %v1484, -1.0
        %v1486 = vmul.f32 %v1337, %v1337
        %v1487 = vmin.f32 16.0, %v1486
        %v1488 = vmul.f32 %v1487, 2.1237322e-06
        %v1489 = vadd.f32 %v1488, 0.00028619796
        %v1490 = vmul.f32 %v1487, %v1489
        %v1491 = vadd.f32 %v1490, 0.0036580483
        %v1492 = vmul.f32 %v1487, %v1491
        %v1493 = vadd.f32 %v1492, 0.05243302
        %v1494 = vmul.f32 %v1487, %v1493
        %v1495 = vadd.f32 %v1494, 0.18741608
        %v1496 = vmul.f32 %v1487, %v1495
        %v1497 = vadd.f32 %v1496, 1.1283791
        %v1498 = vmul.f32 %v1337, %v1497
        %v1499 = vmul.f32 %v1487, 3.8918573e-05
        %v1500 = vadd.f32 %v1499, 0.001143296
        %v1501 = vmul.f32 %v1487, %v1500
        %v1502 = vadd.f32 %v1501, 0.014752088
        %v1503 = vmul.f32 %v1487, %v1502
        %v1504 = vadd.f32 %v1503, 0.112945676
        %v1505 = vmul.f32 %v1487, %v1504
        %v1506 = vadd.f32 %v1505, 0.4994258
        %v1507 = vmul.f32 %v1487, %v1506
        %v1508 = vadd.f32 %v1507, 1.0
        %v1509 = vrcp.pop %v1508
        %v1510 = vmul.f32 %v1508, %v1509
        %v1511 = vsub.f32 1.0, %v1510
        %v1512 = vmul.f32 %v1509, %v1511
        %v1513 = vadd.f32 %v1509, %v1512
        %vm1514 = vweird.f32 %v1508
        %vm1515 = vweird.f32 %v1509
        %vm1516 = vmor %vm1514, %vm1515
        %v1517 = vsel %vm1516, %v1509, %v1513
        %v1518 = vand.u32 2147483647, %v1508
        %vm1519 = vcmp.eq.f32.partialorder %v1518, 8.507059e+37
        %v1520 = vand.u32 %v1508, 2147483648
        %v1521 = vor.u32 1.1754944e-38, %v1520
        %v1522 = vsel %vm1519, %v1521, %v1517
        %v1523 = vmul.f32 %v1498, %v1522
        %v1524 = vmin.f32 %v1523, 1.0
        %v1525 = vmax.f32 %v1524, -1.0
        %v1526 = vmul.f32 %v1338, %v1338
        %v1527 = vmin.f32 16.0, %v1526
        %v1528 = vmul.f32 %v1527, 2.1237322e-06
        %v1529 = vadd.f32 %v1528, 0.00028619796
        %v1530 = vmul.f32 %v1527, %v1529
        %v1531 = vadd.f32 %v1530, 0.0036580483
        %v1532 = vmul.f32 %v1527, %v1531
        %v1533 = vadd.f32 %v1532, 0.05243302
        %v1534 = vmul.f32 %v1527, %v1533
        %v1535 = vadd.f32 %v1534, 0.18741608
        %v1536 = vmul.f32 %v1527, %v1535
        %v1537 = vadd.f32 %v1536, 1.1283791
        %v1538 = vmul.f32 %v1338, %v1537
        %v1539 = vmul.f32 %v1527, 3.8918573e-05
        %v1540 = vadd.f32 %v1539, 0.001143296
        %v1541 = vmul.f32 %v1527, %v1540
        %v1542 = vadd.f32 %v1541, 0.014752088
        %v1543 = vmul.f32 %v1527, %v1542
        %v1544 = vadd.f32 %v1543, 0.112945676
        %v1545 = vmul.f32 %v1527, %v1544
        %v1546 = vadd.f32 %v1545, 0.4994258
        %v1547 = vmul.f32 %v1527, %v1546
        %v1548 = vadd.f32 %v1547, 1.0
        %v1549 = vrcp.pop %v1548
        %v1550 = vmul.f32 %v1548, %v1549
        %v1551 = vsub.f32 1.0, %v1550
        %v1552 = vmul.f32 %v1549, %v1551
        %v1553 = vadd.f32 %v1549, %v1552
        %vm1554 = vweird.f32 %v1548
        %vm1555 = vweird.f32 %v1549
        %vm1556 = vmor %vm1554, %vm1555
        %v1557 = vsel %vm1556, %v1549, %v1553
        %v1558 = vand.u32 2147483647, %v1548
        %vm1559 = vcmp.eq.f32.partialorder %v1558, 8.507059e+37
        %v1560 = vand.u32 %v1548, 2147483648
        %v1561 = vor.u32 1.1754944e-38, %v1560
        %v1562 = vsel %vm1559, %v1561, %v1557
        %v1563 = vmul.f32 %v1538, %v1562
        %v1564 = vmin.f32 %v1563, 1.0
        %v1565 = vmax.f32 %v1564, -1.0
        %v1566 = vmul.f32 %v1339, %v1339
        %v1567 = vmin.f32 16.0, %v1566
        %v1568 = vmul.f32 %v1567, 2.1237322e-06
        %v1569 = vadd.f32 %v1568, 0.00028619796
        %v1570 = vmul.f32 %v1567, %v1569
        %v1571 = vadd.f32 %v1570, 0.0036580483
        %v1572 = vmul.f32 %v1567, %v1571
        %v1573 = vadd.f32 %v1572, 0.05243302
        %v1574 = vmul.f32 %v1567, %v1573
        %v1575 = vadd.f32 %v1574, 0.18741608
        %v1576 = vmul.f32 %v1567, %v1575
        %v1577 = vadd.f32 %v1576, 1.1283791
        %v1578 = vmul.f32 %v1339, %v1577
        %v1579 = vmul.f32 %v1567, 3.8918573e-05
        %v1580 = vadd.f32 %v1579, 0.001143296
        %v1581 = vmul.f32 %v1567, %v1580
        %v1582 = vadd.f32 %v1581, 0.014752088
        %v1583 = vmul.f32 %v1567, %v1582
        %v1584 = vadd.f32 %v1583, 0.112945676
        %v1585 = vmul.f32 %v1567, %v1584
        %v1586 = vadd.f32 %v1585, 0.4994258
        %v1587 = vmul.f32 %v1567, %v1586
        %v1588 = vadd.f32 %v1587, 1.0
        %v1589 = vrcp.pop %v1588
        %v1590 = vmul.f32 %v1588, %v1589
        %v1591 = vsub.f32 1.0, %v1590
        %v1592 = vmul.f32 %v1589, %v1591
        %v1593 = vadd.f32 %v1589, %v1592
        %vm1594 = vweird.f32 %v1588
        %vm1595 = vweird.f32 %v1589
        %vm1596 = vmor %vm1594, %vm1595
        %v1597 = vsel %vm1596, %v1589, %v1593
        %v1598 = vand.u32 2147483647, %v1588
        %vm1599 = vcmp.eq.f32.partialorder %v1598, 8.507059e+37
        %v1600 = vand.u32 %v1588, 2147483648
        %v1601 = vor.u32 1.1754944e-38, %v1600
        %v1602 = vsel %vm1599, %v1601, %v1597
        %v1603 = vmul.f32 %v1578, %v1602
        %v1604 = vmin.f32 %v1603, 1.0
        %v1605 = vmax.f32 %v1604, -1.0
        %v1606 = vmul.f32 %v1340, %v1340
        %v1607 = vmin.f32 16.0, %v1606
        %v1608 = vmul.f32 %v1607, 2.1237322e-06
        %v1609 = vadd.f32 %v1608, 0.00028619796
        %v1610 = vmul.f32 %v1607, %v1609
        %v1611 = vadd.f32 %v1610, 0.0036580483
        %v1612 = vmul.f32 %v1607, %v1611
        %v1613 = vadd.f32 %v1612, 0.05243302
        %v1614 = vmul.f32 %v1607, %v1613
        %v1615 = vadd.f32 %v1614, 0.18741608
        %v1616 = vmul.f32 %v1607, %v1615
        %v1617 = vadd.f32 %v1616, 1.1283791
        %v1618 = vmul.f32 %v1340, %v1617
        %v1619 = vmul.f32 %v1607, 3.8918573e-05
        %v1620 = vadd.f32 %v1619, 0.001143296
        %v1621 = vmul.f32 %v1607, %v1620
        %v1622 = vadd.f32 %v1621, 0.014752088
        %v1623 = vmul.f32 %v1607, %v1622
        %v1624 = vadd.f32 %v1623, 0.112945676
        %v1625 = vmul.f32 %v1607, %v1624
        %v1626 = vadd.f32 %v1625, 0.4994258
        %v1627 = vmul.f32 %v1607, %v1626
        %v1628 = vadd.f32 %v1627, 1.0
        %v1629 = vrcp.pop %v1628
        %v1630 = vmul.f32 %v1628, %v1629
        %v1631 = vsub.f32 1.0, %v1630
        %v1632 = vmul.f32 %v1629, %v1631
        %v1633 = vadd.f32 %v1629, %v1632
        %vm1634 = vweird.f32 %v1628
        %vm1635 = vweird.f32 %v1629
        %vm1636 = vmor %vm1634, %vm1635
        %v1637 = vsel %vm1636, %v1629, %v1633
        %v1638 = vand.u32 2147483647, %v1628
        %vm1639 = vcmp.eq.f32.partialorder %v1638, 8.507059e+37
        %v1640 = vand.u32 %v1628, 2147483648
        %v1641 = vor.u32 1.1754944e-38, %v1640
        %v1642 = vsel %vm1639, %v1641, %v1637
        %v1643 = vmul.f32 %v1618, %v1642
        %v1644 = vmin.f32 %v1643, 1.0
        %v1645 = vmax.f32 %v1644, -1.0
        %v1646 = vmul.f32 %v1341, %v1341
        %v1647 = vmin.f32 16.0, %v1646
        %v1648 = vmul.f32 %v1647, 2.1237322e-06
        %v1649 = vadd.f32 %v1648, 0.00028619796
        %v1650 = vmul.f32 %v1647, %v1649
        %v1651 = vadd.f32 %v1650, 0.0036580483
        %v1652 = vmul.f32 %v1647, %v1651
        %v1653 = vadd.f32 %v1652, 0.05243302
        %v1654 = vmul.f32 %v1647, %v1653
        %v1655 = vadd.f32 %v1654, 0.18741608
        %v1656 = vmul.f32 %v1647, %v1655
        %v1657 = vadd.f32 %v1656, 1.1283791
        %v1658 = vmul.f32 %v1341, %v1657
        %v1659 = vmul.f32 %v1647, 3.8918573e-05
        %v1660 = vadd.f32 %v1659, 0.001143296
        %v1661 = vmul.f32 %v1647, %v1660
        %v1662 = vadd.f32 %v1661, 0.014752088
        %v1663 = vmul.f32 %v1647, %v1662
        %v1664 = vadd.f32 %v1663, 0.112945676
        %v1665 = vmul.f32 %v1647, %v1664
        %v1666 = vadd.f32 %v1665, 0.4994258
        %v1667 = vmul.f32 %v1647, %v1666
        %v1668 = vadd.f32 %v1667, 1.0
        %v1669 = vrcp.pop %v1668
        %v1670 = vmul.f32 %v1668, %v1669
        %v1671 = vsub.f32 1.0, %v1670
        %v1672 = vmul.f32 %v1669, %v1671
        %v1673 = vadd.f32 %v1669, %v1672
        %vm1674 = vweird.f32 %v1668
        %vm1675 = vweird.f32 %v1669
        %vm1676 = vmor %vm1674, %vm1675
        %v1677 = vsel %vm1676, %v1669, %v1673
        %v1678 = vand.u32 2147483647, %v1668
        %vm1679 = vcmp.eq.f32.partialorder %v1678, 8.507059e+37
        %v1680 = vand.u32 %v1668, 2147483648
        %v1681 = vor.u32 1.1754944e-38, %v1680
        %v1682 = vsel %vm1679, %v1681, %v1677
        %v1683 = vmul.f32 %v1658, %v1682
        %v1684 = vmin.f32 %v1683, 1.0
        %v1685 = vmax.f32 %v1684, -1.0
        %v1686 = vmul.f32 %v1342, %v1342
        %v1687 = vmin.f32 16.0, %v1686
        %v1688 = vmul.f32 %v1687, 2.1237322e-06
        %v1689 = vadd.f32 %v1688, 0.00028619796
        %v1690 = vmul.f32 %v1687, %v1689
        %v1691 = vadd.f32 %v1690, 0.0036580483
        %v1692 = vmul.f32 %v1687, %v1691
        %v1693 = vadd.f32 %v1692, 0.05243302
        %v1694 = vmul.f32 %v1687, %v1693
        %v1695 = vadd.f32 %v1694, 0.18741608
        %v1696 = vmul.f32 %v1687, %v1695
        %v1697 = vadd.f32 %v1696, 1.1283791
        %v1698 = vmul.f32 %v1342, %v1697
        %v1699 = vmul.f32 %v1687, 3.8918573e-05
        %v1700 = vadd.f32 %v1699, 0.001143296
        %v1701 = vmul.f32 %v1687, %v1700
        %v1702 = vadd.f32 %v1701, 0.014752088
        %v1703 = vmul.f32 %v1687, %v1702
        %v1704 = vadd.f32 %v1703, 0.112945676
        %v1705 = vmul.f32 %v1687, %v1704
        %v1706 = vadd.f32 %v1705, 0.4994258
        %v1707 = vmul.f32 %v1687, %v1706
        %v1708 = vadd.f32 %v1707, 1.0
        %v1709 = vrcp.pop %v1708
        %v1710 = vmul.f32 %v1708, %v1709
        %v1711 = vsub.f32 1.0, %v1710
        %v1712 = vmul.f32 %v1709, %v1711
        %v1713 = vadd.f32 %v1709, %v1712
        %vm1714 = vweird.f32 %v1708
        %vm1715 = vweird.f32 %v1709
        %vm1716 = vmor %vm1714, %vm1715
        %v1717 = vsel %vm1716, %v1709, %v1713
        %v1718 = vand.u32 2147483647, %v1708
        %vm1719 = vcmp.eq.f32.partialorder %v1718, 8.507059e+37
        %v1720 = vand.u32 %v1708, 2147483648
        %v1721 = vor.u32 1.1754944e-38, %v1720
        %v1722 = vsel %vm1719, %v1721, %v1717
        %v1723 = vmul.f32 %v1698, %v1722
        %v1724 = vmin.f32 %v1723, 1.0
        %v1725 = vmax.f32 %v1724, -1.0
        %v1726 = vmul.f32 %v1343, %v1343
        %v1727 = vmin.f32 16.0, %v1726
        %v1728 = vmul.f32 %v1727, 2.1237322e-06
        %v1729 = vadd.f32 %v1728, 0.00028619796
        %v1730 = vmul.f32 %v1727, %v1729
        %v1731 = vadd.f32 %v1730, 0.0036580483
        %v1732 = vmul.f32 %v1727, %v1731
        %v1733 = vadd.f32 %v1732, 0.05243302
        %v1734 = vmul.f32 %v1727, %v1733
        %v1735 = vadd.f32 %v1734, 0.18741608
        %v1736 = vmul.f32 %v1727, %v1735
        %v1737 = vadd.f32 %v1736, 1.1283791
        %v1738 = vmul.f32 %v1343, %v1737
        %v1739 = vmul.f32 %v1727, 3.8918573e-05
        %v1740 = vadd.f32 %v1739, 0.001143296
        %v1741 = vmul.f32 %v1727, %v1740
        %v1742 = vadd.f32 %v1741, 0.014752088
        %v1743 = vmul.f32 %v1727, %v1742
        %v1744 = vadd.f32 %v1743, 0.112945676
        %v1745 = vmul.f32 %v1727, %v1744
        %v1746 = vadd.f32 %v1745, 0.4994258
        %v1747 = vmul.f32 %v1727, %v1746
        %v1748 = vadd.f32 %v1747, 1.0
        %v1749 = vrcp.pop %v1748
        %v1750 = vmul.f32 %v1748, %v1749
        %v1751 = vsub.f32 1.0, %v1750
        %v1752 = vmul.f32 %v1749, %v1751
        %v1753 = vadd.f32 %v1749, %v1752
        %vm1754 = vweird.f32 %v1748
        %vm1755 = vweird.f32 %v1749
        %vm1756 = vmor %vm1754, %vm1755
        %v1757 = vsel %vm1756, %v1749, %v1753
        %v1758 = vand.u32 2147483647, %v1748
        %vm1759 = vcmp.eq.f32.partialorder %v1758, 8.507059e+37
        %v1760 = vand.u32 %v1748, 2147483648
        %v1761 = vor.u32 1.1754944e-38, %v1760
        %v1762 = vsel %vm1759, %v1761, %v1757
        %v1763 = vmul.f32 %v1738, %v1762
        %v1764 = vmin.f32 %v1763, 1.0
        %v1765 = vmax.f32 %v1764, -1.0
        %v1766 = vmul.f32 %v1344, %v1344
        %v1767 = vmin.f32 16.0, %v1766
        %v1768 = vmul.f32 %v1767, 2.1237322e-06
        %v1769 = vadd.f32 %v1768, 0.00028619796
        %v1770 = vmul.f32 %v1767, %v1769
        %v1771 = vadd.f32 %v1770, 0.0036580483
        %v1772 = vmul.f32 %v1767, %v1771
        %v1773 = vadd.f32 %v1772, 0.05243302
        %v1774 = vmul.f32 %v1767, %v1773
        %v1775 = vadd.f32 %v1774, 0.18741608
        %v1776 = vmul.f32 %v1767, %v1775
        %v1777 = vadd.f32 %v1776, 1.1283791
        %v1778 = vmul.f32 %v1344, %v1777
        %v1779 = vmul.f32 %v1767, 3.8918573e-05
        %v1780 = vadd.f32 %v1779, 0.001143296
        %v1781 = vmul.f32 %v1767, %v1780
        %v1782 = vadd.f32 %v1781, 0.014752088
        %v1783 = vmul.f32 %v1767, %v1782
        %v1784 = vadd.f32 %v1783, 0.112945676
        %v1785 = vmul.f32 %v1767, %v1784
        %v1786 = vadd.f32 %v1785, 0.4994258
        %v1787 = vmul.f32 %v1767, %v1786
        %v1788 = vadd.f32 %v1787, 1.0
        %v1789 = vrcp.pop %v1788
        %v1790 = vmul.f32 %v1788, %v1789
        %v1791 = vsub.f32 1.0, %v1790
        %v1792 = vmul.f32 %v1789, %v1791
        %v1793 = vadd.f32 %v1789, %v1792
        %vm1794 = vweird.f32 %v1788
        %vm1795 = vweird.f32 %v1789
        %vm1796 = vmor %vm1794, %vm1795
        %v1797 = vsel %vm1796, %v1789, %v1793
        %v1798 = vand.u32 2147483647, %v1788
        %vm1799 = vcmp.eq.f32.partialorder %v1798, 8.507059e+37
        %v1800 = vand.u32 %v1788, 2147483648
        %v1801 = vor.u32 1.1754944e-38, %v1800
        %v1802 = vsel %vm1799, %v1801, %v1797
        %v1803 = vmul.f32 %v1778, %v1802
        %v1804 = vmin.f32 %v1803, 1.0
        %v1805 = vmax.f32 %v1804, -1.0
        %v1806 = vmul.f32 %v1345, %v1345
        %v1807 = vmin.f32 16.0, %v1806
        %v1808 = vmul.f32 %v1807, 2.1237322e-06
        %v1809 = vadd.f32 %v1808, 0.00028619796
        %v1810 = vmul.f32 %v1807, %v1809
        %v1811 = vadd.f32 %v1810, 0.0036580483
        %v1812 = vmul.f32 %v1807, %v1811
        %v1813 = vadd.f32 %v1812, 0.05243302
        %v1814 = vmul.f32 %v1807, %v1813
        %v1815 = vadd.f32 %v1814, 0.18741608
        %v1816 = vmul.f32 %v1807, %v1815
        %v1817 = vadd.f32 %v1816, 1.1283791
        %v1818 = vmul.f32 %v1345, %v1817
        %v1819 = vmul.f32 %v1807, 3.8918573e-05
        %v1820 = vadd.f32 %v1819, 0.001143296
        %v1821 = vmul.f32 %v1807, %v1820
        %v1822 = vadd.f32 %v1821, 0.014752088
        %v1823 = vmul.f32 %v1807, %v1822
        %v1824 = vadd.f32 %v1823, 0.112945676
        %v1825 = vmul.f32 %v1807, %v1824
        %v1826 = vadd.f32 %v1825, 0.4994258
        %v1827 = vmul.f32 %v1807, %v1826
        %v1828 = vadd.f32 %v1827, 1.0
        %v1829 = vrcp.pop %v1828
        %v1830 = vmul.f32 %v1828, %v1829
        %v1831 = vsub.f32 1.0, %v1830
        %v1832 = vmul.f32 %v1829, %v1831
        %v1833 = vadd.f32 %v1829, %v1832
        %vm1834 = vweird.f32 %v1828
        %vm1835 = vweird.f32 %v1829
        %vm1836 = vmor %vm1834, %vm1835
        %v1837 = vsel %vm1836, %v1829, %v1833
        %v1838 = vand.u32 2147483647, %v1828
        %vm1839 = vcmp.eq.f32.partialorder %v1838, 8.507059e+37
        %v1840 = vand.u32 %v1828, 2147483648
        %v1841 = vor.u32 1.1754944e-38, %v1840
        %v1842 = vsel %vm1839, %v1841, %v1837
        %v1843 = vmul.f32 %v1818, %v1842
        %v1844 = vmin.f32 %v1843, 1.0
        %v1845 = vmax.f32 %v1844, -1.0
        %v1846 = vmul.f32 %v1346, %v1346
        %v1847 = vmin.f32 16.0, %v1846
        %v1848 = vmul.f32 %v1847, 2.1237322e-06
        %v1849 = vadd.f32 %v1848, 0.00028619796
        %v1850 = vmul.f32 %v1847, %v1849
        %v1851 = vadd.f32 %v1850, 0.0036580483
        %v1852 = vmul.f32 %v1847, %v1851
        %v1853 = vadd.f32 %v1852, 0.05243302
        %v1854 = vmul.f32 %v1847, %v1853
        %v1855 = vadd.f32 %v1854, 0.18741608
        %v1856 = vmul.f32 %v1847, %v1855
        %v1857 = vadd.f32 %v1856, 1.1283791
        %v1858 = vmul.f32 %v1346, %v1857
        %v1859 = vmul.f32 %v1847, 3.8918573e-05
        %v1860 = vadd.f32 %v1859, 0.001143296
        %v1861 = vmul.f32 %v1847, %v1860
        %v1862 = vadd.f32 %v1861, 0.014752088
        %v1863 = vmul.f32 %v1847, %v1862
        %v1864 = vadd.f32 %v1863, 0.112945676
        %v1865 = vmul.f32 %v1847, %v1864
        %v1866 = vadd.f32 %v1865, 0.4994258
        %v1867 = vmul.f32 %v1847, %v1866
        %v1868 = vadd.f32 %v1867, 1.0
        %v1869 = vrcp.pop %v1868
        %v1870 = vmul.f32 %v1868, %v1869
        %v1871 = vsub.f32 1.0, %v1870
        %v1872 = vmul.f32 %v1869, %v1871
        %v1873 = vadd.f32 %v1869, %v1872
        %vm1874 = vweird.f32 %v1868
        %vm1875 = vweird.f32 %v1869
        %vm1876 = vmor %vm1874, %vm1875
        %v1877 = vsel %vm1876, %v1869, %v1873
        %v1878 = vand.u32 2147483647, %v1868
        %vm1879 = vcmp.eq.f32.partialorder %v1878, 8.507059e+37
        %v1880 = vand.u32 %v1868, 2147483648
        %v1881 = vor.u32 1.1754944e-38, %v1880
        %v1882 = vsel %vm1879, %v1881, %v1877
        %v1883 = vmul.f32 %v1858, %v1882
        %v1884 = vmin.f32 %v1883, 1.0
        %v1885 = vmax.f32 %v1884, -1.0
        %v1886 = vmul.f32 %v1347, %v1347
        %v1887 = vmin.f32 16.0, %v1886
        %v1888 = vmul.f32 %v1887, 2.1237322e-06
        %v1889 = vadd.f32 %v1888, 0.00028619796
        %v1890 = vmul.f32 %v1887, %v1889
        %v1891 = vadd.f32 %v1890, 0.0036580483
        %v1892 = vmul.f32 %v1887, %v1891
        %v1893 = vadd.f32 %v1892, 0.05243302
        %v1894 = vmul.f32 %v1887, %v1893
        %v1895 = vadd.f32 %v1894, 0.18741608
        %v1896 = vmul.f32 %v1887, %v1895
        %v1897 = vadd.f32 %v1896, 1.1283791
        %v1898 = vmul.f32 %v1347, %v1897
        %v1899 = vmul.f32 %v1887, 3.8918573e-05
        %v1900 = vadd.f32 %v1899, 0.001143296
        %v1901 = vmul.f32 %v1887, %v1900
        %v1902 = vadd.f32 %v1901, 0.014752088
        %v1903 = vmul.f32 %v1887, %v1902
        %v1904 = vadd.f32 %v1903, 0.112945676
        %v1905 = vmul.f32 %v1887, %v1904
        %v1906 = vadd.f32 %v1905, 0.4994258
        %v1907 = vmul.f32 %v1887, %v1906
        %v1908 = vadd.f32 %v1907, 1.0
        %v1909 = vrcp.pop %v1908
        %v1910 = vmul.f32 %v1908, %v1909
        %v1911 = vsub.f32 1.0, %v1910
        %v1912 = vmul.f32 %v1909, %v1911
        %v1913 = vadd.f32 %v1909, %v1912
        %vm1914 = vweird.f32 %v1908
        %vm1915 = vweird.f32 %v1909
        %vm1916 = vmor %vm1914, %vm1915
        %v1917 = vsel %vm1916, %v1909, %v1913
        %v1918 = vand.u32 2147483647, %v1908
        %vm1919 = vcmp.eq.f32.partialorder %v1918, 8.507059e+37
        %v1920 = vand.u32 %v1908, 2147483648
        %v1921 = vor.u32 1.1754944e-38, %v1920
        %v1922 = vsel %vm1919, %v1921, %v1917
        %v1923 = vmul.f32 %v1898, %v1922
        %v1924 = vmin.f32 %v1923, 1.0
        %v1925 = vmax.f32 %v1924, -1.0
        %v1926 = vmul.f32 %v1348, %v1348
        %v1927 = vmin.f32 16.0, %v1926
        %v1928 = vmul.f32 %v1927, 2.1237322e-06
        %v1929 = vadd.f32 %v1928, 0.00028619796
        %v1930 = vmul.f32 %v1927, %v1929
        %v1931 = vadd.f32 %v1930, 0.0036580483
        %v1932 = vmul.f32 %v1927, %v1931
        %v1933 = vadd.f32 %v1932, 0.05243302
        %v1934 = vmul.f32 %v1927, %v1933
        %v1935 = vadd.f32 %v1934, 0.18741608
        %v1936 = vmul.f32 %v1927, %v1935
        %v1937 = vadd.f32 %v1936, 1.1283791
        %v1938 = vmul.f32 %v1348, %v1937
        %v1939 = vmul.f32 %v1927, 3.8918573e-05
        %v1940 = vadd.f32 %v1939, 0.001143296
        %v1941 = vmul.f32 %v1927, %v1940
        %v1942 = vadd.f32 %v1941, 0.014752088
        %v1943 = vmul.f32 %v1927, %v1942
        %v1944 = vadd.f32 %v1943, 0.112945676
        %v1945 = vmul.f32 %v1927, %v1944
        %v1946 = vadd.f32 %v1945, 0.4994258
        %v1947 = vmul.f32 %v1927, %v1946
        %v1948 = vadd.f32 %v1947, 1.0
        %v1949 = vrcp.pop %v1948
        %v1950 = vmul.f32 %v1948, %v1949
        %v1951 = vsub.f32 1.0, %v1950
        %v1952 = vmul.f32 %v1949, %v1951
        %v1953 = vadd.f32 %v1949, %v1952
        %vm1954 = vweird.f32 %v1948
        %vm1955 = vweird.f32 %v1949
        %vm1956 = vmor %vm1954, %vm1955
        %v1957 = vsel %vm1956, %v1949, %v1953
        %v1958 = vand.u32 2147483647, %v1948
        %vm1959 = vcmp.eq.f32.partialorder %v1958, 8.507059e+37
        %v1960 = vand.u32 %v1948, 2147483648
        %v1961 = vor.u32 1.1754944e-38, %v1960
        %v1962 = vsel %vm1959, %v1961, %v1957
        %v1963 = vmul.f32 %v1938, %v1962
        %v1964 = vmin.f32 %v1963, 1.0
        %v1965 = vmax.f32 %v1964, -1.0
        %v1966 = vmul.f32 %v1349, %v1349
        %v1967 = vmin.f32 16.0, %v1966
        %v1968 = vmul.f32 %v1967, 2.1237322e-06
        %v1969 = vadd.f32 %v1968, 0.00028619796
        %v1970 = vmul.f32 %v1967, %v1969
        %v1971 = vadd.f32 %v1970, 0.0036580483
        %v1972 = vmul.f32 %v1967, %v1971
        %v1973 = vadd.f32 %v1972, 0.05243302
        %v1974 = vmul.f32 %v1967, %v1973
        %v1975 = vadd.f32 %v1974, 0.18741608
        %v1976 = vmul.f32 %v1967, %v1975
        %v1977 = vadd.f32 %v1976, 1.1283791
        %v1978 = vmul.f32 %v1349, %v1977
        %v1979 = vmul.f32 %v1967, 3.8918573e-05
        %v1980 = vadd.f32 %v1979, 0.001143296
        %v1981 = vmul.f32 %v1967, %v1980
        %v1982 = vadd.f32 %v1981, 0.014752088
        %v1983 = vmul.f32 %v1967, %v1982
        %v1984 = vadd.f32 %v1983, 0.112945676
        %v1985 = vmul.f32 %v1967, %v1984
        %v1986 = vadd.f32 %v1985, 0.4994258
        %v1987 = vmul.f32 %v1967, %v1986
        %v1988 = vadd.f32 %v1987, 1.0
        %v1989 = vrcp.pop %v1988
        %v1990 = vmul.f32 %v1988, %v1989
        %v1991 = vsub.f32 1.0, %v1990
        %v1992 = vmul.f32 %v1989, %v1991
        %v1993 = vadd.f32 %v1989, %v1992
        %vm1994 = vweird.f32 %v1988
        %vm1995 = vweird.f32 %v1989
        %vm1996 = vmor %vm1994, %vm1995
        %v1997 = vsel %vm1996, %v1989, %v1993
        %v1998 = vand.u32 2147483647, %v1988
        %vm1999 = vcmp.eq.f32.partialorder %v1998, 8.507059e+37
        %v2000 = vand.u32 %v1988, 2147483648
        %v2001 = vor.u32 1.1754944e-38, %v2000
        %v2002 = vsel %vm1999, %v2001, %v1997
        %v2003 = vmul.f32 %v1978, %v2002
        %v2004 = vmin.f32 %v2003, 1.0
        %v2005 = vmax.f32 %v2004, -1.0
        %v2006 = vmul.f32 %v1350, %v1350
        %v2007 = vmin.f32 16.0, %v2006
        %v2008 = vmul.f32 %v2007, 2.1237322e-06
        %v2009 = vadd.f32 %v2008, 0.00028619796
        %v2010 = vmul.f32 %v2007, %v2009
        %v2011 = vadd.f32 %v2010, 0.0036580483
        %v2012 = vmul.f32 %v2007, %v2011
        %v2013 = vadd.f32 %v2012, 0.05243302
        %v2014 = vmul.f32 %v2007, %v2013
        %v2015 = vadd.f32 %v2014, 0.18741608
        %v2016 = vmul.f32 %v2007, %v2015
        %v2017 = vadd.f32 %v2016, 1.1283791
        %v2018 = vmul.f32 %v1350, %v2017
        %v2019 = vmul.f32 %v2007, 3.8918573e-05
        %v2020 = vadd.f32 %v2019, 0.001143296
        %v2021 = vmul.f32 %v2007, %v2020
        %v2022 = vadd.f32 %v2021, 0.014752088
        %v2023 = vmul.f32 %v2007, %v2022
        %v2024 = vadd.f32 %v2023, 0.112945676
        %v2025 = vmul.f32 %v2007, %v2024
        %v2026 = vadd.f32 %v2025, 0.4994258
        %v2027 = vmul.f32 %v2007, %v2026
        %v2028 = vadd.f32 %v2027, 1.0
        %v2029 = vrcp.pop %v2028
        %v2030 = vmul.f32 %v2028, %v2029
        %v2031 = vsub.f32 1.0, %v2030
        %v2032 = vmul.f32 %v2029, %v2031
        %v2033 = vadd.f32 %v2029, %v2032
        %vm2034 = vweird.f32 %v2028
        %vm2035 = vweird.f32 %v2029
        %vm2036 = vmor %vm2034, %vm2035
        %v2037 = vsel %vm2036, %v2029, %v2033
        %v2038 = vand.u32 2147483647, %v2028
        %vm2039 = vcmp.eq.f32.partialorder %v2038, 8.507059e+37
        %v2040 = vand.u32 %v2028, 2147483648
        %v2041 = vor.u32 1.1754944e-38, %v2040
        %v2042 = vsel %vm2039, %v2041, %v2037
        %v2043 = vmul.f32 %v2018, %v2042
        %v2044 = vmin.f32 %v2043, 1.0
        %v2045 = vmax.f32 %v2044, -1.0
        %v2046 = vmul.f32 %v1351, %v1351
        %v2047 = vmin.f32 16.0, %v2046
        %v2048 = vmul.f32 %v2047, 2.1237322e-06
        %v2049 = vadd.f32 %v2048, 0.00028619796
        %v2050 = vmul.f32 %v2047, %v2049
        %v2051 = vadd.f32 %v2050, 0.0036580483
        %v2052 = vmul.f32 %v2047, %v2051
        %v2053 = vadd.f32 %v2052, 0.05243302
        %v2054 = vmul.f32 %v2047, %v2053
        %v2055 = vadd.f32 %v2054, 0.18741608
        %v2056 = vmul.f32 %v2047, %v2055
        %v2057 = vadd.f32 %v2056, 1.1283791
        %v2058 = vmul.f32 %v1351, %v2057
        %v2059 = vmul.f32 %v2047, 3.8918573e-05
        %v2060 = vadd.f32 %v2059, 0.001143296
        %v2061 = vmul.f32 %v2047, %v2060
        %v2062 = vadd.f32 %v2061, 0.014752088
        %v2063 = vmul.f32 %v2047, %v2062
        %v2064 = vadd.f32 %v2063, 0.112945676
        %v2065 = vmul.f32 %v2047, %v2064
        %v2066 = vadd.f32 %v2065, 0.4994258
        %v2067 = vmul.f32 %v2047, %v2066
        %v2068 = vadd.f32 %v2067, 1.0
        %v2069 = vrcp.pop %v2068
        %v2070 = vmul.f32 %v2068, %v2069
        %v2071 = vsub.f32 1.0, %v2070
        %v2072 = vmul.f32 %v2069, %v2071
        %v2073 = vadd.f32 %v2069, %v2072
        %vm2074 = vweird.f32 %v2068
        %vm2075 = vweird.f32 %v2069
        %vm2076 = vmor %vm2074, %vm2075
        %v2077 = vsel %vm2076, %v2069, %v2073
        %v2078 = vand.u32 2147483647, %v2068
        %vm2079 = vcmp.eq.f32.partialorder %v2078, 8.507059e+37
        %v2080 = vand.u32 %v2068, 2147483648
        %v2081 = vor.u32 1.1754944e-38, %v2080
        %v2082 = vsel %vm2079, %v2081, %v2077
        %v2083 = vmul.f32 %v2058, %v2082
        %v2084 = vmin.f32 %v2083, 1.0
        %v2085 = vmax.f32 %v2084, -1.0
        %v2086 = vmul.f32 %v1352, %v1352
        %v2087 = vmin.f32 16.0, %v2086
        %v2088 = vmul.f32 %v2087, 2.1237322e-06
        %v2089 = vadd.f32 %v2088, 0.00028619796
        %v2090 = vmul.f32 %v2087, %v2089
        %v2091 = vadd.f32 %v2090, 0.0036580483
        %v2092 = vmul.f32 %v2087, %v2091
        %v2093 = vadd.f32 %v2092, 0.05243302
        %v2094 = vmul.f32 %v2087, %v2093
        %v2095 = vadd.f32 %v2094, 0.18741608
        %v2096 = vmul.f32 %v2087, %v2095
        %v2097 = vadd.f32 %v2096, 1.1283791
        %v2098 = vmul.f32 %v1352, %v2097
        %v2099 = vmul.f32 %v2087, 3.8918573e-05
        %v2100 = vadd.f32 %v2099, 0.001143296
        %v2101 = vmul.f32 %v2087, %v2100
        %v2102 = vadd.f32 %v2101, 0.014752088
        %v2103 = vmul.f32 %v2087, %v2102
        %v2104 = vadd.f32 %v2103, 0.112945676
        %v2105 = vmul.f32 %v2087, %v2104
        %v2106 = vadd.f32 %v2105, 0.4994258
        %v2107 = vmul.f32 %v2087, %v2106
        %v2108 = vadd.f32 %v2107, 1.0
        %v2109 = vrcp.pop %v2108
        %v2110 = vmul.f32 %v2108, %v2109
        %v2111 = vsub.f32 1.0, %v2110
        %v2112 = vmul.f32 %v2109, %v2111
        %v2113 = vadd.f32 %v2109, %v2112
        %vm2114 = vweird.f32 %v2108
        %vm2115 = vweird.f32 %v2109
        %vm2116 = vmor %vm2114, %vm2115
        %v2117 = vsel %vm2116, %v2109, %v2113
        %v2118 = vand.u32 2147483647, %v2108
        %vm2119 = vcmp.eq.f32.partialorder %v2118, 8.507059e+37
        %v2120 = vand.u32 %v2108, 2147483648
        %v2121 = vor.u32 1.1754944e-38, %v2120
        %v2122 = vsel %vm2119, %v2121, %v2117
        %v2123 = vmul.f32 %v2098, %v2122
        %v2124 = vmin.f32 %v2123, 1.0
        %v2125 = vmax.f32 %v2124, -1.0
        %v2126 = vmul.f32 %v1353, %v1353
        %v2127 = vmin.f32 16.0, %v2126
        %v2128 = vmul.f32 %v2127, 2.1237322e-06
        %v2129 = vadd.f32 %v2128, 0.00028619796
        %v2130 = vmul.f32 %v2127, %v2129
        %v2131 = vadd.f32 %v2130, 0.0036580483
        %v2132 = vmul.f32 %v2127, %v2131
        %v2133 = vadd.f32 %v2132, 0.05243302
        %v2134 = vmul.f32 %v2127, %v2133
        %v2135 = vadd.f32 %v2134, 0.18741608
        %v2136 = vmul.f32 %v2127, %v2135
        %v2137 = vadd.f32 %v2136, 1.1283791
        %v2138 = vmul.f32 %v1353, %v2137
        %v2139 = vmul.f32 %v2127, 3.8918573e-05
        %v2140 = vadd.f32 %v2139, 0.001143296
        %v2141 = vmul.f32 %v2127, %v2140
        %v2142 = vadd.f32 %v2141, 0.014752088
        %v2143 = vmul.f32 %v2127, %v2142
        %v2144 = vadd.f32 %v2143, 0.112945676
        %v2145 = vmul.f32 %v2127, %v2144
        %v2146 = vadd.f32 %v2145, 0.4994258
        %v2147 = vmul.f32 %v2127, %v2146
        %v2148 = vadd.f32 %v2147, 1.0
        %v2149 = vrcp.pop %v2148
        %v2150 = vmul.f32 %v2148, %v2149
        %v2151 = vsub.f32 1.0, %v2150
        %v2152 = vmul.f32 %v2149, %v2151
        %v2153 = vadd.f32 %v2149, %v2152
        %vm2154 = vweird.f32 %v2148
        %vm2155 = vweird.f32 %v2149
        %vm2156 = vmor %vm2154, %vm2155
        %v2157 = vsel %vm2156, %v2149, %v2153
        %v2158 = vand.u32 2147483647, %v2148
        %vm2159 = vcmp.eq.f32.partialorder %v2158, 8.507059e+37
        %v2160 = vand.u32 %v2148, 2147483648
        %v2161 = vor.u32 1.1754944e-38, %v2160
        %v2162 = vsel %vm2159, %v2161, %v2157
        %v2163 = vmul.f32 %v2138, %v2162
        %v2164 = vmin.f32 %v2163, 1.0
        %v2165 = vmax.f32 %v2164, -1.0
        %v2166 = vmul.f32 %v1354, %v1354
        %v2167 = vmin.f32 16.0, %v2166
        %v2168 = vmul.f32 %v2167, 2.1237322e-06
        %v2169 = vadd.f32 %v2168, 0.00028619796
        %v2170 = vmul.f32 %v2167, %v2169
        %v2171 = vadd.f32 %v2170, 0.0036580483
        %v2172 = vmul.f32 %v2167, %v2171
        %v2173 = vadd.f32 %v2172, 0.05243302
        %v2174 = vmul.f32 %v2167, %v2173
        %v2175 = vadd.f32 %v2174, 0.18741608
        %v2176 = vmul.f32 %v2167, %v2175
        %v2177 = vadd.f32 %v2176, 1.1283791
        %v2178 = vmul.f32 %v1354, %v2177
        %v2179 = vmul.f32 %v2167, 3.8918573e-05
        %v2180 = vadd.f32 %v2179, 0.001143296
        %v2181 = vmul.f32 %v2167, %v2180
        %v2182 = vadd.f32 %v2181, 0.014752088
        %v2183 = vmul.f32 %v2167, %v2182
        %v2184 = vadd.f32 %v2183, 0.112945676
        %v2185 = vmul.f32 %v2167, %v2184
        %v2186 = vadd.f32 %v2185, 0.4994258
        %v2187 = vmul.f32 %v2167, %v2186
        %v2188 = vadd.f32 %v2187, 1.0
        %v2189 = vrcp.pop %v2188
        %v2190 = vmul.f32 %v2188, %v2189
        %v2191 = vsub.f32 1.0, %v2190
        %v2192 = vmul.f32 %v2189, %v2191
        %v2193 = vadd.f32 %v2189, %v2192
        %vm2194 = vweird.f32 %v2188
        %vm2195 = vweird.f32 %v2189
        %vm2196 = vmor %vm2194, %vm2195
        %v2197 = vsel %vm2196, %v2189, %v2193
        %v2198 = vand.u32 2147483647, %v2188
        %vm2199 = vcmp.eq.f32.partialorder %v2198, 8.507059e+37
        %v2200 = vand.u32 %v2188, 2147483648
        %v2201 = vor.u32 1.1754944e-38, %v2200
        %v2202 = vsel %vm2199, %v2201, %v2197
        %v2203 = vmul.f32 %v2178, %v2202
        %v2204 = vmin.f32 %v2203, 1.0
        %v2205 = vmax.f32 %v2204, -1.0
        %v2206 = vmul.f32 %v1355, %v1355
        %v2207 = vmin.f32 16.0, %v2206
        %v2208 = vmul.f32 %v2207, 2.1237322e-06
        %v2209 = vadd.f32 %v2208, 0.00028619796
        %v2210 = vmul.f32 %v2207, %v2209
        %v2211 = vadd.f32 %v2210, 0.0036580483
        %v2212 = vmul.f32 %v2207, %v2211
        %v2213 = vadd.f32 %v2212, 0.05243302
        %v2214 = vmul.f32 %v2207, %v2213
        %v2215 = vadd.f32 %v2214, 0.18741608
        %v2216 = vmul.f32 %v2207, %v2215
        %v2217 = vadd.f32 %v2216, 1.1283791
        %v2218 = vmul.f32 %v1355, %v2217
        %v2219 = vmul.f32 %v2207, 3.8918573e-05
        %v2220 = vadd.f32 %v2219, 0.001143296
        %v2221 = vmul.f32 %v2207, %v2220
        %v2222 = vadd.f32 %v2221, 0.014752088
        %v2223 = vmul.f32 %v2207, %v2222
        %v2224 = vadd.f32 %v2223, 0.112945676
        %v2225 = vmul.f32 %v2207, %v2224
        %v2226 = vadd.f32 %v2225, 0.4994258
        %v2227 = vmul.f32 %v2207, %v2226
        %v2228 = vadd.f32 %v2227, 1.0
        %v2229 = vrcp.pop %v2228
        %v2230 = vmul.f32 %v2228, %v2229
        %v2231 = vsub.f32 1.0, %v2230
        %v2232 = vmul.f32 %v2229, %v2231
        %v2233 = vadd.f32 %v2229, %v2232
        %vm2234 = vweird.f32 %v2228
        %vm2235 = vweird.f32 %v2229
        %vm2236 = vmor %vm2234, %vm2235
        %v2237 = vsel %vm2236, %v2229, %v2233
        %v2238 = vand.u32 2147483647, %v2228
        %vm2239 = vcmp.eq.f32.partialorder %v2238, 8.507059e+37
        %v2240 = vand.u32 %v2228, 2147483648
        %v2241 = vor.u32 1.1754944e-38, %v2240
        %v2242 = vsel %vm2239, %v2241, %v2237
        %v2243 = vmul.f32 %v2218, %v2242
        %v2244 = vmin.f32 %v2243, 1.0
        %v2245 = vmax.f32 %v2244, -1.0
        %v2246 = vmul.f32 %v1356, %v1356
        %v2247 = vmin.f32 16.0, %v2246
        %v2248 = vmul.f32 %v2247, 2.1237322e-06
        %v2249 = vadd.f32 %v2248, 0.00028619796
        %v2250 = vmul.f32 %v2247, %v2249
        %v2251 = vadd.f32 %v2250, 0.0036580483
        %v2252 = vmul.f32 %v2247, %v2251
        %v2253 = vadd.f32 %v2252, 0.05243302
        %v2254 = vmul.f32 %v2247, %v2253
        %v2255 = vadd.f32 %v2254, 0.18741608
        %v2256 = vmul.f32 %v2247, %v2255
        %v2257 = vadd.f32 %v2256, 1.1283791
        %v2258 = vmul.f32 %v1356, %v2257
        %v2259 = vmul.f32 %v2247, 3.8918573e-05
        %v2260 = vadd.f32 %v2259, 0.001143296
        %v2261 = vmul.f32 %v2247, %v2260
        %v2262 = vadd.f32 %v2261, 0.014752088
        %v2263 = vmul.f32 %v2247, %v2262
        %v2264 = vadd.f32 %v2263, 0.112945676
        %v2265 = vmul.f32 %v2247, %v2264
        %v2266 = vadd.f32 %v2265, 0.4994258
        %v2267 = vmul.f32 %v2247, %v2266
        %v2268 = vadd.f32 %v2267, 1.0
        %v2269 = vrcp.pop %v2268
        %v2270 = vmul.f32 %v2268, %v2269
        %v2271 = vsub.f32 1.0, %v2270
        %v2272 = vmul.f32 %v2269, %v2271
        %v2273 = vadd.f32 %v2269, %v2272
        %vm2274 = vweird.f32 %v2268
        %vm2275 = vweird.f32 %v2269
        %vm2276 = vmor %vm2274, %vm2275
        %v2277 = vsel %vm2276, %v2269, %v2273
        %v2278 = vand.u32 2147483647, %v2268
        %vm2279 = vcmp.eq.f32.partialorder %v2278, 8.507059e+37
        %v2280 = vand.u32 %v2268, 2147483648
        %v2281 = vor.u32 1.1754944e-38, %v2280
        %v2282 = vsel %vm2279, %v2281, %v2277
        %v2283 = vmul.f32 %v2258, %v2282
        %v2284 = vmin.f32 %v2283, 1.0
        %v2285 = vmax.f32 %v2284, -1.0
        %v2286 = vmul.f32 %v1357, %v1357
        %v2287 = vmin.f32 16.0, %v2286
        %v2288 = vmul.f32 %v2287, 2.1237322e-06
        %v2289 = vadd.f32 %v2288, 0.00028619796
        %v2290 = vmul.f32 %v2287, %v2289
        %v2291 = vadd.f32 %v2290, 0.0036580483
        %v2292 = vmul.f32 %v2287, %v2291
        %v2293 = vadd.f32 %v2292, 0.05243302
        %v2294 = vmul.f32 %v2287, %v2293
        %v2295 = vadd.f32 %v2294, 0.18741608
        %v2296 = vmul.f32 %v2287, %v2295
        %v2297 = vadd.f32 %v2296, 1.1283791
        %v2298 = vmul.f32 %v1357, %v2297
        %v2299 = vmul.f32 %v2287, 3.8918573e-05
        %v2300 = vadd.f32 %v2299, 0.001143296
        %v2301 = vmul.f32 %v2287, %v2300
        %v2302 = vadd.f32 %v2301, 0.014752088
        %v2303 = vmul.f32 %v2287, %v2302
        %v2304 = vadd.f32 %v2303, 0.112945676
        %v2305 = vmul.f32 %v2287, %v2304
        %v2306 = vadd.f32 %v2305, 0.4994258
        %v2307 = vmul.f32 %v2287, %v2306
        %v2308 = vadd.f32 %v2307, 1.0
        %v2309 = vrcp.pop %v2308
        %v2310 = vmul.f32 %v2308, %v2309
        %v2311 = vsub.f32 1.0, %v2310
        %v2312 = vmul.f32 %v2309, %v2311
        %v2313 = vadd.f32 %v2309, %v2312
        %vm2314 = vweird.f32 %v2308
        %vm2315 = vweird.f32 %v2309
        %vm2316 = vmor %vm2314, %vm2315
        %v2317 = vsel %vm2316, %v2309, %v2313
        %v2318 = vand.u32 2147483647, %v2308
        %vm2319 = vcmp.eq.f32.partialorder %v2318, 8.507059e+37
        %v2320 = vand.u32 %v2308, 2147483648
        %v2321 = vor.u32 1.1754944e-38, %v2320
        %v2322 = vsel %vm2319, %v2321, %v2317
        %v2323 = vmul.f32 %v2298, %v2322
        %v2324 = vmin.f32 %v2323, 1.0
        %v2325 = vmax.f32 %v2324, -1.0
        %v2326 = vmul.f32 %v1358, %v1358
        %v2327 = vmin.f32 16.0, %v2326
        %v2328 = vmul.f32 %v2327, 2.1237322e-06
        %v2329 = vadd.f32 %v2328, 0.00028619796
        %v2330 = vmul.f32 %v2327, %v2329
        %v2331 = vadd.f32 %v2330, 0.0036580483
        %v2332 = vmul.f32 %v2327, %v2331
        %v2333 = vadd.f32 %v2332, 0.05243302
        %v2334 = vmul.f32 %v2327, %v2333
        %v2335 = vadd.f32 %v2334, 0.18741608
        %v2336 = vmul.f32 %v2327, %v2335
        %v2337 = vadd.f32 %v2336, 1.1283791
        %v2338 = vmul.f32 %v1358, %v2337
        %v2339 = vmul.f32 %v2327, 3.8918573e-05
        %v2340 = vadd.f32 %v2339, 0.001143296
        %v2341 = vmul.f32 %v2327, %v2340
        %v2342 = vadd.f32 %v2341, 0.014752088
        %v2343 = vmul.f32 %v2327, %v2342
        %v2344 = vadd.f32 %v2343, 0.112945676
        %v2345 = vmul.f32 %v2327, %v2344
        %v2346 = vadd.f32 %v2345, 0.4994258
        %v2347 = vmul.f32 %v2327, %v2346
        %v2348 = vadd.f32 %v2347, 1.0
        %v2349 = vrcp.pop %v2348
        %v2350 = vmul.f32 %v2348, %v2349
        %v2351 = vsub.f32 1.0, %v2350
        %v2352 = vmul.f32 %v2349, %v2351
        %v2353 = vadd.f32 %v2349, %v2352
        %vm2354 = vweird.f32 %v2348
        %vm2355 = vweird.f32 %v2349
        %vm2356 = vmor %vm2354, %vm2355
        %v2357 = vsel %vm2356, %v2349, %v2353
        %v2358 = vand.u32 2147483647, %v2348
        %vm2359 = vcmp.eq.f32.partialorder %v2358, 8.507059e+37
        %v2360 = vand.u32 %v2348, 2147483648
        %v2361 = vor.u32 1.1754944e-38, %v2360
        %v2362 = vsel %vm2359, %v2361, %v2357
        %v2363 = vmul.f32 %v2338, %v2362
        %v2364 = vmin.f32 %v2363, 1.0
        %v2365 = vmax.f32 %v2364, -1.0
        %v2366 = vmul.f32 %v1359, %v1359
        %v2367 = vmin.f32 16.0, %v2366
        %v2368 = vmul.f32 %v2367, 2.1237322e-06
        %v2369 = vadd.f32 %v2368, 0.00028619796
        %v2370 = vmul.f32 %v2367, %v2369
        %v2371 = vadd.f32 %v2370, 0.0036580483
        %v2372 = vmul.f32 %v2367, %v2371
        %v2373 = vadd.f32 %v2372, 0.05243302
        %v2374 = vmul.f32 %v2367, %v2373
        %v2375 = vadd.f32 %v2374, 0.18741608
        %v2376 = vmul.f32 %v2367, %v2375
        %v2377 = vadd.f32 %v2376, 1.1283791
        %v2378 = vmul.f32 %v1359, %v2377
        %v2379 = vmul.f32 %v2367, 3.8918573e-05
        %v2380 = vadd.f32 %v2379, 0.001143296
        %v2381 = vmul.f32 %v2367, %v2380
        %v2382 = vadd.f32 %v2381, 0.014752088
        %v2383 = vmul.f32 %v2367, %v2382
        %v2384 = vadd.f32 %v2383, 0.112945676
        %v2385 = vmul.f32 %v2367, %v2384
        %v2386 = vadd.f32 %v2385, 0.4994258
        %v2387 = vmul.f32 %v2367, %v2386
        %v2388 = vadd.f32 %v2387, 1.0
        %v2389 = vrcp.pop %v2388
        %v2390 = vmul.f32 %v2388, %v2389
        %v2391 = vsub.f32 1.0, %v2390
        %v2392 = vmul.f32 %v2389, %v2391
        %v2393 = vadd.f32 %v2389, %v2392
        %vm2394 = vweird.f32 %v2388
        %vm2395 = vweird.f32 %v2389
        %vm2396 = vmor %vm2394, %vm2395
        %v2397 = vsel %vm2396, %v2389, %v2393
        %v2398 = vand.u32 2147483647, %v2388
        %vm2399 = vcmp.eq.f32.partialorder %v2398, 8.507059e+37
        %v2400 = vand.u32 %v2388, 2147483648
        %v2401 = vor.u32 1.1754944e-38, %v2400
        %v2402 = vsel %vm2399, %v2401, %v2397
        %v2403 = vmul.f32 %v2378, %v2402
        %v2404 = vmin.f32 %v2403, 1.0
        %v2405 = vmax.f32 %v2404, -1.0
        %v2406 = vmul.f32 %v1360, %v1360
        %v2407 = vmin.f32 16.0, %v2406
        %v2408 = vmul.f32 %v2407, 2.1237322e-06
        %v2409 = vadd.f32 %v2408, 0.00028619796
        %v2410 = vmul.f32 %v2407, %v2409
        %v2411 = vadd.f32 %v2410, 0.0036580483
        %v2412 = vmul.f32 %v2407, %v2411
        %v2413 = vadd.f32 %v2412, 0.05243302
        %v2414 = vmul.f32 %v2407, %v2413
        %v2415 = vadd.f32 %v2414, 0.18741608
        %v2416 = vmul.f32 %v2407, %v2415
        %v2417 = vadd.f32 %v2416, 1.1283791
        %v2418 = vmul.f32 %v1360, %v2417
        %v2419 = vmul.f32 %v2407, 3.8918573e-05
        %v2420 = vadd.f32 %v2419, 0.001143296
        %v2421 = vmul.f32 %v2407, %v2420
        %v2422 = vadd.f32 %v2421, 0.014752088
        %v2423 = vmul.f32 %v2407, %v2422
        %v2424 = vadd.f32 %v2423, 0.112945676
        %v2425 = vmul.f32 %v2407, %v2424
        %v2426 = vadd.f32 %v2425, 0.4994258
        %v2427 = vmul.f32 %v2407, %v2426
        %v2428 = vadd.f32 %v2427, 1.0
        %v2429 = vrcp.pop %v2428
        %v2430 = vmul.f32 %v2428, %v2429
        %v2431 = vsub.f32 1.0, %v2430
        %v2432 = vmul.f32 %v2429, %v2431
        %v2433 = vadd.f32 %v2429, %v2432
        %vm2434 = vweird.f32 %v2428
        %vm2435 = vweird.f32 %v2429
        %vm2436 = vmor %vm2434, %vm2435
        %v2437 = vsel %vm2436, %v2429, %v2433
        %v2438 = vand.u32 2147483647, %v2428
        %vm2439 = vcmp.eq.f32.partialorder %v2438, 8.507059e+37
        %v2440 = vand.u32 %v2428, 2147483648
        %v2441 = vor.u32 1.1754944e-38, %v2440
        %v2442 = vsel %vm2439, %v2441, %v2437
        %v2443 = vmul.f32 %v2418, %v2442
        %v2444 = vmin.f32 %v2443, 1.0
        %v2445 = vmax.f32 %v2444, -1.0
        %v2446 = vmul.f32 %v1361, %v1361
        %v2447 = vmin.f32 16.0, %v2446
        %v2448 = vmul.f32 %v2447, 2.1237322e-06
        %v2449 = vadd.f32 %v2448, 0.00028619796
        %v2450 = vmul.f32 %v2447, %v2449
        %v2451 = vadd.f32 %v2450, 0.0036580483
        %v2452 = vmul.f32 %v2447, %v2451
        %v2453 = vadd.f32 %v2452, 0.05243302
        %v2454 = vmul.f32 %v2447, %v2453
        %v2455 = vadd.f32 %v2454, 0.18741608
        %v2456 = vmul.f32 %v2447, %v2455
        %v2457 = vadd.f32 %v2456, 1.1283791
        %v2458 = vmul.f32 %v1361, %v2457
        %v2459 = vmul.f32 %v2447, 3.8918573e-05
        %v2460 = vadd.f32 %v2459, 0.001143296
        %v2461 = vmul.f32 %v2447, %v2460
        %v2462 = vadd.f32 %v2461, 0.014752088
        %v2463 = vmul.f32 %v2447, %v2462
        %v2464 = vadd.f32 %v2463, 0.112945676
        %v2465 = vmul.f32 %v2447, %v2464
        %v2466 = vadd.f32 %v2465, 0.4994258
        %v2467 = vmul.f32 %v2447, %v2466
        %v2468 = vadd.f32 %v2467, 1.0
        %v2469 = vrcp.pop %v2468
        %v2470 = vmul.f32 %v2468, %v2469
        %v2471 = vsub.f32 1.0, %v2470
        %v2472 = vmul.f32 %v2469, %v2471
        %v2473 = vadd.f32 %v2469, %v2472
        %vm2474 = vweird.f32 %v2468
        %vm2475 = vweird.f32 %v2469
        %vm2476 = vmor %vm2474, %vm2475
        %v2477 = vsel %vm2476, %v2469, %v2473
        %v2478 = vand.u32 2147483647, %v2468
        %vm2479 = vcmp.eq.f32.partialorder %v2478, 8.507059e+37
        %v2480 = vand.u32 %v2468, 2147483648
        %v2481 = vor.u32 1.1754944e-38, %v2480
        %v2482 = vsel %vm2479, %v2481, %v2477
        %v2483 = vmul.f32 %v2458, %v2482
        %v2484 = vmin.f32 %v2483, 1.0
        %v2485 = vmax.f32 %v2484, -1.0
        %v2486 = vmul.f32 %v1362, %v1362
        %v2487 = vmin.f32 16.0, %v2486
        %v2488 = vmul.f32 %v2487, 2.1237322e-06
        %v2489 = vadd.f32 %v2488, 0.00028619796
        %v2490 = vmul.f32 %v2487, %v2489
        %v2491 = vadd.f32 %v2490, 0.0036580483
        %v2492 = vmul.f32 %v2487, %v2491
        %v2493 = vadd.f32 %v2492, 0.05243302
        %v2494 = vmul.f32 %v2487, %v2493
        %v2495 = vadd.f32 %v2494, 0.18741608
        %v2496 = vmul.f32 %v2487, %v2495
        %v2497 = vadd.f32 %v2496, 1.1283791
        %v2498 = vmul.f32 %v1362, %v2497
        %v2499 = vmul.f32 %v2487, 3.8918573e-05
        %v2500 = vadd.f32 %v2499, 0.001143296
        %v2501 = vmul.f32 %v2487, %v2500
        %v2502 = vadd.f32 %v2501, 0.014752088
        %v2503 = vmul.f32 %v2487, %v2502
        %v2504 = vadd.f32 %v2503, 0.112945676
        %v2505 = vmul.f32 %v2487, %v2504
        %v2506 = vadd.f32 %v2505, 0.4994258
        %v2507 = vmul.f32 %v2487, %v2506
        %v2508 = vadd.f32 %v2507, 1.0
        %v2509 = vrcp.pop %v2508
        %v2510 = vmul.f32 %v2508, %v2509
        %v2511 = vsub.f32 1.0, %v2510
        %v2512 = vmul.f32 %v2509, %v2511
        %v2513 = vadd.f32 %v2509, %v2512
        %vm2514 = vweird.f32 %v2508
        %vm2515 = vweird.f32 %v2509
        %vm2516 = vmor %vm2514, %vm2515
        %v2517 = vsel %vm2516, %v2509, %v2513
        %v2518 = vand.u32 2147483647, %v2508
        %vm2519 = vcmp.eq.f32.partialorder %v2518, 8.507059e+37
        %v2520 = vand.u32 %v2508, 2147483648
        %v2521 = vor.u32 1.1754944e-38, %v2520
        %v2522 = vsel %vm2519, %v2521, %v2517
        %v2523 = vmul.f32 %v2498, %v2522
        %v2524 = vmin.f32 %v2523, 1.0
        %v2525 = vmax.f32 %v2524, -1.0
        %v2526 = vmul.f32 %v1363, %v1363
        %v2527 = vmin.f32 16.0, %v2526
        %v2528 = vmul.f32 %v2527, 2.1237322e-06
        %v2529 = vadd.f32 %v2528, 0.00028619796
        %v2530 = vmul.f32 %v2527, %v2529
        %v2531 = vadd.f32 %v2530, 0.0036580483
        %v2532 = vmul.f32 %v2527, %v2531
        %v2533 = vadd.f32 %v2532, 0.05243302
        %v2534 = vmul.f32 %v2527, %v2533
        %v2535 = vadd.f32 %v2534, 0.18741608
        %v2536 = vmul.f32 %v2527, %v2535
        %v2537 = vadd.f32 %v2536, 1.1283791
        %v2538 = vmul.f32 %v1363, %v2537
        %v2539 = vmul.f32 %v2527, 3.8918573e-05
        %v2540 = vadd.f32 %v2539, 0.001143296
        %v2541 = vmul.f32 %v2527, %v2540
        %v2542 = vadd.f32 %v2541, 0.014752088
        %v2543 = vmul.f32 %v2527, %v2542
        %v2544 = vadd.f32 %v2543, 0.112945676
        %v2545 = vmul.f32 %v2527, %v2544
        %v2546 = vadd.f32 %v2545, 0.4994258
        %v2547 = vmul.f32 %v2527, %v2546
        %v2548 = vadd.f32 %v2547, 1.0
        %v2549 = vrcp.pop %v2548
        %v2550 = vmul.f32 %v2548, %v2549
        %v2551 = vsub.f32 1.0, %v2550
        %v2552 = vmul.f32 %v2549, %v2551
        %v2553 = vadd.f32 %v2549, %v2552
        %vm2554 = vweird.f32 %v2548
        %vm2555 = vweird.f32 %v2549
        %vm2556 = vmor %vm2554, %vm2555
        %v2557 = vsel %vm2556, %v2549, %v2553
        %v2558 = vand.u32 2147483647, %v2548
        %vm2559 = vcmp.eq.f32.partialorder %v2558, 8.507059e+37
        %v2560 = vand.u32 %v2548, 2147483648
        %v2561 = vor.u32 1.1754944e-38, %v2560
        %v2562 = vsel %vm2559, %v2561, %v2557
        %v2563 = vmul.f32 %v2538, %v2562
        %v2564 = vmin.f32 %v2563, 1.0
        %v2565 = vmax.f32 %v2564, -1.0
        %v2566 = vmul.f32 %v1364, %v1364
        %v2567 = vmin.f32 16.0, %v2566
        %v2568 = vmul.f32 %v2567, 2.1237322e-06
        %v2569 = vadd.f32 %v2568, 0.00028619796
        %v2570 = vmul.f32 %v2567, %v2569
        %v2571 = vadd.f32 %v2570, 0.0036580483
        %v2572 = vmul.f32 %v2567, %v2571
        %v2573 = vadd.f32 %v2572, 0.05243302
        %v2574 = vmul.f32 %v2567, %v2573
        %v2575 = vadd.f32 %v2574, 0.18741608
        %v2576 = vmul.f32 %v2567, %v2575
        %v2577 = vadd.f32 %v2576, 1.1283791
        %v2578 = vmul.f32 %v1364, %v2577
        %v2579 = vmul.f32 %v2567, 3.8918573e-05
        %v2580 = vadd.f32 %v2579, 0.001143296
        %v2581 = vmul.f32 %v2567, %v2580
        %v2582 = vadd.f32 %v2581, 0.014752088
        %v2583 = vmul.f32 %v2567, %v2582
        %v2584 = vadd.f32 %v2583, 0.112945676
        %v2585 = vmul.f32 %v2567, %v2584
        %v2586 = vadd.f32 %v2585, 0.4994258
        %v2587 = vmul.f32 %v2567, %v2586
        %v2588 = vadd.f32 %v2587, 1.0
        %v2589 = vrcp.pop %v2588
        %v2590 = vmul.f32 %v2588, %v2589
        %v2591 = vsub.f32 1.0, %v2590
        %v2592 = vmul.f32 %v2589, %v2591
        %v2593 = vadd.f32 %v2589, %v2592
        %vm2594 = vweird.f32 %v2588
        %vm2595 = vweird.f32 %v2589
        %vm2596 = vmor %vm2594, %vm2595
        %v2597 = vsel %vm2596, %v2589, %v2593
        %v2598 = vand.u32 2147483647, %v2588
        %vm2599 = vcmp.eq.f32.partialorder %v2598, 8.507059e+37
        %v2600 = vand.u32 %v2588, 2147483648
        %v2601 = vor.u32 1.1754944e-38, %v2600
        %v2602 = vsel %vm2599, %v2601, %v2597
        %v2603 = vmul.f32 %v2578, %v2602
        %v2604 = vmin.f32 %v2603, 1.0
        %v2605 = vmax.f32 %v2604, -1.0
        %v2606 = vmul.f32 %v1365, %v1365
        %v2607 = vmin.f32 16.0, %v2606
        %v2608 = vmul.f32 %v2607, 2.1237322e-06
        %v2609 = vadd.f32 %v2608, 0.00028619796
        %v2610 = vmul.f32 %v2607, %v2609
        %v2611 = vadd.f32 %v2610, 0.0036580483
        %v2612 = vmul.f32 %v2607, %v2611
        %v2613 = vadd.f32 %v2612, 0.05243302
        %v2614 = vmul.f32 %v2607, %v2613
        %v2615 = vadd.f32 %v2614, 0.18741608
        %v2616 = vmul.f32 %v2607, %v2615
        %v2617 = vadd.f32 %v2616, 1.1283791
        %v2618 = vmul.f32 %v1365, %v2617
        %v2619 = vmul.f32 %v2607, 3.8918573e-05
        %v2620 = vadd.f32 %v2619, 0.001143296
        %v2621 = vmul.f32 %v2607, %v2620
        %v2622 = vadd.f32 %v2621, 0.014752088
        %v2623 = vmul.f32 %v2607, %v2622
        %v2624 = vadd.f32 %v2623, 0.112945676
        %v2625 = vmul.f32 %v2607, %v2624
        %v2626 = vadd.f32 %v2625, 0.4994258
        %v2627 = vmul.f32 %v2607, %v2626
        %v2628 = vadd.f32 %v2627, 1.0
        %v2629 = vrcp.pop %v2628
        %v2630 = vmul.f32 %v2628, %v2629
        %v2631 = vsub.f32 1.0, %v2630
        %v2632 = vmul.f32 %v2629, %v2631
        %v2633 = vadd.f32 %v2629, %v2632
        %vm2634 = vweird.f32 %v2628
        %vm2635 = vweird.f32 %v2629
        %vm2636 = vmor %vm2634, %vm2635
        %v2637 = vsel %vm2636, %v2629, %v2633
        %v2638 = vand.u32 2147483647, %v2628
        %vm2639 = vcmp.eq.f32.partialorder %v2638, 8.507059e+37
        %v2640 = vand.u32 %v2628, 2147483648
        %v2641 = vor.u32 1.1754944e-38, %v2640
        %v2642 = vsel %vm2639, %v2641, %v2637
        %v2643 = vmul.f32 %v2618, %v2642
        %v2644 = vmin.f32 %v2643, 1.0
        %v2645 = vmax.f32 %v2644, -1.0
        %v2646 = vadd.f32 %v1405, 1.0
        %v2647 = vadd.f32 %v1445, 1.0
        %v2648 = vadd.f32 %v1485, 1.0
        %v2649 = vadd.f32 %v1525, 1.0
        %v2650 = vadd.f32 %v1565, 1.0
        %v2651 = vadd.f32 %v1605, 1.0
        %v2652 = vadd.f32 %v1645, 1.0
        %v2653 = vadd.f32 %v1685, 1.0
        %v2654 = vadd.f32 %v1725, 1.0
        %v2655 = vadd.f32 %v1765, 1.0
        %v2656 = vadd.f32 %v1805, 1.0
        %v2657 = vadd.f32 %v1845, 1.0
        %v2658 = vadd.f32 %v1885, 1.0
        %v2659 = vadd.f32 %v1925, 1.0
        %v2660 = vadd.f32 %v1965, 1.0
        %v2661 = vadd.f32 %v2005, 1.0
        %v2662 = vadd.f32 %v2045, 1.0
        %v2663 = vadd.f32 %v2085, 1.0
        %v2664 = vadd.f32 %v2125, 1.0
        %v2665 = vadd.f32 %v2165, 1.0
        %v2666 = vadd.f32 %v2205, 1.0
        %v2667 = vadd.f32 %v2245, 1.0
        %v2668 = vadd.f32 %v2285, 1.0
        %v2669 = vadd.f32 %v2325, 1.0
        %v2670 = vadd.f32 %v2365, 1.0
        %v2671 = vadd.f32 %v2405, 1.0
        %v2672 = vadd.f32 %v2445, 1.0
        %v2673 = vadd.f32 %v2485, 1.0
        %v2674 = vadd.f32 %v2525, 1.0
        %v2675 = vadd.f32 %v2565, 1.0
        %v2676 = vadd.f32 %v2605, 1.0
        %v2677 = vadd.f32 %v2645, 1.0
        %v2678 = vmul.f32 %v1302, %v2646
        %v2679 = vmul.f32 %v1303, %v2647
        %v2680 = vmul.f32 %v1304, %v2648
        %v2681 = vmul.f32 %v1305, %v2649
        %v2682 = vmul.f32 %v1306, %v2650
        %v2683 = vmul.f32 %v1307, %v2651
        %v2684 = vmul.f32 %v1308, %v2652
        %v2685 = vmul.f32 %v1309, %v2653
        %v2686 = vmul.f32 %v1310, %v2654
        %v2687 = vmul.f32 %v1311, %v2655
        %v2688 = vmul.f32 %v1312, %v2656
        %v2689 = vmul.f32 %v1313, %v2657
        %v2690 = vmul.f32 %v1314, %v2658
        %v2691 = vmul.f32 %v1315, %v2659
        %v2692 = vmul.f32 %v1316, %v2660
        %v2693 = vmul.f32 %v1317, %v2661
        %v2694 = vmul.f32 %v1318, %v2662
        %v2695 = vmul.f32 %v1319, %v2663
        %v2696 = vmul.f32 %v1320, %v2664
        %v2697 = vmul.f32 %v1321, %v2665
        %v2698 = vmul.f32 %v1322, %v2666
        %v2699 = vmul.f32 %v1323, %v2667
        %v2700 = vmul.f32 %v1324, %v2668
        %v2701 = vmul.f32 %v1325, %v2669
        %v2702 = vmul.f32 %v1326, %v2670
        %v2703 = vmul.f32 %v1327, %v2671
        %v2704 = vmul.f32 %v1328, %v2672
        %v2705 = vmul.f32 %v1329, %v2673
        %v2706 = vmul.f32 %v1330, %v2674
        %v2707 = vmul.f32 %v1331, %v2675
        %v2708 = vmul.f32 %v1332, %v2676
        %v2709 = vmul.f32 %v1333, %v2677
        %2710 = vmatpush.msra.mxu0 %v925
        %2711 = vmatpush.msra.mxu0 %v924
        %2712 = vmatpush.msra.mxu0 %v923
        %2713 = vmatpush.msra.mxu0 %v922
        %2714 = vmatpush.msra.mxu0 %v921
        %2715 = vmatpush.msra.mxu0 %v920
        %2716 = vmatpush.msra.mxu0 %v919
        %2717 = vmatpush.msra.mxu0 %v918
        %2718 = vmatpush.msra.mxu0 %v917
        %2719 = vmatpush.msra.mxu0 %v916
        %2720 = vmatpush.msra.mxu0 %v915
        %2721 = vmatpush.msra.mxu0 %v914
        %2722 = vmatpush.msra.mxu0 %v913
        %2723 = vmatpush.msra.mxu0 %v912
        %2724 = vmatpush.msra.mxu0 %v911
        %2725 = vmatpush.msra.mxu0 %v910
        %2726 = vmatmul.f32.gmra.mxu0 %v2678
        %v2727 = vpop.f32.mrf.mxu0
        %v2728 = vadd.f32 0.0, %v2727
        %2729 = vmatmul.f32.gmra.mxu0 %v2680
        %v2730 = vpop.f32.mrf.mxu0
        %v2731 = vadd.f32 0.0, %v2730
        %2732 = vmatmul.f32.gmra.mxu0 %v2682
        %v2733 = vpop.f32.mrf.mxu0
        %v2734 = vadd.f32 0.0, %v2733
        %2735 = vmatmul.f32.gmra.mxu0 %v2684
        %v2736 = vpop.f32.mrf.mxu0
        %v2737 = vadd.f32 0.0, %v2736
        %2738 = vmatmul.f32.gmra.mxu0 %v2686
        %v2739 = vpop.f32.mrf.mxu0
        %v2740 = vadd.f32 0.0, %v2739
        %2741 = vmatmul.f32.gmra.mxu0 %v2688
        %v2742 = vpop.f32.mrf.mxu0
        %v2743 = vadd.f32 0.0, %v2742
        %2744 = vmatmul.f32.gmra.mxu0 %v2690
        %v2745 = vpop.f32.mrf.mxu0
        %v2746 = vadd.f32 0.0, %v2745
        %2747 = vmatmul.f32.gmra.mxu0 %v2692
        %v2748 = vpop.f32.mrf.mxu0
        %v2749 = vadd.f32 0.0, %v2748
        %2750 = vmatmul.f32.gmra.mxu0 %v2694
        %v2751 = vpop.f32.mrf.mxu0
        %v2752 = vadd.f32 0.0, %v2751
        %2753 = vmatmul.f32.gmra.mxu0 %v2696
        %v2754 = vpop.f32.mrf.mxu0
        %v2755 = vadd.f32 0.0, %v2754
        %2756 = vmatmul.f32.gmra.mxu0 %v2698
        %v2757 = vpop.f32.mrf.mxu0
        %v2758 = vadd.f32 0.0, %v2757
        %2759 = vmatmul.f32.gmra.mxu0 %v2700
        %v2760 = vpop.f32.mrf.mxu0
        %v2761 = vadd.f32 0.0, %v2760
        %2762 = vmatmul.f32.gmra.mxu0 %v2702
        %v2763 = vpop.f32.mrf.mxu0
        %v2764 = vadd.f32 0.0, %v2763
        %2765 = vmatmul.f32.gmra.mxu0 %v2704
        %v2766 = vpop.f32.mrf.mxu0
        %v2767 = vadd.f32 0.0, %v2766
        %2768 = vmatmul.f32.gmra.mxu0 %v2706
        %v2769 = vpop.f32.mrf.mxu0
        %v2770 = vadd.f32 0.0, %v2769
        %2771 = vmatmul.f32.gmra.mxu0 %v2708
        %v2772 = vpop.f32.mrf.mxu0
        %v2773 = vadd.f32 0.0, %v2772
        %2774 = vdwg.mxu0
        %2775 = vmatpush.msra.mxu0 %v941
        %2776 = vmatpush.msra.mxu0 %v940
        %2777 = vmatpush.msra.mxu0 %v939
        %2778 = vmatpush.msra.mxu0 %v938
        %2779 = vmatpush.msra.mxu0 %v937
        %2780 = vmatpush.msra.mxu0 %v936
        %2781 = vmatpush.msra.mxu0 %v935
        %2782 = vmatpush.msra.mxu0 %v934
        %2783 = vmatpush.msra.mxu0 %v933
        %2784 = vmatpush.msra.mxu0 %v932
        %2785 = vmatpush.msra.mxu0 %v931
        %2786 = vmatpush.msra.mxu0 %v930
        %2787 = vmatpush.msra.mxu0 %v929
        %2788 = vmatpush.msra.mxu0 %v928
        %2789 = vmatpush.msra.mxu0 %v927
        %2790 = vmatpush.msra.mxu0 %v926
        %2791 = vmatmul.f32.gmra.mxu0 %v2679
        %v2792 = vpop.f32.mrf.mxu0
        %v2793 = vadd.f32 %v2728, %v2792
        %2794 = vmatmul.f32.gmra.mxu0 %v2681
        %v2795 = vpop.f32.mrf.mxu0
        %v2796 = vadd.f32 %v2731, %v2795
        %2797 = vmatmul.f32.gmra.mxu0 %v2683
        %v2798 = vpop.f32.mrf.mxu0
        %v2799 = vadd.f32 %v2734, %v2798
        %2800 = vmatmul.f32.gmra.mxu0 %v2685
        %v2801 = vpop.f32.mrf.mxu0
        %v2802 = vadd.f32 %v2737, %v2801
        %2803 = vmatmul.f32.gmra.mxu0 %v2687
        %v2804 = vpop.f32.mrf.mxu0
        %v2805 = vadd.f32 %v2740, %v2804
        %2806 = vmatmul.f32.gmra.mxu0 %v2689
        %v2807 = vpop.f32.mrf.mxu0
        %v2808 = vadd.f32 %v2743, %v2807
        %2809 = vmatmul.f32.gmra.mxu0 %v2691
        %v2810 = vpop.f32.mrf.mxu0
        %v2811 = vadd.f32 %v2746, %v2810
        %2812 = vmatmul.f32.gmra.mxu0 %v2693
        %v2813 = vpop.f32.mrf.mxu0
        %v2814 = vadd.f32 %v2749, %v2813
        %2815 = vmatmul.f32.gmra.mxu0 %v2695
        %v2816 = vpop.f32.mrf.mxu0
        %v2817 = vadd.f32 %v2752, %v2816
        %2818 = vmatmul.f32.gmra.mxu0 %v2697
        %v2819 = vpop.f32.mrf.mxu0
        %v2820 = vadd.f32 %v2755, %v2819
        %2821 = vmatmul.f32.gmra.mxu0 %v2699
        %v2822 = vpop.f32.mrf.mxu0
        %v2823 = vadd.f32 %v2758, %v2822
        %2824 = vmatmul.f32.gmra.mxu0 %v2701
        %v2825 = vpop.f32.mrf.mxu0
        %v2826 = vadd.f32 %v2761, %v2825
        %2827 = vmatmul.f32.gmra.mxu0 %v2703
        %v2828 = vpop.f32.mrf.mxu0
        %v2829 = vadd.f32 %v2764, %v2828
        %2830 = vmatmul.f32.gmra.mxu0 %v2705
        %v2831 = vpop.f32.mrf.mxu0
        %v2832 = vadd.f32 %v2767, %v2831
        %2833 = vmatmul.f32.gmra.mxu0 %v2707
        %v2834 = vpop.f32.mrf.mxu0
        %v2835 = vadd.f32 %v2770, %v2834
        %2836 = vmatmul.f32.gmra.mxu0 %v2709
        %v2837 = vpop.f32.mrf.mxu0
        %v2838 = vadd.f32 %v2773, %v2837
        %2839 = vdwg.mxu0
        %v2840 = vmul.f32 %v2793, %v2793
        %v2841 = vmul.f32 %v2796, %v2796
        %v2842 = vmul.f32 %v2799, %v2799
        %v2843 = vmul.f32 %v2802, %v2802
        %v2844 = vmul.f32 %v2805, %v2805
        %v2845 = vmul.f32 %v2808, %v2808
        %v2846 = vmul.f32 %v2811, %v2811
        %v2847 = vmul.f32 %v2814, %v2814
        %v2848 = vmul.f32 %v2817, %v2817
        %v2849 = vmul.f32 %v2820, %v2820
        %v2850 = vmul.f32 %v2823, %v2823
        %v2851 = vmul.f32 %v2826, %v2826
        %v2852 = vmul.f32 %v2829, %v2829
        %v2853 = vmul.f32 %v2832, %v2832
        %v2854 = vmul.f32 %v2835, %v2835
        %v2855 = vmul.f32 %v2838, %v2838
        %2856 = vadd.xlane.f32.xlu0 %v2840
        %v2857 = vpop.xlane.xlu0 %2856
        %2858 = vadd.xlane.f32.xlu0 %v2841
        %v2859 = vpop.xlane.xlu0 %2858
        %2860 = vadd.xlane.f32.xlu0 %v2842
        %v2861 = vpop.xlane.xlu0 %2860
        %2862 = vadd.xlane.f32.xlu0 %v2843
        %v2863 = vpop.xlane.xlu0 %2862
        %2864 = vadd.xlane.f32.xlu0 %v2844
        %v2865 = vpop.xlane.xlu0 %2864
        %2866 = vadd.xlane.f32.xlu0 %v2845
        %v2867 = vpop.xlane.xlu0 %2866
        %2868 = vadd.xlane.f32.xlu0 %v2846
        %v2869 = vpop.xlane.xlu0 %2868
        %2870 = vadd.xlane.f32.xlu0 %v2847
        %v2871 = vpop.xlane.xlu0 %2870
        %2872 = vadd.xlane.f32.xlu0 %v2848
        %v2873 = vpop.xlane.xlu0 %2872
        %2874 = vadd.xlane.f32.xlu0 %v2849
        %v2875 = vpop.xlane.xlu0 %2874
        %2876 = vadd.xlane.f32.xlu0 %v2850
        %v2877 = vpop.xlane.xlu0 %2876
        %2878 = vadd.xlane.f32.xlu0 %v2851
        %v2879 = vpop.xlane.xlu0 %2878
        %2880 = vadd.xlane.f32.xlu0 %v2852
        %v2881 = vpop.xlane.xlu0 %2880
        %2882 = vadd.xlane.f32.xlu0 %v2853
        %v2883 = vpop.xlane.xlu0 %2882
        %2884 = vadd.xlane.f32.xlu0 %v2854
        %v2885 = vpop.xlane.xlu0 %2884
        %2886 = vadd.xlane.f32.xlu0 %v2855
        %v2887 = vpop.xlane.xlu0 %2886
        %v2888 = vrsqrt.pop %v2857
        %v2889 = vmul.f32 %v2888, %v2857
        %v2890 = vmul.f32 %v2889, %v2888
        %v2891 = vmul.f32 0.5, %v2890
        %v2892 = vsub.f32 1.5, %v2891
        %v2893 = vmul.f32 %v2888, %v2892
        %vm2894 = vweird.f32 %v2857
        %vm2895 = vweird.f32 %v2888
        %vm2896 = vmor %vm2894, %vm2895
        %v2897 = vsel %vm2896, %v2888, %v2893
        %v2898 = vrsqrt.pop %v2859
        %v2899 = vmul.f32 %v2898, %v2859
        %v2900 = vmul.f32 %v2899, %v2898
        %v2901 = vmul.f32 0.5, %v2900
        %v2902 = vsub.f32 1.5, %v2901
        %v2903 = vmul.f32 %v2898, %v2902
        %vm2904 = vweird.f32 %v2859
        %vm2905 = vweird.f32 %v2898
        %vm2906 = vmor %vm2904, %vm2905
        %v2907 = vsel %vm2906, %v2898, %v2903
        %v2908 = vrsqrt.pop %v2861
        %v2909 = vmul.f32 %v2908, %v2861
        %v2910 = vmul.f32 %v2909, %v2908
        %v2911 = vmul.f32 0.5, %v2910
        %v2912 = vsub.f32 1.5, %v2911
        %v2913 = vmul.f32 %v2908, %v2912
        %vm2914 = vweird.f32 %v2861
        %vm2915 = vweird.f32 %v2908
        %vm2916 = vmor %vm2914, %vm2915
        %v2917 = vsel %vm2916, %v2908, %v2913
        %v2918 = vrsqrt.pop %v2863
        %v2919 = vmul.f32 %v2918, %v2863
        %v2920 = vmul.f32 %v2919, %v2918
        %v2921 = vmul.f32 0.5, %v2920
        %v2922 = vsub.f32 1.5, %v2921
        %v2923 = vmul.f32 %v2918, %v2922
        %vm2924 = vweird.f32 %v2863
        %vm2925 = vweird.f32 %v2918
        %vm2926 = vmor %vm2924, %vm2925
        %v2927 = vsel %vm2926, %v2918, %v2923
        %v2928 = vrsqrt.pop %v2865
        %v2929 = vmul.f32 %v2928, %v2865
        %v2930 = vmul.f32 %v2929, %v2928
        %v2931 = vmul.f32 0.5, %v2930
        %v2932 = vsub.f32 1.5, %v2931
        %v2933 = vmul.f32 %v2928, %v2932
        %vm2934 = vweird.f32 %v2865
        %vm2935 = vweird.f32 %v2928
        %vm2936 = vmor %vm2934, %vm2935
        %v2937 = vsel %vm2936, %v2928, %v2933
        %v2938 = vrsqrt.pop %v2867
        %v2939 = vmul.f32 %v2938, %v2867
        %v2940 = vmul.f32 %v2939, %v2938
        %v2941 = vmul.f32 0.5, %v2940
        %v2942 = vsub.f32 1.5, %v2941
        %v2943 = vmul.f32 %v2938, %v2942
        %vm2944 = vweird.f32 %v2867
        %vm2945 = vweird.f32 %v2938
        %vm2946 = vmor %vm2944, %vm2945
        %v2947 = vsel %vm2946, %v2938, %v2943
        %v2948 = vrsqrt.pop %v2869
        %v2949 = vmul.f32 %v2948, %v2869
        %v2950 = vmul.f32 %v2949, %v2948
        %v2951 = vmul.f32 0.5, %v2950
        %v2952 = vsub.f32 1.5, %v2951
        %v2953 = vmul.f32 %v2948, %v2952
        %vm2954 = vweird.f32 %v2869
        %vm2955 = vweird.f32 %v2948
        %vm2956 = vmor %vm2954, %vm2955
        %v2957 = vsel %vm2956, %v2948, %v2953
        %v2958 = vrsqrt.pop %v2871
        %v2959 = vmul.f32 %v2958, %v2871
        %v2960 = vmul.f32 %v2959, %v2958
        %v2961 = vmul.f32 0.5, %v2960
        %v2962 = vsub.f32 1.5, %v2961
        %v2963 = vmul.f32 %v2958, %v2962
        %vm2964 = vweird.f32 %v2871
        %vm2965 = vweird.f32 %v2958
        %vm2966 = vmor %vm2964, %vm2965
        %v2967 = vsel %vm2966, %v2958, %v2963
        %v2968 = vrsqrt.pop %v2873
        %v2969 = vmul.f32 %v2968, %v2873
        %v2970 = vmul.f32 %v2969, %v2968
        %v2971 = vmul.f32 0.5, %v2970
        %v2972 = vsub.f32 1.5, %v2971
        %v2973 = vmul.f32 %v2968, %v2972
        %vm2974 = vweird.f32 %v2873
        %vm2975 = vweird.f32 %v2968
        %vm2976 = vmor %vm2974, %vm2975
        %v2977 = vsel %vm2976, %v2968, %v2973
        %v2978 = vrsqrt.pop %v2875
        %v2979 = vmul.f32 %v2978, %v2875
        %v2980 = vmul.f32 %v2979, %v2978
        %v2981 = vmul.f32 0.5, %v2980
        %v2982 = vsub.f32 1.5, %v2981
        %v2983 = vmul.f32 %v2978, %v2982
        %vm2984 = vweird.f32 %v2875
        %vm2985 = vweird.f32 %v2978
        %vm2986 = vmor %vm2984, %vm2985
        %v2987 = vsel %vm2986, %v2978, %v2983
        %v2988 = vrsqrt.pop %v2877
        %v2989 = vmul.f32 %v2988, %v2877
        %v2990 = vmul.f32 %v2989, %v2988
        %v2991 = vmul.f32 0.5, %v2990
        %v2992 = vsub.f32 1.5, %v2991
        %v2993 = vmul.f32 %v2988, %v2992
        %vm2994 = vweird.f32 %v2877
        %vm2995 = vweird.f32 %v2988
        %vm2996 = vmor %vm2994, %vm2995
        %v2997 = vsel %vm2996, %v2988, %v2993
        %v2998 = vrsqrt.pop %v2879
        %v2999 = vmul.f32 %v2998, %v2879
        %v3000 = vmul.f32 %v2999, %v2998
        %v3001 = vmul.f32 0.5, %v3000
        %v3002 = vsub.f32 1.5, %v3001
        %v3003 = vmul.f32 %v2998, %v3002
        %vm3004 = vweird.f32 %v2879
        %vm3005 = vweird.f32 %v2998
        %vm3006 = vmor %vm3004, %vm3005
        %v3007 = vsel %vm3006, %v2998, %v3003
        %v3008 = vrsqrt.pop %v2881
        %v3009 = vmul.f32 %v3008, %v2881
        %v3010 = vmul.f32 %v3009, %v3008
        %v3011 = vmul.f32 0.5, %v3010
        %v3012 = vsub.f32 1.5, %v3011
        %v3013 = vmul.f32 %v3008, %v3012
        %vm3014 = vweird.f32 %v2881
        %vm3015 = vweird.f32 %v3008
        %vm3016 = vmor %vm3014, %vm3015
        %v3017 = vsel %vm3016, %v3008, %v3013
        %v3018 = vrsqrt.pop %v2883
        %v3019 = vmul.f32 %v3018, %v2883
        %v3020 = vmul.f32 %v3019, %v3018
        %v3021 = vmul.f32 0.5, %v3020
        %v3022 = vsub.f32 1.5, %v3021
        %v3023 = vmul.f32 %v3018, %v3022
        %vm3024 = vweird.f32 %v2883
        %vm3025 = vweird.f32 %v3018
        %vm3026 = vmor %vm3024, %vm3025
        %v3027 = vsel %vm3026, %v3018, %v3023
        %v3028 = vrsqrt.pop %v2885
        %v3029 = vmul.f32 %v3028, %v2885
        %v3030 = vmul.f32 %v3029, %v3028
        %v3031 = vmul.f32 0.5, %v3030
        %v3032 = vsub.f32 1.5, %v3031
        %v3033 = vmul.f32 %v3028, %v3032
        %vm3034 = vweird.f32 %v2885
        %vm3035 = vweird.f32 %v3028
        %vm3036 = vmor %vm3034, %vm3035
        %v3037 = vsel %vm3036, %v3028, %v3033
        %v3038 = vrsqrt.pop %v2887
        %v3039 = vmul.f32 %v3038, %v2887
        %v3040 = vmul.f32 %v3039, %v3038
        %v3041 = vmul.f32 0.5, %v3040
        %v3042 = vsub.f32 1.5, %v3041
        %v3043 = vmul.f32 %v3038, %v3042
        %vm3044 = vweird.f32 %v2887
        %vm3045 = vweird.f32 %v3038
        %vm3046 = vmor %vm3044, %vm3045
        %v3047 = vsel %vm3046, %v3038, %v3043
        %v3048 = vmul.f32 %v2793, %v2897
        %v3049 = vmul.f32 %v2796, %v2907
        %v3050 = vmul.f32 %v2799, %v2917
        %v3051 = vmul.f32 %v2802, %v2927
        %v3052 = vmul.f32 %v2805, %v2937
        %v3053 = vmul.f32 %v2808, %v2947
        %v3054 = vmul.f32 %v2811, %v2957
        %v3055 = vmul.f32 %v2814, %v2967
        %v3056 = vmul.f32 %v2817, %v2977
        %v3057 = vmul.f32 %v2820, %v2987
        %v3058 = vmul.f32 %v2823, %v2997
        %v3059 = vmul.f32 %v2826, %v3007
        %v3060 = vmul.f32 %v2829, %v3017
        %v3061 = vmul.f32 %v2832, %v3027
        %v3062 = vmul.f32 %v2835, %v3037
        %v3063 = vmul.f32 %v2838, %v3047
        %3064 = vst [vmem:[%s377] sm:$0xff] %v3048
        %3065 = vst [vmem:[%s377 + $0x8] sm:$0xff] %v3049
        %3066 = vst [vmem:[%s377 + $0x10] sm:$0xff] %v3050
        %3067 = vst [vmem:[%s377 + $0x18] sm:$0xff] %v3051
        %3068 = vst [vmem:[%s377 + $0x20] sm:$0xff] %v3052
        %3069 = vst [vmem:[%s377 + $0x28] sm:$0xff] %v3053
        %3070 = vst [vmem:[%s377 + $0x30] sm:$0xff] %v3054
        %3071 = vst [vmem:[%s377 + $0x38] sm:$0xff] %v3055
        %3072 = vst [vmem:[%s377 + $0x40] sm:$0xff] %v3056
        %3073 = vst [vmem:[%s377 + $0x48] sm:$0xff] %v3057
        %3074 = vst [vmem:[%s377 + $0x50] sm:$0xff] %v3058
        %3075 = vst [vmem:[%s377 + $0x58] sm:$0xff] %v3059
        %3076 = vst [vmem:[%s377 + $0x60] sm:$0xff] %v3060
        %3077 = vst [vmem:[%s377 + $0x68] sm:$0xff] %v3061
        %3078 = vst [vmem:[%s377 + $0x70] sm:$0xff] %v3062
        %3079 = vst [vmem:[%s377 + $0x78] sm:$0xff] %v3063
        %s3080 = sand.u32 %s172, 1
        %s3081 = scalar_lea.sflag [#allocation4], %s3080
        %s3082 = sand.u32 %s172, 1
        %s3083 = smul.addr %s3082, 128
        %s3084 = scalar_lea.vmem [#allocation13], %s3083
        // Predicated region
        $region69: #{tpu_custom_call.1} parent=43 // pred_check
          %p3085 = pneg %p182
        $region70: #{tpu_custom_call.1} parent=43 // pred_check_branch
          %3087 = sbr.rel (%p3085) target = $region72
        $region71: #{tpu_custom_call.1} parent=43 // pred_region
          %s3088 = smul.u32 16, %s28
          %3090 = vsyncadd %s3081, 0
          %s3091 = smul.addr %s3088, 8
          %s3092 = scalar_lea.hbm %s6, %s3091
          %s3093 = sshll.u32 %s3084, 4
          %s3094 = int_to_ptr.vmem [resolvable:$true] %s3093
          %s3095 = sshll.u32 %s3092, 4
          %s3096 = int_to_ptr.hbm [resolvable:$true] %s3095
          %3101 = dma.vmem_to_hbm [thread:$0]  %s3094, 2048, %s3096, %s3081, 128, 128, 8
        $region72: #{tpu_custom_call.1} parent=43 // pred_fallthru
          _
      $region44: #{tpu_custom_call.1} parent=5 // pred_fallthru
        _
      %p3102 = scmp.le.s32.totalorder 2, %s23
      // Predicated region
      $region73: #{tpu_custom_call.1} parent=5 // pred_check
        %p3103 = pneg %p3102
      $region74: #{tpu_custom_call.1} parent=5 // pred_check_branch
        %3105 = sbr.rel (%p3103) target = $region76
      $region75: #{tpu_custom_call.1} parent=5 // pred_region
        %s3106 = ssub.s32 %s23, 2
        // Predicated region
        $region77: #{tpu_custom_call.1} parent=75 // pred_check
          %p3107 = pneg %p188
        $region78: #{tpu_custom_call.1} parent=75 // pred_check_branch
          %3109 = sbr.rel (%p3107) target = $region80
        $region79: #{tpu_custom_call.1} parent=75 // pred_region
          %s3110 = sand.u32 %s173, 1
          %s3111 = scalar_lea.sflag [#allocation4], %s3110
          %s3112 = sand.u32 %s173, 1
          %s3113 = smul.addr %s3112, 128
          %s3114 = scalar_lea.vmem [#allocation13], %s3113
          %3116 = dma.done %s3111, 2048
        $region80: #{tpu_custom_call.1} parent=75 // pred_fallthru
          _
      $region76: #{tpu_custom_call.1} parent=5 // pred_fallthru
        _
    $region6: #{tpu_custom_call.1} parent=1 // loop_footer
      %s27 = sadd.s32 1, %s23
    $region7: #{tpu_custom_call.1} parent=1 // loop_footer_branch
      %22 = sbr.rel target = $region3
    $region8: #{tpu_custom_call.1} parent=1 // loop_exit
      _
    %3117 = vsyncpa [#allocation3], 1
    %s3118 = scalar_lea.sflag [#allocation3], 1
    %3119 = vsyncpa %s3118, 1
    %3120 = vsyncpa [#allocation6], 1
    %s3121 = scalar_lea.sflag [#allocation6], 1
    %3122 = vsyncpa %s3121, 1
    %3123 = vsyncpa [#allocation9], 1
    %3124 = vsyncpa [#allocation12], 1
    %3125 = vsyncpa [#allocation4], 1
    %s3126 = scalar_lea.sflag [#allocation4], 1
    %3127 = vsyncpa %s3126, 1

</llo_original>
